<compile_context>
chip_gen: v6e
topology: v6e:2x2x1
jax: 0.10.0
libtpu: 0.0.40
codegen_flags: <defaults>
</compile_context>

<pallas_src>
import math
import functools

import numpy as np
import jax
import jax.numpy as jnp
from jax.experimental import pallas as pl
from jax.experimental.pallas import tpu as pltpu

# ----------------------------- configuration --------------------------------
IMG_H, IMG_W, IMG_C = 8, 8, 4
HIDDEN = 32
K_FLOW = 2
L_LEVELS = 2
AFFINE_EPS = 1e-3
AFFINE_SCALE_EPS = 0.0
BATCH = 2
N_BINS = 256.0  # uniform_binning_correction (8 bits)

_F32 = jnp.float32
_MXU_DTYPE = jnp.bfloat16   # coupling-net matmul operand dtype (set to _F32 for full precision)
_LOG2PI = math.log(2.0 * math.pi)
_PAD_ROWS = 8               # sublane-aligned row padding for the shifted-conv scratch (>= W+1)


def _fullspec(shape):
    n = len(shape)
    return pl.BlockSpec(tuple(shape), lambda *_, n=n: (0,) * n)


# ----------------------------- Pallas kernels --------------------------------
def _flowstep_kernel(z_ref, wp_ref, bp_ref, w1_ref, b1_ref, w2_ref, b2_ref,
                     w3_ref, b3_ref, mask_ref, seg_ref,
                     zout_ref, ld_ref, pr_ref,
                     z1pad_ref, h2pad_ref,
                     *, B, H, W, C, hidden, scale_eps, affine_eps):
    """One full Glow FlowStep on a (B*H*W, C) channel-last slab."""
    M = B * H * W
    Cin = C // 2
    pad = _PAD_ROWS

    # --- ActNorm + invertible 1x1 conv, folded into one affine matmul (f32) ---
    y = jnp.dot(z_ref[...], wp_ref[...], preferred_element_type=_F32) + bp_ref[...]
    z1 = y[:, :Cin]
    z2 = y[:, Cin:]

    # --- coupling NN stage 1: 3x3 'same' conv (+folded ActNorm) + ReLU --------
    # 3x3 conv = 9 row-shifted, boundary-masked matmuls read from padded scratch.
    z1pad_ref[...] = jnp.zeros_like(z1pad_ref)
    z1pad_ref[pad:pad + M, :] = z1
    acc1 = jnp.zeros((M, hidden), _F32)
    for k in range(9):
        s = (k // 3 - 1) * W + (k % 3 - 1)
        patch = z1pad_ref[pad + s:pad + s + M, :] * mask_ref[:, k:k + 1]
        acc1 = acc1 + jnp.dot(patch.astype(_MXU_DTYPE),
                              w1_ref[k * Cin:(k + 1) * Cin, :],
                              preferred_element_type=_F32)
    h1 = jnp.maximum(acc1 + b1_ref[...], 0.0)

    # --- stage 2: 1x1 conv (+folded ActNorm) + ReLU ---------------------------
    h2 = jnp.maximum(
        jnp.dot(h1.astype(_MXU_DTYPE), w2_ref[...], preferred_element_type=_F32)
        + b2_ref[...], 0.0)

    # --- stage 3: Conv2dZeros 3x3, exp(3*logs) folded into weight/bias --------
    h2pad_ref[...] = jnp.zeros_like(h2pad_ref)
    h2pad_ref[pad:pad + M, :] = h2
    acc3 = jnp.zeros((M, C), _F32)
    for k in range(9):
        s = (k // 3 - 1) * W + (k % 3 - 1)
        patch = h2pad_ref[pad + s:pad + s + M, :] * mask_ref[:, k:k + 1]
        acc3 = acc3 + jnp.dot(patch.astype(_MXU_DTYPE),
                              w3_ref[k * hidden:(k + 1) * hidden, :],
                              preferred_element_type=_F32)
    h3 = acc3 + b3_ref[...]

    # --- affine coupling (w3 columns pre-permuted: [shift | scale] halves) ----
    shift = h3[:, :Cin]
    # stable sigmoid: sigma(x) = 0.5*(tanh(x/2)+1)    (EUP op, f32)
    scale = 0.5 * (jnp.tanh(0.5 * (h3[:, Cin:] + scale_eps)) + 1.0) + affine_eps
    z2n = (z2 + shift) * scale
    zcat = jnp.concatenate([z1, z2n], axis=1)
    zout_ref[...] = zcat

    # per-sample coupling log-det and -0.5*sum(z^2) (prior quadratic term);
    # seg is a (B, M) 0/1 matrix selecting each sample's rows.
    seg = seg_ref[...]
    ld_ref[...] = jnp.sum(
        jnp.dot(seg, jnp.log(scale), preferred_element_type=_F32),
        axis=1, keepdims=True)
    pr_ref[...] = -0.5 * jnp.sum(
        jnp.dot(seg, zcat * zcat, preferred_element_type=_F32),
        axis=1, keepdims=True)


def _split2d_kernel(z_ref, w_ref, b_ref, mask_ref, seg_ref,
                    z1_ref, ll_ref, zpad_ref, *, B, H, W, C):
    """Split2d: Conv2dZeros(z1) -> (mean, logs), gaussian likelihood of z2."""
    M = B * H * W
    Cin = C // 2
    pad = _PAD_ROWS

    z = z_ref[...]
    z1 = z[:, :Cin]
    z2 = z[:, Cin:]

    zpad_ref[...] = jnp.zeros_like(zpad_ref)
    zpad_ref[pad:pad + M, :] = z1
    acc = jnp.zeros((M, C), _F32)
    for k in range(9):
        s = (k // 3 - 1) * W + (k % 3 - 1)
        patch = zpad_ref[pad + s:pad + s + M, :] * mask_ref[:, k:k + 1]
        acc = acc + jnp.dot(patch.astype(_MXU_DTYPE),
                            w_ref[k * Cin:(k + 1) * Cin, :],
                            preferred_element_type=_F32)
    h = acc + b_ref[...]
    mean = h[:, :Cin]          # columns pre-permuted so mean|logs are contiguous
    logs = h[:, Cin:]

    ll = -0.5 * (2.0 * logs + (z2 - mean) ** 2 * jnp.exp(-2.0 * logs) + _LOG2PI)
    ll_ref[...] = jnp.sum(
        jnp.dot(seg_ref[...], ll, preferred_element_type=_F32),
        axis=1, keepdims=True)
    z1_ref[...] = z1


# ----------------------------- kernel wrappers --------------------------------
def flowstep_apply(z2d, sp, B, H, W, C):
    assert W + 1 <= _PAD_ROWS
    M = B * H * W
    args = (z2d, sp['wp'], sp['bp'], sp['w1'], sp['b1'], sp['w2'], sp['b2'],
            sp['w3'], sp['b3'], sp['mask'], sp['seg'])
    return pl.pallas_call(
        functools.partial(_flowstep_kernel, B=B, H=H, W=W, C=C, hidden=HIDDEN,
                          scale_eps=AFFINE_SCALE_EPS, affine_eps=AFFINE_EPS),
        out_shape=(jax.ShapeDtypeStruct((M, C), _F32),
                   jax.ShapeDtypeStruct((B, 1), _F32),
                   jax.ShapeDtypeStruct((B, 1), _F32)),
        grid=(1,),
        in_specs=[_fullspec(a.shape) for a in args],
        out_specs=(_fullspec((M, C)), _fullspec((B, 1)), _fullspec((B, 1))),
        scratch_shapes=[pltpu.VMEM((M + 2 * _PAD_ROWS, C // 2), _F32),
                        pltpu.VMEM((M + 2 * _PAD_ROWS, HIDDEN), _F32)],
        compiler_params=pltpu.CompilerParams(dimension_semantics=("arbitrary",)),
    )(*args)


def split2d_apply(z2d, sp, B, H, W, C):
    assert W + 1 <= _PAD_ROWS
    M = B * H * W
    args = (z2d, sp['w'], sp['b'], sp['mask'], sp['seg'])
    return pl.pallas_call(
        functools.partial(_split2d_kernel, B=B, H=H, W=W, C=C),
        out_shape=(jax.ShapeDtypeStruct((M, C // 2), _F32),
                   jax.ShapeDtypeStruct((B, 1), _F32)),
        grid=(1,),
        in_specs=[_fullspec(a.shape) for a in args],
        out_specs=(_fullspec((M, C // 2)), _fullspec((B, 1))),
        scratch_shapes=[pltpu.VMEM((M + 2 * _PAD_ROWS, C // 2), _F32)],
        compiler_params=pltpu.CompilerParams(dimension_semantics=("arbitrary",)),
    )(*args)


# ----------------------------- layout glue ------------------------------------
def squeeze2d_nhwc(x, factor=2):
    # Channel ordering matches PyTorch squeeze2d (c*f*f + fi*f + fj).
    B, H, W, C = x.shape
    x = x.reshape(B, H // factor, factor, W // factor, factor, C)
    x = x.transpose(0, 1, 3, 5, 2, 4)
    return x.reshape(B, H // factor, W // factor, C * factor * factor)


# ----------------------------- parameter prep ---------------------------------
def _conv_masks(B, H, W):
    """(M, 9) boundary masks for the 9 shifted matmuls of a 3x3 'same' conv."""
    r = np.arange(B * H * W)
    i = (r % (H * W)) // W
    j = r % W
    cols = []
    for k in range(9):
        di, dj = k // 3 - 1, k % 3 - 1
        ok = (i + di >= 0) & (i + di < H) & (j + dj >= 0) & (j + dj < W)
        cols.append(ok.astype(np.float32))
    return jnp.asarray(np.stack(cols, axis=1))


def _seg_matrix(B, H, W):
    """(B, M) 0/1 matrix: seg[b, r] = 1 iff row r belongs to sample b."""
    r = np.arange(B * H * W)
    return jnp.asarray(((r[None, :] // (H * W)) == np.arange(B)[:, None])
                       .astype(np.float32))


def _cross_perm(C):
    # split_feature(h, "cross"): even channels -> first half, odd -> second half.
    return np.concatenate([np.arange(0, C, 2), np.arange(1, C, 2)])


def _conv3x3_matrix(w):
    # torch (Cout, Cin, 3, 3) -> (9*Cin, Cout); block k = 3*kh+kw holds w[:,:,kh,kw].T
    cout, cin = w.shape[0], w.shape[1]
    return jnp.transpose(w, (2, 3, 1, 0)).reshape(9 * cin, cout)


def _prepare_step(raw, B, H, W, C):
    # ActNorm + 1x1 invconv folded into one affine matmul.
    s_a = jnp.exp(raw['an_logs'])
    wp = s_a[:, None] * raw['inv_w'].T
    bp = ((raw['an_bias'] * s_a) @ raw['inv_w'].T).reshape(1, C)
    const_logdet = (H * W) * (jnp.sum(raw['an_logs'])
                              + jnp.linalg.slogdet(raw['inv_w'])[1])

    # Conv2d(3x3) + ActNorm: fold exp(logs) / bias*exp(logs) into W/b.
    s1 = jnp.exp(raw['an1_logs'])
    w1 = (_conv3x3_matrix(raw['w1']) * s1[None, :]).astype(_MXU_DTYPE)
    b1 = (raw['an1_bias'] * s1).reshape(1, HIDDEN).astype(_F32)

    # Conv2d(1x1) + ActNorm.
    s2 = jnp.exp(raw['an2_logs'])
    w2 = (raw['w2'].reshape(HIDDEN, HIDDEN).T * s2[None, :]).astype(_MXU_DTYPE)
    b2 = (raw['an2_bias'] * s2).reshape(1, HIDDEN).astype(_F32)

    # Conv2dZeros(3x3): scale exp(3*logs) folded; columns permuted for "cross" split.
    s3 = jnp.exp(3.0 * raw['logs3'])
    perm = _cross_perm(C)
    w3 = ((_conv3x3_matrix(raw['w3']) * s3[None, :])[:, perm]).astype(_MXU_DTYPE)
    b3 = ((raw['b3'] * s3)[perm]).reshape(1, C).astype(_F32)

    return dict(wp=wp.astype(_F32), bp=bp.astype(_F32),
                w1=w1, b1=b1, w2=w2, b2=b2, w3=w3, b3=b3,
                mask=_conv_masks(B, H, W), seg=_seg_matrix(B, H, W),
                const_logdet=const_logdet.astype(_F32))


def _prepare_split(raw, B, H, W, C):
    s = jnp.exp(3.0 * raw['logs'])
    perm = _cross_perm(C)
    w = ((_conv3x3_matrix(raw['w']) * s[None, :])[:, perm]).astype(_MXU_DTYPE)
    b = ((raw['b'] * s)[perm]).reshape(1, C).astype(_F32)
    return dict(w=w, b=b, mask=_conv_masks(B, H, W), seg=_seg_matrix(B, H, W))


def prepare_params(raw, batch):
    C, H, W = IMG_C, IMG_H, IMG_W
    levels = []
    for level in raw['levels']:
        C, H, W = C * 4, H // 2, W // 2
        lev = {'steps': [_prepare_step(s, batch, H, W, C) for s in level['steps']]}
        if 'split' in level:
            lev['split'] = _prepare_split(level['split'], batch, H, W, C)
            C = C // 2
        levels.append(lev)
    return {'levels': levels}


# ----------------------------- raw parameter init -----------------------------
def init_params(key):
    # TODO(synk): PyTorch ActNorm uses data-dependent init and Conv2dZeros is
    # zero-initialized; here parameters are small deterministic randoms so the
    # kernels are exercised with non-trivial values.
    params = {'levels': []}
    C, H, W = IMG_C, IMG_H, IMG_W
    for lvl in range(L_LEVELS):
        C, H, W = C * 4, H // 2, W // 2
        steps = []
        for _ in range(K_FLOW):
            key, *ks = jax.random.split(key, 13)
            Ch = C // 2
            steps.append({
                'an_bias': 0.01 * jax.random.normal(ks[0], (C,), _F32),
                'an_logs': 0.01 * jax.random.normal(ks[1], (C,), _F32),
                'inv_w': jnp.linalg.qr(jax.random.normal(ks[2], (C, C), _F32))[0],
                'w1': 0.05 * jax.random.normal(ks[3], (HIDDEN, Ch, 3, 3), _F32),
                'an1_bias': 0.01 * jax.random.normal(ks[4], (HIDDEN,), _F32),
                'an1_logs': 0.01 * jax.random.normal(ks[5], (HIDDEN,), _F32),
                'w2': 0.05 * jax.random.normal(ks[6], (HIDDEN, HIDDEN, 1, 1), _F32),
                'an2_bias': 0.01 * jax.random.normal(ks[7], (HIDDEN,), _F32),
                'an2_logs': 0.01 * jax.random.normal(ks[8], (HIDDEN,), _F32),
                'w3': 0.01 * jax.random.normal(ks[9], (C, HIDDEN, 3, 3), _F32),
                'b3': 0.01 * jax.random.normal(ks[10], (C,), _F32),
                'logs3': 0.01 * jax.random.normal(ks[11], (C,), _F32),
            })
        level = {'steps': steps}
        if lvl < L_LEVELS - 1:
            key, k1, k2, k3 = jax.random.split(key, 4)
            level['split'] = {
                'w': 0.01 * jax.random.normal(k1, (C, C // 2, 3, 3), _F32),
                'b': 0.01 * jax.random.normal(k2, (C,), _F32),
                'logs': 0.01 * jax.random.normal(k3, (C,), _F32),
            }
            C = C // 2
        params['levels'].append(level)
    return params


# ----------------------------- Glow forward (normal_flow) ---------------------
def glow_forward(kp, x, noise_key):
    B, c, h, w = x.shape
    # uniform_binning_correction
    x = x + jax.random.uniform(noise_key, x.shape, _F32, 0.0, 1.0 / N_BINS)
    logdet = jnp.full((B,), -math.log(N_BINS) * c * h * w, _F32)

    z = jnp.transpose(x, (0, 2, 3, 1))          # NCHW -> NHWC once
    prior_quad = None
    C_cur, H_cur, W_cur = c, h, w
    for level in kp['levels']:
        z = squeeze2d_nhwc(z, 2)                # SqueezeLayer
        C_cur, H_cur, W_cur = C_cur * 4, H_cur // 2, W_cur // 2
        z2d = z.reshape(B * H_cur * W_cur, C_cur)
        for step in level['steps']:             # K fused FlowSteps
            z2d, ld, pr = flowstep_apply(z2d, step, B, H_cur, W_cur, C_cur)
            logdet = logdet + step['const_logdet'] + ld[:, 0]
            prior_quad = pr[:, 0]               # only the last step's value is used
        if 'split' in level:                    # fused Split2d
            z2d, ll = split2d_apply(z2d, level['split'], B, H_cur, W_cur, C_cur)
            logdet = logdet + ll[:, 0]
            C_cur = C_cur // 2
        z = z2d.reshape(B, H_cur, W_cur, C_cur)

    z_out = jnp.transpose(z, (0, 3, 1, 2))      # back to NCHW for output parity

    # prior: learn_top=False, y_condition=False -> mean = logs = 0, so
    # prior = -0.5*sum(z^2) - 0.5*n*log(2*pi); the quadratic term comes fused
    # out of the last flow-step kernel.
    n_final = C_cur * H_cur * W_cur
    prior = prior_quad - 0.5 * _LOG2PI * n_final

    y_logits = None                             # y_condition == False
    bpd = -(prior + logdet) / (math.log(2.0) * c * h * w)
    return z_out, bpd, y_logits


# ----------------------------- main -------------------------------------------
if __name__ == "__main__":
    key = jax.random.PRNGKey(0)
    pkey, xkey, nkey = jax.random.split(key, 3)
    raw_params = init_params(pkey)
    kparams = prepare_params(raw_params, BATCH)   # fold/transpose weights once
    x = jax.random.uniform(xkey, (BATCH, IMG_C, IMG_H, IMG_W), _F32)

    fwd = jax.jit(glow_forward)
    z, bpd, y_logits = fwd(kparams, x, nkey)
    jax.block_until_ready((z, bpd))

    assert z.shape == (BATCH, 32, 2, 2), z.shape
    assert bpd.shape == (BATCH,), bpd.shape
    assert bool(jnp.all(jnp.isfinite(z))) and bool(jnp.all(jnp.isfinite(bpd)))
    print("KERNEL_OK")
</pallas_src>

<mosaic_0001>
module attributes {stable_mosaic.version = 11 : i64} {
  func.func @_flowstep_kernel(%arg0: i32, %arg1: memref<32x16xf32, #tpu.memory_space<vmem>>, %arg2: memref<16x16xf32, #tpu.memory_space<vmem>>, %arg3: memref<1x16xf32, #tpu.memory_space<vmem>>, %arg4: memref<72x32xbf16, #tpu.memory_space<vmem>>, %arg5: memref<1x32xf32, #tpu.memory_space<vmem>>, %arg6: memref<32x32xbf16, #tpu.memory_space<vmem>>, %arg7: memref<1x32xf32, #tpu.memory_space<vmem>>, %arg8: memref<288x16xbf16, #tpu.memory_space<vmem>>, %arg9: memref<1x16xf32, #tpu.memory_space<vmem>>, %arg10: memref<32x9xf32, #tpu.memory_space<vmem>>, %arg11: memref<2x32xf32, #tpu.memory_space<vmem>>, %arg12: memref<32x16xf32, #tpu.memory_space<vmem>>, %arg13: memref<2x1xf32, #tpu.memory_space<vmem>>, %arg14: memref<2x1xf32, #tpu.memory_space<vmem>>, %arg15: memref<48x8xf32, #tpu.memory_space<vmem>>, %arg16: memref<48x32xf32, #tpu.memory_space<vmem>>) attributes {dimension_semantics = [#tpu.dimension_semantics<arbitrary>], iteration_bounds = array<i64: 1>, scalar_prefetch = 0 : i64, scratch_operands = 2 : i64, tpu.core_type = #tpu.core_type<tc>, window_params = [{pipeline_mode = #tpu.pipeline_mode<synchronous>, transform_indices = @transform_0, window_bounds = array<i64: 32, 16>}, {pipeline_mode = #tpu.pipeline_mode<synchronous>, transform_indices = @transform_1, window_bounds = array<i64: 16, 16>}, {pipeline_mode = #tpu.pipeline_mode<synchronous>, transform_indices = @transform_2, window_bounds = array<i64: 1, 16>}, {pipeline_mode = #tpu.pipeline_mode<synchronous>, transform_indices = @transform_3, window_bounds = array<i64: 72, 32>}, {pipeline_mode = #tpu.pipeline_mode<synchronous>, transform_indices = @transform_4, window_bounds = array<i64: 1, 32>}, {pipeline_mode = #tpu.pipeline_mode<synchronous>, transform_indices = @transform_5, window_bounds = array<i64: 32, 32>}, {pipeline_mode = #tpu.pipeline_mode<synchronous>, transform_indices = @transform_6, window_bounds = array<i64: 1, 32>}, {pipeline_mode = #tpu.pipeline_mode<synchronous>, transform_indices = @transform_7, window_bounds = array<i64: 288, 16>}, {pipeline_mode = #tpu.pipeline_mode<synchronous>, transform_indices = @transform_8, window_bounds = array<i64: 1, 16>}, {pipeline_mode = #tpu.pipeline_mode<synchronous>, transform_indices = @transform_9, window_bounds = array<i64: 32, 9>}, {pipeline_mode = #tpu.pipeline_mode<synchronous>, transform_indices = @transform_10, window_bounds = array<i64: 2, 32>}, {pipeline_mode = #tpu.pipeline_mode<synchronous>, transform_indices = @transform_11, window_bounds = array<i64: 32, 16>}, {pipeline_mode = #tpu.pipeline_mode<synchronous>, transform_indices = @transform_12, window_bounds = array<i64: 2, 1>}, {pipeline_mode = #tpu.pipeline_mode<synchronous>, transform_indices = @transform_13, window_bounds = array<i64: 2, 1>}]} {
    %c0 = arith.constant 0 : index
    %c0_0 = arith.constant 0 : index
    %0 = vector.load %arg1[%c0, %c0_0] : memref<32x16xf32, #tpu.memory_space<vmem>>, vector<32x16xf32>
    %c0_1 = arith.constant 0 : index
    %c0_2 = arith.constant 0 : index
    %1 = vector.load %arg2[%c0_1, %c0_2] : memref<16x16xf32, #tpu.memory_space<vmem>>, vector<16x16xf32>
    %cst = arith.constant dense<0.000000e+00> : vector<32x16xf32>
    %2 = tpu.matmul %0, %1, %cst {dimension_numbers = #tpu.dot_dimension_numbers<[1], [0], [0], [1], [0, 0, 1, 1], [], []>} : vector<32x16xf32>, vector<16x16xf32>, vector<32x16xf32> -> vector<32x16xf32>
    %c0_3 = arith.constant 0 : index
    %c0_4 = arith.constant 0 : index
    %3 = vector.load %arg3[%c0_3, %c0_4] : memref<1x16xf32, #tpu.memory_space<vmem>>, vector<1x16xf32>
    %4 = vector.broadcast %3 : vector<1x16xf32> to vector<32x16xf32>
    %5 = arith.addf %2, %4 : vector<32x16xf32>
    %6 = vector.extract_strided_slice %5 {offsets = [0, 0], sizes = [32, 8], strides = [1, 1]} : vector<32x16xf32> to vector<32x8xf32>
    %7 = vector.extract_strided_slice %5 {offsets = [0, 8], sizes = [32, 8], strides = [1, 1]} : vector<32x16xf32> to vector<32x8xf32>
    %cst_5 = arith.constant 0.000000e+00 : f32
    %8 = vector.broadcast %cst_5 : f32 to vector<48x8xf32>
    %c0_6 = arith.constant 0 : index
    %c0_7 = arith.constant 0 : index
    %9 = vector.load %arg15[%c0_6, %c0_7] : memref<48x8xf32, #tpu.memory_space<vmem>>, vector<48x8xf32>
    tpu.vector_store %arg15[%c0_6, %c0_7], %8 {strides = array<i32>} : memref<48x8xf32, #tpu.memory_space<vmem>>, vector<48x8xf32>,
    %c8 = arith.constant 8 : index
    %c0_8 = arith.constant 0 : index
    %10 = vector.load %arg15[%c8, %c0_8] : memref<48x8xf32, #tpu.memory_space<vmem>>, vector<32x8xf32>
    tpu.vector_store %arg15[%c8, %c0_8], %6 {strides = array<i32>} : memref<48x8xf32, #tpu.memory_space<vmem>>, vector<32x8xf32>,
    %cst_9 = arith.constant 0.000000e+00 : f32
    %11 = vector.broadcast %cst_9 : f32 to vector<32x32xf32>
    %c3 = arith.constant 3 : index
    %c0_10 = arith.constant 0 : index
    %12 = vector.load %arg15[%c3, %c0_10] : memref<48x8xf32, #tpu.memory_space<vmem>>, vector<32x8xf32>
    %c0_11 = arith.constant 0 : index
    %c0_12 = arith.constant 0 : index
    %13 = vector.load %arg10[%c0_11, %c0_12] : memref<32x9xf32, #tpu.memory_space<vmem>>, vector<32x1xf32>
    %14 = vector.broadcast %13 : vector<32x1xf32> to vector<32x8xf32>
    %15 = arith.mulf %12, %14 : vector<32x8xf32>
    %16 = arith.truncf %15 : vector<32x8xf32> to vector<32x8xbf16>
    %c0_13 = arith.constant 0 : index
    %c0_14 = arith.constant 0 : index
    %17 = vector.load %arg4[%c0_13, %c0_14] : memref<72x32xbf16, #tpu.memory_space<vmem>>, vector<8x32xbf16>
    %cst_15 = arith.constant dense<0.000000e+00> : vector<32x32xf32>
    %18 = tpu.matmul %16, %17, %cst_15 {dimension_numbers = #tpu.dot_dimension_numbers<[1], [0], [0], [1], [0, 0, 1, 1], [], []>} : vector<32x8xbf16>, vector<8x32xbf16>, vector<32x32xf32> -> vector<32x32xf32>
    %19 = arith.addf %11, %18 : vector<32x32xf32>
    %c4 = arith.constant 4 : index
    %c0_16 = arith.constant 0 : index
    %20 = vector.load %arg15[%c4, %c0_16] : memref<48x8xf32, #tpu.memory_space<vmem>>, vector<32x8xf32>
    %c0_17 = arith.constant 0 : index
    %c1 = arith.constant 1 : index
    %21 = vector.load %arg10[%c0_17, %c1] : memref<32x9xf32, #tpu.memory_space<vmem>>, vector<32x1xf32>
    %22 = vector.broadcast %21 : vector<32x1xf32> to vector<32x8xf32>
    %23 = arith.mulf %20, %22 : vector<32x8xf32>
    %24 = arith.truncf %23 : vector<32x8xf32> to vector<32x8xbf16>
    %c8_18 = arith.constant 8 : index
    %c0_19 = arith.constant 0 : index
    %25 = vector.load %arg4[%c8_18, %c0_19] : memref<72x32xbf16, #tpu.memory_space<vmem>>, vector<8x32xbf16>
    %cst_20 = arith.constant dense<0.000000e+00> : vector<32x32xf32>
    %26 = tpu.matmul %24, %25, %cst_20 {dimension_numbers = #tpu.dot_dimension_numbers<[1], [0], [0], [1], [0, 0, 1, 1], [], []>} : vector<32x8xbf16>, vector<8x32xbf16>, vector<32x32xf32> -> vector<32x32xf32>
    %27 = arith.addf %19, %26 : vector<32x32xf32>
    %c5 = arith.constant 5 : index
    %c0_21 = arith.constant 0 : index
    %28 = vector.load %arg15[%c5, %c0_21] : memref<48x8xf32, #tpu.memory_space<vmem>>, vector<32x8xf32>
    %c0_22 = arith.constant 0 : index
    %c2 = arith.constant 2 : index
    %29 = vector.load %arg10[%c0_22, %c2] : memref<32x9xf32, #tpu.memory_space<vmem>>, vector<32x1xf32>
    %30 = vector.broadcast %29 : vector<32x1xf32> to vector<32x8xf32>
    %31 = arith.mulf %28, %30 : vector<32x8xf32>
    %32 = arith.truncf %31 : vector<32x8xf32> to vector<32x8xbf16>
    %c16 = arith.constant 16 : index
    %c0_23 = arith.constant 0 : index
    %33 = vector.load %arg4[%c16, %c0_23] : memref<72x32xbf16, #tpu.memory_space<vmem>>, vector<8x32xbf16>
    %cst_24 = arith.constant dense<0.000000e+00> : vector<32x32xf32>
    %34 = tpu.matmul %32, %33, %cst_24 {dimension_numbers = #tpu.dot_dimension_numbers<[1], [0], [0], [1], [0, 0, 1, 1], [], []>} : vector<32x8xbf16>, vector<8x32xbf16>, vector<32x32xf32> -> vector<32x32xf32>
    %35 = arith.addf %27, %34 : vector<32x32xf32>
    %c7 = arith.constant 7 : index
    %c0_25 = arith.constant 0 : index
    %36 = vector.load %arg15[%c7, %c0_25] : memref<48x8xf32, #tpu.memory_space<vmem>>, vector<32x8xf32>
    %c0_26 = arith.constant 0 : index
    %c3_27 = arith.constant 3 : index
    %37 = vector.load %arg10[%c0_26, %c3_27] : memref<32x9xf32, #tpu.memory_space<vmem>>, vector<32x1xf32>
    %38 = vector.broadcast %37 : vector<32x1xf32> to vector<32x8xf32>
    %39 = arith.mulf %36, %38 : vector<32x8xf32>
    %40 = arith.truncf %39 : vector<32x8xf32> to vector<32x8xbf16>
    %c24 = arith.constant 24 : index
    %c0_28 = arith.constant 0 : index
    %41 = vector.load %arg4[%c24, %c0_28] : memref<72x32xbf16, #tpu.memory_space<vmem>>, vector<8x32xbf16>
    %cst_29 = arith.constant dense<0.000000e+00> : vector<32x32xf32>
    %42 = tpu.matmul %40, %41, %cst_29 {dimension_numbers = #tpu.dot_dimension_numbers<[1], [0], [0], [1], [0, 0, 1, 1], [], []>} : vector<32x8xbf16>, vector<8x32xbf16>, vector<32x32xf32> -> vector<32x32xf32>
    %43 = arith.addf %35, %42 : vector<32x32xf32>
    %c8_30 = arith.constant 8 : index
    %c0_31 = arith.constant 0 : index
    %44 = vector.load %arg15[%c8_30, %c0_31] : memref<48x8xf32, #tpu.memory_space<vmem>>, vector<32x8xf32>
    %c0_32 = arith.constant 0 : index
    %c4_33 = arith.constant 4 : index
    %45 = vector.load %arg10[%c0_32, %c4_33] : memref<32x9xf32, #tpu.memory_space<vmem>>, vector<32x1xf32>
    %46 = vector.broadcast %45 : vector<32x1xf32> to vector<32x8xf32>
    %47 = arith.mulf %44, %46 : vector<32x8xf32>
    %48 = arith.truncf %47 : vector<32x8xf32> to vector<32x8xbf16>
    %c32 = arith.constant 32 : index
    %c0_34 = arith.constant 0 : index
    %49 = vector.load %arg4[%c32, %c0_34] : memref<72x32xbf16, #tpu.memory_space<vmem>>, vector<8x32xbf16>
    %cst_35 = arith.constant dense<0.000000e+00> : vector<32x32xf32>
    %50 = tpu.matmul %48, %49, %cst_35 {dimension_numbers = #tpu.dot_dimension_numbers<[1], [0], [0], [1], [0, 0, 1, 1], [], []>} : vector<32x8xbf16>, vector<8x32xbf16>, vector<32x32xf32> -> vector<32x32xf32>
    %51 = arith.addf %43, %50 : vector<32x32xf32>
    %c9 = arith.constant 9 : index
    %c0_36 = arith.constant 0 : index
    %52 = vector.load %arg15[%c9, %c0_36] : memref<48x8xf32, #tpu.memory_space<vmem>>, vector<32x8xf32>
    %c0_37 = arith.constant 0 : index
    %c5_38 = arith.constant 5 : index
    %53 = vector.load %arg10[%c0_37, %c5_38] : memref<32x9xf32, #tpu.memory_space<vmem>>, vector<32x1xf32>
    %54 = vector.broadcast %53 : vector<32x1xf32> to vector<32x8xf32>
    %55 = arith.mulf %52, %54 : vector<32x8xf32>
    %56 = arith.truncf %55 : vector<32x8xf32> to vector<32x8xbf16>
    %c40 = arith.constant 40 : index
    %c0_39 = arith.constant 0 : index
    %57 = vector.load %arg4[%c40, %c0_39] : memref<72x32xbf16, #tpu.memory_space<vmem>>, vector<8x32xbf16>
    %cst_40 = arith.constant dense<0.000000e+00> : vector<32x32xf32>
    %58 = tpu.matmul %56, %57, %cst_40 {dimension_numbers = #tpu.dot_dimension_numbers<[1], [0], [0], [1], [0, 0, 1, 1], [], []>} : vector<32x8xbf16>, vector<8x32xbf16>, vector<32x32xf32> -> vector<32x32xf32>
    %59 = arith.addf %51, %58 : vector<32x32xf32>
    %c11 = arith.constant 11 : index
    %c0_41 = arith.constant 0 : index
    %60 = vector.load %arg15[%c11, %c0_41] : memref<48x8xf32, #tpu.memory_space<vmem>>, vector<32x8xf32>
    %c0_42 = arith.constant 0 : index
    %c6 = arith.constant 6 : index
    %61 = vector.load %arg10[%c0_42, %c6] : memref<32x9xf32, #tpu.memory_space<vmem>>, vector<32x1xf32>
    %62 = vector.broadcast %61 : vector<32x1xf32> to vector<32x8xf32>
    %63 = arith.mulf %60, %62 : vector<32x8xf32>
    %64 = arith.truncf %63 : vector<32x8xf32> to vector<32x8xbf16>
    %c48 = arith.constant 48 : index
    %c0_43 = arith.constant 0 : index
    %65 = vector.load %arg4[%c48, %c0_43] : memref<72x32xbf16, #tpu.memory_space<vmem>>, vector<8x32xbf16>
    %cst_44 = arith.constant dense<0.000000e+00> : vector<32x32xf32>
    %66 = tpu.matmul %64, %65, %cst_44 {dimension_numbers = #tpu.dot_dimension_numbers<[1], [0], [0], [1], [0, 0, 1, 1], [], []>} : vector<32x8xbf16>, vector<8x32xbf16>, vector<32x32xf32> -> vector<32x32xf32>
    %67 = arith.addf %59, %66 : vector<32x32xf32>
    %c12 = arith.constant 12 : index
    %c0_45 = arith.constant 0 : index
    %68 = vector.load %arg15[%c12, %c0_45] : memref<48x8xf32, #tpu.memory_space<vmem>>, vector<32x8xf32>
    %c0_46 = arith.constant 0 : index
    %c7_47 = arith.constant 7 : index
    %69 = vector.load %arg10[%c0_46, %c7_47] : memref<32x9xf32, #tpu.memory_space<vmem>>, vector<32x1xf32>
    %70 = vector.broadcast %69 : vector<32x1xf32> to vector<32x8xf32>
    %71 = arith.mulf %68, %70 : vector<32x8xf32>
    %72 = arith.truncf %71 : vector<32x8xf32> to vector<32x8xbf16>
    %c56 = arith.constant 56 : index
    %c0_48 = arith.constant 0 : index
    %73 = vector.load %arg4[%c56, %c0_48] : memref<72x32xbf16, #tpu.memory_space<vmem>>, vector<8x32xbf16>
    %cst_49 = arith.constant dense<0.000000e+00> : vector<32x32xf32>
    %74 = tpu.matmul %72, %73, %cst_49 {dimension_numbers = #tpu.dot_dimension_numbers<[1], [0], [0], [1], [0, 0, 1, 1], [], []>} : vector<32x8xbf16>, vector<8x32xbf16>, vector<32x32xf32> -> vector<32x32xf32>
    %75 = arith.addf %67, %74 : vector<32x32xf32>
    %c13 = arith.constant 13 : index
    %c0_50 = arith.constant 0 : index
    %76 = vector.load %arg15[%c13, %c0_50] : memref<48x8xf32, #tpu.memory_space<vmem>>, vector<32x8xf32>
    %c0_51 = arith.constant 0 : index
    %c8_52 = arith.constant 8 : index
    %77 = vector.load %arg10[%c0_51, %c8_52] : memref<32x9xf32, #tpu.memory_space<vmem>>, vector<32x1xf32>
    %78 = vector.broadcast %77 : vector<32x1xf32> to vector<32x8xf32>
    %79 = arith.mulf %76, %78 : vector<32x8xf32>
    %80 = arith.truncf %79 : vector<32x8xf32> to vector<32x8xbf16>
    %c64 = arith.constant 64 : index
    %c0_53 = arith.constant 0 : index
    %81 = vector.load %arg4[%c64, %c0_53] : memref<72x32xbf16, #tpu.memory_space<vmem>>, vector<8x32xbf16>
    %cst_54 = arith.constant dense<0.000000e+00> : vector<32x32xf32>
    %82 = tpu.matmul %80, %81, %cst_54 {dimension_numbers = #tpu.dot_dimension_numbers<[1], [0], [0], [1], [0, 0, 1, 1], [], []>} : vector<32x8xbf16>, vector<8x32xbf16>, vector<32x32xf32> -> vector<32x32xf32>
    %83 = arith.addf %75, %82 : vector<32x32xf32>
    %c0_55 = arith.constant 0 : index
    %c0_56 = arith.constant 0 : index
    %84 = vector.load %arg5[%c0_55, %c0_56] : memref<1x32xf32, #tpu.memory_space<vmem>>, vector<1x32xf32>
    %85 = vector.broadcast %84 : vector<1x32xf32> to vector<32x32xf32>
    %86 = arith.addf %83, %85 : vector<32x32xf32>
    %cst_57 = arith.constant 0.000000e+00 : f32
    %87 = vector.broadcast %cst_57 : f32 to vector<32x32xf32>
    %88 = arith.maximumf %86, %87 : vector<32x32xf32>
    %89 = arith.truncf %88 : vector<32x32xf32> to vector<32x32xbf16>
    %c0_58 = arith.constant 0 : index
    %c0_59 = arith.constant 0 : index
    %90 = vector.load %arg6[%c0_58, %c0_59] : memref<32x32xbf16, #tpu.memory_space<vmem>>, vector<32x32xbf16>
    %cst_60 = arith.constant dense<0.000000e+00> : vector<32x32xf32>
    %91 = tpu.matmul %89, %90, %cst_60 {dimension_numbers = #tpu.dot_dimension_numbers<[1], [0], [0], [1], [0, 0, 1, 1], [], []>} : vector<32x32xbf16>, vector<32x32xbf16>, vector<32x32xf32> -> vector<32x32xf32>
    %c0_61 = arith.constant 0 : index
    %c0_62 = arith.constant 0 : index
    %92 = vector.load %arg7[%c0_61, %c0_62] : memref<1x32xf32, #tpu.memory_space<vmem>>, vector<1x32xf32>
    %93 = vector.broadcast %92 : vector<1x32xf32> to vector<32x32xf32>
    %94 = arith.addf %91, %93 : vector<32x32xf32>
    %cst_63 = arith.constant 0.000000e+00 : f32
    %95 = vector.broadcast %cst_63 : f32 to vector<32x32xf32>
    %96 = arith.maximumf %94, %95 : vector<32x32xf32>
    %cst_64 = arith.constant 0.000000e+00 : f32
    %97 = vector.broadcast %cst_64 : f32 to vector<48x32xf32>
    %c0_65 = arith.constant 0 : index
    %c0_66 = arith.constant 0 : index
    %98 = vector.load %arg16[%c0_65, %c0_66] : memref<48x32xf32, #tpu.memory_space<vmem>>, vector<48x32xf32>
    tpu.vector_store %arg16[%c0_65, %c0_66], %97 {strides = array<i32>} : memref<48x32xf32, #tpu.memory_space<vmem>>, vector<48x32xf32>,
    %c8_67 = arith.constant 8 : index
    %c0_68 = arith.constant 0 : index
    %99 = vector.load %arg16[%c8_67, %c0_68] : memref<48x32xf32, #tpu.memory_space<vmem>>, vector<32x32xf32>
    tpu.vector_store %arg16[%c8_67, %c0_68], %96 {strides = array<i32>} : memref<48x32xf32, #tpu.memory_space<vmem>>, vector<32x32xf32>,
    %cst_69 = arith.constant 0.000000e+00 : f32
    %100 = vector.broadcast %cst_69 : f32 to vector<32x16xf32>
    %c3_70 = arith.constant 3 : index
    %c0_71 = arith.constant 0 : index
    %101 = vector.load %arg16[%c3_70, %c0_71] : memref<48x32xf32, #tpu.memory_space<vmem>>, vector<32x32xf32>
    %c0_72 = arith.constant 0 : index
    %c0_73 = arith.constant 0 : index
    %102 = vector.load %arg10[%c0_72, %c0_73] : memref<32x9xf32, #tpu.memory_space<vmem>>, vector<32x1xf32>
    %103 = vector.broadcast %102 : vector<32x1xf32> to vector<32x32xf32>
    %104 = arith.mulf %101, %103 : vector<32x32xf32>
    %105 = arith.truncf %104 : vector<32x32xf32> to vector<32x32xbf16>
    %c0_74 = arith.constant 0 : index
    %c0_75 = arith.constant 0 : index
    %106 = vector.load %arg8[%c0_74, %c0_75] : memref<288x16xbf16, #tpu.memory_space<vmem>>, vector<32x16xbf16>
    %cst_76 = arith.constant dense<0.000000e+00> : vector<32x16xf32>
    %107 = tpu.matmul %105, %106, %cst_76 {dimension_numbers = #tpu.dot_dimension_numbers<[1], [0], [0], [1], [0, 0, 1, 1], [], []>} : vector<32x32xbf16>, vector<32x16xbf16>, vector<32x16xf32> -> vector<32x16xf32>
    %108 = arith.addf %100, %107 : vector<32x16xf32>
    %c4_77 = arith.constant 4 : index
    %c0_78 = arith.constant 0 : index
    %109 = vector.load %arg16[%c4_77, %c0_78] : memref<48x32xf32, #tpu.memory_space<vmem>>, vector<32x32xf32>
    %c0_79 = arith.constant 0 : index
    %c1_80 = arith.constant 1 : index
    %110 = vector.load %arg10[%c0_79, %c1_80] : memref<32x9xf32, #tpu.memory_space<vmem>>, vector<32x1xf32>
    %111 = vector.broadcast %110 : vector<32x1xf32> to vector<32x32xf32>
    %112 = arith.mulf %109, %111 : vector<32x32xf32>
    %113 = arith.truncf %112 : vector<32x32xf32> to vector<32x32xbf16>
    %c32_81 = arith.constant 32 : index
    %c0_82 = arith.constant 0 : index
    %114 = vector.load %arg8[%c32_81, %c0_82] : memref<288x16xbf16, #tpu.memory_space<vmem>>, vector<32x16xbf16>
    %cst_83 = arith.constant dense<0.000000e+00> : vector<32x16xf32>
    %115 = tpu.matmul %113, %114, %cst_83 {dimension_numbers = #tpu.dot_dimension_numbers<[1], [0], [0], [1], [0, 0, 1, 1], [], []>} : vector<32x32xbf16>, vector<32x16xbf16>, vector<32x16xf32> -> vector<32x16xf32>
    %116 = arith.addf %108, %115 : vector<32x16xf32>
    %c5_84 = arith.constant 5 : index
    %c0_85 = arith.constant 0 : index
    %117 = vector.load %arg16[%c5_84, %c0_85] : memref<48x32xf32, #tpu.memory_space<vmem>>, vector<32x32xf32>
    %c0_86 = arith.constant 0 : index
    %c2_87 = arith.constant 2 : index
    %118 = vector.load %arg10[%c0_86, %c2_87] : memref<32x9xf32, #tpu.memory_space<vmem>>, vector<32x1xf32>
    %119 = vector.broadcast %118 : vector<32x1xf32> to vector<32x32xf32>
    %120 = arith.mulf %117, %119 : vector<32x32xf32>
    %121 = arith.truncf %120 : vector<32x32xf32> to vector<32x32xbf16>
    %c64_88 = arith.constant 64 : index
    %c0_89 = arith.constant 0 : index
    %122 = vector.load %arg8[%c64_88, %c0_89] : memref<288x16xbf16, #tpu.memory_space<vmem>>, vector<32x16xbf16>
    %cst_90 = arith.constant dense<0.000000e+00> : vector<32x16xf32>
    %123 = tpu.matmul %121, %122, %cst_90 {dimension_numbers = #tpu.dot_dimension_numbers<[1], [0], [0], [1], [0, 0, 1, 1], [], []>} : vector<32x32xbf16>, vector<32x16xbf16>, vector<32x16xf32> -> vector<32x16xf32>
    %124 = arith.addf %116, %123 : vector<32x16xf32>
    %c7_91 = arith.constant 7 : index
    %c0_92 = arith.constant 0 : index
    %125 = vector.load %arg16[%c7_91, %c0_92] : memref<48x32xf32, #tpu.memory_space<vmem>>, vector<32x32xf32>
    %c0_93 = arith.constant 0 : index
    %c3_94 = arith.constant 3 : index
    %126 = vector.load %arg10[%c0_93, %c3_94] : memref<32x9xf32, #tpu.memory_space<vmem>>, vector<32x1xf32>
    %127 = vector.broadcast %126 : vector<32x1xf32> to vector<32x32xf32>
    %128 = arith.mulf %125, %127 : vector<32x32xf32>
    %129 = arith.truncf %128 : vector<32x32xf32> to vector<32x32xbf16>
    %c96 = arith.constant 96 : index
    %c0_95 = arith.constant 0 : index
    %130 = vector.load %arg8[%c96, %c0_95] : memref<288x16xbf16, #tpu.memory_space<vmem>>, vector<32x16xbf16>
    %cst_96 = arith.constant dense<0.000000e+00> : vector<32x16xf32>
    %131 = tpu.matmul %129, %130, %cst_96 {dimension_numbers = #tpu.dot_dimension_numbers<[1], [0], [0], [1], [0, 0, 1, 1], [], []>} : vector<32x32xbf16>, vector<32x16xbf16>, vector<32x16xf32> -> vector<32x16xf32>
    %132 = arith.addf %124, %131 : vector<32x16xf32>
    %c8_97 = arith.constant 8 : index
    %c0_98 = arith.constant 0 : index
    %133 = vector.load %arg16[%c8_97, %c0_98] : memref<48x32xf32, #tpu.memory_space<vmem>>, vector<32x32xf32>
    %c0_99 = arith.constant 0 : index
    %c4_100 = arith.constant 4 : index
    %134 = vector.load %arg10[%c0_99, %c4_100] : memref<32x9xf32, #tpu.memory_space<vmem>>, vector<32x1xf32>
    %135 = vector.broadcast %134 : vector<32x1xf32> to vector<32x32xf32>
    %136 = arith.mulf %133, %135 : vector<32x32xf32>
    %137 = arith.truncf %136 : vector<32x32xf32> to vector<32x32xbf16>
    %c128 = arith.constant 128 : index
    %c0_101 = arith.constant 0 : index
    %138 = vector.load %arg8[%c128, %c0_101] : memref<288x16xbf16, #tpu.memory_space<vmem>>, vector<32x16xbf16>
    %cst_102 = arith.constant dense<0.000000e+00> : vector<32x16xf32>
    %139 = tpu.matmul %137, %138, %cst_102 {dimension_numbers = #tpu.dot_dimension_numbers<[1], [0], [0], [1], [0, 0, 1, 1], [], []>} : vector<32x32xbf16>, vector<32x16xbf16>, vector<32x16xf32> -> vector<32x16xf32>
    %140 = arith.addf %132, %139 : vector<32x16xf32>
    %c9_103 = arith.constant 9 : index
    %c0_104 = arith.constant 0 : index
    %141 = vector.load %arg16[%c9_103, %c0_104] : memref<48x32xf32, #tpu.memory_space<vmem>>, vector<32x32xf32>
    %c0_105 = arith.constant 0 : index
    %c5_106 = arith.constant 5 : index
    %142 = vector.load %arg10[%c0_105, %c5_106] : memref<32x9xf32, #tpu.memory_space<vmem>>, vector<32x1xf32>
    %143 = vector.broadcast %142 : vector<32x1xf32> to vector<32x32xf32>
    %144 = arith.mulf %141, %143 : vector<32x32xf32>
    %145 = arith.truncf %144 : vector<32x32xf32> to vector<32x32xbf16>
    %c160 = arith.constant 160 : index
    %c0_107 = arith.constant 0 : index
    %146 = vector.load %arg8[%c160, %c0_107] : memref<288x16xbf16, #tpu.memory_space<vmem>>, vector<32x16xbf16>
    %cst_108 = arith.constant dense<0.000000e+00> : vector<32x16xf32>
    %147 = tpu.matmul %145, %146, %cst_108 {dimension_numbers = #tpu.dot_dimension_numbers<[1], [0], [0], [1], [0, 0, 1, 1], [], []>} : vector<32x32xbf16>, vector<32x16xbf16>, vector<32x16xf32> -> vector<32x16xf32>
    %148 = arith.addf %140, %147 : vector<32x16xf32>
    %c11_109 = arith.constant 11 : index
    %c0_110 = arith.constant 0 : index
    %149 = vector.load %arg16[%c11_109, %c0_110] : memref<48x32xf32, #tpu.memory_space<vmem>>, vector<32x32xf32>
    %c0_111 = arith.constant 0 : index
    %c6_112 = arith.constant 6 : index
    %150 = vector.load %arg10[%c0_111, %c6_112] : memref<32x9xf32, #tpu.memory_space<vmem>>, vector<32x1xf32>
    %151 = vector.broadcast %150 : vector<32x1xf32> to vector<32x32xf32>
    %152 = arith.mulf %149, %151 : vector<32x32xf32>
    %153 = arith.truncf %152 : vector<32x32xf32> to vector<32x32xbf16>
    %c192 = arith.constant 192 : index
    %c0_113 = arith.constant 0 : index
    %154 = vector.load %arg8[%c192, %c0_113] : memref<288x16xbf16, #tpu.memory_space<vmem>>, vector<32x16xbf16>
    %cst_114 = arith.constant dense<0.000000e+00> : vector<32x16xf32>
    %155 = tpu.matmul %153, %154, %cst_114 {dimension_numbers = #tpu.dot_dimension_numbers<[1], [0], [0], [1], [0, 0, 1, 1], [], []>} : vector<32x32xbf16>, vector<32x16xbf16>, vector<32x16xf32> -> vector<32x16xf32>
    %156 = arith.addf %148, %155 : vector<32x16xf32>
    %c12_115 = arith.constant 12 : index
    %c0_116 = arith.constant 0 : index
    %157 = vector.load %arg16[%c12_115, %c0_116] : memref<48x32xf32, #tpu.memory_space<vmem>>, vector<32x32xf32>
    %c0_117 = arith.constant 0 : index
    %c7_118 = arith.constant 7 : index
    %158 = vector.load %arg10[%c0_117, %c7_118] : memref<32x9xf32, #tpu.memory_space<vmem>>, vector<32x1xf32>
    %159 = vector.broadcast %158 : vector<32x1xf32> to vector<32x32xf32>
    %160 = arith.mulf %157, %159 : vector<32x32xf32>
    %161 = arith.truncf %160 : vector<32x32xf32> to vector<32x32xbf16>
    %c224 = arith.constant 224 : index
    %c0_119 = arith.constant 0 : index
    %162 = vector.load %arg8[%c224, %c0_119] : memref<288x16xbf16, #tpu.memory_space<vmem>>, vector<32x16xbf16>
    %cst_120 = arith.constant dense<0.000000e+00> : vector<32x16xf32>
    %163 = tpu.matmul %161, %162, %cst_120 {dimension_numbers = #tpu.dot_dimension_numbers<[1], [0], [0], [1], [0, 0, 1, 1], [], []>} : vector<32x32xbf16>, vector<32x16xbf16>, vector<32x16xf32> -> vector<32x16xf32>
    %164 = arith.addf %156, %163 : vector<32x16xf32>
    %c13_121 = arith.constant 13 : index
    %c0_122 = arith.constant 0 : index
    %165 = vector.load %arg16[%c13_121, %c0_122] : memref<48x32xf32, #tpu.memory_space<vmem>>, vector<32x32xf32>
    %c0_123 = arith.constant 0 : index
    %c8_124 = arith.constant 8 : index
    %166 = vector.load %arg10[%c0_123, %c8_124] : memref<32x9xf32, #tpu.memory_space<vmem>>, vector<32x1xf32>
    %167 = vector.broadcast %166 : vector<32x1xf32> to vector<32x32xf32>
    %168 = arith.mulf %165, %167 : vector<32x32xf32>
    %169 = arith.truncf %168 : vector<32x32xf32> to vector<32x32xbf16>
    %c256 = arith.constant 256 : index
    %c0_125 = arith.constant 0 : index
    %170 = vector.load %arg8[%c256, %c0_125] : memref<288x16xbf16, #tpu.memory_space<vmem>>, vector<32x16xbf16>
    %cst_126 = arith.constant dense<0.000000e+00> : vector<32x16xf32>
    %171 = tpu.matmul %169, %170, %cst_126 {dimension_numbers = #tpu.dot_dimension_numbers<[1], [0], [0], [1], [0, 0, 1, 1], [], []>} : vector<32x32xbf16>, vector<32x16xbf16>, vector<32x16xf32> -> vector<32x16xf32>
    %172 = arith.addf %164, %171 : vector<32x16xf32>
    %c0_127 = arith.constant 0 : index
    %c0_128 = arith.constant 0 : index
    %173 = vector.load %arg9[%c0_127, %c0_128] : memref<1x16xf32, #tpu.memory_space<vmem>>, vector<1x16xf32>
    %174 = vector.broadcast %173 : vector<1x16xf32> to vector<32x16xf32>
    %175 = arith.addf %172, %174 : vector<32x16xf32>
    %176 = vector.extract_strided_slice %175 {offsets = [0, 0], sizes = [32, 8], strides = [1, 1]} : vector<32x16xf32> to vector<32x8xf32>
    %177 = vector.extract_strided_slice %175 {offsets = [0, 8], sizes = [32, 8], strides = [1, 1]} : vector<32x16xf32> to vector<32x8xf32>
    %cst_129 = arith.constant 0.000000e+00 : f32
    %178 = vector.broadcast %cst_129 : f32 to vector<32x8xf32>
    %179 = arith.addf %177, %178 : vector<32x8xf32>
    %cst_130 = arith.constant 5.000000e-01 : f32
    %180 = vector.broadcast %cst_130 : f32 to vector<32x8xf32>
    %181 = arith.mulf %180, %179 : vector<32x8xf32>
    %182 = math.tanh %181 : vector<32x8xf32>
    %cst_131 = arith.constant 1.000000e+00 : f32
    %183 = vector.broadcast %cst_131 : f32 to vector<32x8xf32>
    %184 = arith.addf %182, %183 : vector<32x8xf32>
    %cst_132 = arith.constant 5.000000e-01 : f32
    %185 = vector.broadcast %cst_132 : f32 to vector<32x8xf32>
    %186 = arith.mulf %185, %184 : vector<32x8xf32>
    %cst_133 = arith.constant 1.000000e-03 : f32
    %187 = vector.broadcast %cst_133 : f32 to vector<32x8xf32>
    %188 = arith.addf %186, %187 : vector<32x8xf32>
    %189 = arith.addf %7, %176 : vector<32x8xf32>
    %190 = arith.mulf %189, %188 : vector<32x8xf32>
    %191 = tpu.concatenate %6, %190 in 1 : vector<32x8xf32>, vector<32x8xf32> -> vector<32x16xf32>
    %c0_134 = arith.constant 0 : index
    %c0_135 = arith.constant 0 : index
    %192 = vector.load %arg12[%c0_134, %c0_135] : memref<32x16xf32, #tpu.memory_space<vmem>>, vector<32x16xf32>
    tpu.vector_store %arg12[%c0_134, %c0_135], %191 {strides = array<i32>} : memref<32x16xf32, #tpu.memory_space<vmem>>, vector<32x16xf32>,
    %c0_136 = arith.constant 0 : index
    %c0_137 = arith.constant 0 : index
    %193 = vector.load %arg11[%c0_136, %c0_137] : memref<2x32xf32, #tpu.memory_space<vmem>>, vector<2x32xf32>
    %194 = math.log %188 : vector<32x8xf32>
    %cst_138 = arith.constant dense<0.000000e+00> : vector<2x8xf32>
    %195 = tpu.matmul %193, %194, %cst_138 {dimension_numbers = #tpu.dot_dimension_numbers<[1], [0], [0], [1], [0, 0, 1, 1], [], []>} : vector<2x32xf32>, vector<32x8xf32>, vector<2x8xf32> -> vector<2x8xf32>
    %cst_139 = arith.constant dense<0.000000e+00> : vector<2xf32>
    %196 = vector.multi_reduction <add>, %195, %cst_139 [1] : vector<2x8xf32> to vector<2xf32>
    %197 = vector.shape_cast %196 : vector<2xf32> to vector<2x1xf32>
    %c0_140 = arith.constant 0 : index
    %c0_141 = arith.constant 0 : index
    %198 = vector.load %arg13[%c0_140, %c0_141] : memref<2x1xf32, #tpu.memory_space<vmem>>, vector<2x1xf32>
    tpu.vector_store %arg13[%c0_140, %c0_141], %197 {strides = array<i32>} : memref<2x1xf32, #tpu.memory_space<vmem>>, vector<2x1xf32>,
    %199 = arith.mulf %191, %191 : vector<32x16xf32>
    %cst_142 = arith.constant dense<0.000000e+00> : vector<2x16xf32>
    %200 = tpu.matmul %193, %199, %cst_142 {dimension_numbers = #tpu.dot_dimension_numbers<[1], [0], [0], [1], [0, 0, 1, 1], [], []>} : vector<2x32xf32>, vector<32x16xf32>, vector<2x16xf32> -> vector<2x16xf32>
    %cst_143 = arith.constant dense<0.000000e+00> : vector<2xf32>
    %201 = vector.multi_reduction <add>, %200, %cst_143 [1] : vector<2x16xf32> to vector<2xf32>
    %202 = vector.shape_cast %201 : vector<2xf32> to vector<2x1xf32>
    %cst_144 = arith.constant -5.000000e-01 : f32
    %203 = vector.broadcast %cst_144 : f32 to vector<2x1xf32>
    %204 = arith.mulf %203, %202 : vector<2x1xf32>
    %c0_145 = arith.constant 0 : index
    %c0_146 = arith.constant 0 : index
    %205 = vector.load %arg14[%c0_145, %c0_146] : memref<2x1xf32, #tpu.memory_space<vmem>>, vector<2x1xf32>
    tpu.vector_store %arg14[%c0_145, %c0_146], %204 {strides = array<i32>} : memref<2x1xf32, #tpu.memory_space<vmem>>, vector<2x1xf32>,
    return
  }
  func.func @transform_0(%arg0: i32) -> (i32, i32) {
    %c0_i32 = arith.constant 0 : i32
    %c0_i32_0 = arith.constant 0 : i32
    %c0_i32_1 = arith.constant 0 : i32
    return %c0_i32, %c0_i32_0 : i32, i32
  }
  func.func @transform_1(%arg0: i32) -> (i32, i32) {
    %c0_i32 = arith.constant 0 : i32
    %c0_i32_0 = arith.constant 0 : i32
    %c0_i32_1 = arith.constant 0 : i32
    return %c0_i32, %c0_i32_0 : i32, i32
  }
  func.func @transform_2(%arg0: i32) -> (i32, i32) {
    %c0_i32 = arith.constant 0 : i32
    %c0_i32_0 = arith.constant 0 : i32
    %c0_i32_1 = arith.constant 0 : i32
    return %c0_i32, %c0_i32_0 : i32, i32
  }
  func.func @transform_3(%arg0: i32) -> (i32, i32) {
    %c0_i32 = arith.constant 0 : i32
    %c0_i32_0 = arith.constant 0 : i32
    %c0_i32_1 = arith.constant 0 : i32
    return %c0_i32, %c0_i32_0 : i32, i32
  }
  func.func @transform_4(%arg0: i32) -> (i32, i32) {
    %c0_i32 = arith.constant 0 : i32
    %c0_i32_0 = arith.constant 0 : i32
    %c0_i32_1 = arith.constant 0 : i32
    return %c0_i32, %c0_i32_0 : i32, i32
  }
  func.func @transform_5(%arg0: i32) -> (i32, i32) {
    %c0_i32 = arith.constant 0 : i32
    %c0_i32_0 = arith.constant 0 : i32
    %c0_i32_1 = arith.constant 0 : i32
    return %c0_i32, %c0_i32_0 : i32, i32
  }
  func.func @transform_6(%arg0: i32) -> (i32, i32) {
    %c0_i32 = arith.constant 0 : i32
    %c0_i32_0 = arith.constant 0 : i32
    %c0_i32_1 = arith.constant 0 : i32
    return %c0_i32, %c0_i32_0 : i32, i32
  }
  func.func @transform_7(%arg0: i32) -> (i32, i32) {
    %c0_i32 = arith.constant 0 : i32
    %c0_i32_0 = arith.constant 0 : i32
    %c0_i32_1 = arith.constant 0 : i32
    return %c0_i32, %c0_i32_0 : i32, i32
  }
  func.func @transform_8(%arg0: i32) -> (i32, i32) {
    %c0_i32 = arith.constant 0 : i32
    %c0_i32_0 = arith.constant 0 : i32
    %c0_i32_1 = arith.constant 0 : i32
    return %c0_i32, %c0_i32_0 : i32, i32
  }
  func.func @transform_9(%arg0: i32) -> (i32, i32) {
    %c0_i32 = arith.constant 0 : i32
    %c0_i32_0 = arith.constant 0 : i32
    %c0_i32_1 = arith.constant 0 : i32
    return %c0_i32, %c0_i32_0 : i32, i32
  }
  func.func @transform_10(%arg0: i32) -> (i32, i32) {
    %c0_i32 = arith.constant 0 : i32
    %c0_i32_0 = arith.constant 0 : i32
    %c0_i32_1 = arith.constant 0 : i32
    return %c0_i32, %c0_i32_0 : i32, i32
  }
  func.func @transform_11(%arg0: i32) -> (i32, i32) {
    %c0_i32 = arith.constant 0 : i32
    %c0_i32_0 = arith.constant 0 : i32
    %c0_i32_1 = arith.constant 0 : i32
    return %c0_i32, %c0_i32_0 : i32, i32
  }
  func.func @transform_12(%arg0: i32) -> (i32, i32) {
    %c0_i32 = arith.constant 0 : i32
    %c0_i32_0 = arith.constant 0 : i32
    %c0_i32_1 = arith.constant 0 : i32
    return %c0_i32, %c0_i32_0 : i32, i32
  }
  func.func @transform_13(%arg0: i32) -> (i32, i32) {
    %c0_i32 = arith.constant 0 : i32
    %c0_i32_0 = arith.constant 0 : i32
    %c0_i32_1 = arith.constant 0 : i32
    return %c0_i32, %c0_i32_0 : i32, i32
  }
}

module attributes {stable_mosaic.version = 11 : i64} {
  func.func @_split2d_kernel(%arg0: i32, %arg1: memref<32x16xf32, #tpu.memory_space<vmem>>, %arg2: memref<72x16xbf16, #tpu.memory_space<vmem>>, %arg3: memref<1x16xf32, #tpu.memory_space<vmem>>, %arg4: memref<32x9xf32, #tpu.memory_space<vmem>>, %arg5: memref<2x32xf32, #tpu.memory_space<vmem>>, %arg6: memref<32x8xf32, #tpu.memory_space<vmem>>, %arg7: memref<2x1xf32, #tpu.memory_space<vmem>>, %arg8: memref<48x8xf32, #tpu.memory_space<vmem>>) attributes {dimension_semantics = [#tpu.dimension_semantics<arbitrary>], iteration_bounds = array<i64: 1>, scalar_prefetch = 0 : i64, scratch_operands = 1 : i64, tpu.core_type = #tpu.core_type<tc>, window_params = [{pipeline_mode = #tpu.pipeline_mode<synchronous>, transform_indices = @transform_0, window_bounds = array<i64: 32, 16>}, {pipeline_mode = #tpu.pipeline_mode<synchronous>, transform_indices = @transform_1, window_bounds = array<i64: 72, 16>}, {pipeline_mode = #tpu.pipeline_mode<synchronous>, transform_indices = @transform_2, window_bounds = array<i64: 1, 16>}, {pipeline_mode = #tpu.pipeline_mode<synchronous>, transform_indices = @transform_3, window_bounds = array<i64: 32, 9>}, {pipeline_mode = #tpu.pipeline_mode<synchronous>, transform_indices = @transform_4, window_bounds = array<i64: 2, 32>}, {pipeline_mode = #tpu.pipeline_mode<synchronous>, transform_indices = @transform_5, window_bounds = array<i64: 32, 8>}, {pipeline_mode = #tpu.pipeline_mode<synchronous>, transform_indices = @transform_6, window_bounds = array<i64: 2, 1>}]} {
    %c0 = arith.constant 0 : index
    %c0_0 = arith.constant 0 : index
    %0 = vector.load %arg1[%c0, %c0_0] : memref<32x16xf32, #tpu.memory_space<vmem>>, vector<32x16xf32>
    %1 = vector.extract_strided_slice %0 {offsets = [0, 0], sizes = [32, 8], strides = [1, 1]} : vector<32x16xf32> to vector<32x8xf32>
    %2 = vector.extract_strided_slice %0 {offsets = [0, 8], sizes = [32, 8], strides = [1, 1]} : vector<32x16xf32> to vector<32x8xf32>
    %cst = arith.constant 0.000000e+00 : f32
    %3 = vector.broadcast %cst : f32 to vector<48x8xf32>
    %c0_1 = arith.constant 0 : index
    %c0_2 = arith.constant 0 : index
    %4 = vector.load %arg8[%c0_1, %c0_2] : memref<48x8xf32, #tpu.memory_space<vmem>>, vector<48x8xf32>
    tpu.vector_store %arg8[%c0_1, %c0_2], %3 {strides = array<i32>} : memref<48x8xf32, #tpu.memory_space<vmem>>, vector<48x8xf32>,
    %c8 = arith.constant 8 : index
    %c0_3 = arith.constant 0 : index
    %5 = vector.load %arg8[%c8, %c0_3] : memref<48x8xf32, #tpu.memory_space<vmem>>, vector<32x8xf32>
    tpu.vector_store %arg8[%c8, %c0_3], %1 {strides = array<i32>} : memref<48x8xf32, #tpu.memory_space<vmem>>, vector<32x8xf32>,
    %cst_4 = arith.constant 0.000000e+00 : f32
    %6 = vector.broadcast %cst_4 : f32 to vector<32x16xf32>
    %c3 = arith.constant 3 : index
    %c0_5 = arith.constant 0 : index
    %7 = vector.load %arg8[%c3, %c0_5] : memref<48x8xf32, #tpu.memory_space<vmem>>, vector<32x8xf32>
    %c0_6 = arith.constant 0 : index
    %c0_7 = arith.constant 0 : index
    %8 = vector.load %arg4[%c0_6, %c0_7] : memref<32x9xf32, #tpu.memory_space<vmem>>, vector<32x1xf32>
    %9 = vector.broadcast %8 : vector<32x1xf32> to vector<32x8xf32>
    %10 = arith.mulf %7, %9 : vector<32x8xf32>
    %11 = arith.truncf %10 : vector<32x8xf32> to vector<32x8xbf16>
    %c0_8 = arith.constant 0 : index
    %c0_9 = arith.constant 0 : index
    %12 = vector.load %arg2[%c0_8, %c0_9] : memref<72x16xbf16, #tpu.memory_space<vmem>>, vector<8x16xbf16>
    %cst_10 = arith.constant dense<0.000000e+00> : vector<32x16xf32>
    %13 = tpu.matmul %11, %12, %cst_10 {dimension_numbers = #tpu.dot_dimension_numbers<[1], [0], [0], [1], [0, 0, 1, 1], [], []>} : vector<32x8xbf16>, vector<8x16xbf16>, vector<32x16xf32> -> vector<32x16xf32>
    %14 = arith.addf %6, %13 : vector<32x16xf32>
    %c4 = arith.constant 4 : index
    %c0_11 = arith.constant 0 : index
    %15 = vector.load %arg8[%c4, %c0_11] : memref<48x8xf32, #tpu.memory_space<vmem>>, vector<32x8xf32>
    %c0_12 = arith.constant 0 : index
    %c1 = arith.constant 1 : index
    %16 = vector.load %arg4[%c0_12, %c1] : memref<32x9xf32, #tpu.memory_space<vmem>>, vector<32x1xf32>
    %17 = vector.broadcast %16 : vector<32x1xf32> to vector<32x8xf32>
    %18 = arith.mulf %15, %17 : vector<32x8xf32>
    %19 = arith.truncf %18 : vector<32x8xf32> to vector<32x8xbf16>
    %c8_13 = arith.constant 8 : index
    %c0_14 = arith.constant 0 : index
    %20 = vector.load %arg2[%c8_13, %c0_14] : memref<72x16xbf16, #tpu.memory_space<vmem>>, vector<8x16xbf16>
    %cst_15 = arith.constant dense<0.000000e+00> : vector<32x16xf32>
    %21 = tpu.matmul %19, %20, %cst_15 {dimension_numbers = #tpu.dot_dimension_numbers<[1], [0], [0], [1], [0, 0, 1, 1], [], []>} : vector<32x8xbf16>, vector<8x16xbf16>, vector<32x16xf32> -> vector<32x16xf32>
    %22 = arith.addf %14, %21 : vector<32x16xf32>
    %c5 = arith.constant 5 : index
    %c0_16 = arith.constant 0 : index
    %23 = vector.load %arg8[%c5, %c0_16] : memref<48x8xf32, #tpu.memory_space<vmem>>, vector<32x8xf32>
    %c0_17 = arith.constant 0 : index
    %c2 = arith.constant 2 : index
    %24 = vector.load %arg4[%c0_17, %c2] : memref<32x9xf32, #tpu.memory_space<vmem>>, vector<32x1xf32>
    %25 = vector.broadcast %24 : vector<32x1xf32> to vector<32x8xf32>
    %26 = arith.mulf %23, %25 : vector<32x8xf32>
    %27 = arith.truncf %26 : vector<32x8xf32> to vector<32x8xbf16>
    %c16 = arith.constant 16 : index
    %c0_18 = arith.constant 0 : index
    %28 = vector.load %arg2[%c16, %c0_18] : memref<72x16xbf16, #tpu.memory_space<vmem>>, vector<8x16xbf16>
    %cst_19 = arith.constant dense<0.000000e+00> : vector<32x16xf32>
    %29 = tpu.matmul %27, %28, %cst_19 {dimension_numbers = #tpu.dot_dimension_numbers<[1], [0], [0], [1], [0, 0, 1, 1], [], []>} : vector<32x8xbf16>, vector<8x16xbf16>, vector<32x16xf32> -> vector<32x16xf32>
    %30 = arith.addf %22, %29 : vector<32x16xf32>
    %c7 = arith.constant 7 : index
    %c0_20 = arith.constant 0 : index
    %31 = vector.load %arg8[%c7, %c0_20] : memref<48x8xf32, #tpu.memory_space<vmem>>, vector<32x8xf32>
    %c0_21 = arith.constant 0 : index
    %c3_22 = arith.constant 3 : index
    %32 = vector.load %arg4[%c0_21, %c3_22] : memref<32x9xf32, #tpu.memory_space<vmem>>, vector<32x1xf32>
    %33 = vector.broadcast %32 : vector<32x1xf32> to vector<32x8xf32>
    %34 = arith.mulf %31, %33 : vector<32x8xf32>
    %35 = arith.truncf %34 : vector<32x8xf32> to vector<32x8xbf16>
    %c24 = arith.constant 24 : index
    %c0_23 = arith.constant 0 : index
    %36 = vector.load %arg2[%c24, %c0_23] : memref<72x16xbf16, #tpu.memory_space<vmem>>, vector<8x16xbf16>
    %cst_24 = arith.constant dense<0.000000e+00> : vector<32x16xf32>
    %37 = tpu.matmul %35, %36, %cst_24 {dimension_numbers = #tpu.dot_dimension_numbers<[1], [0], [0], [1], [0, 0, 1, 1], [], []>} : vector<32x8xbf16>, vector<8x16xbf16>, vector<32x16xf32> -> vector<32x16xf32>
    %38 = arith.addf %30, %37 : vector<32x16xf32>
    %c8_25 = arith.constant 8 : index
    %c0_26 = arith.constant 0 : index
    %39 = vector.load %arg8[%c8_25, %c0_26] : memref<48x8xf32, #tpu.memory_space<vmem>>, vector<32x8xf32>
    %c0_27 = arith.constant 0 : index
    %c4_28 = arith.constant 4 : index
    %40 = vector.load %arg4[%c0_27, %c4_28] : memref<32x9xf32, #tpu.memory_space<vmem>>, vector<32x1xf32>
    %41 = vector.broadcast %40 : vector<32x1xf32> to vector<32x8xf32>
    %42 = arith.mulf %39, %41 : vector<32x8xf32>
    %43 = arith.truncf %42 : vector<32x8xf32> to vector<32x8xbf16>
    %c32 = arith.constant 32 : index
    %c0_29 = arith.constant 0 : index
    %44 = vector.load %arg2[%c32, %c0_29] : memref<72x16xbf16, #tpu.memory_space<vmem>>, vector<8x16xbf16>
    %cst_30 = arith.constant dense<0.000000e+00> : vector<32x16xf32>
    %45 = tpu.matmul %43, %44, %cst_30 {dimension_numbers = #tpu.dot_dimension_numbers<[1], [0], [0], [1], [0, 0, 1, 1], [], []>} : vector<32x8xbf16>, vector<8x16xbf16>, vector<32x16xf32> -> vector<32x16xf32>
    %46 = arith.addf %38, %45 : vector<32x16xf32>
    %c9 = arith.constant 9 : index
    %c0_31 = arith.constant 0 : index
    %47 = vector.load %arg8[%c9, %c0_31] : memref<48x8xf32, #tpu.memory_space<vmem>>, vector<32x8xf32>
    %c0_32 = arith.constant 0 : index
    %c5_33 = arith.constant 5 : index
    %48 = vector.load %arg4[%c0_32, %c5_33] : memref<32x9xf32, #tpu.memory_space<vmem>>, vector<32x1xf32>
    %49 = vector.broadcast %48 : vector<32x1xf32> to vector<32x8xf32>
    %50 = arith.mulf %47, %49 : vector<32x8xf32>
    %51 = arith.truncf %50 : vector<32x8xf32> to vector<32x8xbf16>
    %c40 = arith.constant 40 : index
    %c0_34 = arith.constant 0 : index
    %52 = vector.load %arg2[%c40, %c0_34] : memref<72x16xbf16, #tpu.memory_space<vmem>>, vector<8x16xbf16>
    %cst_35 = arith.constant dense<0.000000e+00> : vector<32x16xf32>
    %53 = tpu.matmul %51, %52, %cst_35 {dimension_numbers = #tpu.dot_dimension_numbers<[1], [0], [0], [1], [0, 0, 1, 1], [], []>} : vector<32x8xbf16>, vector<8x16xbf16>, vector<32x16xf32> -> vector<32x16xf32>
    %54 = arith.addf %46, %53 : vector<32x16xf32>
    %c11 = arith.constant 11 : index
    %c0_36 = arith.constant 0 : index
    %55 = vector.load %arg8[%c11, %c0_36] : memref<48x8xf32, #tpu.memory_space<vmem>>, vector<32x8xf32>
    %c0_37 = arith.constant 0 : index
    %c6 = arith.constant 6 : index
    %56 = vector.load %arg4[%c0_37, %c6] : memref<32x9xf32, #tpu.memory_space<vmem>>, vector<32x1xf32>
    %57 = vector.broadcast %56 : vector<32x1xf32> to vector<32x8xf32>
    %58 = arith.mulf %55, %57 : vector<32x8xf32>
    %59 = arith.truncf %58 : vector<32x8xf32> to vector<32x8xbf16>
    %c48 = arith.constant 48 : index
    %c0_38 = arith.constant 0 : index
    %60 = vector.load %arg2[%c48, %c0_38] : memref<72x16xbf16, #tpu.memory_space<vmem>>, vector<8x16xbf16>
    %cst_39 = arith.constant dense<0.000000e+00> : vector<32x16xf32>
    %61 = tpu.matmul %59, %60, %cst_39 {dimension_numbers = #tpu.dot_dimension_numbers<[1], [0], [0], [1], [0, 0, 1, 1], [], []>} : vector<32x8xbf16>, vector<8x16xbf16>, vector<32x16xf32> -> vector<32x16xf32>
    %62 = arith.addf %54, %61 : vector<32x16xf32>
    %c12 = arith.constant 12 : index
    %c0_40 = arith.constant 0 : index
    %63 = vector.load %arg8[%c12, %c0_40] : memref<48x8xf32, #tpu.memory_space<vmem>>, vector<32x8xf32>
    %c0_41 = arith.constant 0 : index
    %c7_42 = arith.constant 7 : index
    %64 = vector.load %arg4[%c0_41, %c7_42] : memref<32x9xf32, #tpu.memory_space<vmem>>, vector<32x1xf32>
    %65 = vector.broadcast %64 : vector<32x1xf32> to vector<32x8xf32>
    %66 = arith.mulf %63, %65 : vector<32x8xf32>
    %67 = arith.truncf %66 : vector<32x8xf32> to vector<32x8xbf16>
    %c56 = arith.constant 56 : index
    %c0_43 = arith.constant 0 : index
    %68 = vector.load %arg2[%c56, %c0_43] : memref<72x16xbf16, #tpu.memory_space<vmem>>, vector<8x16xbf16>
    %cst_44 = arith.constant dense<0.000000e+00> : vector<32x16xf32>
    %69 = tpu.matmul %67, %68, %cst_44 {dimension_numbers = #tpu.dot_dimension_numbers<[1], [0], [0], [1], [0, 0, 1, 1], [], []>} : vector<32x8xbf16>, vector<8x16xbf16>, vector<32x16xf32> -> vector<32x16xf32>
    %70 = arith.addf %62, %69 : vector<32x16xf32>
    %c13 = arith.constant 13 : index
    %c0_45 = arith.constant 0 : index
    %71 = vector.load %arg8[%c13, %c0_45] : memref<48x8xf32, #tpu.memory_space<vmem>>, vector<32x8xf32>
    %c0_46 = arith.constant 0 : index
    %c8_47 = arith.constant 8 : index
    %72 = vector.load %arg4[%c0_46, %c8_47] : memref<32x9xf32, #tpu.memory_space<vmem>>, vector<32x1xf32>
    %73 = vector.broadcast %72 : vector<32x1xf32> to vector<32x8xf32>
    %74 = arith.mulf %71, %73 : vector<32x8xf32>
    %75 = arith.truncf %74 : vector<32x8xf32> to vector<32x8xbf16>
    %c64 = arith.constant 64 : index
    %c0_48 = arith.constant 0 : index
    %76 = vector.load %arg2[%c64, %c0_48] : memref<72x16xbf16, #tpu.memory_space<vmem>>, vector<8x16xbf16>
    %cst_49 = arith.constant dense<0.000000e+00> : vector<32x16xf32>
    %77 = tpu.matmul %75, %76, %cst_49 {dimension_numbers = #tpu.dot_dimension_numbers<[1], [0], [0], [1], [0, 0, 1, 1], [], []>} : vector<32x8xbf16>, vector<8x16xbf16>, vector<32x16xf32> -> vector<32x16xf32>
    %78 = arith.addf %70, %77 : vector<32x16xf32>
    %c0_50 = arith.constant 0 : index
    %c0_51 = arith.constant 0 : index
    %79 = vector.load %arg3[%c0_50, %c0_51] : memref<1x16xf32, #tpu.memory_space<vmem>>, vector<1x16xf32>
    %80 = vector.broadcast %79 : vector<1x16xf32> to vector<32x16xf32>
    %81 = arith.addf %78, %80 : vector<32x16xf32>
    %82 = vector.extract_strided_slice %81 {offsets = [0, 0], sizes = [32, 8], strides = [1, 1]} : vector<32x16xf32> to vector<32x8xf32>
    %83 = vector.extract_strided_slice %81 {offsets = [0, 8], sizes = [32, 8], strides = [1, 1]} : vector<32x16xf32> to vector<32x8xf32>
    %cst_52 = arith.constant 2.000000e+00 : f32
    %84 = vector.broadcast %cst_52 : f32 to vector<32x8xf32>
    %85 = arith.mulf %84, %83 : vector<32x8xf32>
    %86 = arith.subf %2, %82 : vector<32x8xf32>
    %87 = arith.mulf %86, %86 : vector<32x8xf32>
    %cst_53 = arith.constant -2.000000e+00 : f32
    %88 = vector.broadcast %cst_53 : f32 to vector<32x8xf32>
    %89 = arith.mulf %88, %83 : vector<32x8xf32>
    %90 = math.exp %89 : vector<32x8xf32>
    %91 = arith.mulf %87, %90 : vector<32x8xf32>
    %92 = arith.addf %85, %91 : vector<32x8xf32>
    %cst_54 = arith.constant 1.83787704 : f32
    %93 = vector.broadcast %cst_54 : f32 to vector<32x8xf32>
    %94 = arith.addf %92, %93 : vector<32x8xf32>
    %cst_55 = arith.constant -5.000000e-01 : f32
    %95 = vector.broadcast %cst_55 : f32 to vector<32x8xf32>
    %96 = arith.mulf %95, %94 : vector<32x8xf32>
    %c0_56 = arith.constant 0 : index
    %c0_57 = arith.constant 0 : index
    %97 = vector.load %arg5[%c0_56, %c0_57] : memref<2x32xf32, #tpu.memory_space<vmem>>, vector<2x32xf32>
    %cst_58 = arith.constant dense<0.000000e+00> : vector<2x8xf32>
    %98 = tpu.matmul %97, %96, %cst_58 {dimension_numbers = #tpu.dot_dimension_numbers<[1], [0], [0], [1], [0, 0, 1, 1], [], []>} : vector<2x32xf32>, vector<32x8xf32>, vector<2x8xf32> -> vector<2x8xf32>
    %cst_59 = arith.constant dense<0.000000e+00> : vector<2xf32>
    %99 = vector.multi_reduction <add>, %98, %cst_59 [1] : vector<2x8xf32> to vector<2xf32>
    %100 = vector.shape_cast %99 : vector<2xf32> to vector<2x1xf32>
    %c0_60 = arith.constant 0 : index
    %c0_61 = arith.constant 0 : index
    %101 = vector.load %arg7[%c0_60, %c0_61] : memref<2x1xf32, #tpu.memory_space<vmem>>, vector<2x1xf32>
    tpu.vector_store %arg7[%c0_60, %c0_61], %100 {strides = array<i32>} : memref<2x1xf32, #tpu.memory_space<vmem>>, vector<2x1xf32>,
    %c0_62 = arith.constant 0 : index
    %c0_63 = arith.constant 0 : index
    %102 = vector.load %arg6[%c0_62, %c0_63] : memref<32x8xf32, #tpu.memory_space<vmem>>, vector<32x8xf32>
    tpu.vector_store %arg6[%c0_62, %c0_63], %1 {strides = array<i32>} : memref<32x8xf32, #tpu.memory_space<vmem>>, vector<32x8xf32>,
    return
  }
  func.func @transform_0(%arg0: i32) -> (i32, i32) {
    %c0_i32 = arith.constant 0 : i32
    %c0_i32_0 = arith.constant 0 : i32
    %c0_i32_1 = arith.constant 0 : i32
    return %c0_i32, %c0_i32_0 : i32, i32
  }
  func.func @transform_1(%arg0: i32) -> (i32, i32) {
    %c0_i32 = arith.constant 0 : i32
    %c0_i32_0 = arith.constant 0 : i32
    %c0_i32_1 = arith.constant 0 : i32
    return %c0_i32, %c0_i32_0 : i32, i32
  }
  func.func @transform_2(%arg0: i32) -> (i32, i32) {
    %c0_i32 = arith.constant 0 : i32
    %c0_i32_0 = arith.constant 0 : i32
    %c0_i32_1 = arith.constant 0 : i32
    return %c0_i32, %c0_i32_0 : i32, i32
  }
  func.func @transform_3(%arg0: i32) -> (i32, i32) {
    %c0_i32 = arith.constant 0 : i32
    %c0_i32_0 = arith.constant 0 : i32
    %c0_i32_1 = arith.constant 0 : i32
    return %c0_i32, %c0_i32_0 : i32, i32
  }
  func.func @transform_4(%arg0: i32) -> (i32, i32) {
    %c0_i32 = arith.constant 0 : i32
    %c0_i32_0 = arith.constant 0 : i32
    %c0_i32_1 = arith.constant 0 : i32
    return %c0_i32, %c0_i32_0 : i32, i32
  }
  func.func @transform_5(%arg0: i32) -> (i32, i32) {
    %c0_i32 = arith.constant 0 : i32
    %c0_i32_0 = arith.constant 0 : i32
    %c0_i32_1 = arith.constant 0 : i32
    return %c0_i32, %c0_i32_0 : i32, i32
  }
  func.func @transform_6(%arg0: i32) -> (i32, i32) {
    %c0_i32 = arith.constant 0 : i32
    %c0_i32_0 = arith.constant 0 : i32
    %c0_i32_1 = arith.constant 0 : i32
    return %c0_i32, %c0_i32_0 : i32, i32
  }
}

module attributes {stable_mosaic.version = 11 : i64} {
  func.func @_flowstep_kernel(%arg0: i32, %arg1: memref<8x32xf32, #tpu.memory_space<vmem>>, %arg2: memref<32x32xf32, #tpu.memory_space<vmem>>, %arg3: memref<1x32xf32, #tpu.memory_space<vmem>>, %arg4: memref<144x32xbf16, #tpu.memory_space<vmem>>, %arg5: memref<1x32xf32, #tpu.memory_space<vmem>>, %arg6: memref<32x32xbf16, #tpu.memory_space<vmem>>, %arg7: memref<1x32xf32, #tpu.memory_space<vmem>>, %arg8: memref<288x32xbf16, #tpu.memory_space<vmem>>, %arg9: memref<1x32xf32, #tpu.memory_space<vmem>>, %arg10: memref<8x9xf32, #tpu.memory_space<vmem>>, %arg11: memref<2x8xf32, #tpu.memory_space<vmem>>, %arg12: memref<8x32xf32, #tpu.memory_space<vmem>>, %arg13: memref<2x1xf32, #tpu.memory_space<vmem>>, %arg14: memref<2x1xf32, #tpu.memory_space<vmem>>, %arg15: memref<24x16xf32, #tpu.memory_space<vmem>>, %arg16: memref<24x32xf32, #tpu.memory_space<vmem>>) attributes {dimension_semantics = [#tpu.dimension_semantics<arbitrary>], iteration_bounds = array<i64: 1>, scalar_prefetch = 0 : i64, scratch_operands = 2 : i64, tpu.core_type = #tpu.core_type<tc>, window_params = [{pipeline_mode = #tpu.pipeline_mode<synchronous>, transform_indices = @transform_0, window_bounds = array<i64: 8, 32>}, {pipeline_mode = #tpu.pipeline_mode<synchronous>, transform_indices = @transform_1, window_bounds = array<i64: 32, 32>}, {pipeline_mode = #tpu.pipeline_mode<synchronous>, transform_indices = @transform_2, window_bounds = array<i64: 1, 32>}, {pipeline_mode = #tpu.pipeline_mode<synchronous>, transform_indices = @transform_3, window_bounds = array<i64: 144, 32>}, {pipeline_mode = #tpu.pipeline_mode<synchronous>, transform_indices = @transform_4, window_bounds = array<i64: 1, 32>}, {pipeline_mode = #tpu.pipeline_mode<synchronous>, transform_indices = @transform_5, window_bounds = array<i64: 32, 32>}, {pipeline_mode = #tpu.pipeline_mode<synchronous>, transform_indices = @transform_6, window_bounds = array<i64: 1, 32>}, {pipeline_mode = #tpu.pipeline_mode<synchronous>, transform_indices = @transform_7, window_bounds = array<i64: 288, 32>}, {pipeline_mode = #tpu.pipeline_mode<synchronous>, transform_indices = @transform_8, window_bounds = array<i64: 1, 32>}, {pipeline_mode = #tpu.pipeline_mode<synchronous>, transform_indices = @transform_9, window_bounds = array<i64: 8, 9>}, {pipeline_mode = #tpu.pipeline_mode<synchronous>, transform_indices = @transform_10, window_bounds = array<i64: 2, 8>}, {pipeline_mode = #tpu.pipeline_mode<synchronous>, transform_indices = @transform_11, window_bounds = array<i64: 8, 32>}, {pipeline_mode = #tpu.pipeline_mode<synchronous>, transform_indices = @transform_12, window_bounds = array<i64: 2, 1>}, {pipeline_mode = #tpu.pipeline_mode<synchronous>, transform_indices = @transform_13, window_bounds = array<i64: 2, 1>}]} {
    %c0 = arith.constant 0 : index
    %c0_0 = arith.constant 0 : index
    %0 = vector.load %arg1[%c0, %c0_0] : memref<8x32xf32, #tpu.memory_space<vmem>>, vector<8x32xf32>
    %c0_1 = arith.constant 0 : index
    %c0_2 = arith.constant 0 : index
    %1 = vector.load %arg2[%c0_1, %c0_2] : memref<32x32xf32, #tpu.memory_space<vmem>>, vector<32x32xf32>
    %cst = arith.constant dense<0.000000e+00> : vector<8x32xf32>
    %2 = tpu.matmul %0, %1, %cst {dimension_numbers = #tpu.dot_dimension_numbers<[1], [0], [0], [1], [0, 0, 1, 1], [], []>} : vector<8x32xf32>, vector<32x32xf32>, vector<8x32xf32> -> vector<8x32xf32>
    %c0_3 = arith.constant 0 : index
    %c0_4 = arith.constant 0 : index
    %3 = vector.load %arg3[%c0_3, %c0_4] : memref<1x32xf32, #tpu.memory_space<vmem>>, vector<1x32xf32>
    %4 = vector.broadcast %3 : vector<1x32xf32> to vector<8x32xf32>
    %5 = arith.addf %2, %4 : vector<8x32xf32>
    %6 = vector.extract_strided_slice %5 {offsets = [0, 0], sizes = [8, 16], strides = [1, 1]} : vector<8x32xf32> to vector<8x16xf32>
    %7 = vector.extract_strided_slice %5 {offsets = [0, 16], sizes = [8, 16], strides = [1, 1]} : vector<8x32xf32> to vector<8x16xf32>
    %cst_5 = arith.constant 0.000000e+00 : f32
    %8 = vector.broadcast %cst_5 : f32 to vector<24x16xf32>
    %c0_6 = arith.constant 0 : index
    %c0_7 = arith.constant 0 : index
    %9 = vector.load %arg15[%c0_6, %c0_7] : memref<24x16xf32, #tpu.memory_space<vmem>>, vector<24x16xf32>
    tpu.vector_store %arg15[%c0_6, %c0_7], %8 {strides = array<i32>} : memref<24x16xf32, #tpu.memory_space<vmem>>, vector<24x16xf32>,
    %c8 = arith.constant 8 : index
    %c0_8 = arith.constant 0 : index
    %10 = vector.load %arg15[%c8, %c0_8] : memref<24x16xf32, #tpu.memory_space<vmem>>, vector<8x16xf32>
    tpu.vector_store %arg15[%c8, %c0_8], %6 {strides = array<i32>} : memref<24x16xf32, #tpu.memory_space<vmem>>, vector<8x16xf32>,
    %cst_9 = arith.constant 0.000000e+00 : f32
    %11 = vector.broadcast %cst_9 : f32 to vector<8x32xf32>
    %c5 = arith.constant 5 : index
    %c0_10 = arith.constant 0 : index
    %12 = vector.load %arg15[%c5, %c0_10] : memref<24x16xf32, #tpu.memory_space<vmem>>, vector<8x16xf32>
    %c0_11 = arith.constant 0 : index
    %c0_12 = arith.constant 0 : index
    %13 = vector.load %arg10[%c0_11, %c0_12] : memref<8x9xf32, #tpu.memory_space<vmem>>, vector<8x1xf32>
    %14 = vector.broadcast %13 : vector<8x1xf32> to vector<8x16xf32>
    %15 = arith.mulf %12, %14 : vector<8x16xf32>
    %16 = arith.truncf %15 : vector<8x16xf32> to vector<8x16xbf16>
    %c0_13 = arith.constant 0 : index
    %c0_14 = arith.constant 0 : index
    %17 = vector.load %arg4[%c0_13, %c0_14] : memref<144x32xbf16, #tpu.memory_space<vmem>>, vector<16x32xbf16>
    %cst_15 = arith.constant dense<0.000000e+00> : vector<8x32xf32>
    %18 = tpu.matmul %16, %17, %cst_15 {dimension_numbers = #tpu.dot_dimension_numbers<[1], [0], [0], [1], [0, 0, 1, 1], [], []>} : vector<8x16xbf16>, vector<16x32xbf16>, vector<8x32xf32> -> vector<8x32xf32>
    %19 = arith.addf %11, %18 : vector<8x32xf32>
    %c6 = arith.constant 6 : index
    %c0_16 = arith.constant 0 : index
    %20 = vector.load %arg15[%c6, %c0_16] : memref<24x16xf32, #tpu.memory_space<vmem>>, vector<8x16xf32>
    %c0_17 = arith.constant 0 : index
    %c1 = arith.constant 1 : index
    %21 = vector.load %arg10[%c0_17, %c1] : memref<8x9xf32, #tpu.memory_space<vmem>>, vector<8x1xf32>
    %22 = vector.broadcast %21 : vector<8x1xf32> to vector<8x16xf32>
    %23 = arith.mulf %20, %22 : vector<8x16xf32>
    %24 = arith.truncf %23 : vector<8x16xf32> to vector<8x16xbf16>
    %c16 = arith.constant 16 : index
    %c0_18 = arith.constant 0 : index
    %25 = vector.load %arg4[%c16, %c0_18] : memref<144x32xbf16, #tpu.memory_space<vmem>>, vector<16x32xbf16>
    %cst_19 = arith.constant dense<0.000000e+00> : vector<8x32xf32>
    %26 = tpu.matmul %24, %25, %cst_19 {dimension_numbers = #tpu.dot_dimension_numbers<[1], [0], [0], [1], [0, 0, 1, 1], [], []>} : vector<8x16xbf16>, vector<16x32xbf16>, vector<8x32xf32> -> vector<8x32xf32>
    %27 = arith.addf %19, %26 : vector<8x32xf32>
    %c7 = arith.constant 7 : index
    %c0_20 = arith.constant 0 : index
    %28 = vector.load %arg15[%c7, %c0_20] : memref<24x16xf32, #tpu.memory_space<vmem>>, vector<8x16xf32>
    %c0_21 = arith.constant 0 : index
    %c2 = arith.constant 2 : index
    %29 = vector.load %arg10[%c0_21, %c2] : memref<8x9xf32, #tpu.memory_space<vmem>>, vector<8x1xf32>
    %30 = vector.broadcast %29 : vector<8x1xf32> to vector<8x16xf32>
    %31 = arith.mulf %28, %30 : vector<8x16xf32>
    %32 = arith.truncf %31 : vector<8x16xf32> to vector<8x16xbf16>
    %c32 = arith.constant 32 : index
    %c0_22 = arith.constant 0 : index
    %33 = vector.load %arg4[%c32, %c0_22] : memref<144x32xbf16, #tpu.memory_space<vmem>>, vector<16x32xbf16>
    %cst_23 = arith.constant dense<0.000000e+00> : vector<8x32xf32>
    %34 = tpu.matmul %32, %33, %cst_23 {dimension_numbers = #tpu.dot_dimension_numbers<[1], [0], [0], [1], [0, 0, 1, 1], [], []>} : vector<8x16xbf16>, vector<16x32xbf16>, vector<8x32xf32> -> vector<8x32xf32>
    %35 = arith.addf %27, %34 : vector<8x32xf32>
    %c7_24 = arith.constant 7 : index
    %c0_25 = arith.constant 0 : index
    %36 = vector.load %arg15[%c7_24, %c0_25] : memref<24x16xf32, #tpu.memory_space<vmem>>, vector<8x16xf32>
    %c0_26 = arith.constant 0 : index
    %c3 = arith.constant 3 : index
    %37 = vector.load %arg10[%c0_26, %c3] : memref<8x9xf32, #tpu.memory_space<vmem>>, vector<8x1xf32>
    %38 = vector.broadcast %37 : vector<8x1xf32> to vector<8x16xf32>
    %39 = arith.mulf %36, %38 : vector<8x16xf32>
    %40 = arith.truncf %39 : vector<8x16xf32> to vector<8x16xbf16>
    %c48 = arith.constant 48 : index
    %c0_27 = arith.constant 0 : index
    %41 = vector.load %arg4[%c48, %c0_27] : memref<144x32xbf16, #tpu.memory_space<vmem>>, vector<16x32xbf16>
    %cst_28 = arith.constant dense<0.000000e+00> : vector<8x32xf32>
    %42 = tpu.matmul %40, %41, %cst_28 {dimension_numbers = #tpu.dot_dimension_numbers<[1], [0], [0], [1], [0, 0, 1, 1], [], []>} : vector<8x16xbf16>, vector<16x32xbf16>, vector<8x32xf32> -> vector<8x32xf32>
    %43 = arith.addf %35, %42 : vector<8x32xf32>
    %c8_29 = arith.constant 8 : index
    %c0_30 = arith.constant 0 : index
    %44 = vector.load %arg15[%c8_29, %c0_30] : memref<24x16xf32, #tpu.memory_space<vmem>>, vector<8x16xf32>
    %c0_31 = arith.constant 0 : index
    %c4 = arith.constant 4 : index
    %45 = vector.load %arg10[%c0_31, %c4] : memref<8x9xf32, #tpu.memory_space<vmem>>, vector<8x1xf32>
    %46 = vector.broadcast %45 : vector<8x1xf32> to vector<8x16xf32>
    %47 = arith.mulf %44, %46 : vector<8x16xf32>
    %48 = arith.truncf %47 : vector<8x16xf32> to vector<8x16xbf16>
    %c64 = arith.constant 64 : index
    %c0_32 = arith.constant 0 : index
    %49 = vector.load %arg4[%c64, %c0_32] : memref<144x32xbf16, #tpu.memory_space<vmem>>, vector<16x32xbf16>
    %cst_33 = arith.constant dense<0.000000e+00> : vector<8x32xf32>
    %50 = tpu.matmul %48, %49, %cst_33 {dimension_numbers = #tpu.dot_dimension_numbers<[1], [0], [0], [1], [0, 0, 1, 1], [], []>} : vector<8x16xbf16>, vector<16x32xbf16>, vector<8x32xf32> -> vector<8x32xf32>
    %51 = arith.addf %43, %50 : vector<8x32xf32>
    %c9 = arith.constant 9 : index
    %c0_34 = arith.constant 0 : index
    %52 = vector.load %arg15[%c9, %c0_34] : memref<24x16xf32, #tpu.memory_space<vmem>>, vector<8x16xf32>
    %c0_35 = arith.constant 0 : index
    %c5_36 = arith.constant 5 : index
    %53 = vector.load %arg10[%c0_35, %c5_36] : memref<8x9xf32, #tpu.memory_space<vmem>>, vector<8x1xf32>
    %54 = vector.broadcast %53 : vector<8x1xf32> to vector<8x16xf32>
    %55 = arith.mulf %52, %54 : vector<8x16xf32>
    %56 = arith.truncf %55 : vector<8x16xf32> to vector<8x16xbf16>
    %c80 = arith.constant 80 : index
    %c0_37 = arith.constant 0 : index
    %57 = vector.load %arg4[%c80, %c0_37] : memref<144x32xbf16, #tpu.memory_space<vmem>>, vector<16x32xbf16>
    %cst_38 = arith.constant dense<0.000000e+00> : vector<8x32xf32>
    %58 = tpu.matmul %56, %57, %cst_38 {dimension_numbers = #tpu.dot_dimension_numbers<[1], [0], [0], [1], [0, 0, 1, 1], [], []>} : vector<8x16xbf16>, vector<16x32xbf16>, vector<8x32xf32> -> vector<8x32xf32>
    %59 = arith.addf %51, %58 : vector<8x32xf32>
    %c9_39 = arith.constant 9 : index
    %c0_40 = arith.constant 0 : index
    %60 = vector.load %arg15[%c9_39, %c0_40] : memref<24x16xf32, #tpu.memory_space<vmem>>, vector<8x16xf32>
    %c0_41 = arith.constant 0 : index
    %c6_42 = arith.constant 6 : index
    %61 = vector.load %arg10[%c0_41, %c6_42] : memref<8x9xf32, #tpu.memory_space<vmem>>, vector<8x1xf32>
    %62 = vector.broadcast %61 : vector<8x1xf32> to vector<8x16xf32>
    %63 = arith.mulf %60, %62 : vector<8x16xf32>
    %64 = arith.truncf %63 : vector<8x16xf32> to vector<8x16xbf16>
    %c96 = arith.constant 96 : index
    %c0_43 = arith.constant 0 : index
    %65 = vector.load %arg4[%c96, %c0_43] : memref<144x32xbf16, #tpu.memory_space<vmem>>, vector<16x32xbf16>
    %cst_44 = arith.constant dense<0.000000e+00> : vector<8x32xf32>
    %66 = tpu.matmul %64, %65, %cst_44 {dimension_numbers = #tpu.dot_dimension_numbers<[1], [0], [0], [1], [0, 0, 1, 1], [], []>} : vector<8x16xbf16>, vector<16x32xbf16>, vector<8x32xf32> -> vector<8x32xf32>
    %67 = arith.addf %59, %66 : vector<8x32xf32>
    %c10 = arith.constant 10 : index
    %c0_45 = arith.constant 0 : index
    %68 = vector.load %arg15[%c10, %c0_45] : memref<24x16xf32, #tpu.memory_space<vmem>>, vector<8x16xf32>
    %c0_46 = arith.constant 0 : index
    %c7_47 = arith.constant 7 : index
    %69 = vector.load %arg10[%c0_46, %c7_47] : memref<8x9xf32, #tpu.memory_space<vmem>>, vector<8x1xf32>
    %70 = vector.broadcast %69 : vector<8x1xf32> to vector<8x16xf32>
    %71 = arith.mulf %68, %70 : vector<8x16xf32>
    %72 = arith.truncf %71 : vector<8x16xf32> to vector<8x16xbf16>
    %c112 = arith.constant 112 : index
    %c0_48 = arith.constant 0 : index
    %73 = vector.load %arg4[%c112, %c0_48] : memref<144x32xbf16, #tpu.memory_space<vmem>>, vector<16x32xbf16>
    %cst_49 = arith.constant dense<0.000000e+00> : vector<8x32xf32>
    %74 = tpu.matmul %72, %73, %cst_49 {dimension_numbers = #tpu.dot_dimension_numbers<[1], [0], [0], [1], [0, 0, 1, 1], [], []>} : vector<8x16xbf16>, vector<16x32xbf16>, vector<8x32xf32> -> vector<8x32xf32>
    %75 = arith.addf %67, %74 : vector<8x32xf32>
    %c11 = arith.constant 11 : index
    %c0_50 = arith.constant 0 : index
    %76 = vector.load %arg15[%c11, %c0_50] : memref<24x16xf32, #tpu.memory_space<vmem>>, vector<8x16xf32>
    %c0_51 = arith.constant 0 : index
    %c8_52 = arith.constant 8 : index
    %77 = vector.load %arg10[%c0_51, %c8_52] : memref<8x9xf32, #tpu.memory_space<vmem>>, vector<8x1xf32>
    %78 = vector.broadcast %77 : vector<8x1xf32> to vector<8x16xf32>
    %79 = arith.mulf %76, %78 : vector<8x16xf32>
    %80 = arith.truncf %79 : vector<8x16xf32> to vector<8x16xbf16>
    %c128 = arith.constant 128 : index
    %c0_53 = arith.constant 0 : index
    %81 = vector.load %arg4[%c128, %c0_53] : memref<144x32xbf16, #tpu.memory_space<vmem>>, vector<16x32xbf16>
    %cst_54 = arith.constant dense<0.000000e+00> : vector<8x32xf32>
    %82 = tpu.matmul %80, %81, %cst_54 {dimension_numbers = #tpu.dot_dimension_numbers<[1], [0], [0], [1], [0, 0, 1, 1], [], []>} : vector<8x16xbf16>, vector<16x32xbf16>, vector<8x32xf32> -> vector<8x32xf32>
    %83 = arith.addf %75, %82 : vector<8x32xf32>
    %c0_55 = arith.constant 0 : index
    %c0_56 = arith.constant 0 : index
    %84 = vector.load %arg5[%c0_55, %c0_56] : memref<1x32xf32, #tpu.memory_space<vmem>>, vector<1x32xf32>
    %85 = vector.broadcast %84 : vector<1x32xf32> to vector<8x32xf32>
    %86 = arith.addf %83, %85 : vector<8x32xf32>
    %cst_57 = arith.constant 0.000000e+00 : f32
    %87 = vector.broadcast %cst_57 : f32 to vector<8x32xf32>
    %88 = arith.maximumf %86, %87 : vector<8x32xf32>
    %89 = arith.truncf %88 : vector<8x32xf32> to vector<8x32xbf16>
    %c0_58 = arith.constant 0 : index
    %c0_59 = arith.constant 0 : index
    %90 = vector.load %arg6[%c0_58, %c0_59] : memref<32x32xbf16, #tpu.memory_space<vmem>>, vector<32x32xbf16>
    %cst_60 = arith.constant dense<0.000000e+00> : vector<8x32xf32>
    %91 = tpu.matmul %89, %90, %cst_60 {dimension_numbers = #tpu.dot_dimension_numbers<[1], [0], [0], [1], [0, 0, 1, 1], [], []>} : vector<8x32xbf16>, vector<32x32xbf16>, vector<8x32xf32> -> vector<8x32xf32>
    %c0_61 = arith.constant 0 : index
    %c0_62 = arith.constant 0 : index
    %92 = vector.load %arg7[%c0_61, %c0_62] : memref<1x32xf32, #tpu.memory_space<vmem>>, vector<1x32xf32>
    %93 = vector.broadcast %92 : vector<1x32xf32> to vector<8x32xf32>
    %94 = arith.addf %91, %93 : vector<8x32xf32>
    %cst_63 = arith.constant 0.000000e+00 : f32
    %95 = vector.broadcast %cst_63 : f32 to vector<8x32xf32>
    %96 = arith.maximumf %94, %95 : vector<8x32xf32>
    %cst_64 = arith.constant 0.000000e+00 : f32
    %97 = vector.broadcast %cst_64 : f32 to vector<24x32xf32>
    %c0_65 = arith.constant 0 : index
    %c0_66 = arith.constant 0 : index
    %98 = vector.load %arg16[%c0_65, %c0_66] : memref<24x32xf32, #tpu.memory_space<vmem>>, vector<24x32xf32>
    tpu.vector_store %arg16[%c0_65, %c0_66], %97 {strides = array<i32>} : memref<24x32xf32, #tpu.memory_space<vmem>>, vector<24x32xf32>,
    %c8_67 = arith.constant 8 : index
    %c0_68 = arith.constant 0 : index
    %99 = vector.load %arg16[%c8_67, %c0_68] : memref<24x32xf32, #tpu.memory_space<vmem>>, vector<8x32xf32>
    tpu.vector_store %arg16[%c8_67, %c0_68], %96 {strides = array<i32>} : memref<24x32xf32, #tpu.memory_space<vmem>>, vector<8x32xf32>,
    %cst_69 = arith.constant 0.000000e+00 : f32
    %100 = vector.broadcast %cst_69 : f32 to vector<8x32xf32>
    %c5_70 = arith.constant 5 : index
    %c0_71 = arith.constant 0 : index
    %101 = vector.load %arg16[%c5_70, %c0_71] : memref<24x32xf32, #tpu.memory_space<vmem>>, vector<8x32xf32>
    %c0_72 = arith.constant 0 : index
    %c0_73 = arith.constant 0 : index
    %102 = vector.load %arg10[%c0_72, %c0_73] : memref<8x9xf32, #tpu.memory_space<vmem>>, vector<8x1xf32>
    %103 = vector.broadcast %102 : vector<8x1xf32> to vector<8x32xf32>
    %104 = arith.mulf %101, %103 : vector<8x32xf32>
    %105 = arith.truncf %104 : vector<8x32xf32> to vector<8x32xbf16>
    %c0_74 = arith.constant 0 : index
    %c0_75 = arith.constant 0 : index
    %106 = vector.load %arg8[%c0_74, %c0_75] : memref<288x32xbf16, #tpu.memory_space<vmem>>, vector<32x32xbf16>
    %cst_76 = arith.constant dense<0.000000e+00> : vector<8x32xf32>
    %107 = tpu.matmul %105, %106, %cst_76 {dimension_numbers = #tpu.dot_dimension_numbers<[1], [0], [0], [1], [0, 0, 1, 1], [], []>} : vector<8x32xbf16>, vector<32x32xbf16>, vector<8x32xf32> -> vector<8x32xf32>
    %108 = arith.addf %100, %107 : vector<8x32xf32>
    %c6_77 = arith.constant 6 : index
    %c0_78 = arith.constant 0 : index
    %109 = vector.load %arg16[%c6_77, %c0_78] : memref<24x32xf32, #tpu.memory_space<vmem>>, vector<8x32xf32>
    %c0_79 = arith.constant 0 : index
    %c1_80 = arith.constant 1 : index
    %110 = vector.load %arg10[%c0_79, %c1_80] : memref<8x9xf32, #tpu.memory_space<vmem>>, vector<8x1xf32>
    %111 = vector.broadcast %110 : vector<8x1xf32> to vector<8x32xf32>
    %112 = arith.mulf %109, %111 : vector<8x32xf32>
    %113 = arith.truncf %112 : vector<8x32xf32> to vector<8x32xbf16>
    %c32_81 = arith.constant 32 : index
    %c0_82 = arith.constant 0 : index
    %114 = vector.load %arg8[%c32_81, %c0_82] : memref<288x32xbf16, #tpu.memory_space<vmem>>, vector<32x32xbf16>
    %cst_83 = arith.constant dense<0.000000e+00> : vector<8x32xf32>
    %115 = tpu.matmul %113, %114, %cst_83 {dimension_numbers = #tpu.dot_dimension_numbers<[1], [0], [0], [1], [0, 0, 1, 1], [], []>} : vector<8x32xbf16>, vector<32x32xbf16>, vector<8x32xf32> -> vector<8x32xf32>
    %116 = arith.addf %108, %115 : vector<8x32xf32>
    %c7_84 = arith.constant 7 : index
    %c0_85 = arith.constant 0 : index
    %117 = vector.load %arg16[%c7_84, %c0_85] : memref<24x32xf32, #tpu.memory_space<vmem>>, vector<8x32xf32>
    %c0_86 = arith.constant 0 : index
    %c2_87 = arith.constant 2 : index
    %118 = vector.load %arg10[%c0_86, %c2_87] : memref<8x9xf32, #tpu.memory_space<vmem>>, vector<8x1xf32>
    %119 = vector.broadcast %118 : vector<8x1xf32> to vector<8x32xf32>
    %120 = arith.mulf %117, %119 : vector<8x32xf32>
    %121 = arith.truncf %120 : vector<8x32xf32> to vector<8x32xbf16>
    %c64_88 = arith.constant 64 : index
    %c0_89 = arith.constant 0 : index
    %122 = vector.load %arg8[%c64_88, %c0_89] : memref<288x32xbf16, #tpu.memory_space<vmem>>, vector<32x32xbf16>
    %cst_90 = arith.constant dense<0.000000e+00> : vector<8x32xf32>
    %123 = tpu.matmul %121, %122, %cst_90 {dimension_numbers = #tpu.dot_dimension_numbers<[1], [0], [0], [1], [0, 0, 1, 1], [], []>} : vector<8x32xbf16>, vector<32x32xbf16>, vector<8x32xf32> -> vector<8x32xf32>
    %124 = arith.addf %116, %123 : vector<8x32xf32>
    %c7_91 = arith.constant 7 : index
    %c0_92 = arith.constant 0 : index
    %125 = vector.load %arg16[%c7_91, %c0_92] : memref<24x32xf32, #tpu.memory_space<vmem>>, vector<8x32xf32>
    %c0_93 = arith.constant 0 : index
    %c3_94 = arith.constant 3 : index
    %126 = vector.load %arg10[%c0_93, %c3_94] : memref<8x9xf32, #tpu.memory_space<vmem>>, vector<8x1xf32>
    %127 = vector.broadcast %126 : vector<8x1xf32> to vector<8x32xf32>
    %128 = arith.mulf %125, %127 : vector<8x32xf32>
    %129 = arith.truncf %128 : vector<8x32xf32> to vector<8x32xbf16>
    %c96_95 = arith.constant 96 : index
    %c0_96 = arith.constant 0 : index
    %130 = vector.load %arg8[%c96_95, %c0_96] : memref<288x32xbf16, #tpu.memory_space<vmem>>, vector<32x32xbf16>
    %cst_97 = arith.constant dense<0.000000e+00> : vector<8x32xf32>
    %131 = tpu.matmul %129, %130, %cst_97 {dimension_numbers = #tpu.dot_dimension_numbers<[1], [0], [0], [1], [0, 0, 1, 1], [], []>} : vector<8x32xbf16>, vector<32x32xbf16>, vector<8x32xf32> -> vector<8x32xf32>
    %132 = arith.addf %124, %131 : vector<8x32xf32>
    %c8_98 = arith.constant 8 : index
    %c0_99 = arith.constant 0 : index
    %133 = vector.load %arg16[%c8_98, %c0_99] : memref<24x32xf32, #tpu.memory_space<vmem>>, vector<8x32xf32>
    %c0_100 = arith.constant 0 : index
    %c4_101 = arith.constant 4 : index
    %134 = vector.load %arg10[%c0_100, %c4_101] : memref<8x9xf32, #tpu.memory_space<vmem>>, vector<8x1xf32>
    %135 = vector.broadcast %134 : vector<8x1xf32> to vector<8x32xf32>
    %136 = arith.mulf %133, %135 : vector<8x32xf32>
    %137 = arith.truncf %136 : vector<8x32xf32> to vector<8x32xbf16>
    %c128_102 = arith.constant 128 : index
    %c0_103 = arith.constant 0 : index
    %138 = vector.load %arg8[%c128_102, %c0_103] : memref<288x32xbf16, #tpu.memory_space<vmem>>, vector<32x32xbf16>
    %cst_104 = arith.constant dense<0.000000e+00> : vector<8x32xf32>
    %139 = tpu.matmul %137, %138, %cst_104 {dimension_numbers = #tpu.dot_dimension_numbers<[1], [0], [0], [1], [0, 0, 1, 1], [], []>} : vector<8x32xbf16>, vector<32x32xbf16>, vector<8x32xf32> -> vector<8x32xf32>
    %140 = arith.addf %132, %139 : vector<8x32xf32>
    %c9_105 = arith.constant 9 : index
    %c0_106 = arith.constant 0 : index
    %141 = vector.load %arg16[%c9_105, %c0_106] : memref<24x32xf32, #tpu.memory_space<vmem>>, vector<8x32xf32>
    %c0_107 = arith.constant 0 : index
    %c5_108 = arith.constant 5 : index
    %142 = vector.load %arg10[%c0_107, %c5_108] : memref<8x9xf32, #tpu.memory_space<vmem>>, vector<8x1xf32>
    %143 = vector.broadcast %142 : vector<8x1xf32> to vector<8x32xf32>
    %144 = arith.mulf %141, %143 : vector<8x32xf32>
    %145 = arith.truncf %144 : vector<8x32xf32> to vector<8x32xbf16>
    %c160 = arith.constant 160 : index
    %c0_109 = arith.constant 0 : index
    %146 = vector.load %arg8[%c160, %c0_109] : memref<288x32xbf16, #tpu.memory_space<vmem>>, vector<32x32xbf16>
    %cst_110 = arith.constant dense<0.000000e+00> : vector<8x32xf32>
    %147 = tpu.matmul %145, %146, %cst_110 {dimension_numbers = #tpu.dot_dimension_numbers<[1], [0], [0], [1], [0, 0, 1, 1], [], []>} : vector<8x32xbf16>, vector<32x32xbf16>, vector<8x32xf32> -> vector<8x32xf32>
    %148 = arith.addf %140, %147 : vector<8x32xf32>
    %c9_111 = arith.constant 9 : index
    %c0_112 = arith.constant 0 : index
    %149 = vector.load %arg16[%c9_111, %c0_112] : memref<24x32xf32, #tpu.memory_space<vmem>>, vector<8x32xf32>
    %c0_113 = arith.constant 0 : index
    %c6_114 = arith.constant 6 : index
    %150 = vector.load %arg10[%c0_113, %c6_114] : memref<8x9xf32, #tpu.memory_space<vmem>>, vector<8x1xf32>
    %151 = vector.broadcast %150 : vector<8x1xf32> to vector<8x32xf32>
    %152 = arith.mulf %149, %151 : vector<8x32xf32>
    %153 = arith.truncf %152 : vector<8x32xf32> to vector<8x32xbf16>
    %c192 = arith.constant 192 : index
    %c0_115 = arith.constant 0 : index
    %154 = vector.load %arg8[%c192, %c0_115] : memref<288x32xbf16, #tpu.memory_space<vmem>>, vector<32x32xbf16>
    %cst_116 = arith.constant dense<0.000000e+00> : vector<8x32xf32>
    %155 = tpu.matmul %153, %154, %cst_116 {dimension_numbers = #tpu.dot_dimension_numbers<[1], [0], [0], [1], [0, 0, 1, 1], [], []>} : vector<8x32xbf16>, vector<32x32xbf16>, vector<8x32xf32> -> vector<8x32xf32>
    %156 = arith.addf %148, %155 : vector<8x32xf32>
    %c10_117 = arith.constant 10 : index
    %c0_118 = arith.constant 0 : index
    %157 = vector.load %arg16[%c10_117, %c0_118] : memref<24x32xf32, #tpu.memory_space<vmem>>, vector<8x32xf32>
    %c0_119 = arith.constant 0 : index
    %c7_120 = arith.constant 7 : index
    %158 = vector.load %arg10[%c0_119, %c7_120] : memref<8x9xf32, #tpu.memory_space<vmem>>, vector<8x1xf32>
    %159 = vector.broadcast %158 : vector<8x1xf32> to vector<8x32xf32>
    %160 = arith.mulf %157, %159 : vector<8x32xf32>
    %161 = arith.truncf %160 : vector<8x32xf32> to vector<8x32xbf16>
    %c224 = arith.constant 224 : index
    %c0_121 = arith.constant 0 : index
    %162 = vector.load %arg8[%c224, %c0_121] : memref<288x32xbf16, #tpu.memory_space<vmem>>, vector<32x32xbf16>
    %cst_122 = arith.constant dense<0.000000e+00> : vector<8x32xf32>
    %163 = tpu.matmul %161, %162, %cst_122 {dimension_numbers = #tpu.dot_dimension_numbers<[1], [0], [0], [1], [0, 0, 1, 1], [], []>} : vector<8x32xbf16>, vector<32x32xbf16>, vector<8x32xf32> -> vector<8x32xf32>
    %164 = arith.addf %156, %163 : vector<8x32xf32>
    %c11_123 = arith.constant 11 : index
    %c0_124 = arith.constant 0 : index
    %165 = vector.load %arg16[%c11_123, %c0_124] : memref<24x32xf32, #tpu.memory_space<vmem>>, vector<8x32xf32>
    %c0_125 = arith.constant 0 : index
    %c8_126 = arith.constant 8 : index
    %166 = vector.load %arg10[%c0_125, %c8_126] : memref<8x9xf32, #tpu.memory_space<vmem>>, vector<8x1xf32>
    %167 = vector.broadcast %166 : vector<8x1xf32> to vector<8x32xf32>
    %168 = arith.mulf %165, %167 : vector<8x32xf32>
    %169 = arith.truncf %168 : vector<8x32xf32> to vector<8x32xbf16>
    %c256 = arith.constant 256 : index
    %c0_127 = arith.constant 0 : index
    %170 = vector.load %arg8[%c256, %c0_127] : memref<288x32xbf16, #tpu.memory_space<vmem>>, vector<32x32xbf16>
    %cst_128 = arith.constant dense<0.000000e+00> : vector<8x32xf32>
    %171 = tpu.matmul %169, %170, %cst_128 {dimension_numbers = #tpu.dot_dimension_numbers<[1], [0], [0], [1], [0, 0, 1, 1], [], []>} : vector<8x32xbf16>, vector<32x32xbf16>, vector<8x32xf32> -> vector<8x32xf32>
    %172 = arith.addf %164, %171 : vector<8x32xf32>
    %c0_129 = arith.constant 0 : index
    %c0_130 = arith.constant 0 : index
    %173 = vector.load %arg9[%c0_129, %c0_130] : memref<1x32xf32, #tpu.memory_space<vmem>>, vector<1x32xf32>
    %174 = vector.broadcast %173 : vector<1x32xf32> to vector<8x32xf32>
    %175 = arith.addf %172, %174 : vector<8x32xf32>
    %176 = vector.extract_strided_slice %175 {offsets = [0, 0], sizes = [8, 16], strides = [1, 1]} : vector<8x32xf32> to vector<8x16xf32>
    %177 = vector.extract_strided_slice %175 {offsets = [0, 16], sizes = [8, 16], strides = [1, 1]} : vector<8x32xf32> to vector<8x16xf32>
    %cst_131 = arith.constant 0.000000e+00 : f32
    %178 = vector.broadcast %cst_131 : f32 to vector<8x16xf32>
    %179 = arith.addf %177, %178 : vector<8x16xf32>
    %cst_132 = arith.constant 5.000000e-01 : f32
    %180 = vector.broadcast %cst_132 : f32 to vector<8x16xf32>
    %181 = arith.mulf %180, %179 : vector<8x16xf32>
    %182 = math.tanh %181 : vector<8x16xf32>
    %cst_133 = arith.constant 1.000000e+00 : f32
    %183 = vector.broadcast %cst_133 : f32 to vector<8x16xf32>
    %184 = arith.addf %182, %183 : vector<8x16xf32>
    %cst_134 = arith.constant 5.000000e-01 : f32
    %185 = vector.broadcast %cst_134 : f32 to vector<8x16xf32>
    %186 = arith.mulf %185, %184 : vector<8x16xf32>
    %cst_135 = arith.constant 1.000000e-03 : f32
    %187 = vector.broadcast %cst_135 : f32 to vector<8x16xf32>
    %188 = arith.addf %186, %187 : vector<8x16xf32>
    %189 = arith.addf %7, %176 : vector<8x16xf32>
    %190 = arith.mulf %189, %188 : vector<8x16xf32>
    %191 = tpu.concatenate %6, %190 in 1 : vector<8x16xf32>, vector<8x16xf32> -> vector<8x32xf32>
    %c0_136 = arith.constant 0 : index
    %c0_137 = arith.constant 0 : index
    %192 = vector.load %arg12[%c0_136, %c0_137] : memref<8x32xf32, #tpu.memory_space<vmem>>, vector<8x32xf32>
    tpu.vector_store %arg12[%c0_136, %c0_137], %191 {strides = array<i32>} : memref<8x32xf32, #tpu.memory_space<vmem>>, vector<8x32xf32>,
    %c0_138 = arith.constant 0 : index
    %c0_139 = arith.constant 0 : index
    %193 = vector.load %arg11[%c0_138, %c0_139] : memref<2x8xf32, #tpu.memory_space<vmem>>, vector<2x8xf32>
    %194 = math.log %188 : vector<8x16xf32>
    %cst_140 = arith.constant dense<0.000000e+00> : vector<2x16xf32>
    %195 = tpu.matmul %193, %194, %cst_140 {dimension_numbers = #tpu.dot_dimension_numbers<[1], [0], [0], [1], [0, 0, 1, 1], [], []>} : vector<2x8xf32>, vector<8x16xf32>, vector<2x16xf32> -> vector<2x16xf32>
    %cst_141 = arith.constant dense<0.000000e+00> : vector<2xf32>
    %196 = vector.multi_reduction <add>, %195, %cst_141 [1] : vector<2x16xf32> to vector<2xf32>
    %197 = vector.shape_cast %196 : vector<2xf32> to vector<2x1xf32>
    %c0_142 = arith.constant 0 : index
    %c0_143 = arith.constant 0 : index
    %198 = vector.load %arg13[%c0_142, %c0_143] : memref<2x1xf32, #tpu.memory_space<vmem>>, vector<2x1xf32>
    tpu.vector_store %arg13[%c0_142, %c0_143], %197 {strides = array<i32>} : memref<2x1xf32, #tpu.memory_space<vmem>>, vector<2x1xf32>,
    %199 = arith.mulf %191, %191 : vector<8x32xf32>
    %cst_144 = arith.constant dense<0.000000e+00> : vector<2x32xf32>
    %200 = tpu.matmul %193, %199, %cst_144 {dimension_numbers = #tpu.dot_dimension_numbers<[1], [0], [0], [1], [0, 0, 1, 1], [], []>} : vector<2x8xf32>, vector<8x32xf32>, vector<2x32xf32> -> vector<2x32xf32>
    %cst_145 = arith.constant dense<0.000000e+00> : vector<2xf32>
    %201 = vector.multi_reduction <add>, %200, %cst_145 [1] : vector<2x32xf32> to vector<2xf32>
    %202 = vector.shape_cast %201 : vector<2xf32> to vector<2x1xf32>
    %cst_146 = arith.constant -5.000000e-01 : f32
    %203 = vector.broadcast %cst_146 : f32 to vector<2x1xf32>
    %204 = arith.mulf %203, %202 : vector<2x1xf32>
    %c0_147 = arith.constant 0 : index
    %c0_148 = arith.constant 0 : index
    %205 = vector.load %arg14[%c0_147, %c0_148] : memref<2x1xf32, #tpu.memory_space<vmem>>, vector<2x1xf32>
    tpu.vector_store %arg14[%c0_147, %c0_148], %204 {strides = array<i32>} : memref<2x1xf32, #tpu.memory_space<vmem>>, vector<2x1xf32>,
    return
  }
  func.func @transform_0(%arg0: i32) -> (i32, i32) {
    %c0_i32 = arith.constant 0 : i32
    %c0_i32_0 = arith.constant 0 : i32
    %c0_i32_1 = arith.constant 0 : i32
    return %c0_i32, %c0_i32_0 : i32, i32
  }
  func.func @transform_1(%arg0: i32) -> (i32, i32) {
    %c0_i32 = arith.constant 0 : i32
    %c0_i32_0 = arith.constant 0 : i32
    %c0_i32_1 = arith.constant 0 : i32
    return %c0_i32, %c0_i32_0 : i32, i32
  }
  func.func @transform_2(%arg0: i32) -> (i32, i32) {
    %c0_i32 = arith.constant 0 : i32
    %c0_i32_0 = arith.constant 0 : i32
    %c0_i32_1 = arith.constant 0 : i32
    return %c0_i32, %c0_i32_0 : i32, i32
  }
  func.func @transform_3(%arg0: i32) -> (i32, i32) {
    %c0_i32 = arith.constant 0 : i32
    %c0_i32_0 = arith.constant 0 : i32
    %c0_i32_1 = arith.constant 0 : i32
    return %c0_i32, %c0_i32_0 : i32, i32
  }
  func.func @transform_4(%arg0: i32) -> (i32, i32) {
    %c0_i32 = arith.constant 0 : i32
    %c0_i32_0 = arith.constant 0 : i32
    %c0_i32_1 = arith.constant 0 : i32
    return %c0_i32, %c0_i32_0 : i32, i32
  }
  func.func @transform_5(%arg0: i32) -> (i32, i32) {
    %c0_i32 = arith.constant 0 : i32
    %c0_i32_0 = arith.constant 0 : i32
    %c0_i32_1 = arith.constant 0 : i32
    return %c0_i32, %c0_i32_0 : i32, i32
  }
  func.func @transform_6(%arg0: i32) -> (i32, i32) {
    %c0_i32 = arith.constant 0 : i32
    %c0_i32_0 = arith.constant 0 : i32
    %c0_i32_1 = arith.constant 0 : i32
    return %c0_i32, %c0_i32_0 : i32, i32
  }
  func.func @transform_7(%arg0: i32) -> (i32, i32) {
    %c0_i32 = arith.constant 0 : i32
    %c0_i32_0 = arith.constant 0 : i32
    %c0_i32_1 = arith.constant 0 : i32
    return %c0_i32, %c0_i32_0 : i32, i32
  }
  func.func @transform_8(%arg0: i32) -> (i32, i32) {
    %c0_i32 = arith.constant 0 : i32
    %c0_i32_0 = arith.constant 0 : i32
    %c0_i32_1 = arith.constant 0 : i32
    return %c0_i32, %c0_i32_0 : i32, i32
  }
  func.func @transform_9(%arg0: i32) -> (i32, i32) {
    %c0_i32 = arith.constant 0 : i32
    %c0_i32_0 = arith.constant 0 : i32
    %c0_i32_1 = arith.constant 0 : i32
    return %c0_i32, %c0_i32_0 : i32, i32
  }
  func.func @transform_10(%arg0: i32) -> (i32, i32) {
    %c0_i32 = arith.constant 0 : i32
    %c0_i32_0 = arith.constant 0 : i32
    %c0_i32_1 = arith.constant 0 : i32
    return %c0_i32, %c0_i32_0 : i32, i32
  }
  func.func @transform_11(%arg0: i32) -> (i32, i32) {
    %c0_i32 = arith.constant 0 : i32
    %c0_i32_0 = arith.constant 0 : i32
    %c0_i32_1 = arith.constant 0 : i32
    return %c0_i32, %c0_i32_0 : i32, i32
  }
  func.func @transform_12(%arg0: i32) -> (i32, i32) {
    %c0_i32 = arith.constant 0 : i32
    %c0_i32_0 = arith.constant 0 : i32
    %c0_i32_1 = arith.constant 0 : i32
    return %c0_i32, %c0_i32_0 : i32, i32
  }
  func.func @transform_13(%arg0: i32) -> (i32, i32) {
    %c0_i32 = arith.constant 0 : i32
    %c0_i32_0 = arith.constant 0 : i32
    %c0_i32_1 = arith.constant 0 : i32
    return %c0_i32, %c0_i32_0 : i32, i32
  }
}

module attributes {stable_mosaic.version = 11 : i64} {
  func.func @_flowstep_kernel(%arg0: i32, %arg1: memref<8x32xf32, #tpu.memory_space<vmem>>, %arg2: memref<32x32xf32, #tpu.memory_space<vmem>>, %arg3: memref<1x32xf32, #tpu.memory_space<vmem>>, %arg4: memref<144x32xbf16, #tpu.memory_space<vmem>>, %arg5: memref<1x32xf32, #tpu.memory_space<vmem>>, %arg6: memref<32x32xbf16, #tpu.memory_space<vmem>>, %arg7: memref<1x32xf32, #tpu.memory_space<vmem>>, %arg8: memref<288x32xbf16, #tpu.memory_space<vmem>>, %arg9: memref<1x32xf32, #tpu.memory_space<vmem>>, %arg10: memref<8x9xf32, #tpu.memory_space<vmem>>, %arg11: memref<2x8xf32, #tpu.memory_space<vmem>>, %arg12: memref<8x32xf32, #tpu.memory_space<vmem>>, %arg13: memref<2x1xf32, #tpu.memory_space<vmem>>, %arg14: memref<2x1xf32, #tpu.memory_space<vmem>>, %arg15: memref<24x16xf32, #tpu.memory_space<vmem>>, %arg16: memref<24x32xf32, #tpu.memory_space<vmem>>) attributes {dimension_semantics = [#tpu.dimension_semantics<arbitrary>], iteration_bounds = array<i64: 1>, scalar_prefetch = 0 : i64, scratch_operands = 2 : i64, tpu.core_type = #tpu.core_type<tc>, window_params = [{pipeline_mode = #tpu.pipeline_mode<synchronous>, transform_indices = @transform_0, window_bounds = array<i64: 8, 32>}, {pipeline_mode = #tpu.pipeline_mode<synchronous>, transform_indices = @transform_1, window_bounds = array<i64: 32, 32>}, {pipeline_mode = #tpu.pipeline_mode<synchronous>, transform_indices = @transform_2, window_bounds = array<i64: 1, 32>}, {pipeline_mode = #tpu.pipeline_mode<synchronous>, transform_indices = @transform_3, window_bounds = array<i64: 144, 32>}, {pipeline_mode = #tpu.pipeline_mode<synchronous>, transform_indices = @transform_4, window_bounds = array<i64: 1, 32>}, {pipeline_mode = #tpu.pipeline_mode<synchronous>, transform_indices = @transform_5, window_bounds = array<i64: 32, 32>}, {pipeline_mode = #tpu.pipeline_mode<synchronous>, transform_indices = @transform_6, window_bounds = array<i64: 1, 32>}, {pipeline_mode = #tpu.pipeline_mode<synchronous>, transform_indices = @transform_7, window_bounds = array<i64: 288, 32>}, {pipeline_mode = #tpu.pipeline_mode<synchronous>, transform_indices = @transform_8, window_bounds = array<i64: 1, 32>}, {pipeline_mode = #tpu.pipeline_mode<synchronous>, transform_indices = @transform_9, window_bounds = array<i64: 8, 9>}, {pipeline_mode = #tpu.pipeline_mode<synchronous>, transform_indices = @transform_10, window_bounds = array<i64: 2, 8>}, {pipeline_mode = #tpu.pipeline_mode<synchronous>, transform_indices = @transform_11, window_bounds = array<i64: 8, 32>}, {pipeline_mode = #tpu.pipeline_mode<synchronous>, transform_indices = @transform_12, window_bounds = array<i64: 2, 1>}, {pipeline_mode = #tpu.pipeline_mode<synchronous>, transform_indices = @transform_13, window_bounds = array<i64: 2, 1>}]} {
    %c0 = arith.constant 0 : index
    %c0_0 = arith.constant 0 : index
    %0 = vector.load %arg1[%c0, %c0_0] : memref<8x32xf32, #tpu.memory_space<vmem>>, vector<8x32xf32>
    %c0_1 = arith.constant 0 : index
    %c0_2 = arith.constant 0 : index
    %1 = vector.load %arg2[%c0_1, %c0_2] : memref<32x32xf32, #tpu.memory_space<vmem>>, vector<32x32xf32>
    %cst = arith.constant dense<0.000000e+00> : vector<8x32xf32>
    %2 = tpu.matmul %0, %1, %cst {dimension_numbers = #tpu.dot_dimension_numbers<[1], [0], [0], [1], [0, 0, 1, 1], [], []>} : vector<8x32xf32>, vector<32x32xf32>, vector<8x32xf32> -> vector<8x32xf32>
    %c0_3 = arith.constant 0 : index
    %c0_4 = arith.constant 0 : index
    %3 = vector.load %arg3[%c0_3, %c0_4] : memref<1x32xf32, #tpu.memory_space<vmem>>, vector<1x32xf32>
    %4 = vector.broadcast %3 : vector<1x32xf32> to vector<8x32xf32>
    %5 = arith.addf %2, %4 : vector<8x32xf32>
    %6 = vector.extract_strided_slice %5 {offsets = [0, 0], sizes = [8, 16], strides = [1, 1]} : vector<8x32xf32> to vector<8x16xf32>
    %7 = vector.extract_strided_slice %5 {offsets = [0, 16], sizes = [8, 16], strides = [1, 1]} : vector<8x32xf32> to vector<8x16xf32>
    %cst_5 = arith.constant 0.000000e+00 : f32
    %8 = vector.broadcast %cst_5 : f32 to vector<24x16xf32>
    %c0_6 = arith.constant 0 : index
    %c0_7 = arith.constant 0 : index
    %9 = vector.load %arg15[%c0_6, %c0_7] : memref<24x16xf32, #tpu.memory_space<vmem>>, vector<24x16xf32>
    tpu.vector_store %arg15[%c0_6, %c0_7], %8 {strides = array<i32>} : memref<24x16xf32, #tpu.memory_space<vmem>>, vector<24x16xf32>,
    %c8 = arith.constant 8 : index
    %c0_8 = arith.constant 0 : index
    %10 = vector.load %arg15[%c8, %c0_8] : memref<24x16xf32, #tpu.memory_space<vmem>>, vector<8x16xf32>
    tpu.vector_store %arg15[%c8, %c0_8], %6 {strides = array<i32>} : memref<24x16xf32, #tpu.memory_space<vmem>>, vector<8x16xf32>,
    %cst_9 = arith.constant 0.000000e+00 : f32
    %11 = vector.broadcast %cst_9 : f32 to vector<8x32xf32>
    %c5 = arith.constant 5 : index
    %c0_10 = arith.constant 0 : index
    %12 = vector.load %arg15[%c5, %c0_10] : memref<24x16xf32, #tpu.memory_space<vmem>>, vector<8x16xf32>
    %c0_11 = arith.constant 0 : index
    %c0_12 = arith.constant 0 : index
    %13 = vector.load %arg10[%c0_11, %c0_12] : memref<8x9xf32, #tpu.memory_space<vmem>>, vector<8x1xf32>
    %14 = vector.broadcast %13 : vector<8x1xf32> to vector<8x16xf32>
    %15 = arith.mulf %12, %14 : vector<8x16xf32>
    %16 = arith.truncf %15 : vector<8x16xf32> to vector<8x16xbf16>
    %c0_13 = arith.constant 0 : index
    %c0_14 = arith.constant 0 : index
    %17 = vector.load %arg4[%c0_13, %c0_14] : memref<144x32xbf16, #tpu.memory_space<vmem>>, vector<16x32xbf16>
    %cst_15 = arith.constant dense<0.000000e+00> : vector<8x32xf32>
    %18 = tpu.matmul %16, %17, %cst_15 {dimension_numbers = #tpu.dot_dimension_numbers<[1], [0], [0], [1], [0, 0, 1, 1], [], []>} : vector<8x16xbf16>, vector<16x32xbf16>, vector<8x32xf32> -> vector<8x32xf32>
    %19 = arith.addf %11, %18 : vector<8x32xf32>
    %c6 = arith.constant 6 : index
    %c0_16 = arith.constant 0 : index
    %20 = vector.load %arg15[%c6, %c0_16] : memref<24x16xf32, #tpu.memory_space<vmem>>, vector<8x16xf32>
    %c0_17 = arith.constant 0 : index
    %c1 = arith.constant 1 : index
    %21 = vector.load %arg10[%c0_17, %c1] : memref<8x9xf32, #tpu.memory_space<vmem>>, vector<8x1xf32>
    %22 = vector.broadcast %21 : vector<8x1xf32> to vector<8x16xf32>
    %23 = arith.mulf %20, %22 : vector<8x16xf32>
    %24 = arith.truncf %23 : vector<8x16xf32> to vector<8x16xbf16>
    %c16 = arith.constant 16 : index
    %c0_18 = arith.constant 0 : index
    %25 = vector.load %arg4[%c16, %c0_18] : memref<144x32xbf16, #tpu.memory_space<vmem>>, vector<16x32xbf16>
    %cst_19 = arith.constant dense<0.000000e+00> : vector<8x32xf32>
    %26 = tpu.matmul %24, %25, %cst_19 {dimension_numbers = #tpu.dot_dimension_numbers<[1], [0], [0], [1], [0, 0, 1, 1], [], []>} : vector<8x16xbf16>, vector<16x32xbf16>, vector<8x32xf32> -> vector<8x32xf32>
    %27 = arith.addf %19, %26 : vector<8x32xf32>
    %c7 = arith.constant 7 : index
    %c0_20 = arith.constant 0 : index
    %28 = vector.load %arg15[%c7, %c0_20] : memref<24x16xf32, #tpu.memory_space<vmem>>, vector<8x16xf32>
    %c0_21 = arith.constant 0 : index
    %c2 = arith.constant 2 : index
    %29 = vector.load %arg10[%c0_21, %c2] : memref<8x9xf32, #tpu.memory_space<vmem>>, vector<8x1xf32>
    %30 = vector.broadcast %29 : vector<8x1xf32> to vector<8x16xf32>
    %31 = arith.mulf %28, %30 : vector<8x16xf32>
    %32 = arith.truncf %31 : vector<8x16xf32> to vector<8x16xbf16>
    %c32 = arith.constant 32 : index
    %c0_22 = arith.constant 0 : index
    %33 = vector.load %arg4[%c32, %c0_22] : memref<144x32xbf16, #tpu.memory_space<vmem>>, vector<16x32xbf16>
    %cst_23 = arith.constant dense<0.000000e+00> : vector<8x32xf32>
    %34 = tpu.matmul %32, %33, %cst_23 {dimension_numbers = #tpu.dot_dimension_numbers<[1], [0], [0], [1], [0, 0, 1, 1], [], []>} : vector<8x16xbf16>, vector<16x32xbf16>, vector<8x32xf32> -> vector<8x32xf32>
    %35 = arith.addf %27, %34 : vector<8x32xf32>
    %c7_24 = arith.constant 7 : index
    %c0_25 = arith.constant 0 : index
    %36 = vector.load %arg15[%c7_24, %c0_25] : memref<24x16xf32, #tpu.memory_space<vmem>>, vector<8x16xf32>
    %c0_26 = arith.constant 0 : index
    %c3 = arith.constant 3 : index
    %37 = vector.load %arg10[%c0_26, %c3] : memref<8x9xf32, #tpu.memory_space<vmem>>, vector<8x1xf32>
    %38 = vector.broadcast %37 : vector<8x1xf32> to vector<8x16xf32>
    %39 = arith.mulf %36, %38 : vector<8x16xf32>
    %40 = arith.truncf %39 : vector<8x16xf32> to vector<8x16xbf16>
    %c48 = arith.constant 48 : index
    %c0_27 = arith.constant 0 : index
    %41 = vector.load %arg4[%c48, %c0_27] : memref<144x32xbf16, #tpu.memory_space<vmem>>, vector<16x32xbf16>
    %cst_28 = arith.constant dense<0.000000e+00> : vector<8x32xf32>
    %42 = tpu.matmul %40, %41, %cst_28 {dimension_numbers = #tpu.dot_dimension_numbers<[1], [0], [0], [1], [0, 0, 1, 1], [], []>} : vector<8x16xbf16>, vector<16x32xbf16>, vector<8x32xf32> -> vector<8x32xf32>
    %43 = arith.addf %35, %42 : vector<8x32xf32>
    %c8_29 = arith.constant 8 : index
    %c0_30 = arith.constant 0 : index
    %44 = vector.load %arg15[%c8_29, %c0_30] : memref<24x16xf32, #tpu.memory_space<vmem>>, vector<8x16xf32>
    %c0_31 = arith.constant 0 : index
    %c4 = arith.constant 4 : index
    %45 = vector.load %arg10[%c0_31, %c4] : memref<8x9xf32, #tpu.memory_space<vmem>>, vector<8x1xf32>
    %46 = vector.broadcast %45 : vector<8x1xf32> to vector<8x16xf32>
    %47 = arith.mulf %44, %46 : vector<8x16xf32>
    %48 = arith.truncf %47 : vector<8x16xf32> to vector<8x16xbf16>
    %c64 = arith.constant 64 : index
    %c0_32 = arith.constant 0 : index
    %49 = vector.load %arg4[%c64, %c0_32] : memref<144x32xbf16, #tpu.memory_space<vmem>>, vector<16x32xbf16>
    %cst_33 = arith.constant dense<0.000000e+00> : vector<8x32xf32>
    %50 = tpu.matmul %48, %49, %cst_33 {dimension_numbers = #tpu.dot_dimension_numbers<[1], [0], [0], [1], [0, 0, 1, 1], [], []>} : vector<8x16xbf16>, vector<16x32xbf16>, vector<8x32xf32> -> vector<8x32xf32>
    %51 = arith.addf %43, %50 : vector<8x32xf32>
    %c9 = arith.constant 9 : index
    %c0_34 = arith.constant 0 : index
    %52 = vector.load %arg15[%c9, %c0_34] : memref<24x16xf32, #tpu.memory_space<vmem>>, vector<8x16xf32>
    %c0_35 = arith.constant 0 : index
    %c5_36 = arith.constant 5 : index
    %53 = vector.load %arg10[%c0_35, %c5_36] : memref<8x9xf32, #tpu.memory_space<vmem>>, vector<8x1xf32>
    %54 = vector.broadcast %53 : vector<8x1xf32> to vector<8x16xf32>
    %55 = arith.mulf %52, %54 : vector<8x16xf32>
    %56 = arith.truncf %55 : vector<8x16xf32> to vector<8x16xbf16>
    %c80 = arith.constant 80 : index
    %c0_37 = arith.constant 0 : index
    %57 = vector.load %arg4[%c80, %c0_37] : memref<144x32xbf16, #tpu.memory_space<vmem>>, vector<16x32xbf16>
    %cst_38 = arith.constant dense<0.000000e+00> : vector<8x32xf32>
    %58 = tpu.matmul %56, %57, %cst_38 {dimension_numbers = #tpu.dot_dimension_numbers<[1], [0], [0], [1], [0, 0, 1, 1], [], []>} : vector<8x16xbf16>, vector<16x32xbf16>, vector<8x32xf32> -> vector<8x32xf32>
    %59 = arith.addf %51, %58 : vector<8x32xf32>
    %c9_39 = arith.constant 9 : index
    %c0_40 = arith.constant 0 : index
    %60 = vector.load %arg15[%c9_39, %c0_40] : memref<24x16xf32, #tpu.memory_space<vmem>>, vector<8x16xf32>
    %c0_41 = arith.constant 0 : index
    %c6_42 = arith.constant 6 : index
    %61 = vector.load %arg10[%c0_41, %c6_42] : memref<8x9xf32, #tpu.memory_space<vmem>>, vector<8x1xf32>
    %62 = vector.broadcast %61 : vector<8x1xf32> to vector<8x16xf32>
    %63 = arith.mulf %60, %62 : vector<8x16xf32>
    %64 = arith.truncf %63 : vector<8x16xf32> to vector<8x16xbf16>
    %c96 = arith.constant 96 : index
    %c0_43 = arith.constant 0 : index
    %65 = vector.load %arg4[%c96, %c0_43] : memref<144x32xbf16, #tpu.memory_space<vmem>>, vector<16x32xbf16>
    %cst_44 = arith.constant dense<0.000000e+00> : vector<8x32xf32>
    %66 = tpu.matmul %64, %65, %cst_44 {dimension_numbers = #tpu.dot_dimension_numbers<[1], [0], [0], [1], [0, 0, 1, 1], [], []>} : vector<8x16xbf16>, vector<16x32xbf16>, vector<8x32xf32> -> vector<8x32xf32>
    %67 = arith.addf %59, %66 : vector<8x32xf32>
    %c10 = arith.constant 10 : index
    %c0_45 = arith.constant 0 : index
    %68 = vector.load %arg15[%c10, %c0_45] : memref<24x16xf32, #tpu.memory_space<vmem>>, vector<8x16xf32>
    %c0_46 = arith.constant 0 : index
    %c7_47 = arith.constant 7 : index
    %69 = vector.load %arg10[%c0_46, %c7_47] : memref<8x9xf32, #tpu.memory_space<vmem>>, vector<8x1xf32>
    %70 = vector.broadcast %69 : vector<8x1xf32> to vector<8x16xf32>
    %71 = arith.mulf %68, %70 : vector<8x16xf32>
    %72 = arith.truncf %71 : vector<8x16xf32> to vector<8x16xbf16>
    %c112 = arith.constant 112 : index
    %c0_48 = arith.constant 0 : index
    %73 = vector.load %arg4[%c112, %c0_48] : memref<144x32xbf16, #tpu.memory_space<vmem>>, vector<16x32xbf16>
    %cst_49 = arith.constant dense<0.000000e+00> : vector<8x32xf32>
    %74 = tpu.matmul %72, %73, %cst_49 {dimension_numbers = #tpu.dot_dimension_numbers<[1], [0], [0], [1], [0, 0, 1, 1], [], []>} : vector<8x16xbf16>, vector<16x32xbf16>, vector<8x32xf32> -> vector<8x32xf32>
    %75 = arith.addf %67, %74 : vector<8x32xf32>
    %c11 = arith.constant 11 : index
    %c0_50 = arith.constant 0 : index
    %76 = vector.load %arg15[%c11, %c0_50] : memref<24x16xf32, #tpu.memory_space<vmem>>, vector<8x16xf32>
    %c0_51 = arith.constant 0 : index
    %c8_52 = arith.constant 8 : index
    %77 = vector.load %arg10[%c0_51, %c8_52] : memref<8x9xf32, #tpu.memory_space<vmem>>, vector<8x1xf32>
    %78 = vector.broadcast %77 : vector<8x1xf32> to vector<8x16xf32>
    %79 = arith.mulf %76, %78 : vector<8x16xf32>
    %80 = arith.truncf %79 : vector<8x16xf32> to vector<8x16xbf16>
    %c128 = arith.constant 128 : index
    %c0_53 = arith.constant 0 : index
    %81 = vector.load %arg4[%c128, %c0_53] : memref<144x32xbf16, #tpu.memory_space<vmem>>, vector<16x32xbf16>
    %cst_54 = arith.constant dense<0.000000e+00> : vector<8x32xf32>
    %82 = tpu.matmul %80, %81, %cst_54 {dimension_numbers = #tpu.dot_dimension_numbers<[1], [0], [0], [1], [0, 0, 1, 1], [], []>} : vector<8x16xbf16>, vector<16x32xbf16>, vector<8x32xf32> -> vector<8x32xf32>
    %83 = arith.addf %75, %82 : vector<8x32xf32>
    %c0_55 = arith.constant 0 : index
    %c0_56 = arith.constant 0 : index
    %84 = vector.load %arg5[%c0_55, %c0_56] : memref<1x32xf32, #tpu.memory_space<vmem>>, vector<1x32xf32>
    %85 = vector.broadcast %84 : vector<1x32xf32> to vector<8x32xf32>
    %86 = arith.addf %83, %85 : vector<8x32xf32>
    %cst_57 = arith.constant 0.000000e+00 : f32
    %87 = vector.broadcast %cst_57 : f32 to vector<8x32xf32>
    %88 = arith.maximumf %86, %87 : vector<8x32xf32>
    %89 = arith.truncf %88 : vector<8x32xf32> to vector<8x32xbf16>
    %c0_58 = arith.constant 0 : index
    %c0_59 = arith.constant 0 : index
    %90 = vector.load %arg6[%c0_58, %c0_59] : memref<32x32xbf16, #tpu.memory_space<vmem>>, vector<32x32xbf16>
    %cst_60 = arith.constant dense<0.000000e+00> : vector<8x32xf32>
    %91 = tpu.matmul %89, %90, %cst_60 {dimension_numbers = #tpu.dot_dimension_numbers<[1], [0], [0], [1], [0, 0, 1, 1], [], []>} : vector<8x32xbf16>, vector<32x32xbf16>, vector<8x32xf32> -> vector<8x32xf32>
    %c0_61 = arith.constant 0 : index
    %c0_62 = arith.constant 0 : index
    %92 = vector.load %arg7[%c0_61, %c0_62] : memref<1x32xf32, #tpu.memory_space<vmem>>, vector<1x32xf32>
    %93 = vector.broadcast %92 : vector<1x32xf32> to vector<8x32xf32>
    %94 = arith.addf %91, %93 : vector<8x32xf32>
    %cst_63 = arith.constant 0.000000e+00 : f32
    %95 = vector.broadcast %cst_63 : f32 to vector<8x32xf32>
    %96 = arith.maximumf %94, %95 : vector<8x32xf32>
    %cst_64 = arith.constant 0.000000e+00 : f32
    %97 = vector.broadcast %cst_64 : f32 to vector<24x32xf32>
    %c0_65 = arith.constant 0 : index
    %c0_66 = arith.constant 0 : index
    %98 = vector.load %arg16[%c0_65, %c0_66] : memref<24x32xf32, #tpu.memory_space<vmem>>, vector<24x32xf32>
    tpu.vector_store %arg16[%c0_65, %c0_66], %97 {strides = array<i32>} : memref<24x32xf32, #tpu.memory_space<vmem>>, vector<24x32xf32>,
    %c8_67 = arith.constant 8 : index
    %c0_68 = arith.constant 0 : index
    %99 = vector.load %arg16[%c8_67, %c0_68] : memref<24x32xf32, #tpu.memory_space<vmem>>, vector<8x32xf32>
    tpu.vector_store %arg16[%c8_67, %c0_68], %96 {strides = array<i32>} : memref<24x32xf32, #tpu.memory_space<vmem>>, vector<8x32xf32>,
    %cst_69 = arith.constant 0.000000e+00 : f32
    %100 = vector.broadcast %cst_69 : f32 to vector<8x32xf32>
    %c5_70 = arith.constant 5 : index
    %c0_71 = arith.constant 0 : index
    %101 = vector.load %arg16[%c5_70, %c0_71] : memref<24x32xf32, #tpu.memory_space<vmem>>, vector<8x32xf32>
    %c0_72 = arith.constant 0 : index
    %c0_73 = arith.constant 0 : index
    %102 = vector.load %arg10[%c0_72, %c0_73] : memref<8x9xf32, #tpu.memory_space<vmem>>, vector<8x1xf32>
    %103 = vector.broadcast %102 : vector<8x1xf32> to vector<8x32xf32>
    %104 = arith.mulf %101, %103 : vector<8x32xf32>
    %105 = arith.truncf %104 : vector<8x32xf32> to vector<8x32xbf16>
    %c0_74 = arith.constant 0 : index
    %c0_75 = arith.constant 0 : index
    %106 = vector.load %arg8[%c0_74, %c0_75] : memref<288x32xbf16, #tpu.memory_space<vmem>>, vector<32x32xbf16>
    %cst_76 = arith.constant dense<0.000000e+00> : vector<8x32xf32>
    %107 = tpu.matmul %105, %106, %cst_76 {dimension_numbers = #tpu.dot_dimension_numbers<[1], [0], [0], [1], [0, 0, 1, 1], [], []>} : vector<8x32xbf16>, vector<32x32xbf16>, vector<8x32xf32> -> vector<8x32xf32>
    %108 = arith.addf %100, %107 : vector<8x32xf32>
    %c6_77 = arith.constant 6 : index
    %c0_78 = arith.constant 0 : index
    %109 = vector.load %arg16[%c6_77, %c0_78] : memref<24x32xf32, #tpu.memory_space<vmem>>, vector<8x32xf32>
    %c0_79 = arith.constant 0 : index
    %c1_80 = arith.constant 1 : index
    %110 = vector.load %arg10[%c0_79, %c1_80] : memref<8x9xf32, #tpu.memory_space<vmem>>, vector<8x1xf32>
    %111 = vector.broadcast %110 : vector<8x1xf32> to vector<8x32xf32>
    %112 = arith.mulf %109, %111 : vector<8x32xf32>
    %113 = arith.truncf %112 : vector<8x32xf32> to vector<8x32xbf16>
    %c32_81 = arith.constant 32 : index
    %c0_82 = arith.constant 0 : index
    %114 = vector.load %arg8[%c32_81, %c0_82] : memref<288x32xbf16, #tpu.memory_space<vmem>>, vector<32x32xbf16>
    %cst_83 = arith.constant dense<0.000000e+00> : vector<8x32xf32>
    %115 = tpu.matmul %113, %114, %cst_83 {dimension_numbers = #tpu.dot_dimension_numbers<[1], [0], [0], [1], [0, 0, 1, 1], [], []>} : vector<8x32xbf16>, vector<32x32xbf16>, vector<8x32xf32> -> vector<8x32xf32>
    %116 = arith.addf %108, %115 : vector<8x32xf32>
    %c7_84 = arith.constant 7 : index
    %c0_85 = arith.constant 0 : index
    %117 = vector.load %arg16[%c7_84, %c0_85] : memref<24x32xf32, #tpu.memory_space<vmem>>, vector<8x32xf32>
    %c0_86 = arith.constant 0 : index
    %c2_87 = arith.constant 2 : index
    %118 = vector.load %arg10[%c0_86, %c2_87] : memref<8x9xf32, #tpu.memory_space<vmem>>, vector<8x1xf32>
    %119 = vector.broadcast %118 : vector<8x1xf32> to vector<8x32xf32>
    %120 = arith.mulf %117, %119 : vector<8x32xf32>
    %121 = arith.truncf %120 : vector<8x32xf32> to vector<8x32xbf16>
    %c64_88 = arith.constant 64 : index
    %c0_89 = arith.constant 0 : index
    %122 = vector.load %arg8[%c64_88, %c0_89] : memref<288x32xbf16, #tpu.memory_space<vmem>>, vector<32x32xbf16>
    %cst_90 = arith.constant dense<0.000000e+00> : vector<8x32xf32>
    %123 = tpu.matmul %121, %122, %cst_90 {dimension_numbers = #tpu.dot_dimension_numbers<[1], [0], [0], [1], [0, 0, 1, 1], [], []>} : vector<8x32xbf16>, vector<32x32xbf16>, vector<8x32xf32> -> vector<8x32xf32>
    %124 = arith.addf %116, %123 : vector<8x32xf32>
    %c7_91 = arith.constant 7 : index
    %c0_92 = arith.constant 0 : index
    %125 = vector.load %arg16[%c7_91, %c0_92] : memref<24x32xf32, #tpu.memory_space<vmem>>, vector<8x32xf32>
    %c0_93 = arith.constant 0 : index
    %c3_94 = arith.constant 3 : index
    %126 = vector.load %arg10[%c0_93, %c3_94] : memref<8x9xf32, #tpu.memory_space<vmem>>, vector<8x1xf32>
    %127 = vector.broadcast %126 : vector<8x1xf32> to vector<8x32xf32>
    %128 = arith.mulf %125, %127 : vector<8x32xf32>
    %129 = arith.truncf %128 : vector<8x32xf32> to vector<8x32xbf16>
    %c96_95 = arith.constant 96 : index
    %c0_96 = arith.constant 0 : index
    %130 = vector.load %arg8[%c96_95, %c0_96] : memref<288x32xbf16, #tpu.memory_space<vmem>>, vector<32x32xbf16>
    %cst_97 = arith.constant dense<0.000000e+00> : vector<8x32xf32>
    %131 = tpu.matmul %129, %130, %cst_97 {dimension_numbers = #tpu.dot_dimension_numbers<[1], [0], [0], [1], [0, 0, 1, 1], [], []>} : vector<8x32xbf16>, vector<32x32xbf16>, vector<8x32xf32> -> vector<8x32xf32>
    %132 = arith.addf %124, %131 : vector<8x32xf32>
    %c8_98 = arith.constant 8 : index
    %c0_99 = arith.constant 0 : index
    %133 = vector.load %arg16[%c8_98, %c0_99] : memref<24x32xf32, #tpu.memory_space<vmem>>, vector<8x32xf32>
    %c0_100 = arith.constant 0 : index
    %c4_101 = arith.constant 4 : index
    %134 = vector.load %arg10[%c0_100, %c4_101] : memref<8x9xf32, #tpu.memory_space<vmem>>, vector<8x1xf32>
    %135 = vector.broadcast %134 : vector<8x1xf32> to vector<8x32xf32>
    %136 = arith.mulf %133, %135 : vector<8x32xf32>
    %137 = arith.truncf %136 : vector<8x32xf32> to vector<8x32xbf16>
    %c128_102 = arith.constant 128 : index
    %c0_103 = arith.constant 0 : index
    %138 = vector.load %arg8[%c128_102, %c0_103] : memref<288x32xbf16, #tpu.memory_space<vmem>>, vector<32x32xbf16>
    %cst_104 = arith.constant dense<0.000000e+00> : vector<8x32xf32>
    %139 = tpu.matmul %137, %138, %cst_104 {dimension_numbers = #tpu.dot_dimension_numbers<[1], [0], [0], [1], [0, 0, 1, 1], [], []>} : vector<8x32xbf16>, vector<32x32xbf16>, vector<8x32xf32> -> vector<8x32xf32>
    %140 = arith.addf %132, %139 : vector<8x32xf32>
    %c9_105 = arith.constant 9 : index
    %c0_106 = arith.constant 0 : index
    %141 = vector.load %arg16[%c9_105, %c0_106] : memref<24x32xf32, #tpu.memory_space<vmem>>, vector<8x32xf32>
    %c0_107 = arith.constant 0 : index
    %c5_108 = arith.constant 5 : index
    %142 = vector.load %arg10[%c0_107, %c5_108] : memref<8x9xf32, #tpu.memory_space<vmem>>, vector<8x1xf32>
    %143 = vector.broadcast %142 : vector<8x1xf32> to vector<8x32xf32>
    %144 = arith.mulf %141, %143 : vector<8x32xf32>
    %145 = arith.truncf %144 : vector<8x32xf32> to vector<8x32xbf16>
    %c160 = arith.constant 160 : index
    %c0_109 = arith.constant 0 : index
    %146 = vector.load %arg8[%c160, %c0_109] : memref<288x32xbf16, #tpu.memory_space<vmem>>, vector<32x32xbf16>
    %cst_110 = arith.constant dense<0.000000e+00> : vector<8x32xf32>
    %147 = tpu.matmul %145, %146, %cst_110 {dimension_numbers = #tpu.dot_dimension_numbers<[1], [0], [0], [1], [0, 0, 1, 1], [], []>} : vector<8x32xbf16>, vector<32x32xbf16>, vector<8x32xf32> -> vector<8x32xf32>
    %148 = arith.addf %140, %147 : vector<8x32xf32>
    %c9_111 = arith.constant 9 : index
    %c0_112 = arith.constant 0 : index
    %149 = vector.load %arg16[%c9_111, %c0_112] : memref<24x32xf32, #tpu.memory_space<vmem>>, vector<8x32xf32>
    %c0_113 = arith.constant 0 : index
    %c6_114 = arith.constant 6 : index
    %150 = vector.load %arg10[%c0_113, %c6_114] : memref<8x9xf32, #tpu.memory_space<vmem>>, vector<8x1xf32>
    %151 = vector.broadcast %150 : vector<8x1xf32> to vector<8x32xf32>
    %152 = arith.mulf %149, %151 : vector<8x32xf32>
    %153 = arith.truncf %152 : vector<8x32xf32> to vector<8x32xbf16>
    %c192 = arith.constant 192 : index
    %c0_115 = arith.constant 0 : index
    %154 = vector.load %arg8[%c192, %c0_115] : memref<288x32xbf16, #tpu.memory_space<vmem>>, vector<32x32xbf16>
    %cst_116 = arith.constant dense<0.000000e+00> : vector<8x32xf32>
    %155 = tpu.matmul %153, %154, %cst_116 {dimension_numbers = #tpu.dot_dimension_numbers<[1], [0], [0], [1], [0, 0, 1, 1], [], []>} : vector<8x32xbf16>, vector<32x32xbf16>, vector<8x32xf32> -> vector<8x32xf32>
    %156 = arith.addf %148, %155 : vector<8x32xf32>
    %c10_117 = arith.constant 10 : index
    %c0_118 = arith.constant 0 : index
    %157 = vector.load %arg16[%c10_117, %c0_118] : memref<24x32xf32, #tpu.memory_space<vmem>>, vector<8x32xf32>
    %c0_119 = arith.constant 0 : index
    %c7_120 = arith.constant 7 : index
    %158 = vector.load %arg10[%c0_119, %c7_120] : memref<8x9xf32, #tpu.memory_space<vmem>>, vector<8x1xf32>
    %159 = vector.broadcast %158 : vector<8x1xf32> to vector<8x32xf32>
    %160 = arith.mulf %157, %159 : vector<8x32xf32>
    %161 = arith.truncf %160 : vector<8x32xf32> to vector<8x32xbf16>
    %c224 = arith.constant 224 : index
    %c0_121 = arith.constant 0 : index
    %162 = vector.load %arg8[%c224, %c0_121] : memref<288x32xbf16, #tpu.memory_space<vmem>>, vector<32x32xbf16>
    %cst_122 = arith.constant dense<0.000000e+00> : vector<8x32xf32>
    %163 = tpu.matmul %161, %162, %cst_122 {dimension_numbers = #tpu.dot_dimension_numbers<[1], [0], [0], [1], [0, 0, 1, 1], [], []>} : vector<8x32xbf16>, vector<32x32xbf16>, vector<8x32xf32> -> vector<8x32xf32>
    %164 = arith.addf %156, %163 : vector<8x32xf32>
    %c11_123 = arith.constant 11 : index
    %c0_124 = arith.constant 0 : index
    %165 = vector.load %arg16[%c11_123, %c0_124] : memref<24x32xf32, #tpu.memory_space<vmem>>, vector<8x32xf32>
    %c0_125 = arith.constant 0 : index
    %c8_126 = arith.constant 8 : index
    %166 = vector.load %arg10[%c0_125, %c8_126] : memref<8x9xf32, #tpu.memory_space<vmem>>, vector<8x1xf32>
    %167 = vector.broadcast %166 : vector<8x1xf32> to vector<8x32xf32>
    %168 = arith.mulf %165, %167 : vector<8x32xf32>
    %169 = arith.truncf %168 : vector<8x32xf32> to vector<8x32xbf16>
    %c256 = arith.constant 256 : index
    %c0_127 = arith.constant 0 : index
    %170 = vector.load %arg8[%c256, %c0_127] : memref<288x32xbf16, #tpu.memory_space<vmem>>, vector<32x32xbf16>
    %cst_128 = arith.constant dense<0.000000e+00> : vector<8x32xf32>
    %171 = tpu.matmul %169, %170, %cst_128 {dimension_numbers = #tpu.dot_dimension_numbers<[1], [0], [0], [1], [0, 0, 1, 1], [], []>} : vector<8x32xbf16>, vector<32x32xbf16>, vector<8x32xf32> -> vector<8x32xf32>
    %172 = arith.addf %164, %171 : vector<8x32xf32>
    %c0_129 = arith.constant 0 : index
    %c0_130 = arith.constant 0 : index
    %173 = vector.load %arg9[%c0_129, %c0_130] : memref<1x32xf32, #tpu.memory_space<vmem>>, vector<1x32xf32>
    %174 = vector.broadcast %173 : vector<1x32xf32> to vector<8x32xf32>
    %175 = arith.addf %172, %174 : vector<8x32xf32>
    %176 = vector.extract_strided_slice %175 {offsets = [0, 0], sizes = [8, 16], strides = [1, 1]} : vector<8x32xf32> to vector<8x16xf32>
    %177 = vector.extract_strided_slice %175 {offsets = [0, 16], sizes = [8, 16], strides = [1, 1]} : vector<8x32xf32> to vector<8x16xf32>
    %cst_131 = arith.constant 0.000000e+00 : f32
    %178 = vector.broadcast %cst_131 : f32 to vector<8x16xf32>
    %179 = arith.addf %177, %178 : vector<8x16xf32>
    %cst_132 = arith.constant 5.000000e-01 : f32
    %180 = vector.broadcast %cst_132 : f32 to vector<8x16xf32>
    %181 = arith.mulf %180, %179 : vector<8x16xf32>
    %182 = math.tanh %181 : vector<8x16xf32>
    %cst_133 = arith.constant 1.000000e+00 : f32
    %183 = vector.broadcast %cst_133 : f32 to vector<8x16xf32>
    %184 = arith.addf %182, %183 : vector<8x16xf32>
    %cst_134 = arith.constant 5.000000e-01 : f32
    %185 = vector.broadcast %cst_134 : f32 to vector<8x16xf32>
    %186 = arith.mulf %185, %184 : vector<8x16xf32>
    %cst_135 = arith.constant 1.000000e-03 : f32
    %187 = vector.broadcast %cst_135 : f32 to vector<8x16xf32>
    %188 = arith.addf %186, %187 : vector<8x16xf32>
    %189 = arith.addf %7, %176 : vector<8x16xf32>
    %190 = arith.mulf %189, %188 : vector<8x16xf32>
    %191 = tpu.concatenate %6, %190 in 1 : vector<8x16xf32>, vector<8x16xf32> -> vector<8x32xf32>
    %c0_136 = arith.constant 0 : index
    %c0_137 = arith.constant 0 : index
    %192 = vector.load %arg12[%c0_136, %c0_137] : memref<8x32xf32, #tpu.memory_space<vmem>>, vector<8x32xf32>
    tpu.vector_store %arg12[%c0_136, %c0_137], %191 {strides = array<i32>} : memref<8x32xf32, #tpu.memory_space<vmem>>, vector<8x32xf32>,
    %c0_138 = arith.constant 0 : index
    %c0_139 = arith.constant 0 : index
    %193 = vector.load %arg11[%c0_138, %c0_139] : memref<2x8xf32, #tpu.memory_space<vmem>>, vector<2x8xf32>
    %194 = math.log %188 : vector<8x16xf32>
    %cst_140 = arith.constant dense<0.000000e+00> : vector<2x16xf32>
    %195 = tpu.matmul %193, %194, %cst_140 {dimension_numbers = #tpu.dot_dimension_numbers<[1], [0], [0], [1], [0, 0, 1, 1], [], []>} : vector<2x8xf32>, vector<8x16xf32>, vector<2x16xf32> -> vector<2x16xf32>
    %cst_141 = arith.constant dense<0.000000e+00> : vector<2xf32>
    %196 = vector.multi_reduction <add>, %195, %cst_141 [1] : vector<2x16xf32> to vector<2xf32>
    %197 = vector.shape_cast %196 : vector<2xf32> to vector<2x1xf32>
    %c0_142 = arith.constant 0 : index
    %c0_143 = arith.constant 0 : index
    %198 = vector.load %arg13[%c0_142, %c0_143] : memref<2x1xf32, #tpu.memory_space<vmem>>, vector<2x1xf32>
    tpu.vector_store %arg13[%c0_142, %c0_143], %197 {strides = array<i32>} : memref<2x1xf32, #tpu.memory_space<vmem>>, vector<2x1xf32>,
    %199 = arith.mulf %191, %191 : vector<8x32xf32>
    %cst_144 = arith.constant dense<0.000000e+00> : vector<2x32xf32>
    %200 = tpu.matmul %193, %199, %cst_144 {dimension_numbers = #tpu.dot_dimension_numbers<[1], [0], [0], [1], [0, 0, 1, 1], [], []>} : vector<2x8xf32>, vector<8x32xf32>, vector<2x32xf32> -> vector<2x32xf32>
    %cst_145 = arith.constant dense<0.000000e+00> : vector<2xf32>
    %201 = vector.multi_reduction <add>, %200, %cst_145 [1] : vector<2x32xf32> to vector<2xf32>
    %202 = vector.shape_cast %201 : vector<2xf32> to vector<2x1xf32>
    %cst_146 = arith.constant -5.000000e-01 : f32
    %203 = vector.broadcast %cst_146 : f32 to vector<2x1xf32>
    %204 = arith.mulf %203, %202 : vector<2x1xf32>
    %c0_147 = arith.constant 0 : index
    %c0_148 = arith.constant 0 : index
    %205 = vector.load %arg14[%c0_147, %c0_148] : memref<2x1xf32, #tpu.memory_space<vmem>>, vector<2x1xf32>
    tpu.vector_store %arg14[%c0_147, %c0_148], %204 {strides = array<i32>} : memref<2x1xf32, #tpu.memory_space<vmem>>, vector<2x1xf32>,
    return
  }
  func.func @transform_0(%arg0: i32) -> (i32, i32) {
    %c0_i32 = arith.constant 0 : i32
    %c0_i32_0 = arith.constant 0 : i32
    %c0_i32_1 = arith.constant 0 : i32
    return %c0_i32, %c0_i32_0 : i32, i32
  }
  func.func @transform_1(%arg0: i32) -> (i32, i32) {
    %c0_i32 = arith.constant 0 : i32
    %c0_i32_0 = arith.constant 0 : i32
    %c0_i32_1 = arith.constant 0 : i32
    return %c0_i32, %c0_i32_0 : i32, i32
  }
  func.func @transform_2(%arg0: i32) -> (i32, i32) {
    %c0_i32 = arith.constant 0 : i32
    %c0_i32_0 = arith.constant 0 : i32
    %c0_i32_1 = arith.constant 0 : i32
    return %c0_i32, %c0_i32_0 : i32, i32
  }
  func.func @transform_3(%arg0: i32) -> (i32, i32) {
    %c0_i32 = arith.constant 0 : i32
    %c0_i32_0 = arith.constant 0 : i32
    %c0_i32_1 = arith.constant 0 : i32
    return %c0_i32, %c0_i32_0 : i32, i32
  }
  func.func @transform_4(%arg0: i32) -> (i32, i32) {
    %c0_i32 = arith.constant 0 : i32
    %c0_i32_0 = arith.constant 0 : i32
    %c0_i32_1 = arith.constant 0 : i32
    return %c0_i32, %c0_i32_0 : i32, i32
  }
  func.func @transform_5(%arg0: i32) -> (i32, i32) {
    %c0_i32 = arith.constant 0 : i32
    %c0_i32_0 = arith.constant 0 : i32
    %c0_i32_1 = arith.constant 0 : i32
    return %c0_i32, %c0_i32_0 : i32, i32
  }
  func.func @transform_6(%arg0: i32) -> (i32, i32) {
    %c0_i32 = arith.constant 0 : i32
    %c0_i32_0 = arith.constant 0 : i32
    %c0_i32_1 = arith.constant 0 : i32
    return %c0_i32, %c0_i32_0 : i32, i32
  }
  func.func @transform_7(%arg0: i32) -> (i32, i32) {
    %c0_i32 = arith.constant 0 : i32
    %c0_i32_0 = arith.constant 0 : i32
    %c0_i32_1 = arith.constant 0 : i32
    return %c0_i32, %c0_i32_0 : i32, i32
  }
  func.func @transform_8(%arg0: i32) -> (i32, i32) {
    %c0_i32 = arith.constant 0 : i32
    %c0_i32_0 = arith.constant 0 : i32
    %c0_i32_1 = arith.constant 0 : i32
    return %c0_i32, %c0_i32_0 : i32, i32
  }
  func.func @transform_9(%arg0: i32) -> (i32, i32) {
    %c0_i32 = arith.constant 0 : i32
    %c0_i32_0 = arith.constant 0 : i32
    %c0_i32_1 = arith.constant 0 : i32
    return %c0_i32, %c0_i32_0 : i32, i32
  }
  func.func @transform_10(%arg0: i32) -> (i32, i32) {
    %c0_i32 = arith.constant 0 : i32
    %c0_i32_0 = arith.constant 0 : i32
    %c0_i32_1 = arith.constant 0 : i32
    return %c0_i32, %c0_i32_0 : i32, i32
  }
  func.func @transform_11(%arg0: i32) -> (i32, i32) {
    %c0_i32 = arith.constant 0 : i32
    %c0_i32_0 = arith.constant 0 : i32
    %c0_i32_1 = arith.constant 0 : i32
    return %c0_i32, %c0_i32_0 : i32, i32
  }
  func.func @transform_12(%arg0: i32) -> (i32, i32) {
    %c0_i32 = arith.constant 0 : i32
    %c0_i32_0 = arith.constant 0 : i32
    %c0_i32_1 = arith.constant 0 : i32
    return %c0_i32, %c0_i32_0 : i32, i32
  }
  func.func @transform_13(%arg0: i32) -> (i32, i32) {
    %c0_i32 = arith.constant 0 : i32
    %c0_i32_0 = arith.constant 0 : i32
    %c0_i32_1 = arith.constant 0 : i32
    return %c0_i32, %c0_i32_0 : i32, i32
  }
}

</mosaic_0001>

<llo_original>
// kernel: glow_forward.7
$region0: #{glow_forward.7}
  #allocation0 [shape = 'u32[]', space=smem, size = 0x4, offset = 0x4, fixed_abs, tag = 'smem constant byte address 0x4 - core index']
  #allocation1 [shape = 'u32[144,128]{1,0:T(1,128)}', space=vmem, size = 0x12000, scoped, tag = 'internal scratch']
  #allocation2 [shape = 'f32[48,8]{1,0:T(8,128)}', space=vmem, size = 0x6000, scoped, tag = 'scratch operand']
  %s0 = inlined_call_operand.vmem [shape: f32[32,16], index: 0, kind: input, shape index: {}]
  %s1 = inlined_call_operand.vmem [shape: bf16[72,16], index: 1, kind: input, shape index: {}]
  %s2 = inlined_call_operand.vmem [shape: f32[1,16], index: 2, kind: input, shape index: {}]
  %s3 = inlined_call_operand.vmem [shape: f32[32,9], index: 3, kind: input, shape index: {}]
  %s4 = inlined_call_operand.vmem [shape: f32[2,32], index: 4, kind: input, shape index: {}]
  %s5 = inlined_call_operand.vmem [shape: f32[32,8], index: 5, kind: output, shape index: {0}]
  %s6 = inlined_call_operand.vmem [shape: f32[2,1], index: 6, kind: output, shape index: {1}]
  %7 = xla_tuple %s5, %s6
  %s8 = sld [smem:[#allocation0]]
  $region38: #{glow_forward.7} parent=0
    _
  %s10 = ssub.s32 1, %s8
  %s11 = scalar_select 0, %s10, %s8
  // Predicated region
  $region2: #{glow_forward.7} parent=0 // pred_check
    _
  $region3: #{glow_forward.7} parent=0 // pred_check_branch
    %13 = sbr.rel (0) target = $region5
  $region4: #{glow_forward.7} parent=0 // pred_region
    _
  $region5: #{glow_forward.7} parent=0 // pred_fallthru
    _
  // Predicated region
  $region6: #{glow_forward.7} parent=0 // pred_check
    _
  $region7: #{glow_forward.7} parent=0 // pred_check_branch
    %15 = sbr.rel (0) target = $region9
  $region8: #{glow_forward.7} parent=0 // pred_region
    _
  $region9: #{glow_forward.7} parent=0 // pred_fallthru
    _
  // Predicated region
  $region10: #{glow_forward.7} parent=0 // pred_check
    _
  $region11: #{glow_forward.7} parent=0 // pred_check_branch
    %17 = sbr.rel (0) target = $region13
  $region12: #{glow_forward.7} parent=0 // pred_region
    _
  $region13: #{glow_forward.7} parent=0 // pred_fallthru
    _
  // Predicated region
  $region14: #{glow_forward.7} parent=0 // pred_check
    _
  $region15: #{glow_forward.7} parent=0 // pred_check_branch
    %19 = sbr.rel (0) target = $region17
  $region16: #{glow_forward.7} parent=0 // pred_region
    _
  $region17: #{glow_forward.7} parent=0 // pred_fallthru
    _
  // Predicated region
  $region18: #{glow_forward.7} parent=0 // pred_check
    _
  $region19: #{glow_forward.7} parent=0 // pred_check_branch
    %21 = sbr.rel (0) target = $region21
  $region20: #{glow_forward.7} parent=0 // pred_region
    _
  $region21: #{glow_forward.7} parent=0 // pred_fallthru
    _
  %v23 = vld [vmem:[%s0] sm:$0xff]
  %v24 = vld [vmem:[%s0 + $0x8] sm:$0xff]
  %v25 = vld [vmem:[%s0 + $0x10] sm:$0xff]
  %v26 = vld [vmem:[%s0 + $0x18] sm:$0xff]
  %vm27 = vcmask 64512
  %28 = vst.msk [vmem:[#allocation2] sm:$0xff] %vm27, 0.0
  %29 = vst.msk [vmem:[#allocation2 + $0x8] sm:$0xff] %vm27, 0.0
  %30 = vst.msk [vmem:[#allocation2 + $0x10] sm:$0xff] %vm27, 0.0
  %31 = vst.msk [vmem:[#allocation2 + $0x18] sm:$0xff] %vm27, 0.0
  %32 = vst.msk [vmem:[#allocation2 + $0x20] sm:$0xff] %vm27, 0.0
  %33 = vst.msk [vmem:[#allocation2 + $0x28] sm:$0xff] %vm27, 0.0
  %34 = vst.msk [vmem:[#allocation2 + $0x8] sm:$0xff] %vm27, %v23
  %35 = vst.msk [vmem:[#allocation2 + $0x10] sm:$0xff] %vm27, %v24
  %36 = vst.msk [vmem:[#allocation2 + $0x18] sm:$0xff] %vm27, %v25
  %37 = vst.msk [vmem:[#allocation2 + $0x20] sm:$0xff] %vm27, %v26
  %v38 = vld [vmem:[#allocation2 + $0x3] sm:$0xff]
  %v39 = vld [vmem:[#allocation2 + $0xb] sm:$0xff]
  %v40 = vld [vmem:[#allocation2 + $0x13] sm:$0xff]
  %v41 = vld [vmem:[#allocation2 + $0x1b] sm:$0xff]
  %v42 = vld [vmem:[%s3] sm:$0xff]
  %v43 = vld [vmem:[%s3 + $0x8] sm:$0xff]
  %v44 = vld [vmem:[%s3 + $0x10] sm:$0xff]
  %v45 = vld [vmem:[%s3 + $0x18] sm:$0xff]
  %47 = vset.pattern.permute.xlu0 0
  %48 = vperm.xlu0 %47, %v42
  %v49 = vpop.permute.xlu0 %48
  %52 = vset.pattern.permute.xlu0 0
  %53 = vperm.xlu0 %52, %v43
  %v54 = vpop.permute.xlu0 %53
  %57 = vset.pattern.permute.xlu0 0
  %58 = vperm.xlu0 %57, %v44
  %v59 = vpop.permute.xlu0 %58
  %62 = vset.pattern.permute.xlu0 0
  %63 = vperm.xlu0 %62, %v45
  %v64 = vpop.permute.xlu0 %63
  %v66 = vmul.f32 %v38, %v49
  %v67 = vmul.f32 %v39, %v54
  %v68 = vmul.f32 %v40, %v59
  %v69 = vmul.f32 %v41, %v64
  %v70 = vpack.c.bf16 %v67, %v66
  %v71 = vpack.c.bf16 %v69, %v68
  %v72 = vld [vmem:[%s1] sm:$0xf]
  %v73 = vld [vmem:[#allocation2 + $0x4] sm:$0xff]
  %v74 = vld [vmem:[#allocation2 + $0xc] sm:$0xff]
  %v75 = vld [vmem:[#allocation2 + $0x14] sm:$0xff]
  %v76 = vld [vmem:[#allocation2 + $0x1c] sm:$0xff]
  %77 = vset.pattern.permute.xlu0 1
  %78 = vperm.xlu0 %77, %v42
  %v79 = vpop.permute.xlu0 %78
  %81 = vset.pattern.permute.xlu0 1
  %82 = vperm.xlu0 %81, %v43
  %v83 = vpop.permute.xlu0 %82
  %85 = vset.pattern.permute.xlu0 1
  %86 = vperm.xlu0 %85, %v44
  %v87 = vpop.permute.xlu0 %86
  %89 = vset.pattern.permute.xlu0 1
  %90 = vperm.xlu0 %89, %v45
  %v91 = vpop.permute.xlu0 %90
  %v93 = vmul.f32 %v73, %v79
  %v94 = vmul.f32 %v74, %v83
  %v95 = vmul.f32 %v75, %v87
  %v96 = vmul.f32 %v76, %v91
  %v97 = vpack.c.bf16 %v94, %v93
  %v98 = vpack.c.bf16 %v96, %v95
  %v99 = vld [vmem:[%s1 + $0x4] sm:$0xf]
  %v101 = vsel %vm27, %v97, 0
  %v104 = vsel %vm27, %v98, 0
  %vm106 = vcmask 1043456
  %v108 = vsel %vm106, %v99, 0
  %110 = vmatprep.subr.bf16.mxu0 0
  %111 = vmatpush1.bf16.msra.mxu0 0
  %112 = vmatprep.subr.bf16.mxu0 0
  %113 = vmatpush1.bf16.msra.mxu0 0
  %114 = vmatprep.subr.bf16.mxu0 0
  %115 = vmatpush1.bf16.msra.mxu0 0
  %116 = vmatprep.subr.bf16.mxu0 0
  %117 = vmatpush1.bf16.msra.mxu0 0
  %118 = vmatprep.subr.bf16.mxu0 0
  %119 = vmatpush1.bf16.msra.mxu0 0
  %120 = vmatprep.subr.bf16.mxu0 0
  %121 = vmatpush1.bf16.msra.mxu0 0
  %122 = vmatprep.subr.bf16.mxu0 0
  %123 = vmatpush1.bf16.msra.mxu0 0
  %124 = vmatprep.subr.bf16.mxu0 0
  %125 = vmatpush1.bf16.msra.mxu0 %v108
  %126 = vmatprep.subr.bf16.mxu0 0
  %127 = vmatpush2.bf16.msra.mxu0 0
  %128 = vmatprep.subr.bf16.mxu0 0
  %129 = vmatpush2.bf16.msra.mxu0 0
  %130 = vmatprep.subr.bf16.mxu0 0
  %131 = vmatpush2.bf16.msra.mxu0 0
  %132 = vmatprep.subr.bf16.mxu0 0
  %133 = vmatpush2.bf16.msra.mxu0 0
  %134 = vmatprep.subr.bf16.mxu0 0
  %135 = vmatpush2.bf16.msra.mxu0 0
  %136 = vmatprep.subr.bf16.mxu0 0
  %137 = vmatpush2.bf16.msra.mxu0 0
  %138 = vmatprep.subr.bf16.mxu0 0
  %139 = vmatpush2.bf16.msra.mxu0 0
  %140 = vmatprep.subr.bf16.mxu0 0
  %141 = vmatpush2.bf16.msra.mxu0 0
  %142 = vmatprep.mubr.bf16.mxu0 0
  %143 = vmatmul.mubr.bf16.gmra.mxu0 %v101
  %v144 = vpop.f32.mrf.mxu0
  %v145 = vadd.f32 0.0, %v144
  %v146 = vpop.f32.mrf.mxu0
  %v147 = vpop.f32.mrf.mxu0
  %v148 = vadd.f32 0.0, %v147
  %v149 = vpop.f32.mrf.mxu0
  %150 = vmatprep.mubr.bf16.mxu0 0
  %151 = vmatmul.mubr.bf16.gmra.mxu0 %v104
  %v152 = vpop.f32.mrf.mxu0
  %v153 = vadd.f32 0.0, %v152
  %v154 = vpop.f32.mrf.mxu0
  %v155 = vpop.f32.mrf.mxu0
  %v156 = vadd.f32 0.0, %v155
  %v157 = vpop.f32.mrf.mxu0
  %158 = vdwg.mxu0
  %v160 = vsel %vm27, %v70, 0
  %v163 = vsel %vm27, %v71, 0
  %v166 = vsel %vm106, %v72, 0
  %168 = vmatprep.subr.bf16.mxu0 0
  %169 = vmatpush1.bf16.msra.mxu0 0
  %170 = vmatprep.subr.bf16.mxu0 0
  %171 = vmatpush1.bf16.msra.mxu0 0
  %172 = vmatprep.subr.bf16.mxu0 0
  %173 = vmatpush1.bf16.msra.mxu0 0
  %174 = vmatprep.subr.bf16.mxu0 0
  %175 = vmatpush1.bf16.msra.mxu0 0
  %176 = vmatprep.subr.bf16.mxu0 0
  %177 = vmatpush1.bf16.msra.mxu0 0
  %178 = vmatprep.subr.bf16.mxu0 0
  %179 = vmatpush1.bf16.msra.mxu0 0
  %180 = vmatprep.subr.bf16.mxu0 0
  %181 = vmatpush1.bf16.msra.mxu0 0
  %182 = vmatprep.subr.bf16.mxu0 0
  %183 = vmatpush1.bf16.msra.mxu0 %v166
  %184 = vmatprep.subr.bf16.mxu0 0
  %185 = vmatpush2.bf16.msra.mxu0 0
  %186 = vmatprep.subr.bf16.mxu0 0
  %187 = vmatpush2.bf16.msra.mxu0 0
  %188 = vmatprep.subr.bf16.mxu0 0
  %189 = vmatpush2.bf16.msra.mxu0 0
  %190 = vmatprep.subr.bf16.mxu0 0
  %191 = vmatpush2.bf16.msra.mxu0 0
  %192 = vmatprep.subr.bf16.mxu0 0
  %193 = vmatpush2.bf16.msra.mxu0 0
  %194 = vmatprep.subr.bf16.mxu0 0
  %195 = vmatpush2.bf16.msra.mxu0 0
  %196 = vmatprep.subr.bf16.mxu0 0
  %197 = vmatpush2.bf16.msra.mxu0 0
  %198 = vmatprep.subr.bf16.mxu0 0
  %199 = vmatpush2.bf16.msra.mxu0 0
  %200 = vmatprep.mubr.bf16.mxu0 0
  %201 = vmatmul.mubr.bf16.gmra.mxu0 %v160
  %v202 = vpop.f32.mrf.mxu0
  %v203 = vadd.f32 %v145, %v202
  %v204 = vpop.f32.mrf.mxu0
  %v205 = vpop.f32.mrf.mxu0
  %v206 = vadd.f32 %v148, %v205
  %v207 = vpop.f32.mrf.mxu0
  %208 = vmatprep.mubr.bf16.mxu0 0
  %209 = vmatmul.mubr.bf16.gmra.mxu0 %v163
  %v210 = vpop.f32.mrf.mxu0
  %v211 = vadd.f32 %v153, %v210
  %v212 = vpop.f32.mrf.mxu0
  %v213 = vpop.f32.mrf.mxu0
  %v214 = vadd.f32 %v156, %v213
  %v215 = vpop.f32.mrf.mxu0
  %216 = vdwg.mxu0
  %v217 = vld [vmem:[#allocation2 + $0x5] sm:$0xff]
  %v218 = vld [vmem:[#allocation2 + $0xd] sm:$0xff]
  %v219 = vld [vmem:[#allocation2 + $0x15] sm:$0xff]
  %v220 = vld [vmem:[#allocation2 + $0x1d] sm:$0xff]
  %221 = vset.pattern.permute.xlu0 2
  %222 = vperm.xlu0 %221, %v42
  %v223 = vpop.permute.xlu0 %222
  %225 = vset.pattern.permute.xlu0 2
  %226 = vperm.xlu0 %225, %v43
  %v227 = vpop.permute.xlu0 %226
  %229 = vset.pattern.permute.xlu0 2
  %230 = vperm.xlu0 %229, %v44
  %v231 = vpop.permute.xlu0 %230
  %233 = vset.pattern.permute.xlu0 2
  %234 = vperm.xlu0 %233, %v45
  %v235 = vpop.permute.xlu0 %234
  %v237 = vmul.f32 %v217, %v223
  %v238 = vmul.f32 %v218, %v227
  %v239 = vmul.f32 %v219, %v231
  %v240 = vmul.f32 %v220, %v235
  %v241 = vpack.c.bf16 %v238, %v237
  %v242 = vpack.c.bf16 %v240, %v239
  %v243 = vld [vmem:[%s1 + $0x8] sm:$0xf]
  %v245 = vsel %vm27, %v241, 0
  %v248 = vsel %vm27, %v242, 0
  %v251 = vsel %vm106, %v243, 0
  %253 = vmatprep.subr.bf16.mxu0 0
  %254 = vmatpush1.bf16.msra.mxu0 0
  %255 = vmatprep.subr.bf16.mxu0 0
  %256 = vmatpush1.bf16.msra.mxu0 0
  %257 = vmatprep.subr.bf16.mxu0 0
  %258 = vmatpush1.bf16.msra.mxu0 0
  %259 = vmatprep.subr.bf16.mxu0 0
  %260 = vmatpush1.bf16.msra.mxu0 0
  %261 = vmatprep.subr.bf16.mxu0 0
  %262 = vmatpush1.bf16.msra.mxu0 0
  %263 = vmatprep.subr.bf16.mxu0 0
  %264 = vmatpush1.bf16.msra.mxu0 0
  %265 = vmatprep.subr.bf16.mxu0 0
  %266 = vmatpush1.bf16.msra.mxu0 0
  %267 = vmatprep.subr.bf16.mxu0 0
  %268 = vmatpush1.bf16.msra.mxu0 %v251
  %269 = vmatprep.subr.bf16.mxu0 0
  %270 = vmatpush2.bf16.msra.mxu0 0
  %271 = vmatprep.subr.bf16.mxu0 0
  %272 = vmatpush2.bf16.msra.mxu0 0
  %273 = vmatprep.subr.bf16.mxu0 0
  %274 = vmatpush2.bf16.msra.mxu0 0
  %275 = vmatprep.subr.bf16.mxu0 0
  %276 = vmatpush2.bf16.msra.mxu0 0
  %277 = vmatprep.subr.bf16.mxu0 0
  %278 = vmatpush2.bf16.msra.mxu0 0
  %279 = vmatprep.subr.bf16.mxu0 0
  %280 = vmatpush2.bf16.msra.mxu0 0
  %281 = vmatprep.subr.bf16.mxu0 0
  %282 = vmatpush2.bf16.msra.mxu0 0
  %283 = vmatprep.subr.bf16.mxu0 0
  %284 = vmatpush2.bf16.msra.mxu0 0
  %285 = vmatprep.mubr.bf16.mxu0 0
  %286 = vmatmul.mubr.bf16.gmra.mxu0 %v245
  %v287 = vpop.f32.mrf.mxu0
  %v288 = vadd.f32 0.0, %v287
  %v289 = vpop.f32.mrf.mxu0
  %v290 = vpop.f32.mrf.mxu0
  %v291 = vadd.f32 0.0, %v290
  %v292 = vpop.f32.mrf.mxu0
  %293 = vmatprep.mubr.bf16.mxu0 0
  %294 = vmatmul.mubr.bf16.gmra.mxu0 %v248
  %v295 = vpop.f32.mrf.mxu0
  %v296 = vadd.f32 0.0, %v295
  %v297 = vpop.f32.mrf.mxu0
  %v298 = vpop.f32.mrf.mxu0
  %v299 = vadd.f32 0.0, %v298
  %v300 = vpop.f32.mrf.mxu0
  %301 = vdwg.mxu0
  %v302 = vadd.f32 %v203, %v288
  %v303 = vadd.f32 %v206, %v291
  %v304 = vadd.f32 %v211, %v296
  %v305 = vadd.f32 %v214, %v299
  %v306 = vld [vmem:[#allocation2 + $0x7] sm:$0xff]
  %v307 = vld [vmem:[#allocation2 + $0xf] sm:$0xff]
  %v308 = vld [vmem:[#allocation2 + $0x17] sm:$0xff]
  %v309 = vld [vmem:[#allocation2 + $0x1f] sm:$0xff]
  %310 = vset.pattern.permute.xlu0 3
  %311 = vperm.xlu0 %310, %v42
  %v312 = vpop.permute.xlu0 %311
  %314 = vset.pattern.permute.xlu0 3
  %315 = vperm.xlu0 %314, %v43
  %v316 = vpop.permute.xlu0 %315
  %318 = vset.pattern.permute.xlu0 3
  %319 = vperm.xlu0 %318, %v44
  %v320 = vpop.permute.xlu0 %319
  %322 = vset.pattern.permute.xlu0 3
  %323 = vperm.xlu0 %322, %v45
  %v324 = vpop.permute.xlu0 %323
  %v326 = vmul.f32 %v306, %v312
  %v327 = vmul.f32 %v307, %v316
  %v328 = vmul.f32 %v308, %v320
  %v329 = vmul.f32 %v309, %v324
  %v330 = vpack.c.bf16 %v327, %v326
  %v331 = vpack.c.bf16 %v329, %v328
  %v332 = vld [vmem:[%s1 + $0xc] sm:$0xf]
  %v334 = vsel %vm27, %v330, 0
  %v337 = vsel %vm27, %v331, 0
  %v340 = vsel %vm106, %v332, 0
  %342 = vmatprep.subr.bf16.mxu0 0
  %343 = vmatpush1.bf16.msra.mxu0 0
  %344 = vmatprep.subr.bf16.mxu0 0
  %345 = vmatpush1.bf16.msra.mxu0 0
  %346 = vmatprep.subr.bf16.mxu0 0
  %347 = vmatpush1.bf16.msra.mxu0 0
  %348 = vmatprep.subr.bf16.mxu0 0
  %349 = vmatpush1.bf16.msra.mxu0 0
  %350 = vmatprep.subr.bf16.mxu0 0
  %351 = vmatpush1.bf16.msra.mxu0 0
  %352 = vmatprep.subr.bf16.mxu0 0
  %353 = vmatpush1.bf16.msra.mxu0 0
  %354 = vmatprep.subr.bf16.mxu0 0
  %355 = vmatpush1.bf16.msra.mxu0 0
  %356 = vmatprep.subr.bf16.mxu0 0
  %357 = vmatpush1.bf16.msra.mxu0 %v340
  %358 = vmatprep.subr.bf16.mxu0 0
  %359 = vmatpush2.bf16.msra.mxu0 0
  %360 = vmatprep.subr.bf16.mxu0 0
  %361 = vmatpush2.bf16.msra.mxu0 0
  %362 = vmatprep.subr.bf16.mxu0 0
  %363 = vmatpush2.bf16.msra.mxu0 0
  %364 = vmatprep.subr.bf16.mxu0 0
  %365 = vmatpush2.bf16.msra.mxu0 0
  %366 = vmatprep.subr.bf16.mxu0 0
  %367 = vmatpush2.bf16.msra.mxu0 0
  %368 = vmatprep.subr.bf16.mxu0 0
  %369 = vmatpush2.bf16.msra.mxu0 0
  %370 = vmatprep.subr.bf16.mxu0 0
  %371 = vmatpush2.bf16.msra.mxu0 0
  %372 = vmatprep.subr.bf16.mxu0 0
  %373 = vmatpush2.bf16.msra.mxu0 0
  %374 = vmatprep.mubr.bf16.mxu0 0
  %375 = vmatmul.mubr.bf16.gmra.mxu0 %v334
  %v376 = vpop.f32.mrf.mxu0
  %v377 = vadd.f32 0.0, %v376
  %v378 = vpop.f32.mrf.mxu0
  %v379 = vpop.f32.mrf.mxu0
  %v380 = vadd.f32 0.0, %v379
  %v381 = vpop.f32.mrf.mxu0
  %382 = vmatprep.mubr.bf16.mxu0 0
  %383 = vmatmul.mubr.bf16.gmra.mxu0 %v337
  %v384 = vpop.f32.mrf.mxu0
  %v385 = vadd.f32 0.0, %v384
  %v386 = vpop.f32.mrf.mxu0
  %v387 = vpop.f32.mrf.mxu0
  %v388 = vadd.f32 0.0, %v387
  %v389 = vpop.f32.mrf.mxu0
  %390 = vdwg.mxu0
  %v391 = vadd.f32 %v302, %v377
  %v392 = vadd.f32 %v303, %v380
  %v393 = vadd.f32 %v304, %v385
  %v394 = vadd.f32 %v305, %v388
  %v395 = vld [vmem:[#allocation2 + $0x8] sm:$0xff]
  %v396 = vld [vmem:[#allocation2 + $0x10] sm:$0xff]
  %v397 = vld [vmem:[#allocation2 + $0x18] sm:$0xff]
  %v398 = vld [vmem:[#allocation2 + $0x20] sm:$0xff]
  %399 = vset.pattern.permute.xlu0 4
  %400 = vperm.xlu0 %399, %v42
  %v401 = vpop.permute.xlu0 %400
  %403 = vset.pattern.permute.xlu0 4
  %404 = vperm.xlu0 %403, %v43
  %v405 = vpop.permute.xlu0 %404
  %407 = vset.pattern.permute.xlu0 4
  %408 = vperm.xlu0 %407, %v44
  %v409 = vpop.permute.xlu0 %408
  %411 = vset.pattern.permute.xlu0 4
  %412 = vperm.xlu0 %411, %v45
  %v413 = vpop.permute.xlu0 %412
  %v415 = vmul.f32 %v395, %v401
  %v416 = vmul.f32 %v396, %v405
  %v417 = vmul.f32 %v397, %v409
  %v418 = vmul.f32 %v398, %v413
  %v419 = vpack.c.bf16 %v416, %v415
  %v420 = vpack.c.bf16 %v418, %v417
  %v421 = vld [vmem:[%s1 + $0x10] sm:$0xf]
  %v423 = vsel %vm27, %v419, 0
  %v426 = vsel %vm27, %v420, 0
  %v429 = vsel %vm106, %v421, 0
  %431 = vmatprep.subr.bf16.mxu0 0
  %432 = vmatpush1.bf16.msra.mxu0 0
  %433 = vmatprep.subr.bf16.mxu0 0
  %434 = vmatpush1.bf16.msra.mxu0 0
  %435 = vmatprep.subr.bf16.mxu0 0
  %436 = vmatpush1.bf16.msra.mxu0 0
  %437 = vmatprep.subr.bf16.mxu0 0
  %438 = vmatpush1.bf16.msra.mxu0 0
  %439 = vmatprep.subr.bf16.mxu0 0
  %440 = vmatpush1.bf16.msra.mxu0 0
  %441 = vmatprep.subr.bf16.mxu0 0
  %442 = vmatpush1.bf16.msra.mxu0 0
  %443 = vmatprep.subr.bf16.mxu0 0
  %444 = vmatpush1.bf16.msra.mxu0 0
  %445 = vmatprep.subr.bf16.mxu0 0
  %446 = vmatpush1.bf16.msra.mxu0 %v429
  %447 = vmatprep.subr.bf16.mxu0 0
  %448 = vmatpush2.bf16.msra.mxu0 0
  %449 = vmatprep.subr.bf16.mxu0 0
  %450 = vmatpush2.bf16.msra.mxu0 0
  %451 = vmatprep.subr.bf16.mxu0 0
  %452 = vmatpush2.bf16.msra.mxu0 0
  %453 = vmatprep.subr.bf16.mxu0 0
  %454 = vmatpush2.bf16.msra.mxu0 0
  %455 = vmatprep.subr.bf16.mxu0 0
  %456 = vmatpush2.bf16.msra.mxu0 0
  %457 = vmatprep.subr.bf16.mxu0 0
  %458 = vmatpush2.bf16.msra.mxu0 0
  %459 = vmatprep.subr.bf16.mxu0 0
  %460 = vmatpush2.bf16.msra.mxu0 0
  %461 = vmatprep.subr.bf16.mxu0 0
  %462 = vmatpush2.bf16.msra.mxu0 0
  %463 = vmatprep.mubr.bf16.mxu0 0
  %464 = vmatmul.mubr.bf16.gmra.mxu0 %v423
  %v465 = vpop.f32.mrf.mxu0
  %v466 = vadd.f32 0.0, %v465
  %v467 = vpop.f32.mrf.mxu0
  %v468 = vpop.f32.mrf.mxu0
  %v469 = vadd.f32 0.0, %v468
  %v470 = vpop.f32.mrf.mxu0
  %471 = vmatprep.mubr.bf16.mxu0 0
  %472 = vmatmul.mubr.bf16.gmra.mxu0 %v426
  %v473 = vpop.f32.mrf.mxu0
  %v474 = vadd.f32 0.0, %v473
  %v475 = vpop.f32.mrf.mxu0
  %v476 = vpop.f32.mrf.mxu0
  %v477 = vadd.f32 0.0, %v476
  %v478 = vpop.f32.mrf.mxu0
  %479 = vdwg.mxu0
  %v480 = vadd.f32 %v391, %v466
  %v481 = vadd.f32 %v392, %v469
  %v482 = vadd.f32 %v393, %v474
  %v483 = vadd.f32 %v394, %v477
  %v484 = vld [vmem:[#allocation2 + $0x9] sm:$0xff]
  %v485 = vld [vmem:[#allocation2 + $0x11] sm:$0xff]
  %v486 = vld [vmem:[#allocation2 + $0x19] sm:$0xff]
  %v487 = vld [vmem:[#allocation2 + $0x21] sm:$0xff]
  %488 = vset.pattern.permute.xlu0 5
  %489 = vperm.xlu0 %488, %v42
  %v490 = vpop.permute.xlu0 %489
  %492 = vset.pattern.permute.xlu0 5
  %493 = vperm.xlu0 %492, %v43
  %v494 = vpop.permute.xlu0 %493
  %496 = vset.pattern.permute.xlu0 5
  %497 = vperm.xlu0 %496, %v44
  %v498 = vpop.permute.xlu0 %497
  %500 = vset.pattern.permute.xlu0 5
  %501 = vperm.xlu0 %500, %v45
  %v502 = vpop.permute.xlu0 %501
  %v504 = vmul.f32 %v484, %v490
  %v505 = vmul.f32 %v485, %v494
  %v506 = vmul.f32 %v486, %v498
  %v507 = vmul.f32 %v487, %v502
  %v508 = vpack.c.bf16 %v505, %v504
  %v509 = vpack.c.bf16 %v507, %v506
  %v510 = vld [vmem:[%s1 + $0x14] sm:$0xf]
  %v512 = vsel %vm27, %v508, 0
  %v515 = vsel %vm27, %v509, 0
  %v518 = vsel %vm106, %v510, 0
  %520 = vmatprep.subr.bf16.mxu0 0
  %521 = vmatpush1.bf16.msra.mxu0 0
  %522 = vmatprep.subr.bf16.mxu0 0
  %523 = vmatpush1.bf16.msra.mxu0 0
  %524 = vmatprep.subr.bf16.mxu0 0
  %525 = vmatpush1.bf16.msra.mxu0 0
  %526 = vmatprep.subr.bf16.mxu0 0
  %527 = vmatpush1.bf16.msra.mxu0 0
  %528 = vmatprep.subr.bf16.mxu0 0
  %529 = vmatpush1.bf16.msra.mxu0 0
  %530 = vmatprep.subr.bf16.mxu0 0
  %531 = vmatpush1.bf16.msra.mxu0 0
  %532 = vmatprep.subr.bf16.mxu0 0
  %533 = vmatpush1.bf16.msra.mxu0 0
  %534 = vmatprep.subr.bf16.mxu0 0
  %535 = vmatpush1.bf16.msra.mxu0 %v518
  %536 = vmatprep.subr.bf16.mxu0 0
  %537 = vmatpush2.bf16.msra.mxu0 0
  %538 = vmatprep.subr.bf16.mxu0 0
  %539 = vmatpush2.bf16.msra.mxu0 0
  %540 = vmatprep.subr.bf16.mxu0 0
  %541 = vmatpush2.bf16.msra.mxu0 0
  %542 = vmatprep.subr.bf16.mxu0 0
  %543 = vmatpush2.bf16.msra.mxu0 0
  %544 = vmatprep.subr.bf16.mxu0 0
  %545 = vmatpush2.bf16.msra.mxu0 0
  %546 = vmatprep.subr.bf16.mxu0 0
  %547 = vmatpush2.bf16.msra.mxu0 0
  %548 = vmatprep.subr.bf16.mxu0 0
  %549 = vmatpush2.bf16.msra.mxu0 0
  %550 = vmatprep.subr.bf16.mxu0 0
  %551 = vmatpush2.bf16.msra.mxu0 0
  %552 = vmatprep.mubr.bf16.mxu0 0
  %553 = vmatmul.mubr.bf16.gmra.mxu0 %v512
  %v554 = vpop.f32.mrf.mxu0
  %v555 = vadd.f32 0.0, %v554
  %v556 = vpop.f32.mrf.mxu0
  %v557 = vpop.f32.mrf.mxu0
  %v558 = vadd.f32 0.0, %v557
  %v559 = vpop.f32.mrf.mxu0
  %560 = vmatprep.mubr.bf16.mxu0 0
  %561 = vmatmul.mubr.bf16.gmra.mxu0 %v515
  %v562 = vpop.f32.mrf.mxu0
  %v563 = vadd.f32 0.0, %v562
  %v564 = vpop.f32.mrf.mxu0
  %v565 = vpop.f32.mrf.mxu0
  %v566 = vadd.f32 0.0, %v565
  %v567 = vpop.f32.mrf.mxu0
  %568 = vdwg.mxu0
  %v569 = vadd.f32 %v480, %v555
  %v570 = vadd.f32 %v481, %v558
  %v571 = vadd.f32 %v482, %v563
  %v572 = vadd.f32 %v483, %v566
  %v573 = vld [vmem:[#allocation2 + $0xb] sm:$0xff]
  %v574 = vld [vmem:[#allocation2 + $0x13] sm:$0xff]
  %v575 = vld [vmem:[#allocation2 + $0x1b] sm:$0xff]
  %v576 = vld [vmem:[#allocation2 + $0x23] sm:$0xff]
  %577 = vset.pattern.permute.xlu0 6
  %578 = vperm.xlu0 %577, %v42
  %v579 = vpop.permute.xlu0 %578
  %581 = vset.pattern.permute.xlu0 6
  %582 = vperm.xlu0 %581, %v43
  %v583 = vpop.permute.xlu0 %582
  %585 = vset.pattern.permute.xlu0 6
  %586 = vperm.xlu0 %585, %v44
  %v587 = vpop.permute.xlu0 %586
  %589 = vset.pattern.permute.xlu0 6
  %590 = vperm.xlu0 %589, %v45
  %v591 = vpop.permute.xlu0 %590
  %v593 = vmul.f32 %v573, %v579
  %v594 = vmul.f32 %v574, %v583
  %v595 = vmul.f32 %v575, %v587
  %v596 = vmul.f32 %v576, %v591
  %v597 = vpack.c.bf16 %v594, %v593
  %v598 = vpack.c.bf16 %v596, %v595
  %v599 = vld [vmem:[%s1 + $0x18] sm:$0xf]
  %v601 = vsel %vm27, %v597, 0
  %v604 = vsel %vm27, %v598, 0
  %v607 = vsel %vm106, %v599, 0
  %609 = vmatprep.subr.bf16.mxu0 0
  %610 = vmatpush1.bf16.msra.mxu0 0
  %611 = vmatprep.subr.bf16.mxu0 0
  %612 = vmatpush1.bf16.msra.mxu0 0
  %613 = vmatprep.subr.bf16.mxu0 0
  %614 = vmatpush1.bf16.msra.mxu0 0
  %615 = vmatprep.subr.bf16.mxu0 0
  %616 = vmatpush1.bf16.msra.mxu0 0
  %617 = vmatprep.subr.bf16.mxu0 0
  %618 = vmatpush1.bf16.msra.mxu0 0
  %619 = vmatprep.subr.bf16.mxu0 0
  %620 = vmatpush1.bf16.msra.mxu0 0
  %621 = vmatprep.subr.bf16.mxu0 0
  %622 = vmatpush1.bf16.msra.mxu0 0
  %623 = vmatprep.subr.bf16.mxu0 0
  %624 = vmatpush1.bf16.msra.mxu0 %v607
  %625 = vmatprep.subr.bf16.mxu0 0
  %626 = vmatpush2.bf16.msra.mxu0 0
  %627 = vmatprep.subr.bf16.mxu0 0
  %628 = vmatpush2.bf16.msra.mxu0 0
  %629 = vmatprep.subr.bf16.mxu0 0
  %630 = vmatpush2.bf16.msra.mxu0 0
  %631 = vmatprep.subr.bf16.mxu0 0
  %632 = vmatpush2.bf16.msra.mxu0 0
  %633 = vmatprep.subr.bf16.mxu0 0
  %634 = vmatpush2.bf16.msra.mxu0 0
  %635 = vmatprep.subr.bf16.mxu0 0
  %636 = vmatpush2.bf16.msra.mxu0 0
  %637 = vmatprep.subr.bf16.mxu0 0
  %638 = vmatpush2.bf16.msra.mxu0 0
  %639 = vmatprep.subr.bf16.mxu0 0
  %640 = vmatpush2.bf16.msra.mxu0 0
  %641 = vmatprep.mubr.bf16.mxu0 0
  %642 = vmatmul.mubr.bf16.gmra.mxu0 %v601
  %v643 = vpop.f32.mrf.mxu0
  %v644 = vadd.f32 0.0, %v643
  %v645 = vpop.f32.mrf.mxu0
  %v646 = vpop.f32.mrf.mxu0
  %v647 = vadd.f32 0.0, %v646
  %v648 = vpop.f32.mrf.mxu0
  %649 = vmatprep.mubr.bf16.mxu0 0
  %650 = vmatmul.mubr.bf16.gmra.mxu0 %v604
  %v651 = vpop.f32.mrf.mxu0
  %v652 = vadd.f32 0.0, %v651
  %v653 = vpop.f32.mrf.mxu0
  %v654 = vpop.f32.mrf.mxu0
  %v655 = vadd.f32 0.0, %v654
  %v656 = vpop.f32.mrf.mxu0
  %657 = vdwg.mxu0
  %v658 = vadd.f32 %v569, %v644
  %v659 = vadd.f32 %v570, %v647
  %v660 = vadd.f32 %v571, %v652
  %v661 = vadd.f32 %v572, %v655
  %v662 = vld [vmem:[#allocation2 + $0xc] sm:$0xff]
  %v663 = vld [vmem:[#allocation2 + $0x14] sm:$0xff]
  %v664 = vld [vmem:[#allocation2 + $0x1c] sm:$0xff]
  %v665 = vld [vmem:[#allocation2 + $0x24] sm:$0xff]
  %666 = vset.pattern.permute.xlu0 7
  %667 = vperm.xlu0 %666, %v42
  %v668 = vpop.permute.xlu0 %667
  %670 = vset.pattern.permute.xlu0 7
  %671 = vperm.xlu0 %670, %v43
  %v672 = vpop.permute.xlu0 %671
  %674 = vset.pattern.permute.xlu0 7
  %675 = vperm.xlu0 %674, %v44
  %v676 = vpop.permute.xlu0 %675
  %678 = vset.pattern.permute.xlu0 7
  %679 = vperm.xlu0 %678, %v45
  %v680 = vpop.permute.xlu0 %679
  %v682 = vmul.f32 %v662, %v668
  %v683 = vmul.f32 %v663, %v672
  %v684 = vmul.f32 %v664, %v676
  %v685 = vmul.f32 %v665, %v680
  %v686 = vpack.c.bf16 %v683, %v682
  %v687 = vpack.c.bf16 %v685, %v684
  %v688 = vld [vmem:[%s1 + $0x1c] sm:$0xf]
  %v690 = vsel %vm27, %v686, 0
  %v693 = vsel %vm27, %v687, 0
  %v696 = vsel %vm106, %v688, 0
  %698 = vmatprep.subr.bf16.mxu0 0
  %699 = vmatpush1.bf16.msra.mxu0 0
  %700 = vmatprep.subr.bf16.mxu0 0
  %701 = vmatpush1.bf16.msra.mxu0 0
  %702 = vmatprep.subr.bf16.mxu0 0
  %703 = vmatpush1.bf16.msra.mxu0 0
  %704 = vmatprep.subr.bf16.mxu0 0
  %705 = vmatpush1.bf16.msra.mxu0 0
  %706 = vmatprep.subr.bf16.mxu0 0
  %707 = vmatpush1.bf16.msra.mxu0 0
  %708 = vmatprep.subr.bf16.mxu0 0
  %709 = vmatpush1.bf16.msra.mxu0 0
  %710 = vmatprep.subr.bf16.mxu0 0
  %711 = vmatpush1.bf16.msra.mxu0 0
  %712 = vmatprep.subr.bf16.mxu0 0
  %713 = vmatpush1.bf16.msra.mxu0 %v696
  %714 = vmatprep.subr.bf16.mxu0 0
  %715 = vmatpush2.bf16.msra.mxu0 0
  %716 = vmatprep.subr.bf16.mxu0 0
  %717 = vmatpush2.bf16.msra.mxu0 0
  %718 = vmatprep.subr.bf16.mxu0 0
  %719 = vmatpush2.bf16.msra.mxu0 0
  %720 = vmatprep.subr.bf16.mxu0 0
  %721 = vmatpush2.bf16.msra.mxu0 0
  %722 = vmatprep.subr.bf16.mxu0 0
  %723 = vmatpush2.bf16.msra.mxu0 0
  %724 = vmatprep.subr.bf16.mxu0 0
  %725 = vmatpush2.bf16.msra.mxu0 0
  %726 = vmatprep.subr.bf16.mxu0 0
  %727 = vmatpush2.bf16.msra.mxu0 0
  %728 = vmatprep.subr.bf16.mxu0 0
  %729 = vmatpush2.bf16.msra.mxu0 0
  %730 = vmatprep.mubr.bf16.mxu0 0
  %731 = vmatmul.mubr.bf16.gmra.mxu0 %v690
  %v732 = vpop.f32.mrf.mxu0
  %v733 = vadd.f32 0.0, %v732
  %v734 = vpop.f32.mrf.mxu0
  %v735 = vpop.f32.mrf.mxu0
  %v736 = vadd.f32 0.0, %v735
  %v737 = vpop.f32.mrf.mxu0
  %738 = vmatprep.mubr.bf16.mxu0 0
  %739 = vmatmul.mubr.bf16.gmra.mxu0 %v693
  %v740 = vpop.f32.mrf.mxu0
  %v741 = vadd.f32 0.0, %v740
  %v742 = vpop.f32.mrf.mxu0
  %v743 = vpop.f32.mrf.mxu0
  %v744 = vadd.f32 0.0, %v743
  %v745 = vpop.f32.mrf.mxu0
  %746 = vdwg.mxu0
  %v747 = vadd.f32 %v658, %v733
  %v748 = vadd.f32 %v659, %v736
  %v749 = vadd.f32 %v660, %v741
  %v750 = vadd.f32 %v661, %v744
  %v751 = vld [vmem:[#allocation2 + $0xd] sm:$0xff]
  %v752 = vld [vmem:[#allocation2 + $0x15] sm:$0xff]
  %v753 = vld [vmem:[#allocation2 + $0x1d] sm:$0xff]
  %v754 = vld [vmem:[#allocation2 + $0x25] sm:$0xff]
  %755 = vset.pattern.permute.xlu0 8
  %756 = vperm.xlu0 %755, %v42
  %v757 = vpop.permute.xlu0 %756
  %759 = vset.pattern.permute.xlu0 8
  %760 = vperm.xlu0 %759, %v43
  %v761 = vpop.permute.xlu0 %760
  %763 = vset.pattern.permute.xlu0 8
  %764 = vperm.xlu0 %763, %v44
  %v765 = vpop.permute.xlu0 %764
  %767 = vset.pattern.permute.xlu0 8
  %768 = vperm.xlu0 %767, %v45
  %v769 = vpop.permute.xlu0 %768
  %v771 = vmul.f32 %v751, %v757
  %v772 = vmul.f32 %v752, %v761
  %v773 = vmul.f32 %v753, %v765
  %v774 = vmul.f32 %v754, %v769
  %v775 = vpack.c.bf16 %v772, %v771
  %v776 = vpack.c.bf16 %v774, %v773
  %v777 = vld [vmem:[%s1 + $0x20] sm:$0xf]
  %v779 = vsel %vm27, %v775, 0
  %v782 = vsel %vm27, %v776, 0
  %v785 = vsel %vm106, %v777, 0
  %787 = vmatprep.subr.bf16.mxu0 0
  %788 = vmatpush1.bf16.msra.mxu0 0
  %789 = vmatprep.subr.bf16.mxu0 0
  %790 = vmatpush1.bf16.msra.mxu0 0
  %791 = vmatprep.subr.bf16.mxu0 0
  %792 = vmatpush1.bf16.msra.mxu0 0
  %793 = vmatprep.subr.bf16.mxu0 0
  %794 = vmatpush1.bf16.msra.mxu0 0
  %795 = vmatprep.subr.bf16.mxu0 0
  %796 = vmatpush1.bf16.msra.mxu0 0
  %797 = vmatprep.subr.bf16.mxu0 0
  %798 = vmatpush1.bf16.msra.mxu0 0
  %799 = vmatprep.subr.bf16.mxu0 0
  %800 = vmatpush1.bf16.msra.mxu0 0
  %801 = vmatprep.subr.bf16.mxu0 0
  %802 = vmatpush1.bf16.msra.mxu0 %v785
  %803 = vmatprep.subr.bf16.mxu0 0
  %804 = vmatpush2.bf16.msra.mxu0 0
  %805 = vmatprep.subr.bf16.mxu0 0
  %806 = vmatpush2.bf16.msra.mxu0 0
  %807 = vmatprep.subr.bf16.mxu0 0
  %808 = vmatpush2.bf16.msra.mxu0 0
  %809 = vmatprep.subr.bf16.mxu0 0
  %810 = vmatpush2.bf16.msra.mxu0 0
  %811 = vmatprep.subr.bf16.mxu0 0
  %812 = vmatpush2.bf16.msra.mxu0 0
  %813 = vmatprep.subr.bf16.mxu0 0
  %814 = vmatpush2.bf16.msra.mxu0 0
  %815 = vmatprep.subr.bf16.mxu0 0
  %816 = vmatpush2.bf16.msra.mxu0 0
  %817 = vmatprep.subr.bf16.mxu0 0
  %818 = vmatpush2.bf16.msra.mxu0 0
  %819 = vmatprep.mubr.bf16.mxu0 0
  %820 = vmatmul.mubr.bf16.gmra.mxu0 %v779
  %v821 = vpop.f32.mrf.mxu0
  %v822 = vadd.f32 0.0, %v821
  %v823 = vpop.f32.mrf.mxu0
  %v824 = vpop.f32.mrf.mxu0
  %v825 = vadd.f32 0.0, %v824
  %v826 = vpop.f32.mrf.mxu0
  %827 = vmatprep.mubr.bf16.mxu0 0
  %828 = vmatmul.mubr.bf16.gmra.mxu0 %v782
  %v829 = vpop.f32.mrf.mxu0
  %v830 = vadd.f32 0.0, %v829
  %v831 = vpop.f32.mrf.mxu0
  %v832 = vpop.f32.mrf.mxu0
  %v833 = vadd.f32 0.0, %v832
  %v834 = vpop.f32.mrf.mxu0
  %835 = vdwg.mxu0
  %v836 = vadd.f32 %v747, %v822
  %v837 = vadd.f32 %v748, %v825
  %v838 = vadd.f32 %v749, %v830
  %v839 = vadd.f32 %v750, %v833
  %v840 = vld [vmem:[%s2] sm:$0x1]
  %v842 = vlaneseq
  %v843 = vshrl.u32 %v842, 7
  %v844 = vsub.s32 0, %v843
  %v845 = vrot.slane %v840, %v844
  %v847 = vadd.f32 %v836, %v845
  %v848 = vadd.f32 %v837, %v845
  %v849 = vadd.f32 %v838, %v845
  %v850 = vadd.f32 %v839, %v845
  %v851 = vmul.f32 %v847, 2.0
  %v852 = vmul.f32 %v848, 2.0
  %v853 = vmul.f32 %v849, 2.0
  %v854 = vmul.f32 %v850, 2.0
  %859 = vrot.lane.b32.xlu0 %v847, 8
  %v860 = vpop.permute.xlu0 %859
  %861 = vrot.lane.b32.xlu0 %v848, 8
  %v862 = vpop.permute.xlu0 %861
  %863 = vrot.lane.b32.xlu0 %v849, 8
  %v864 = vpop.permute.xlu0 %863
  %865 = vrot.lane.b32.xlu0 %v850, 8
  %v866 = vpop.permute.xlu0 %865
  %v871 = vsub.f32 %v23, %v860
  %v872 = vsub.f32 %v24, %v862
  %v873 = vsub.f32 %v25, %v864
  %v874 = vsub.f32 %v26, %v866
  %v875 = vmul.f32 %v871, %v871
  %v876 = vmul.f32 %v872, %v872
  %v877 = vmul.f32 %v873, %v873
  %v878 = vmul.f32 %v874, %v874
  %v879 = vmul.f32 %v847, -2.0
  %v880 = vmul.f32 %v848, -2.0
  %v881 = vmul.f32 %v849, -2.0
  %v882 = vmul.f32 %v850, -2.0
  %v883 = vmul.f32 %v879, 1.442695
  %v884 = vpow.pop %v883
  %v885 = vmul.f32 %v880, 1.442695
  %v886 = vpow.pop %v885
  %v887 = vmul.f32 %v881, 1.442695
  %v888 = vpow.pop %v887
  %v889 = vmul.f32 %v882, 1.442695
  %v890 = vpow.pop %v889
  %v891 = vmul.f32 %v875, %v884
  %v892 = vmul.f32 %v876, %v886
  %v893 = vmul.f32 %v877, %v888
  %v894 = vmul.f32 %v878, %v890
  %v895 = vadd.f32 %v851, %v891
  %v896 = vadd.f32 %v852, %v892
  %v897 = vadd.f32 %v853, %v893
  %v898 = vadd.f32 %v854, %v894
  %v899 = vadd.f32 %v895, 1.837877
  %v900 = vadd.f32 %v896, 1.837877
  %v901 = vadd.f32 %v897, 1.837877
  %v902 = vadd.f32 %v898, 1.837877
  %v903 = vmul.f32 %v899, -0.5
  %v904 = vmul.f32 %v900, -0.5
  %v905 = vmul.f32 %v901, -0.5
  %v906 = vmul.f32 %v902, -0.5
  %v907 = vld [vmem:[%s4] sm:$0x3]
  %912 = vrot.lane.b32.xlu0 %v903, 120
  %v913 = vpop.permute.xlu0 %912
  %914 = vrot.lane.b32.xlu0 %v904, 120
  %v915 = vpop.permute.xlu0 %914
  %916 = vrot.lane.b32.xlu0 %v905, 120
  %v917 = vpop.permute.xlu0 %916
  %918 = vrot.lane.b32.xlu0 %v906, 120
  %v919 = vpop.permute.xlu0 %918
  %vm924 = vcmask 261120
  %v926 = vsel %vm924, %v907, 0
  %928 = vmatprep.subr.mxu0 0.0
  %929 = vmatpush1.msra.mxu0 0.0
  %930 = vmatprep.subr.mxu0 0.0
  %931 = vmatpush1.msra.mxu0 0.0
  %932 = vmatprep.subr.mxu0 0.0
  %933 = vmatpush1.msra.mxu0 0.0
  %934 = vmatprep.subr.mxu0 0.0
  %935 = vmatpush1.msra.mxu0 0.0
  %936 = vmatprep.subr.mxu0 0.0
  %937 = vmatpush1.msra.mxu0 0.0
  %938 = vmatprep.subr.mxu0 0.0
  %939 = vmatpush1.msra.mxu0 0.0
  %940 = vmatprep.subr.mxu0 0.0
  %941 = vmatpush1.msra.mxu0 0.0
  %942 = vmatprep.subr.mxu0 0.0
  %943 = vmatpush1.msra.mxu0 0.0
  %944 = vmatprep.subr.mxu0 0.0
  %945 = vmatpush1.msra.mxu0 0.0
  %946 = vmatprep.subr.mxu0 0.0
  %947 = vmatpush1.msra.mxu0 0.0
  %948 = vmatprep.subr.mxu0 0.0
  %949 = vmatpush1.msra.mxu0 0.0
  %950 = vmatprep.subr.mxu0 0.0
  %951 = vmatpush1.msra.mxu0 0.0
  %952 = vmatprep.subr.mxu0 0.0
  %953 = vmatpush1.msra.mxu0 %v919
  %954 = vmatprep.subr.mxu0 0.0
  %955 = vmatpush1.msra.mxu0 %v917
  %956 = vmatprep.subr.mxu0 0.0
  %957 = vmatpush1.msra.mxu0 %v915
  %958 = vmatprep.subr.mxu0 0.0
  %959 = vmatpush1.msra.mxu0 %v913
  %960 = vmatprep.subr.mxu0 0.0
  %961 = vmatpush2.msra.mxu0 0.0
  %962 = vmatprep.subr.mxu0 0.0
  %963 = vmatpush2.msra.mxu0 0.0
  %964 = vmatprep.subr.mxu0 0.0
  %965 = vmatpush2.msra.mxu0 0.0
  %966 = vmatprep.subr.mxu0 0.0
  %967 = vmatpush2.msra.mxu0 0.0
  %968 = vmatprep.subr.mxu0 0.0
  %969 = vmatpush2.msra.mxu0 0.0
  %970 = vmatprep.subr.mxu0 0.0
  %971 = vmatpush2.msra.mxu0 0.0
  %972 = vmatprep.subr.mxu0 0.0
  %973 = vmatpush2.msra.mxu0 0.0
  %974 = vmatprep.subr.mxu0 0.0
  %975 = vmatpush2.msra.mxu0 0.0
  %976 = vmatprep.subr.mxu0 0.0
  %977 = vmatpush2.msra.mxu0 0.0
  %978 = vmatprep.subr.mxu0 0.0
  %979 = vmatpush2.msra.mxu0 0.0
  %980 = vmatprep.subr.mxu0 0.0
  %981 = vmatpush2.msra.mxu0 0.0
  %982 = vmatprep.subr.mxu0 0.0
  %983 = vmatpush2.msra.mxu0 0.0
  %984 = vmatprep.subr.mxu0 0.0
  %985 = vmatpush2.msra.mxu0 0.0
  %986 = vmatprep.subr.mxu0 0.0
  %987 = vmatpush2.msra.mxu0 0.0
  %988 = vmatprep.subr.mxu0 0.0
  %989 = vmatpush2.msra.mxu0 0.0
  %990 = vmatprep.subr.mxu0 0.0
  %991 = vmatpush2.msra.mxu0 0.0
  %992 = vmatprep.mubr.f32.mxu0 0.0
  %993 = vmatmul.mubr.f32.gmra.mxu0 %v926
  %v994 = vpop.f32.mrf.mxu0
  %v995 = vadd.f32 0.0, %v994
  %v996 = vpop.f32.mrf.mxu0
  %997 = vdwg.mxu0
  %vm998 = vcmask 58368
  %v999 = vsel %vm998, %v995, 0.0
  %1000 = vadd.xlane.f32.xlu0 %v999
  %v1001 = vpop.xlane.xlu0 %1000
  %vm1002 = vcmask 1024
  %1003 = vst.msk [vmem:[%s6] sm:$0x3] %vm1002, %v1001
  %1004 = vst.msk [vmem:[%s5] sm:$0xff] %vm27, %v23
  %1005 = vst.msk [vmem:[%s5 + $0x8] sm:$0xff] %vm27, %v24
  %1006 = vst.msk [vmem:[%s5 + $0x10] sm:$0xff] %vm27, %v25
  %1007 = vst.msk [vmem:[%s5 + $0x18] sm:$0xff] %vm27, %v26
  // Predicated region
  $region22: #{glow_forward.7} parent=0 // pred_check
    _
  $region23: #{glow_forward.7} parent=0 // pred_check_branch
    %1009 = sbr.rel (0) target = $region25
  $region24: #{glow_forward.7} parent=0 // pred_region
    _
  $region25: #{glow_forward.7} parent=0 // pred_fallthru
    _
  // Predicated region
  $region26: #{glow_forward.7} parent=0 // pred_check
    _
  $region27: #{glow_forward.7} parent=0 // pred_check_branch
    %1011 = sbr.rel (0) target = $region29
  $region28: #{glow_forward.7} parent=0 // pred_region
    _
  $region29: #{glow_forward.7} parent=0 // pred_fallthru
    _
  // Predicated region
  $region30: #{glow_forward.7} parent=0 // pred_check
    _
  $region31: #{glow_forward.7} parent=0 // pred_check_branch
    %1013 = sbr.rel (0) target = $region33
  $region32: #{glow_forward.7} parent=0 // pred_region
    _
  $region33: #{glow_forward.7} parent=0 // pred_fallthru
    _
  // Predicated region
  $region34: #{glow_forward.7} parent=0 // pred_check
    _
  $region35: #{glow_forward.7} parent=0 // pred_check_branch
    %1015 = sbr.rel (0) target = $region37
  $region36: #{glow_forward.7} parent=0 // pred_region
    _
  $region37: #{glow_forward.7} parent=0 // pred_fallthru
    _

// kernel: glow_forward.5
$region0: #{glow_forward.5}
  #allocation0 [shape = 'u32[]', space=smem, size = 0x4, offset = 0x4, fixed_abs, tag = 'smem constant byte address 0x4 - core index']
  #allocation1 [shape = 'u32[144,128]{1,0:T(1,128)}', space=vmem, size = 0x12000, scoped, tag = 'internal scratch']
  #allocation2 [shape = 'f32[48,8]{1,0:T(8,128)}', space=vmem, size = 0x6000, scoped, tag = 'scratch operand']
  #allocation3 [shape = 'f32[48,32]{1,0:T(8,128)}', space=vmem, size = 0x6000, scoped, tag = 'scratch operand']
  %s0 = inlined_call_operand.vmem [shape: f32[32,16], index: 0, kind: input, shape index: {}]
  %s1 = inlined_call_operand.vmem [shape: f32[16,16], index: 1, kind: input, shape index: {}]
  %s2 = inlined_call_operand.vmem [shape: f32[1,16], index: 2, kind: input, shape index: {}]
  %s3 = inlined_call_operand.vmem [shape: bf16[72,32], index: 3, kind: input, shape index: {}]
  %s4 = inlined_call_operand.vmem [shape: f32[1,32], index: 4, kind: input, shape index: {}]
  %s5 = inlined_call_operand.vmem [shape: bf16[32,32], index: 5, kind: input, shape index: {}]
  %s6 = inlined_call_operand.vmem [shape: f32[1,32], index: 6, kind: input, shape index: {}]
  %s7 = inlined_call_operand.vmem [shape: bf16[288,16], index: 7, kind: input, shape index: {}]
  %s8 = inlined_call_operand.vmem [shape: f32[1,16], index: 8, kind: input, shape index: {}]
  %s9 = inlined_call_operand.vmem [shape: f32[32,9], index: 9, kind: input, shape index: {}]
  %s10 = inlined_call_operand.vmem [shape: f32[2,32], index: 10, kind: input, shape index: {}]
  %s11 = inlined_call_operand.vmem [shape: f32[32,16], index: 11, kind: output, shape index: {0}]
  %s12 = inlined_call_operand.vmem [shape: f32[2,1], index: 12, kind: output, shape index: {1}]
  %s13 = inlined_call_operand.hbm [shape: f32[2,1], index: 13, kind: output, shape index: {2}]
  %14 = xla_tuple %s11, %s12, %s13
  %s15 = sld [smem:[#allocation0]]
  $region70: #{glow_forward.5} parent=0
    _
  %s17 = ssub.s32 1, %s15
  %s18 = scalar_select 0, %s17, %s15
  $region1: #{glow_forward.5} parent=0
    #allocation4 [shape = 'u8[1024]{0}', space=vmem, size = 0x400, scoped, tag = 'output window, operand 2, single buffered']
    #allocation5 [shape = 's32[1]{0}', space=sflag, size = 0x4, scoped, tag = 'scoped memory for glow_forward.5']
    %19 = vsyncpa [#allocation5], 0
    // Predicated region
    $region2: #{glow_forward.5} parent=1 // pred_check
      _
    $region3: #{glow_forward.5} parent=1 // pred_check_branch
      %21 = sbr.rel (0) target = $region5
    $region4: #{glow_forward.5} parent=1 // pred_region
      _
    $region5: #{glow_forward.5} parent=1 // pred_fallthru
      _
    // Predicated region
    $region6: #{glow_forward.5} parent=1 // pred_check
      _
    $region7: #{glow_forward.5} parent=1 // pred_check_branch
      %23 = sbr.rel (0) target = $region9
    $region8: #{glow_forward.5} parent=1 // pred_region
      _
    $region9: #{glow_forward.5} parent=1 // pred_fallthru
      _
    // Predicated region
    $region10: #{glow_forward.5} parent=1 // pred_check
      _
    $region11: #{glow_forward.5} parent=1 // pred_check_branch
      %25 = sbr.rel (0) target = $region13
    $region12: #{glow_forward.5} parent=1 // pred_region
      _
    $region13: #{glow_forward.5} parent=1 // pred_fallthru
      _
    // Predicated region
    $region14: #{glow_forward.5} parent=1 // pred_check
      _
    $region15: #{glow_forward.5} parent=1 // pred_check_branch
      %27 = sbr.rel (0) target = $region17
    $region16: #{glow_forward.5} parent=1 // pred_region
      _
    $region17: #{glow_forward.5} parent=1 // pred_fallthru
      _
    // Predicated region
    $region18: #{glow_forward.5} parent=1 // pred_check
      _
    $region19: #{glow_forward.5} parent=1 // pred_check_branch
      %29 = sbr.rel (0) target = $region21
    $region20: #{glow_forward.5} parent=1 // pred_region
      _
    $region21: #{glow_forward.5} parent=1 // pred_fallthru
      _
    // Predicated region
    $region22: #{glow_forward.5} parent=1 // pred_check
      _
    $region23: #{glow_forward.5} parent=1 // pred_check_branch
      %31 = sbr.rel (0) target = $region25
    $region24: #{glow_forward.5} parent=1 // pred_region
      _
    $region25: #{glow_forward.5} parent=1 // pred_fallthru
      _
    // Predicated region
    $region26: #{glow_forward.5} parent=1 // pred_check
      _
    $region27: #{glow_forward.5} parent=1 // pred_check_branch
      %33 = sbr.rel (0) target = $region29
    $region28: #{glow_forward.5} parent=1 // pred_region
      _
    $region29: #{glow_forward.5} parent=1 // pred_fallthru
      _
    // Predicated region
    $region30: #{glow_forward.5} parent=1 // pred_check
      _
    $region31: #{glow_forward.5} parent=1 // pred_check_branch
      %35 = sbr.rel (0) target = $region33
    $region32: #{glow_forward.5} parent=1 // pred_region
      _
    $region33: #{glow_forward.5} parent=1 // pred_fallthru
      _
    // Predicated region
    $region34: #{glow_forward.5} parent=1 // pred_check
      _
    $region35: #{glow_forward.5} parent=1 // pred_check_branch
      %37 = sbr.rel (0) target = $region37
    $region36: #{glow_forward.5} parent=1 // pred_region
      _
    $region37: #{glow_forward.5} parent=1 // pred_fallthru
      _
    // Predicated region
    $region38: #{glow_forward.5} parent=1 // pred_check
      _
    $region39: #{glow_forward.5} parent=1 // pred_check_branch
      %39 = sbr.rel (0) target = $region41
    $region40: #{glow_forward.5} parent=1 // pred_region
      _
    $region41: #{glow_forward.5} parent=1 // pred_fallthru
      _
    // Predicated region
    $region42: #{glow_forward.5} parent=1 // pred_check
      _
    $region43: #{glow_forward.5} parent=1 // pred_check_branch
      %41 = sbr.rel (0) target = $region45
    $region44: #{glow_forward.5} parent=1 // pred_region
      _
    $region45: #{glow_forward.5} parent=1 // pred_fallthru
      _
    %v43 = vld [vmem:[%s0] sm:$0xff]
    %v44 = vld [vmem:[%s0 + $0x8] sm:$0xff]
    %v45 = vld [vmem:[%s0 + $0x10] sm:$0xff]
    %v46 = vld [vmem:[%s0 + $0x18] sm:$0xff]
    %v47 = vld [vmem:[%s1] sm:$0xff]
    %v48 = vld [vmem:[%s1 + $0x8] sm:$0xff]
    %v49 = vld [vmem:[%s2] sm:$0x1]
    %v51 = vlaneseq
    %v52 = vshrl.u32 %v51, 7
    %v53 = vsub.s32 0, %v52
    %v54 = vrot.slane %v49, %v53
    %vm56 = vcmask 130048
    %v58 = vsel %vm56, %v43, 0
    %v61 = vsel %vm56, %v44, 0
    %v64 = vsel %vm56, %v45, 0
    %v67 = vsel %vm56, %v46, 0
    %69 = vmatprep.subr.mxu0 0.0
    %70 = vmatpush1.msra.mxu0 0.0
    %71 = vmatprep.subr.mxu0 0.0
    %72 = vmatpush1.msra.mxu0 0.0
    %73 = vmatprep.subr.mxu0 0.0
    %74 = vmatpush1.msra.mxu0 0.0
    %75 = vmatprep.subr.mxu0 0.0
    %76 = vmatpush1.msra.mxu0 0.0
    %77 = vmatprep.subr.mxu0 0.0
    %78 = vmatpush1.msra.mxu0 0.0
    %79 = vmatprep.subr.mxu0 0.0
    %80 = vmatpush1.msra.mxu0 0.0
    %81 = vmatprep.subr.mxu0 0.0
    %82 = vmatpush1.msra.mxu0 0.0
    %83 = vmatprep.subr.mxu0 0.0
    %84 = vmatpush1.msra.mxu0 0.0
    %85 = vmatprep.subr.mxu0 0.0
    %86 = vmatpush1.msra.mxu0 0.0
    %87 = vmatprep.subr.mxu0 0.0
    %88 = vmatpush1.msra.mxu0 0.0
    %89 = vmatprep.subr.mxu0 0.0
    %90 = vmatpush1.msra.mxu0 0.0
    %91 = vmatprep.subr.mxu0 0.0
    %92 = vmatpush1.msra.mxu0 0.0
    %93 = vmatprep.subr.mxu0 0.0
    %94 = vmatpush1.msra.mxu0 0.0
    %95 = vmatprep.subr.mxu0 0.0
    %96 = vmatpush1.msra.mxu0 0.0
    %97 = vmatprep.subr.mxu0 0.0
    %98 = vmatpush1.msra.mxu0 %v48
    %99 = vmatprep.subr.mxu0 0.0
    %100 = vmatpush1.msra.mxu0 %v47
    %101 = vmatprep.subr.mxu0 0.0
    %102 = vmatpush2.msra.mxu0 0.0
    %103 = vmatprep.subr.mxu0 0.0
    %104 = vmatpush2.msra.mxu0 0.0
    %105 = vmatprep.subr.mxu0 0.0
    %106 = vmatpush2.msra.mxu0 0.0
    %107 = vmatprep.subr.mxu0 0.0
    %108 = vmatpush2.msra.mxu0 0.0
    %109 = vmatprep.subr.mxu0 0.0
    %110 = vmatpush2.msra.mxu0 0.0
    %111 = vmatprep.subr.mxu0 0.0
    %112 = vmatpush2.msra.mxu0 0.0
    %113 = vmatprep.subr.mxu0 0.0
    %114 = vmatpush2.msra.mxu0 0.0
    %115 = vmatprep.subr.mxu0 0.0
    %116 = vmatpush2.msra.mxu0 0.0
    %117 = vmatprep.subr.mxu0 0.0
    %118 = vmatpush2.msra.mxu0 0.0
    %119 = vmatprep.subr.mxu0 0.0
    %120 = vmatpush2.msra.mxu0 0.0
    %121 = vmatprep.subr.mxu0 0.0
    %122 = vmatpush2.msra.mxu0 0.0
    %123 = vmatprep.subr.mxu0 0.0
    %124 = vmatpush2.msra.mxu0 0.0
    %125 = vmatprep.subr.mxu0 0.0
    %126 = vmatpush2.msra.mxu0 0.0
    %127 = vmatprep.subr.mxu0 0.0
    %128 = vmatpush2.msra.mxu0 0.0
    %129 = vmatprep.subr.mxu0 0.0
    %130 = vmatpush2.msra.mxu0 0.0
    %131 = vmatprep.subr.mxu0 0.0
    %132 = vmatpush2.msra.mxu0 0.0
    %133 = vmatprep.mubr.f32.mxu0 0.0
    %134 = vmatmul.mubr.f32.gmra.mxu0 %v58
    %v135 = vpop.f32.mrf.mxu0
    %v136 = vadd.f32 %v54, %v135
    %v137 = vpop.f32.mrf.mxu0
    %138 = vmatprep.mubr.f32.mxu0 0.0
    %139 = vmatmul.mubr.f32.gmra.mxu0 %v61
    %v140 = vpop.f32.mrf.mxu0
    %v141 = vadd.f32 %v54, %v140
    %v142 = vpop.f32.mrf.mxu0
    %143 = vmatprep.mubr.f32.mxu0 0.0
    %144 = vmatmul.mubr.f32.gmra.mxu0 %v64
    %v145 = vpop.f32.mrf.mxu0
    %v146 = vadd.f32 %v54, %v145
    %v147 = vpop.f32.mrf.mxu0
    %148 = vmatprep.mubr.f32.mxu0 0.0
    %149 = vmatmul.mubr.f32.gmra.mxu0 %v67
    %v150 = vpop.f32.mrf.mxu0
    %v151 = vadd.f32 %v54, %v150
    %v152 = vpop.f32.mrf.mxu0
    %153 = vdwg.mxu0
    %vm154 = vcmask 64512
    %155 = vst.msk [vmem:[#allocation2] sm:$0xff] %vm154, 0.0
    %156 = vst.msk [vmem:[#allocation2 + $0x8] sm:$0xff] %vm154, 0.0
    %157 = vst.msk [vmem:[#allocation2 + $0x10] sm:$0xff] %vm154, 0.0
    %158 = vst.msk [vmem:[#allocation2 + $0x18] sm:$0xff] %vm154, 0.0
    %159 = vst.msk [vmem:[#allocation2 + $0x20] sm:$0xff] %vm154, 0.0
    %160 = vst.msk [vmem:[#allocation2 + $0x28] sm:$0xff] %vm154, 0.0
    %161 = vst.msk [vmem:[#allocation2 + $0x8] sm:$0xff] %vm154, %v136
    %162 = vst.msk [vmem:[#allocation2 + $0x10] sm:$0xff] %vm154, %v141
    %163 = vst.msk [vmem:[#allocation2 + $0x18] sm:$0xff] %vm154, %v146
    %164 = vst.msk [vmem:[#allocation2 + $0x20] sm:$0xff] %vm154, %v151
    %v165 = vld [vmem:[#allocation2 + $0x3] sm:$0xff]
    %v166 = vld [vmem:[#allocation2 + $0xb] sm:$0xff]
    %v167 = vld [vmem:[#allocation2 + $0x13] sm:$0xff]
    %v168 = vld [vmem:[#allocation2 + $0x1b] sm:$0xff]
    %v169 = vld [vmem:[%s9] sm:$0xff]
    %v170 = vld [vmem:[%s9 + $0x8] sm:$0xff]
    %v171 = vld [vmem:[%s9 + $0x10] sm:$0xff]
    %v172 = vld [vmem:[%s9 + $0x18] sm:$0xff]
    %174 = vset.pattern.permute.xlu0 0
    %175 = vperm.xlu0 %174, %v169
    %v176 = vpop.permute.xlu0 %175
    %179 = vset.pattern.permute.xlu0 0
    %180 = vperm.xlu0 %179, %v170
    %v181 = vpop.permute.xlu0 %180
    %184 = vset.pattern.permute.xlu0 0
    %185 = vperm.xlu0 %184, %v171
    %v186 = vpop.permute.xlu0 %185
    %189 = vset.pattern.permute.xlu0 0
    %190 = vperm.xlu0 %189, %v172
    %v191 = vpop.permute.xlu0 %190
    %v193 = vmul.f32 %v165, %v176
    %v194 = vmul.f32 %v166, %v181
    %v195 = vmul.f32 %v167, %v186
    %v196 = vmul.f32 %v168, %v191
    %v197 = vpack.c.bf16 %v194, %v193
    %v198 = vpack.c.bf16 %v196, %v195
    %v199 = vld [vmem:[%s3] sm:$0xf]
    %v200 = vld [vmem:[#allocation2 + $0x4] sm:$0xff]
    %v201 = vld [vmem:[#allocation2 + $0xc] sm:$0xff]
    %v202 = vld [vmem:[#allocation2 + $0x14] sm:$0xff]
    %v203 = vld [vmem:[#allocation2 + $0x1c] sm:$0xff]
    %204 = vset.pattern.permute.xlu0 1
    %205 = vperm.xlu0 %204, %v169
    %v206 = vpop.permute.xlu0 %205
    %208 = vset.pattern.permute.xlu0 1
    %209 = vperm.xlu0 %208, %v170
    %v210 = vpop.permute.xlu0 %209
    %212 = vset.pattern.permute.xlu0 1
    %213 = vperm.xlu0 %212, %v171
    %v214 = vpop.permute.xlu0 %213
    %216 = vset.pattern.permute.xlu0 1
    %217 = vperm.xlu0 %216, %v172
    %v218 = vpop.permute.xlu0 %217
    %v220 = vmul.f32 %v200, %v206
    %v221 = vmul.f32 %v201, %v210
    %v222 = vmul.f32 %v202, %v214
    %v223 = vmul.f32 %v203, %v218
    %v224 = vpack.c.bf16 %v221, %v220
    %v225 = vpack.c.bf16 %v223, %v222
    %v226 = vld [vmem:[%s3 + $0x4] sm:$0xf]
    %v228 = vsel %vm154, %v224, 0
    %v231 = vsel %vm154, %v225, 0
    %vm233 = vcmask 1043456
    %v235 = vsel %vm233, %v226, 0
    %237 = vmatprep.subr.bf16.mxu0 0
    %238 = vmatpush1.bf16.msra.mxu0 0
    %239 = vmatprep.subr.bf16.mxu0 0
    %240 = vmatpush1.bf16.msra.mxu0 0
    %241 = vmatprep.subr.bf16.mxu0 0
    %242 = vmatpush1.bf16.msra.mxu0 0
    %243 = vmatprep.subr.bf16.mxu0 0
    %244 = vmatpush1.bf16.msra.mxu0 0
    %245 = vmatprep.subr.bf16.mxu0 0
    %246 = vmatpush1.bf16.msra.mxu0 0
    %247 = vmatprep.subr.bf16.mxu0 0
    %248 = vmatpush1.bf16.msra.mxu0 0
    %249 = vmatprep.subr.bf16.mxu0 0
    %250 = vmatpush1.bf16.msra.mxu0 0
    %251 = vmatprep.subr.bf16.mxu0 0
    %252 = vmatpush1.bf16.msra.mxu0 %v235
    %253 = vmatprep.subr.bf16.mxu0 0
    %254 = vmatpush2.bf16.msra.mxu0 0
    %255 = vmatprep.subr.bf16.mxu0 0
    %256 = vmatpush2.bf16.msra.mxu0 0
    %257 = vmatprep.subr.bf16.mxu0 0
    %258 = vmatpush2.bf16.msra.mxu0 0
    %259 = vmatprep.subr.bf16.mxu0 0
    %260 = vmatpush2.bf16.msra.mxu0 0
    %261 = vmatprep.subr.bf16.mxu0 0
    %262 = vmatpush2.bf16.msra.mxu0 0
    %263 = vmatprep.subr.bf16.mxu0 0
    %264 = vmatpush2.bf16.msra.mxu0 0
    %265 = vmatprep.subr.bf16.mxu0 0
    %266 = vmatpush2.bf16.msra.mxu0 0
    %267 = vmatprep.subr.bf16.mxu0 0
    %268 = vmatpush2.bf16.msra.mxu0 0
    %269 = vmatprep.mubr.bf16.mxu0 0
    %270 = vmatmul.mubr.bf16.gmra.mxu0 %v228
    %v271 = vpop.f32.mrf.mxu0
    %v272 = vadd.f32 0.0, %v271
    %v273 = vpop.f32.mrf.mxu0
    %v274 = vpop.f32.mrf.mxu0
    %v275 = vadd.f32 0.0, %v274
    %v276 = vpop.f32.mrf.mxu0
    %277 = vmatprep.mubr.bf16.mxu0 0
    %278 = vmatmul.mubr.bf16.gmra.mxu0 %v231
    %v279 = vpop.f32.mrf.mxu0
    %v280 = vadd.f32 0.0, %v279
    %v281 = vpop.f32.mrf.mxu0
    %v282 = vpop.f32.mrf.mxu0
    %v283 = vadd.f32 0.0, %v282
    %v284 = vpop.f32.mrf.mxu0
    %285 = vdwg.mxu0
    %v287 = vsel %vm154, %v197, 0
    %v290 = vsel %vm154, %v198, 0
    %v293 = vsel %vm233, %v199, 0
    %295 = vmatprep.subr.bf16.mxu0 0
    %296 = vmatpush1.bf16.msra.mxu0 0
    %297 = vmatprep.subr.bf16.mxu0 0
    %298 = vmatpush1.bf16.msra.mxu0 0
    %299 = vmatprep.subr.bf16.mxu0 0
    %300 = vmatpush1.bf16.msra.mxu0 0
    %301 = vmatprep.subr.bf16.mxu0 0
    %302 = vmatpush1.bf16.msra.mxu0 0
    %303 = vmatprep.subr.bf16.mxu0 0
    %304 = vmatpush1.bf16.msra.mxu0 0
    %305 = vmatprep.subr.bf16.mxu0 0
    %306 = vmatpush1.bf16.msra.mxu0 0
    %307 = vmatprep.subr.bf16.mxu0 0
    %308 = vmatpush1.bf16.msra.mxu0 0
    %309 = vmatprep.subr.bf16.mxu0 0
    %310 = vmatpush1.bf16.msra.mxu0 %v293
    %311 = vmatprep.subr.bf16.mxu0 0
    %312 = vmatpush2.bf16.msra.mxu0 0
    %313 = vmatprep.subr.bf16.mxu0 0
    %314 = vmatpush2.bf16.msra.mxu0 0
    %315 = vmatprep.subr.bf16.mxu0 0
    %316 = vmatpush2.bf16.msra.mxu0 0
    %317 = vmatprep.subr.bf16.mxu0 0
    %318 = vmatpush2.bf16.msra.mxu0 0
    %319 = vmatprep.subr.bf16.mxu0 0
    %320 = vmatpush2.bf16.msra.mxu0 0
    %321 = vmatprep.subr.bf16.mxu0 0
    %322 = vmatpush2.bf16.msra.mxu0 0
    %323 = vmatprep.subr.bf16.mxu0 0
    %324 = vmatpush2.bf16.msra.mxu0 0
    %325 = vmatprep.subr.bf16.mxu0 0
    %326 = vmatpush2.bf16.msra.mxu0 0
    %327 = vmatprep.mubr.bf16.mxu0 0
    %328 = vmatmul.mubr.bf16.gmra.mxu0 %v287
    %v329 = vpop.f32.mrf.mxu0
    %v330 = vadd.f32 %v272, %v329
    %v331 = vpop.f32.mrf.mxu0
    %v332 = vpop.f32.mrf.mxu0
    %v333 = vadd.f32 %v275, %v332
    %v334 = vpop.f32.mrf.mxu0
    %335 = vmatprep.mubr.bf16.mxu0 0
    %336 = vmatmul.mubr.bf16.gmra.mxu0 %v290
    %v337 = vpop.f32.mrf.mxu0
    %v338 = vadd.f32 %v280, %v337
    %v339 = vpop.f32.mrf.mxu0
    %v340 = vpop.f32.mrf.mxu0
    %v341 = vadd.f32 %v283, %v340
    %v342 = vpop.f32.mrf.mxu0
    %343 = vdwg.mxu0
    %v344 = vld [vmem:[#allocation2 + $0x5] sm:$0xff]
    %v345 = vld [vmem:[#allocation2 + $0xd] sm:$0xff]
    %v346 = vld [vmem:[#allocation2 + $0x15] sm:$0xff]
    %v347 = vld [vmem:[#allocation2 + $0x1d] sm:$0xff]
    %348 = vset.pattern.permute.xlu0 2
    %349 = vperm.xlu0 %348, %v169
    %v350 = vpop.permute.xlu0 %349
    %352 = vset.pattern.permute.xlu0 2
    %353 = vperm.xlu0 %352, %v170
    %v354 = vpop.permute.xlu0 %353
    %356 = vset.pattern.permute.xlu0 2
    %357 = vperm.xlu0 %356, %v171
    %v358 = vpop.permute.xlu0 %357
    %360 = vset.pattern.permute.xlu0 2
    %361 = vperm.xlu0 %360, %v172
    %v362 = vpop.permute.xlu0 %361
    %v364 = vmul.f32 %v344, %v350
    %v365 = vmul.f32 %v345, %v354
    %v366 = vmul.f32 %v346, %v358
    %v367 = vmul.f32 %v347, %v362
    %v368 = vpack.c.bf16 %v365, %v364
    %v369 = vpack.c.bf16 %v367, %v366
    %v370 = vld [vmem:[%s3 + $0x8] sm:$0xf]
    %v372 = vsel %vm154, %v368, 0
    %v375 = vsel %vm154, %v369, 0
    %v378 = vsel %vm233, %v370, 0
    %380 = vmatprep.subr.bf16.mxu0 0
    %381 = vmatpush1.bf16.msra.mxu0 0
    %382 = vmatprep.subr.bf16.mxu0 0
    %383 = vmatpush1.bf16.msra.mxu0 0
    %384 = vmatprep.subr.bf16.mxu0 0
    %385 = vmatpush1.bf16.msra.mxu0 0
    %386 = vmatprep.subr.bf16.mxu0 0
    %387 = vmatpush1.bf16.msra.mxu0 0
    %388 = vmatprep.subr.bf16.mxu0 0
    %389 = vmatpush1.bf16.msra.mxu0 0
    %390 = vmatprep.subr.bf16.mxu0 0
    %391 = vmatpush1.bf16.msra.mxu0 0
    %392 = vmatprep.subr.bf16.mxu0 0
    %393 = vmatpush1.bf16.msra.mxu0 0
    %394 = vmatprep.subr.bf16.mxu0 0
    %395 = vmatpush1.bf16.msra.mxu0 %v378
    %396 = vmatprep.subr.bf16.mxu0 0
    %397 = vmatpush2.bf16.msra.mxu0 0
    %398 = vmatprep.subr.bf16.mxu0 0
    %399 = vmatpush2.bf16.msra.mxu0 0
    %400 = vmatprep.subr.bf16.mxu0 0
    %401 = vmatpush2.bf16.msra.mxu0 0
    %402 = vmatprep.subr.bf16.mxu0 0
    %403 = vmatpush2.bf16.msra.mxu0 0
    %404 = vmatprep.subr.bf16.mxu0 0
    %405 = vmatpush2.bf16.msra.mxu0 0
    %406 = vmatprep.subr.bf16.mxu0 0
    %407 = vmatpush2.bf16.msra.mxu0 0
    %408 = vmatprep.subr.bf16.mxu0 0
    %409 = vmatpush2.bf16.msra.mxu0 0
    %410 = vmatprep.subr.bf16.mxu0 0
    %411 = vmatpush2.bf16.msra.mxu0 0
    %412 = vmatprep.mubr.bf16.mxu0 0
    %413 = vmatmul.mubr.bf16.gmra.mxu0 %v372
    %v414 = vpop.f32.mrf.mxu0
    %v415 = vadd.f32 0.0, %v414
    %v416 = vpop.f32.mrf.mxu0
    %v417 = vpop.f32.mrf.mxu0
    %v418 = vadd.f32 0.0, %v417
    %v419 = vpop.f32.mrf.mxu0
    %420 = vmatprep.mubr.bf16.mxu0 0
    %421 = vmatmul.mubr.bf16.gmra.mxu0 %v375
    %v422 = vpop.f32.mrf.mxu0
    %v423 = vadd.f32 0.0, %v422
    %v424 = vpop.f32.mrf.mxu0
    %v425 = vpop.f32.mrf.mxu0
    %v426 = vadd.f32 0.0, %v425
    %v427 = vpop.f32.mrf.mxu0
    %428 = vdwg.mxu0
    %v429 = vadd.f32 %v330, %v415
    %v430 = vadd.f32 %v333, %v418
    %v431 = vadd.f32 %v338, %v423
    %v432 = vadd.f32 %v341, %v426
    %v433 = vld [vmem:[#allocation2 + $0x7] sm:$0xff]
    %v434 = vld [vmem:[#allocation2 + $0xf] sm:$0xff]
    %v435 = vld [vmem:[#allocation2 + $0x17] sm:$0xff]
    %v436 = vld [vmem:[#allocation2 + $0x1f] sm:$0xff]
    %437 = vset.pattern.permute.xlu0 3
    %438 = vperm.xlu0 %437, %v169
    %v439 = vpop.permute.xlu0 %438
    %441 = vset.pattern.permute.xlu0 3
    %442 = vperm.xlu0 %441, %v170
    %v443 = vpop.permute.xlu0 %442
    %445 = vset.pattern.permute.xlu0 3
    %446 = vperm.xlu0 %445, %v171
    %v447 = vpop.permute.xlu0 %446
    %449 = vset.pattern.permute.xlu0 3
    %450 = vperm.xlu0 %449, %v172
    %v451 = vpop.permute.xlu0 %450
    %v453 = vmul.f32 %v433, %v439
    %v454 = vmul.f32 %v434, %v443
    %v455 = vmul.f32 %v435, %v447
    %v456 = vmul.f32 %v436, %v451
    %v457 = vpack.c.bf16 %v454, %v453
    %v458 = vpack.c.bf16 %v456, %v455
    %v459 = vld [vmem:[%s3 + $0xc] sm:$0xf]
    %v461 = vsel %vm154, %v457, 0
    %v464 = vsel %vm154, %v458, 0
    %v467 = vsel %vm233, %v459, 0
    %469 = vmatprep.subr.bf16.mxu0 0
    %470 = vmatpush1.bf16.msra.mxu0 0
    %471 = vmatprep.subr.bf16.mxu0 0
    %472 = vmatpush1.bf16.msra.mxu0 0
    %473 = vmatprep.subr.bf16.mxu0 0
    %474 = vmatpush1.bf16.msra.mxu0 0
    %475 = vmatprep.subr.bf16.mxu0 0
    %476 = vmatpush1.bf16.msra.mxu0 0
    %477 = vmatprep.subr.bf16.mxu0 0
    %478 = vmatpush1.bf16.msra.mxu0 0
    %479 = vmatprep.subr.bf16.mxu0 0
    %480 = vmatpush1.bf16.msra.mxu0 0
    %481 = vmatprep.subr.bf16.mxu0 0
    %482 = vmatpush1.bf16.msra.mxu0 0
    %483 = vmatprep.subr.bf16.mxu0 0
    %484 = vmatpush1.bf16.msra.mxu0 %v467
    %485 = vmatprep.subr.bf16.mxu0 0
    %486 = vmatpush2.bf16.msra.mxu0 0
    %487 = vmatprep.subr.bf16.mxu0 0
    %488 = vmatpush2.bf16.msra.mxu0 0
    %489 = vmatprep.subr.bf16.mxu0 0
    %490 = vmatpush2.bf16.msra.mxu0 0
    %491 = vmatprep.subr.bf16.mxu0 0
    %492 = vmatpush2.bf16.msra.mxu0 0
    %493 = vmatprep.subr.bf16.mxu0 0
    %494 = vmatpush2.bf16.msra.mxu0 0
    %495 = vmatprep.subr.bf16.mxu0 0
    %496 = vmatpush2.bf16.msra.mxu0 0
    %497 = vmatprep.subr.bf16.mxu0 0
    %498 = vmatpush2.bf16.msra.mxu0 0
    %499 = vmatprep.subr.bf16.mxu0 0
    %500 = vmatpush2.bf16.msra.mxu0 0
    %501 = vmatprep.mubr.bf16.mxu0 0
    %502 = vmatmul.mubr.bf16.gmra.mxu0 %v461
    %v503 = vpop.f32.mrf.mxu0
    %v504 = vadd.f32 0.0, %v503
    %v505 = vpop.f32.mrf.mxu0
    %v506 = vpop.f32.mrf.mxu0
    %v507 = vadd.f32 0.0, %v506
    %v508 = vpop.f32.mrf.mxu0
    %509 = vmatprep.mubr.bf16.mxu0 0
    %510 = vmatmul.mubr.bf16.gmra.mxu0 %v464
    %v511 = vpop.f32.mrf.mxu0
    %v512 = vadd.f32 0.0, %v511
    %v513 = vpop.f32.mrf.mxu0
    %v514 = vpop.f32.mrf.mxu0
    %v515 = vadd.f32 0.0, %v514
    %v516 = vpop.f32.mrf.mxu0
    %517 = vdwg.mxu0
    %v518 = vadd.f32 %v429, %v504
    %v519 = vadd.f32 %v430, %v507
    %v520 = vadd.f32 %v431, %v512
    %v521 = vadd.f32 %v432, %v515
    %v522 = vld [vmem:[#allocation2 + $0x8] sm:$0xff]
    %v523 = vld [vmem:[#allocation2 + $0x10] sm:$0xff]
    %v524 = vld [vmem:[#allocation2 + $0x18] sm:$0xff]
    %v525 = vld [vmem:[#allocation2 + $0x20] sm:$0xff]
    %526 = vset.pattern.permute.xlu0 4
    %527 = vperm.xlu0 %526, %v169
    %v528 = vpop.permute.xlu0 %527
    %530 = vset.pattern.permute.xlu0 4
    %531 = vperm.xlu0 %530, %v170
    %v532 = vpop.permute.xlu0 %531
    %534 = vset.pattern.permute.xlu0 4
    %535 = vperm.xlu0 %534, %v171
    %v536 = vpop.permute.xlu0 %535
    %538 = vset.pattern.permute.xlu0 4
    %539 = vperm.xlu0 %538, %v172
    %v540 = vpop.permute.xlu0 %539
    %v542 = vmul.f32 %v522, %v528
    %v543 = vmul.f32 %v523, %v532
    %v544 = vmul.f32 %v524, %v536
    %v545 = vmul.f32 %v525, %v540
    %v546 = vpack.c.bf16 %v543, %v542
    %v547 = vpack.c.bf16 %v545, %v544
    %v548 = vld [vmem:[%s3 + $0x10] sm:$0xf]
    %v550 = vsel %vm154, %v546, 0
    %v553 = vsel %vm154, %v547, 0
    %v556 = vsel %vm233, %v548, 0
    %558 = vmatprep.subr.bf16.mxu0 0
    %559 = vmatpush1.bf16.msra.mxu0 0
    %560 = vmatprep.subr.bf16.mxu0 0
    %561 = vmatpush1.bf16.msra.mxu0 0
    %562 = vmatprep.subr.bf16.mxu0 0
    %563 = vmatpush1.bf16.msra.mxu0 0
    %564 = vmatprep.subr.bf16.mxu0 0
    %565 = vmatpush1.bf16.msra.mxu0 0
    %566 = vmatprep.subr.bf16.mxu0 0
    %567 = vmatpush1.bf16.msra.mxu0 0
    %568 = vmatprep.subr.bf16.mxu0 0
    %569 = vmatpush1.bf16.msra.mxu0 0
    %570 = vmatprep.subr.bf16.mxu0 0
    %571 = vmatpush1.bf16.msra.mxu0 0
    %572 = vmatprep.subr.bf16.mxu0 0
    %573 = vmatpush1.bf16.msra.mxu0 %v556
    %574 = vmatprep.subr.bf16.mxu0 0
    %575 = vmatpush2.bf16.msra.mxu0 0
    %576 = vmatprep.subr.bf16.mxu0 0
    %577 = vmatpush2.bf16.msra.mxu0 0
    %578 = vmatprep.subr.bf16.mxu0 0
    %579 = vmatpush2.bf16.msra.mxu0 0
    %580 = vmatprep.subr.bf16.mxu0 0
    %581 = vmatpush2.bf16.msra.mxu0 0
    %582 = vmatprep.subr.bf16.mxu0 0
    %583 = vmatpush2.bf16.msra.mxu0 0
    %584 = vmatprep.subr.bf16.mxu0 0
    %585 = vmatpush2.bf16.msra.mxu0 0
    %586 = vmatprep.subr.bf16.mxu0 0
    %587 = vmatpush2.bf16.msra.mxu0 0
    %588 = vmatprep.subr.bf16.mxu0 0
    %589 = vmatpush2.bf16.msra.mxu0 0
    %590 = vmatprep.mubr.bf16.mxu0 0
    %591 = vmatmul.mubr.bf16.gmra.mxu0 %v550
    %v592 = vpop.f32.mrf.mxu0
    %v593 = vadd.f32 0.0, %v592
    %v594 = vpop.f32.mrf.mxu0
    %v595 = vpop.f32.mrf.mxu0
    %v596 = vadd.f32 0.0, %v595
    %v597 = vpop.f32.mrf.mxu0
    %598 = vmatprep.mubr.bf16.mxu0 0
    %599 = vmatmul.mubr.bf16.gmra.mxu0 %v553
    %v600 = vpop.f32.mrf.mxu0
    %v601 = vadd.f32 0.0, %v600
    %v602 = vpop.f32.mrf.mxu0
    %v603 = vpop.f32.mrf.mxu0
    %v604 = vadd.f32 0.0, %v603
    %v605 = vpop.f32.mrf.mxu0
    %606 = vdwg.mxu0
    %v607 = vadd.f32 %v518, %v593
    %v608 = vadd.f32 %v519, %v596
    %v609 = vadd.f32 %v520, %v601
    %v610 = vadd.f32 %v521, %v604
    %v611 = vld [vmem:[#allocation2 + $0x9] sm:$0xff]
    %v612 = vld [vmem:[#allocation2 + $0x11] sm:$0xff]
    %v613 = vld [vmem:[#allocation2 + $0x19] sm:$0xff]
    %v614 = vld [vmem:[#allocation2 + $0x21] sm:$0xff]
    %615 = vset.pattern.permute.xlu0 5
    %616 = vperm.xlu0 %615, %v169
    %v617 = vpop.permute.xlu0 %616
    %619 = vset.pattern.permute.xlu0 5
    %620 = vperm.xlu0 %619, %v170
    %v621 = vpop.permute.xlu0 %620
    %623 = vset.pattern.permute.xlu0 5
    %624 = vperm.xlu0 %623, %v171
    %v625 = vpop.permute.xlu0 %624
    %627 = vset.pattern.permute.xlu0 5
    %628 = vperm.xlu0 %627, %v172
    %v629 = vpop.permute.xlu0 %628
    %v631 = vmul.f32 %v611, %v617
    %v632 = vmul.f32 %v612, %v621
    %v633 = vmul.f32 %v613, %v625
    %v634 = vmul.f32 %v614, %v629
    %v635 = vpack.c.bf16 %v632, %v631
    %v636 = vpack.c.bf16 %v634, %v633
    %v637 = vld [vmem:[%s3 + $0x14] sm:$0xf]
    %v639 = vsel %vm154, %v635, 0
    %v642 = vsel %vm154, %v636, 0
    %v645 = vsel %vm233, %v637, 0
    %647 = vmatprep.subr.bf16.mxu0 0
    %648 = vmatpush1.bf16.msra.mxu0 0
    %649 = vmatprep.subr.bf16.mxu0 0
    %650 = vmatpush1.bf16.msra.mxu0 0
    %651 = vmatprep.subr.bf16.mxu0 0
    %652 = vmatpush1.bf16.msra.mxu0 0
    %653 = vmatprep.subr.bf16.mxu0 0
    %654 = vmatpush1.bf16.msra.mxu0 0
    %655 = vmatprep.subr.bf16.mxu0 0
    %656 = vmatpush1.bf16.msra.mxu0 0
    %657 = vmatprep.subr.bf16.mxu0 0
    %658 = vmatpush1.bf16.msra.mxu0 0
    %659 = vmatprep.subr.bf16.mxu0 0
    %660 = vmatpush1.bf16.msra.mxu0 0
    %661 = vmatprep.subr.bf16.mxu0 0
    %662 = vmatpush1.bf16.msra.mxu0 %v645
    %663 = vmatprep.subr.bf16.mxu0 0
    %664 = vmatpush2.bf16.msra.mxu0 0
    %665 = vmatprep.subr.bf16.mxu0 0
    %666 = vmatpush2.bf16.msra.mxu0 0
    %667 = vmatprep.subr.bf16.mxu0 0
    %668 = vmatpush2.bf16.msra.mxu0 0
    %669 = vmatprep.subr.bf16.mxu0 0
    %670 = vmatpush2.bf16.msra.mxu0 0
    %671 = vmatprep.subr.bf16.mxu0 0
    %672 = vmatpush2.bf16.msra.mxu0 0
    %673 = vmatprep.subr.bf16.mxu0 0
    %674 = vmatpush2.bf16.msra.mxu0 0
    %675 = vmatprep.subr.bf16.mxu0 0
    %676 = vmatpush2.bf16.msra.mxu0 0
    %677 = vmatprep.subr.bf16.mxu0 0
    %678 = vmatpush2.bf16.msra.mxu0 0
    %679 = vmatprep.mubr.bf16.mxu0 0
    %680 = vmatmul.mubr.bf16.gmra.mxu0 %v639
    %v681 = vpop.f32.mrf.mxu0
    %v682 = vadd.f32 0.0, %v681
    %v683 = vpop.f32.mrf.mxu0
    %v684 = vpop.f32.mrf.mxu0
    %v685 = vadd.f32 0.0, %v684
    %v686 = vpop.f32.mrf.mxu0
    %687 = vmatprep.mubr.bf16.mxu0 0
    %688 = vmatmul.mubr.bf16.gmra.mxu0 %v642
    %v689 = vpop.f32.mrf.mxu0
    %v690 = vadd.f32 0.0, %v689
    %v691 = vpop.f32.mrf.mxu0
    %v692 = vpop.f32.mrf.mxu0
    %v693 = vadd.f32 0.0, %v692
    %v694 = vpop.f32.mrf.mxu0
    %695 = vdwg.mxu0
    %v696 = vadd.f32 %v607, %v682
    %v697 = vadd.f32 %v608, %v685
    %v698 = vadd.f32 %v609, %v690
    %v699 = vadd.f32 %v610, %v693
    %v700 = vld [vmem:[#allocation2 + $0xb] sm:$0xff]
    %v701 = vld [vmem:[#allocation2 + $0x13] sm:$0xff]
    %v702 = vld [vmem:[#allocation2 + $0x1b] sm:$0xff]
    %v703 = vld [vmem:[#allocation2 + $0x23] sm:$0xff]
    %704 = vset.pattern.permute.xlu0 6
    %705 = vperm.xlu0 %704, %v169
    %v706 = vpop.permute.xlu0 %705
    %708 = vset.pattern.permute.xlu0 6
    %709 = vperm.xlu0 %708, %v170
    %v710 = vpop.permute.xlu0 %709
    %712 = vset.pattern.permute.xlu0 6
    %713 = vperm.xlu0 %712, %v171
    %v714 = vpop.permute.xlu0 %713
    %716 = vset.pattern.permute.xlu0 6
    %717 = vperm.xlu0 %716, %v172
    %v718 = vpop.permute.xlu0 %717
    %v720 = vmul.f32 %v700, %v706
    %v721 = vmul.f32 %v701, %v710
    %v722 = vmul.f32 %v702, %v714
    %v723 = vmul.f32 %v703, %v718
    %v724 = vpack.c.bf16 %v721, %v720
    %v725 = vpack.c.bf16 %v723, %v722
    %v726 = vld [vmem:[%s3 + $0x18] sm:$0xf]
    %v728 = vsel %vm154, %v724, 0
    %v731 = vsel %vm154, %v725, 0
    %v734 = vsel %vm233, %v726, 0
    %736 = vmatprep.subr.bf16.mxu0 0
    %737 = vmatpush1.bf16.msra.mxu0 0
    %738 = vmatprep.subr.bf16.mxu0 0
    %739 = vmatpush1.bf16.msra.mxu0 0
    %740 = vmatprep.subr.bf16.mxu0 0
    %741 = vmatpush1.bf16.msra.mxu0 0
    %742 = vmatprep.subr.bf16.mxu0 0
    %743 = vmatpush1.bf16.msra.mxu0 0
    %744 = vmatprep.subr.bf16.mxu0 0
    %745 = vmatpush1.bf16.msra.mxu0 0
    %746 = vmatprep.subr.bf16.mxu0 0
    %747 = vmatpush1.bf16.msra.mxu0 0
    %748 = vmatprep.subr.bf16.mxu0 0
    %749 = vmatpush1.bf16.msra.mxu0 0
    %750 = vmatprep.subr.bf16.mxu0 0
    %751 = vmatpush1.bf16.msra.mxu0 %v734
    %752 = vmatprep.subr.bf16.mxu0 0
    %753 = vmatpush2.bf16.msra.mxu0 0
    %754 = vmatprep.subr.bf16.mxu0 0
    %755 = vmatpush2.bf16.msra.mxu0 0
    %756 = vmatprep.subr.bf16.mxu0 0
    %757 = vmatpush2.bf16.msra.mxu0 0
    %758 = vmatprep.subr.bf16.mxu0 0
    %759 = vmatpush2.bf16.msra.mxu0 0
    %760 = vmatprep.subr.bf16.mxu0 0
    %761 = vmatpush2.bf16.msra.mxu0 0
    %762 = vmatprep.subr.bf16.mxu0 0
    %763 = vmatpush2.bf16.msra.mxu0 0
    %764 = vmatprep.subr.bf16.mxu0 0
    %765 = vmatpush2.bf16.msra.mxu0 0
    %766 = vmatprep.subr.bf16.mxu0 0
    %767 = vmatpush2.bf16.msra.mxu0 0
    %768 = vmatprep.mubr.bf16.mxu0 0
    %769 = vmatmul.mubr.bf16.gmra.mxu0 %v728
    %v770 = vpop.f32.mrf.mxu0
    %v771 = vadd.f32 0.0, %v770
    %v772 = vpop.f32.mrf.mxu0
    %v773 = vpop.f32.mrf.mxu0
    %v774 = vadd.f32 0.0, %v773
    %v775 = vpop.f32.mrf.mxu0
    %776 = vmatprep.mubr.bf16.mxu0 0
    %777 = vmatmul.mubr.bf16.gmra.mxu0 %v731
    %v778 = vpop.f32.mrf.mxu0
    %v779 = vadd.f32 0.0, %v778
    %v780 = vpop.f32.mrf.mxu0
    %v781 = vpop.f32.mrf.mxu0
    %v782 = vadd.f32 0.0, %v781
    %v783 = vpop.f32.mrf.mxu0
    %784 = vdwg.mxu0
    %v785 = vadd.f32 %v696, %v771
    %v786 = vadd.f32 %v697, %v774
    %v787 = vadd.f32 %v698, %v779
    %v788 = vadd.f32 %v699, %v782
    %v789 = vld [vmem:[#allocation2 + $0xc] sm:$0xff]
    %v790 = vld [vmem:[#allocation2 + $0x14] sm:$0xff]
    %v791 = vld [vmem:[#allocation2 + $0x1c] sm:$0xff]
    %v792 = vld [vmem:[#allocation2 + $0x24] sm:$0xff]
    %793 = vset.pattern.permute.xlu0 7
    %794 = vperm.xlu0 %793, %v169
    %v795 = vpop.permute.xlu0 %794
    %797 = vset.pattern.permute.xlu0 7
    %798 = vperm.xlu0 %797, %v170
    %v799 = vpop.permute.xlu0 %798
    %801 = vset.pattern.permute.xlu0 7
    %802 = vperm.xlu0 %801, %v171
    %v803 = vpop.permute.xlu0 %802
    %805 = vset.pattern.permute.xlu0 7
    %806 = vperm.xlu0 %805, %v172
    %v807 = vpop.permute.xlu0 %806
    %v809 = vmul.f32 %v789, %v795
    %v810 = vmul.f32 %v790, %v799
    %v811 = vmul.f32 %v791, %v803
    %v812 = vmul.f32 %v792, %v807
    %v813 = vpack.c.bf16 %v810, %v809
    %v814 = vpack.c.bf16 %v812, %v811
    %v815 = vld [vmem:[%s3 + $0x1c] sm:$0xf]
    %v817 = vsel %vm154, %v813, 0
    %v820 = vsel %vm154, %v814, 0
    %v823 = vsel %vm233, %v815, 0
    %825 = vmatprep.subr.bf16.mxu0 0
    %826 = vmatpush1.bf16.msra.mxu0 0
    %827 = vmatprep.subr.bf16.mxu0 0
    %828 = vmatpush1.bf16.msra.mxu0 0
    %829 = vmatprep.subr.bf16.mxu0 0
    %830 = vmatpush1.bf16.msra.mxu0 0
    %831 = vmatprep.subr.bf16.mxu0 0
    %832 = vmatpush1.bf16.msra.mxu0 0
    %833 = vmatprep.subr.bf16.mxu0 0
    %834 = vmatpush1.bf16.msra.mxu0 0
    %835 = vmatprep.subr.bf16.mxu0 0
    %836 = vmatpush1.bf16.msra.mxu0 0
    %837 = vmatprep.subr.bf16.mxu0 0
    %838 = vmatpush1.bf16.msra.mxu0 0
    %839 = vmatprep.subr.bf16.mxu0 0
    %840 = vmatpush1.bf16.msra.mxu0 %v823
    %841 = vmatprep.subr.bf16.mxu0 0
    %842 = vmatpush2.bf16.msra.mxu0 0
    %843 = vmatprep.subr.bf16.mxu0 0
    %844 = vmatpush2.bf16.msra.mxu0 0
    %845 = vmatprep.subr.bf16.mxu0 0
    %846 = vmatpush2.bf16.msra.mxu0 0
    %847 = vmatprep.subr.bf16.mxu0 0
    %848 = vmatpush2.bf16.msra.mxu0 0
    %849 = vmatprep.subr.bf16.mxu0 0
    %850 = vmatpush2.bf16.msra.mxu0 0
    %851 = vmatprep.subr.bf16.mxu0 0
    %852 = vmatpush2.bf16.msra.mxu0 0
    %853 = vmatprep.subr.bf16.mxu0 0
    %854 = vmatpush2.bf16.msra.mxu0 0
    %855 = vmatprep.subr.bf16.mxu0 0
    %856 = vmatpush2.bf16.msra.mxu0 0
    %857 = vmatprep.mubr.bf16.mxu0 0
    %858 = vmatmul.mubr.bf16.gmra.mxu0 %v817
    %v859 = vpop.f32.mrf.mxu0
    %v860 = vadd.f32 0.0, %v859
    %v861 = vpop.f32.mrf.mxu0
    %v862 = vpop.f32.mrf.mxu0
    %v863 = vadd.f32 0.0, %v862
    %v864 = vpop.f32.mrf.mxu0
    %865 = vmatprep.mubr.bf16.mxu0 0
    %866 = vmatmul.mubr.bf16.gmra.mxu0 %v820
    %v867 = vpop.f32.mrf.mxu0
    %v868 = vadd.f32 0.0, %v867
    %v869 = vpop.f32.mrf.mxu0
    %v870 = vpop.f32.mrf.mxu0
    %v871 = vadd.f32 0.0, %v870
    %v872 = vpop.f32.mrf.mxu0
    %873 = vdwg.mxu0
    %v874 = vadd.f32 %v785, %v860
    %v875 = vadd.f32 %v786, %v863
    %v876 = vadd.f32 %v787, %v868
    %v877 = vadd.f32 %v788, %v871
    %v878 = vld [vmem:[#allocation2 + $0xd] sm:$0xff]
    %v879 = vld [vmem:[#allocation2 + $0x15] sm:$0xff]
    %v880 = vld [vmem:[#allocation2 + $0x1d] sm:$0xff]
    %v881 = vld [vmem:[#allocation2 + $0x25] sm:$0xff]
    %882 = vset.pattern.permute.xlu0 8
    %883 = vperm.xlu0 %882, %v169
    %v884 = vpop.permute.xlu0 %883
    %886 = vset.pattern.permute.xlu0 8
    %887 = vperm.xlu0 %886, %v170
    %v888 = vpop.permute.xlu0 %887
    %890 = vset.pattern.permute.xlu0 8
    %891 = vperm.xlu0 %890, %v171
    %v892 = vpop.permute.xlu0 %891
    %894 = vset.pattern.permute.xlu0 8
    %895 = vperm.xlu0 %894, %v172
    %v896 = vpop.permute.xlu0 %895
    %v898 = vmul.f32 %v878, %v884
    %v899 = vmul.f32 %v879, %v888
    %v900 = vmul.f32 %v880, %v892
    %v901 = vmul.f32 %v881, %v896
    %v902 = vpack.c.bf16 %v899, %v898
    %v903 = vpack.c.bf16 %v901, %v900
    %v904 = vld [vmem:[%s3 + $0x20] sm:$0xf]
    %v906 = vsel %vm154, %v902, 0
    %v909 = vsel %vm154, %v903, 0
    %v912 = vsel %vm233, %v904, 0
    %914 = vmatprep.subr.bf16.mxu0 0
    %915 = vmatpush1.bf16.msra.mxu0 0
    %916 = vmatprep.subr.bf16.mxu0 0
    %917 = vmatpush1.bf16.msra.mxu0 0
    %918 = vmatprep.subr.bf16.mxu0 0
    %919 = vmatpush1.bf16.msra.mxu0 0
    %920 = vmatprep.subr.bf16.mxu0 0
    %921 = vmatpush1.bf16.msra.mxu0 0
    %922 = vmatprep.subr.bf16.mxu0 0
    %923 = vmatpush1.bf16.msra.mxu0 0
    %924 = vmatprep.subr.bf16.mxu0 0
    %925 = vmatpush1.bf16.msra.mxu0 0
    %926 = vmatprep.subr.bf16.mxu0 0
    %927 = vmatpush1.bf16.msra.mxu0 0
    %928 = vmatprep.subr.bf16.mxu0 0
    %929 = vmatpush1.bf16.msra.mxu0 %v912
    %930 = vmatprep.subr.bf16.mxu0 0
    %931 = vmatpush2.bf16.msra.mxu0 0
    %932 = vmatprep.subr.bf16.mxu0 0
    %933 = vmatpush2.bf16.msra.mxu0 0
    %934 = vmatprep.subr.bf16.mxu0 0
    %935 = vmatpush2.bf16.msra.mxu0 0
    %936 = vmatprep.subr.bf16.mxu0 0
    %937 = vmatpush2.bf16.msra.mxu0 0
    %938 = vmatprep.subr.bf16.mxu0 0
    %939 = vmatpush2.bf16.msra.mxu0 0
    %940 = vmatprep.subr.bf16.mxu0 0
    %941 = vmatpush2.bf16.msra.mxu0 0
    %942 = vmatprep.subr.bf16.mxu0 0
    %943 = vmatpush2.bf16.msra.mxu0 0
    %944 = vmatprep.subr.bf16.mxu0 0
    %945 = vmatpush2.bf16.msra.mxu0 0
    %946 = vmatprep.mubr.bf16.mxu0 0
    %947 = vmatmul.mubr.bf16.gmra.mxu0 %v906
    %v948 = vpop.f32.mrf.mxu0
    %v949 = vadd.f32 0.0, %v948
    %v950 = vpop.f32.mrf.mxu0
    %v951 = vpop.f32.mrf.mxu0
    %v952 = vadd.f32 0.0, %v951
    %v953 = vpop.f32.mrf.mxu0
    %954 = vmatprep.mubr.bf16.mxu0 0
    %955 = vmatmul.mubr.bf16.gmra.mxu0 %v909
    %v956 = vpop.f32.mrf.mxu0
    %v957 = vadd.f32 0.0, %v956
    %v958 = vpop.f32.mrf.mxu0
    %v959 = vpop.f32.mrf.mxu0
    %v960 = vadd.f32 0.0, %v959
    %v961 = vpop.f32.mrf.mxu0
    %962 = vdwg.mxu0
    %v963 = vadd.f32 %v874, %v949
    %v964 = vadd.f32 %v875, %v952
    %v965 = vadd.f32 %v876, %v957
    %v966 = vadd.f32 %v877, %v960
    %v967 = vld [vmem:[%s4] sm:$0x1]
    %v969 = vlaneseq
    %v970 = vshrl.u32 %v969, 7
    %v971 = vsub.s32 0, %v970
    %v972 = vrot.slane %v967, %v971
    %v974 = vadd.f32 %v963, %v972
    %v975 = vadd.f32 %v964, %v972
    %v976 = vadd.f32 %v965, %v972
    %v977 = vadd.f32 %v966, %v972
    %v978 = vmax.f32 %v974, 0.0
    %v979 = vmax.f32 %v975, 0.0
    %v980 = vmax.f32 %v976, 0.0
    %v981 = vmax.f32 %v977, 0.0
    %v982 = vpack.c.bf16 %v979, %v978
    %v983 = vpack.c.bf16 %v981, %v980
    %v984 = vld [vmem:[%s5] sm:$0xf]
    %v985 = vld [vmem:[%s5 + $0x4] sm:$0xf]
    %v986 = vld [vmem:[%s5 + $0x8] sm:$0xf]
    %v987 = vld [vmem:[%s5 + $0xc] sm:$0xf]
    %v988 = vld [vmem:[%s6] sm:$0x1]
    %v990 = vlaneseq
    %v991 = vshrl.u32 %v990, 7
    %v992 = vsub.s32 0, %v991
    %v993 = vrot.slane %v988, %v992
    %v999 = vunpack.c.l.b16 %v984
    %v1000 = vunpack.c.l.b16 %v985
    %v1001 = vunpack.c.l.b16 %v986
    %v1002 = vunpack.c.l.b16 %v987
    %v1003 = vpack.c.b16 %v1000, %v999
    %v1004 = vpack.c.b16 %v1002, %v1001
    %vm1007 = vcmask 261120
    %v1009 = vsel %vm1007, %v982, 0
    %v1012 = vsel %vm1007, %v983, 0
    %1014 = vmatprep.subr.bf16.mxu0 0
    %1015 = vmatpush1.bf16.msra.mxu0 0
    %1016 = vmatprep.subr.bf16.mxu0 0
    %1017 = vmatpush1.bf16.msra.mxu0 0
    %1018 = vmatprep.subr.bf16.mxu0 0
    %1019 = vmatpush1.bf16.msra.mxu0 0
    %1020 = vmatprep.subr.bf16.mxu0 0
    %1021 = vmatpush1.bf16.msra.mxu0 0
    %1022 = vmatprep.subr.bf16.mxu0 0
    %1023 = vmatpush1.bf16.msra.mxu0 0
    %1024 = vmatprep.subr.bf16.mxu0 0
    %1025 = vmatpush1.bf16.msra.mxu0 0
    %1026 = vmatprep.subr.bf16.mxu0 0
    %1027 = vmatpush1.bf16.msra.mxu0 %v1004
    %1028 = vmatprep.subr.bf16.mxu0 0
    %1029 = vmatpush1.bf16.msra.mxu0 %v1003
    %1030 = vmatprep.subr.bf16.mxu0 0
    %1031 = vmatpush2.bf16.msra.mxu0 0
    %1032 = vmatprep.subr.bf16.mxu0 0
    %1033 = vmatpush2.bf16.msra.mxu0 0
    %1034 = vmatprep.subr.bf16.mxu0 0
    %1035 = vmatpush2.bf16.msra.mxu0 0
    %1036 = vmatprep.subr.bf16.mxu0 0
    %1037 = vmatpush2.bf16.msra.mxu0 0
    %1038 = vmatprep.subr.bf16.mxu0 0
    %1039 = vmatpush2.bf16.msra.mxu0 0
    %1040 = vmatprep.subr.bf16.mxu0 0
    %1041 = vmatpush2.bf16.msra.mxu0 0
    %1042 = vmatprep.subr.bf16.mxu0 0
    %1043 = vmatpush2.bf16.msra.mxu0 0
    %1044 = vmatprep.subr.bf16.mxu0 0
    %1045 = vmatpush2.bf16.msra.mxu0 0
    %1046 = vmatprep.mubr.bf16.mxu0 0
    %1047 = vmatmul.mubr.bf16.gmra.mxu0 %v1009
    %v1048 = vpop.f32.mrf.mxu0
    %v1049 = vadd.f32 %v993, %v1048
    %v1050 = vpop.f32.mrf.mxu0
    %v1051 = vpop.f32.mrf.mxu0
    %v1052 = vadd.f32 %v993, %v1051
    %v1053 = vpop.f32.mrf.mxu0
    %1054 = vmatprep.mubr.bf16.mxu0 0
    %1055 = vmatmul.mubr.bf16.gmra.mxu0 %v1012
    %v1056 = vpop.f32.mrf.mxu0
    %v1057 = vadd.f32 %v993, %v1056
    %v1058 = vpop.f32.mrf.mxu0
    %v1059 = vpop.f32.mrf.mxu0
    %v1060 = vadd.f32 %v993, %v1059
    %v1061 = vpop.f32.mrf.mxu0
    %1062 = vdwg.mxu0
    %v1063 = vmax.f32 %v1049, 0.0
    %v1064 = vmax.f32 %v1052, 0.0
    %v1065 = vmax.f32 %v1057, 0.0
    %v1066 = vmax.f32 %v1060, 0.0
    %1067 = vst.msk [vmem:[#allocation3] sm:$0xff] %vm1007, 0.0
    %1068 = vst.msk [vmem:[#allocation3 + $0x8] sm:$0xff] %vm1007, 0.0
    %1069 = vst.msk [vmem:[#allocation3 + $0x10] sm:$0xff] %vm1007, 0.0
    %1070 = vst.msk [vmem:[#allocation3 + $0x18] sm:$0xff] %vm1007, 0.0
    %1071 = vst.msk [vmem:[#allocation3 + $0x20] sm:$0xff] %vm1007, 0.0
    %1072 = vst.msk [vmem:[#allocation3 + $0x28] sm:$0xff] %vm1007, 0.0
    %1073 = vst.msk [vmem:[#allocation3 + $0x8] sm:$0xff] %vm1007, %v1063
    %1074 = vst.msk [vmem:[#allocation3 + $0x10] sm:$0xff] %vm1007, %v1064
    %1075 = vst.msk [vmem:[#allocation3 + $0x18] sm:$0xff] %vm1007, %v1065
    %1076 = vst.msk [vmem:[#allocation3 + $0x20] sm:$0xff] %vm1007, %v1066
    %v1077 = vld [vmem:[#allocation3 + $0x3] sm:$0xff]
    %v1078 = vld [vmem:[#allocation3 + $0xb] sm:$0xff]
    %v1079 = vld [vmem:[#allocation3 + $0x13] sm:$0xff]
    %v1080 = vld [vmem:[#allocation3 + $0x1b] sm:$0xff]
    %v1081 = vld [vmem:[%s9] sm:$0xff]
    %v1082 = vld [vmem:[%s9 + $0x8] sm:$0xff]
    %v1083 = vld [vmem:[%s9 + $0x10] sm:$0xff]
    %v1084 = vld [vmem:[%s9 + $0x18] sm:$0xff]
    %1086 = vset.pattern.permute.xlu0 0
    %1087 = vperm.xlu0 %1086, %v1081
    %v1088 = vpop.permute.xlu0 %1087
    %1091 = vset.pattern.permute.xlu0 0
    %1092 = vperm.xlu0 %1091, %v1082
    %v1093 = vpop.permute.xlu0 %1092
    %1096 = vset.pattern.permute.xlu0 0
    %1097 = vperm.xlu0 %1096, %v1083
    %v1098 = vpop.permute.xlu0 %1097
    %1101 = vset.pattern.permute.xlu0 0
    %1102 = vperm.xlu0 %1101, %v1084
    %v1103 = vpop.permute.xlu0 %1102
    %v1105 = vmul.f32 %v1077, %v1088
    %v1106 = vmul.f32 %v1078, %v1093
    %v1107 = vmul.f32 %v1079, %v1098
    %v1108 = vmul.f32 %v1080, %v1103
    %v1109 = vpack.c.bf16 %v1106, %v1105
    %v1110 = vpack.c.bf16 %v1108, %v1107
    %v1111 = vld [vmem:[%s7] sm:$0xf]
    %v1112 = vld [vmem:[%s7 + $0x4] sm:$0xf]
    %v1113 = vld [vmem:[%s7 + $0x8] sm:$0xf]
    %v1114 = vld [vmem:[%s7 + $0xc] sm:$0xf]
    %v1115 = vld [vmem:[#allocation3 + $0x4] sm:$0xff]
    %v1116 = vld [vmem:[#allocation3 + $0xc] sm:$0xff]
    %v1117 = vld [vmem:[#allocation3 + $0x14] sm:$0xff]
    %v1118 = vld [vmem:[#allocation3 + $0x1c] sm:$0xff]
    %1119 = vset.pattern.permute.xlu0 1
    %1120 = vperm.xlu0 %1119, %v1081
    %v1121 = vpop.permute.xlu0 %1120
    %1123 = vset.pattern.permute.xlu0 1
    %1124 = vperm.xlu0 %1123, %v1082
    %v1125 = vpop.permute.xlu0 %1124
    %1127 = vset.pattern.permute.xlu0 1
    %1128 = vperm.xlu0 %1127, %v1083
    %v1129 = vpop.permute.xlu0 %1128
    %1131 = vset.pattern.permute.xlu0 1
    %1132 = vperm.xlu0 %1131, %v1084
    %v1133 = vpop.permute.xlu0 %1132
    %v1135 = vmul.f32 %v1115, %v1121
    %v1136 = vmul.f32 %v1116, %v1125
    %v1137 = vmul.f32 %v1117, %v1129
    %v1138 = vmul.f32 %v1118, %v1133
    %v1139 = vpack.c.bf16 %v1136, %v1135
    %v1140 = vpack.c.bf16 %v1138, %v1137
    %v1141 = vld [vmem:[%s7 + $0x10] sm:$0xf]
    %v1142 = vld [vmem:[%s7 + $0x14] sm:$0xf]
    %v1143 = vld [vmem:[%s7 + $0x18] sm:$0xf]
    %v1144 = vld [vmem:[%s7 + $0x1c] sm:$0xf]
    %v1149 = vunpack.c.l.b16 %v1141
    %v1150 = vunpack.c.l.b16 %v1142
    %v1151 = vunpack.c.l.b16 %v1143
    %v1152 = vunpack.c.l.b16 %v1144
    %v1153 = vpack.c.b16 %v1150, %v1149
    %v1154 = vpack.c.b16 %v1152, %v1151
    %v1158 = vsel %vm1007, %v1139, 0
    %v1161 = vsel %vm1007, %v1140, 0
    %1163 = vmatprep.subr.bf16.mxu0 0
    %1164 = vmatpush1.bf16.msra.mxu0 0
    %1165 = vmatprep.subr.bf16.mxu0 0
    %1166 = vmatpush1.bf16.msra.mxu0 0
    %1167 = vmatprep.subr.bf16.mxu0 0
    %1168 = vmatpush1.bf16.msra.mxu0 0
    %1169 = vmatprep.subr.bf16.mxu0 0
    %1170 = vmatpush1.bf16.msra.mxu0 0
    %1171 = vmatprep.subr.bf16.mxu0 0
    %1172 = vmatpush1.bf16.msra.mxu0 0
    %1173 = vmatprep.subr.bf16.mxu0 0
    %1174 = vmatpush1.bf16.msra.mxu0 0
    %1175 = vmatprep.subr.bf16.mxu0 0
    %1176 = vmatpush1.bf16.msra.mxu0 %v1154
    %1177 = vmatprep.subr.bf16.mxu0 0
    %1178 = vmatpush1.bf16.msra.mxu0 %v1153
    %1179 = vmatprep.subr.bf16.mxu0 0
    %1180 = vmatpush2.bf16.msra.mxu0 0
    %1181 = vmatprep.subr.bf16.mxu0 0
    %1182 = vmatpush2.bf16.msra.mxu0 0
    %1183 = vmatprep.subr.bf16.mxu0 0
    %1184 = vmatpush2.bf16.msra.mxu0 0
    %1185 = vmatprep.subr.bf16.mxu0 0
    %1186 = vmatpush2.bf16.msra.mxu0 0
    %1187 = vmatprep.subr.bf16.mxu0 0
    %1188 = vmatpush2.bf16.msra.mxu0 0
    %1189 = vmatprep.subr.bf16.mxu0 0
    %1190 = vmatpush2.bf16.msra.mxu0 0
    %1191 = vmatprep.subr.bf16.mxu0 0
    %1192 = vmatpush2.bf16.msra.mxu0 0
    %1193 = vmatprep.subr.bf16.mxu0 0
    %1194 = vmatpush2.bf16.msra.mxu0 0
    %1195 = vmatprep.mubr.bf16.mxu0 0
    %1196 = vmatmul.mubr.bf16.gmra.mxu0 %v1158
    %v1197 = vpop.f32.mrf.mxu0
    %v1198 = vadd.f32 0.0, %v1197
    %v1199 = vpop.f32.mrf.mxu0
    %v1200 = vpop.f32.mrf.mxu0
    %v1201 = vadd.f32 0.0, %v1200
    %v1202 = vpop.f32.mrf.mxu0
    %1203 = vmatprep.mubr.bf16.mxu0 0
    %1204 = vmatmul.mubr.bf16.gmra.mxu0 %v1161
    %v1205 = vpop.f32.mrf.mxu0
    %v1206 = vadd.f32 0.0, %v1205
    %v1207 = vpop.f32.mrf.mxu0
    %v1208 = vpop.f32.mrf.mxu0
    %v1209 = vadd.f32 0.0, %v1208
    %v1210 = vpop.f32.mrf.mxu0
    %1211 = vdwg.mxu0
    %v1216 = vunpack.c.l.b16 %v1111
    %v1217 = vunpack.c.l.b16 %v1112
    %v1218 = vunpack.c.l.b16 %v1113
    %v1219 = vunpack.c.l.b16 %v1114
    %v1220 = vpack.c.b16 %v1217, %v1216
    %v1221 = vpack.c.b16 %v1219, %v1218
    %v1225 = vsel %vm1007, %v1109, 0
    %v1228 = vsel %vm1007, %v1110, 0
    %1230 = vmatprep.subr.bf16.mxu0 0
    %1231 = vmatpush1.bf16.msra.mxu0 0
    %1232 = vmatprep.subr.bf16.mxu0 0
    %1233 = vmatpush1.bf16.msra.mxu0 0
    %1234 = vmatprep.subr.bf16.mxu0 0
    %1235 = vmatpush1.bf16.msra.mxu0 0
    %1236 = vmatprep.subr.bf16.mxu0 0
    %1237 = vmatpush1.bf16.msra.mxu0 0
    %1238 = vmatprep.subr.bf16.mxu0 0
    %1239 = vmatpush1.bf16.msra.mxu0 0
    %1240 = vmatprep.subr.bf16.mxu0 0
    %1241 = vmatpush1.bf16.msra.mxu0 0
    %1242 = vmatprep.subr.bf16.mxu0 0
    %1243 = vmatpush1.bf16.msra.mxu0 %v1221
    %1244 = vmatprep.subr.bf16.mxu0 0
    %1245 = vmatpush1.bf16.msra.mxu0 %v1220
    %1246 = vmatprep.subr.bf16.mxu0 0
    %1247 = vmatpush2.bf16.msra.mxu0 0
    %1248 = vmatprep.subr.bf16.mxu0 0
    %1249 = vmatpush2.bf16.msra.mxu0 0
    %1250 = vmatprep.subr.bf16.mxu0 0
    %1251 = vmatpush2.bf16.msra.mxu0 0
    %1252 = vmatprep.subr.bf16.mxu0 0
    %1253 = vmatpush2.bf16.msra.mxu0 0
    %1254 = vmatprep.subr.bf16.mxu0 0
    %1255 = vmatpush2.bf16.msra.mxu0 0
    %1256 = vmatprep.subr.bf16.mxu0 0
    %1257 = vmatpush2.bf16.msra.mxu0 0
    %1258 = vmatprep.subr.bf16.mxu0 0
    %1259 = vmatpush2.bf16.msra.mxu0 0
    %1260 = vmatprep.subr.bf16.mxu0 0
    %1261 = vmatpush2.bf16.msra.mxu0 0
    %1262 = vmatprep.mubr.bf16.mxu0 0
    %1263 = vmatmul.mubr.bf16.gmra.mxu0 %v1225
    %v1264 = vpop.f32.mrf.mxu0
    %v1265 = vadd.f32 %v1198, %v1264
    %v1266 = vpop.f32.mrf.mxu0
    %v1267 = vpop.f32.mrf.mxu0
    %v1268 = vadd.f32 %v1201, %v1267
    %v1269 = vpop.f32.mrf.mxu0
    %1270 = vmatprep.mubr.bf16.mxu0 0
    %1271 = vmatmul.mubr.bf16.gmra.mxu0 %v1228
    %v1272 = vpop.f32.mrf.mxu0
    %v1273 = vadd.f32 %v1206, %v1272
    %v1274 = vpop.f32.mrf.mxu0
    %v1275 = vpop.f32.mrf.mxu0
    %v1276 = vadd.f32 %v1209, %v1275
    %v1277 = vpop.f32.mrf.mxu0
    %1278 = vdwg.mxu0
    %v1279 = vld [vmem:[#allocation3 + $0x5] sm:$0xff]
    %v1280 = vld [vmem:[#allocation3 + $0xd] sm:$0xff]
    %v1281 = vld [vmem:[#allocation3 + $0x15] sm:$0xff]
    %v1282 = vld [vmem:[#allocation3 + $0x1d] sm:$0xff]
    %1283 = vset.pattern.permute.xlu0 2
    %1284 = vperm.xlu0 %1283, %v1081
    %v1285 = vpop.permute.xlu0 %1284
    %1287 = vset.pattern.permute.xlu0 2
    %1288 = vperm.xlu0 %1287, %v1082
    %v1289 = vpop.permute.xlu0 %1288
    %1291 = vset.pattern.permute.xlu0 2
    %1292 = vperm.xlu0 %1291, %v1083
    %v1293 = vpop.permute.xlu0 %1292
    %1295 = vset.pattern.permute.xlu0 2
    %1296 = vperm.xlu0 %1295, %v1084
    %v1297 = vpop.permute.xlu0 %1296
    %v1299 = vmul.f32 %v1279, %v1285
    %v1300 = vmul.f32 %v1280, %v1289
    %v1301 = vmul.f32 %v1281, %v1293
    %v1302 = vmul.f32 %v1282, %v1297
    %v1303 = vpack.c.bf16 %v1300, %v1299
    %v1304 = vpack.c.bf16 %v1302, %v1301
    %v1305 = vld [vmem:[%s7 + $0x20] sm:$0xf]
    %v1306 = vld [vmem:[%s7 + $0x24] sm:$0xf]
    %v1307 = vld [vmem:[%s7 + $0x28] sm:$0xf]
    %v1308 = vld [vmem:[%s7 + $0x2c] sm:$0xf]
    %v1313 = vunpack.c.l.b16 %v1305
    %v1314 = vunpack.c.l.b16 %v1306
    %v1315 = vunpack.c.l.b16 %v1307
    %v1316 = vunpack.c.l.b16 %v1308
    %v1317 = vpack.c.b16 %v1314, %v1313
    %v1318 = vpack.c.b16 %v1316, %v1315
    %v1322 = vsel %vm1007, %v1303, 0
    %v1325 = vsel %vm1007, %v1304, 0
    %1327 = vmatprep.subr.bf16.mxu0 0
    %1328 = vmatpush1.bf16.msra.mxu0 0
    %1329 = vmatprep.subr.bf16.mxu0 0
    %1330 = vmatpush1.bf16.msra.mxu0 0
    %1331 = vmatprep.subr.bf16.mxu0 0
    %1332 = vmatpush1.bf16.msra.mxu0 0
    %1333 = vmatprep.subr.bf16.mxu0 0
    %1334 = vmatpush1.bf16.msra.mxu0 0
    %1335 = vmatprep.subr.bf16.mxu0 0
    %1336 = vmatpush1.bf16.msra.mxu0 0
    %1337 = vmatprep.subr.bf16.mxu0 0
    %1338 = vmatpush1.bf16.msra.mxu0 0
    %1339 = vmatprep.subr.bf16.mxu0 0
    %1340 = vmatpush1.bf16.msra.mxu0 %v1318
    %1341 = vmatprep.subr.bf16.mxu0 0
    %1342 = vmatpush1.bf16.msra.mxu0 %v1317
    %1343 = vmatprep.subr.bf16.mxu0 0
    %1344 = vmatpush2.bf16.msra.mxu0 0
    %1345 = vmatprep.subr.bf16.mxu0 0
    %1346 = vmatpush2.bf16.msra.mxu0 0
    %1347 = vmatprep.subr.bf16.mxu0 0
    %1348 = vmatpush2.bf16.msra.mxu0 0
    %1349 = vmatprep.subr.bf16.mxu0 0
    %1350 = vmatpush2.bf16.msra.mxu0 0
    %1351 = vmatprep.subr.bf16.mxu0 0
    %1352 = vmatpush2.bf16.msra.mxu0 0
    %1353 = vmatprep.subr.bf16.mxu0 0
    %1354 = vmatpush2.bf16.msra.mxu0 0
    %1355 = vmatprep.subr.bf16.mxu0 0
    %1356 = vmatpush2.bf16.msra.mxu0 0
    %1357 = vmatprep.subr.bf16.mxu0 0
    %1358 = vmatpush2.bf16.msra.mxu0 0
    %1359 = vmatprep.mubr.bf16.mxu0 0
    %1360 = vmatmul.mubr.bf16.gmra.mxu0 %v1322
    %v1361 = vpop.f32.mrf.mxu0
    %v1362 = vadd.f32 0.0, %v1361
    %v1363 = vpop.f32.mrf.mxu0
    %v1364 = vpop.f32.mrf.mxu0
    %v1365 = vadd.f32 0.0, %v1364
    %v1366 = vpop.f32.mrf.mxu0
    %1367 = vmatprep.mubr.bf16.mxu0 0
    %1368 = vmatmul.mubr.bf16.gmra.mxu0 %v1325
    %v1369 = vpop.f32.mrf.mxu0
    %v1370 = vadd.f32 0.0, %v1369
    %v1371 = vpop.f32.mrf.mxu0
    %v1372 = vpop.f32.mrf.mxu0
    %v1373 = vadd.f32 0.0, %v1372
    %v1374 = vpop.f32.mrf.mxu0
    %1375 = vdwg.mxu0
    %v1376 = vadd.f32 %v1265, %v1362
    %v1377 = vadd.f32 %v1268, %v1365
    %v1378 = vadd.f32 %v1273, %v1370
    %v1379 = vadd.f32 %v1276, %v1373
    %v1380 = vld [vmem:[#allocation3 + $0x7] sm:$0xff]
    %v1381 = vld [vmem:[#allocation3 + $0xf] sm:$0xff]
    %v1382 = vld [vmem:[#allocation3 + $0x17] sm:$0xff]
    %v1383 = vld [vmem:[#allocation3 + $0x1f] sm:$0xff]
    %1384 = vset.pattern.permute.xlu0 3
    %1385 = vperm.xlu0 %1384, %v1081
    %v1386 = vpop.permute.xlu0 %1385
    %1388 = vset.pattern.permute.xlu0 3
    %1389 = vperm.xlu0 %1388, %v1082
    %v1390 = vpop.permute.xlu0 %1389
    %1392 = vset.pattern.permute.xlu0 3
    %1393 = vperm.xlu0 %1392, %v1083
    %v1394 = vpop.permute.xlu0 %1393
    %1396 = vset.pattern.permute.xlu0 3
    %1397 = vperm.xlu0 %1396, %v1084
    %v1398 = vpop.permute.xlu0 %1397
    %v1400 = vmul.f32 %v1380, %v1386
    %v1401 = vmul.f32 %v1381, %v1390
    %v1402 = vmul.f32 %v1382, %v1394
    %v1403 = vmul.f32 %v1383, %v1398
    %v1404 = vpack.c.bf16 %v1401, %v1400
    %v1405 = vpack.c.bf16 %v1403, %v1402
    %v1406 = vld [vmem:[%s7 + $0x30] sm:$0xf]
    %v1407 = vld [vmem:[%s7 + $0x34] sm:$0xf]
    %v1408 = vld [vmem:[%s7 + $0x38] sm:$0xf]
    %v1409 = vld [vmem:[%s7 + $0x3c] sm:$0xf]
    %v1414 = vunpack.c.l.b16 %v1406
    %v1415 = vunpack.c.l.b16 %v1407
    %v1416 = vunpack.c.l.b16 %v1408
    %v1417 = vunpack.c.l.b16 %v1409
    %v1418 = vpack.c.b16 %v1415, %v1414
    %v1419 = vpack.c.b16 %v1417, %v1416
    %v1423 = vsel %vm1007, %v1404, 0
    %v1426 = vsel %vm1007, %v1405, 0
    %1428 = vmatprep.subr.bf16.mxu0 0
    %1429 = vmatpush1.bf16.msra.mxu0 0
    %1430 = vmatprep.subr.bf16.mxu0 0
    %1431 = vmatpush1.bf16.msra.mxu0 0
    %1432 = vmatprep.subr.bf16.mxu0 0
    %1433 = vmatpush1.bf16.msra.mxu0 0
    %1434 = vmatprep.subr.bf16.mxu0 0
    %1435 = vmatpush1.bf16.msra.mxu0 0
    %1436 = vmatprep.subr.bf16.mxu0 0
    %1437 = vmatpush1.bf16.msra.mxu0 0
    %1438 = vmatprep.subr.bf16.mxu0 0
    %1439 = vmatpush1.bf16.msra.mxu0 0
    %1440 = vmatprep.subr.bf16.mxu0 0
    %1441 = vmatpush1.bf16.msra.mxu0 %v1419
    %1442 = vmatprep.subr.bf16.mxu0 0
    %1443 = vmatpush1.bf16.msra.mxu0 %v1418
    %1444 = vmatprep.subr.bf16.mxu0 0
    %1445 = vmatpush2.bf16.msra.mxu0 0
    %1446 = vmatprep.subr.bf16.mxu0 0
    %1447 = vmatpush2.bf16.msra.mxu0 0
    %1448 = vmatprep.subr.bf16.mxu0 0
    %1449 = vmatpush2.bf16.msra.mxu0 0
    %1450 = vmatprep.subr.bf16.mxu0 0
    %1451 = vmatpush2.bf16.msra.mxu0 0
    %1452 = vmatprep.subr.bf16.mxu0 0
    %1453 = vmatpush2.bf16.msra.mxu0 0
    %1454 = vmatprep.subr.bf16.mxu0 0
    %1455 = vmatpush2.bf16.msra.mxu0 0
    %1456 = vmatprep.subr.bf16.mxu0 0
    %1457 = vmatpush2.bf16.msra.mxu0 0
    %1458 = vmatprep.subr.bf16.mxu0 0
    %1459 = vmatpush2.bf16.msra.mxu0 0
    %1460 = vmatprep.mubr.bf16.mxu0 0
    %1461 = vmatmul.mubr.bf16.gmra.mxu0 %v1423
    %v1462 = vpop.f32.mrf.mxu0
    %v1463 = vadd.f32 0.0, %v1462
    %v1464 = vpop.f32.mrf.mxu0
    %v1465 = vpop.f32.mrf.mxu0
    %v1466 = vadd.f32 0.0, %v1465
    %v1467 = vpop.f32.mrf.mxu0
    %1468 = vmatprep.mubr.bf16.mxu0 0
    %1469 = vmatmul.mubr.bf16.gmra.mxu0 %v1426
    %v1470 = vpop.f32.mrf.mxu0
    %v1471 = vadd.f32 0.0, %v1470
    %v1472 = vpop.f32.mrf.mxu0
    %v1473 = vpop.f32.mrf.mxu0
    %v1474 = vadd.f32 0.0, %v1473
    %v1475 = vpop.f32.mrf.mxu0
    %1476 = vdwg.mxu0
    %v1477 = vadd.f32 %v1376, %v1463
    %v1478 = vadd.f32 %v1377, %v1466
    %v1479 = vadd.f32 %v1378, %v1471
    %v1480 = vadd.f32 %v1379, %v1474
    %v1481 = vld [vmem:[#allocation3 + $0x8] sm:$0xff]
    %v1482 = vld [vmem:[#allocation3 + $0x10] sm:$0xff]
    %v1483 = vld [vmem:[#allocation3 + $0x18] sm:$0xff]
    %v1484 = vld [vmem:[#allocation3 + $0x20] sm:$0xff]
    %1485 = vset.pattern.permute.xlu0 4
    %1486 = vperm.xlu0 %1485, %v1081
    %v1487 = vpop.permute.xlu0 %1486
    %1489 = vset.pattern.permute.xlu0 4
    %1490 = vperm.xlu0 %1489, %v1082
    %v1491 = vpop.permute.xlu0 %1490
    %1493 = vset.pattern.permute.xlu0 4
    %1494 = vperm.xlu0 %1493, %v1083
    %v1495 = vpop.permute.xlu0 %1494
    %1497 = vset.pattern.permute.xlu0 4
    %1498 = vperm.xlu0 %1497, %v1084
    %v1499 = vpop.permute.xlu0 %1498
    %v1501 = vmul.f32 %v1481, %v1487
    %v1502 = vmul.f32 %v1482, %v1491
    %v1503 = vmul.f32 %v1483, %v1495
    %v1504 = vmul.f32 %v1484, %v1499
    %v1505 = vpack.c.bf16 %v1502, %v1501
    %v1506 = vpack.c.bf16 %v1504, %v1503
    %v1507 = vld [vmem:[%s7 + $0x40] sm:$0xf]
    %v1508 = vld [vmem:[%s7 + $0x44] sm:$0xf]
    %v1509 = vld [vmem:[%s7 + $0x48] sm:$0xf]
    %v1510 = vld [vmem:[%s7 + $0x4c] sm:$0xf]
    %v1515 = vunpack.c.l.b16 %v1507
    %v1516 = vunpack.c.l.b16 %v1508
    %v1517 = vunpack.c.l.b16 %v1509
    %v1518 = vunpack.c.l.b16 %v1510
    %v1519 = vpack.c.b16 %v1516, %v1515
    %v1520 = vpack.c.b16 %v1518, %v1517
    %v1524 = vsel %vm1007, %v1505, 0
    %v1527 = vsel %vm1007, %v1506, 0
    %1529 = vmatprep.subr.bf16.mxu0 0
    %1530 = vmatpush1.bf16.msra.mxu0 0
    %1531 = vmatprep.subr.bf16.mxu0 0
    %1532 = vmatpush1.bf16.msra.mxu0 0
    %1533 = vmatprep.subr.bf16.mxu0 0
    %1534 = vmatpush1.bf16.msra.mxu0 0
    %1535 = vmatprep.subr.bf16.mxu0 0
    %1536 = vmatpush1.bf16.msra.mxu0 0
    %1537 = vmatprep.subr.bf16.mxu0 0
    %1538 = vmatpush1.bf16.msra.mxu0 0
    %1539 = vmatprep.subr.bf16.mxu0 0
    %1540 = vmatpush1.bf16.msra.mxu0 0
    %1541 = vmatprep.subr.bf16.mxu0 0
    %1542 = vmatpush1.bf16.msra.mxu0 %v1520
    %1543 = vmatprep.subr.bf16.mxu0 0
    %1544 = vmatpush1.bf16.msra.mxu0 %v1519
    %1545 = vmatprep.subr.bf16.mxu0 0
    %1546 = vmatpush2.bf16.msra.mxu0 0
    %1547 = vmatprep.subr.bf16.mxu0 0
    %1548 = vmatpush2.bf16.msra.mxu0 0
    %1549 = vmatprep.subr.bf16.mxu0 0
    %1550 = vmatpush2.bf16.msra.mxu0 0
    %1551 = vmatprep.subr.bf16.mxu0 0
    %1552 = vmatpush2.bf16.msra.mxu0 0
    %1553 = vmatprep.subr.bf16.mxu0 0
    %1554 = vmatpush2.bf16.msra.mxu0 0
    %1555 = vmatprep.subr.bf16.mxu0 0
    %1556 = vmatpush2.bf16.msra.mxu0 0
    %1557 = vmatprep.subr.bf16.mxu0 0
    %1558 = vmatpush2.bf16.msra.mxu0 0
    %1559 = vmatprep.subr.bf16.mxu0 0
    %1560 = vmatpush2.bf16.msra.mxu0 0
    %1561 = vmatprep.mubr.bf16.mxu0 0
    %1562 = vmatmul.mubr.bf16.gmra.mxu0 %v1524
    %v1563 = vpop.f32.mrf.mxu0
    %v1564 = vadd.f32 0.0, %v1563
    %v1565 = vpop.f32.mrf.mxu0
    %v1566 = vpop.f32.mrf.mxu0
    %v1567 = vadd.f32 0.0, %v1566
    %v1568 = vpop.f32.mrf.mxu0
    %1569 = vmatprep.mubr.bf16.mxu0 0
    %1570 = vmatmul.mubr.bf16.gmra.mxu0 %v1527
    %v1571 = vpop.f32.mrf.mxu0
    %v1572 = vadd.f32 0.0, %v1571
    %v1573 = vpop.f32.mrf.mxu0
    %v1574 = vpop.f32.mrf.mxu0
    %v1575 = vadd.f32 0.0, %v1574
    %v1576 = vpop.f32.mrf.mxu0
    %1577 = vdwg.mxu0
    %v1578 = vadd.f32 %v1477, %v1564
    %v1579 = vadd.f32 %v1478, %v1567
    %v1580 = vadd.f32 %v1479, %v1572
    %v1581 = vadd.f32 %v1480, %v1575
    %v1582 = vld [vmem:[#allocation3 + $0x9] sm:$0xff]
    %v1583 = vld [vmem:[#allocation3 + $0x11] sm:$0xff]
    %v1584 = vld [vmem:[#allocation3 + $0x19] sm:$0xff]
    %v1585 = vld [vmem:[#allocation3 + $0x21] sm:$0xff]
    %1586 = vset.pattern.permute.xlu0 5
    %1587 = vperm.xlu0 %1586, %v1081
    %v1588 = vpop.permute.xlu0 %1587
    %1590 = vset.pattern.permute.xlu0 5
    %1591 = vperm.xlu0 %1590, %v1082
    %v1592 = vpop.permute.xlu0 %1591
    %1594 = vset.pattern.permute.xlu0 5
    %1595 = vperm.xlu0 %1594, %v1083
    %v1596 = vpop.permute.xlu0 %1595
    %1598 = vset.pattern.permute.xlu0 5
    %1599 = vperm.xlu0 %1598, %v1084
    %v1600 = vpop.permute.xlu0 %1599
    %v1602 = vmul.f32 %v1582, %v1588
    %v1603 = vmul.f32 %v1583, %v1592
    %v1604 = vmul.f32 %v1584, %v1596
    %v1605 = vmul.f32 %v1585, %v1600
    %v1606 = vpack.c.bf16 %v1603, %v1602
    %v1607 = vpack.c.bf16 %v1605, %v1604
    %v1608 = vld [vmem:[%s7 + $0x50] sm:$0xf]
    %v1609 = vld [vmem:[%s7 + $0x54] sm:$0xf]
    %v1610 = vld [vmem:[%s7 + $0x58] sm:$0xf]
    %v1611 = vld [vmem:[%s7 + $0x5c] sm:$0xf]
    %v1616 = vunpack.c.l.b16 %v1608
    %v1617 = vunpack.c.l.b16 %v1609
    %v1618 = vunpack.c.l.b16 %v1610
    %v1619 = vunpack.c.l.b16 %v1611
    %v1620 = vpack.c.b16 %v1617, %v1616
    %v1621 = vpack.c.b16 %v1619, %v1618
    %v1625 = vsel %vm1007, %v1606, 0
    %v1628 = vsel %vm1007, %v1607, 0
    %1630 = vmatprep.subr.bf16.mxu0 0
    %1631 = vmatpush1.bf16.msra.mxu0 0
    %1632 = vmatprep.subr.bf16.mxu0 0
    %1633 = vmatpush1.bf16.msra.mxu0 0
    %1634 = vmatprep.subr.bf16.mxu0 0
    %1635 = vmatpush1.bf16.msra.mxu0 0
    %1636 = vmatprep.subr.bf16.mxu0 0
    %1637 = vmatpush1.bf16.msra.mxu0 0
    %1638 = vmatprep.subr.bf16.mxu0 0
    %1639 = vmatpush1.bf16.msra.mxu0 0
    %1640 = vmatprep.subr.bf16.mxu0 0
    %1641 = vmatpush1.bf16.msra.mxu0 0
    %1642 = vmatprep.subr.bf16.mxu0 0
    %1643 = vmatpush1.bf16.msra.mxu0 %v1621
    %1644 = vmatprep.subr.bf16.mxu0 0
    %1645 = vmatpush1.bf16.msra.mxu0 %v1620
    %1646 = vmatprep.subr.bf16.mxu0 0
    %1647 = vmatpush2.bf16.msra.mxu0 0
    %1648 = vmatprep.subr.bf16.mxu0 0
    %1649 = vmatpush2.bf16.msra.mxu0 0
    %1650 = vmatprep.subr.bf16.mxu0 0
    %1651 = vmatpush2.bf16.msra.mxu0 0
    %1652 = vmatprep.subr.bf16.mxu0 0
    %1653 = vmatpush2.bf16.msra.mxu0 0
    %1654 = vmatprep.subr.bf16.mxu0 0
    %1655 = vmatpush2.bf16.msra.mxu0 0
    %1656 = vmatprep.subr.bf16.mxu0 0
    %1657 = vmatpush2.bf16.msra.mxu0 0
    %1658 = vmatprep.subr.bf16.mxu0 0
    %1659 = vmatpush2.bf16.msra.mxu0 0
    %1660 = vmatprep.subr.bf16.mxu0 0
    %1661 = vmatpush2.bf16.msra.mxu0 0
    %1662 = vmatprep.mubr.bf16.mxu0 0
    %1663 = vmatmul.mubr.bf16.gmra.mxu0 %v1625
    %v1664 = vpop.f32.mrf.mxu0
    %v1665 = vadd.f32 0.0, %v1664
    %v1666 = vpop.f32.mrf.mxu0
    %v1667 = vpop.f32.mrf.mxu0
    %v1668 = vadd.f32 0.0, %v1667
    %v1669 = vpop.f32.mrf.mxu0
    %1670 = vmatprep.mubr.bf16.mxu0 0
    %1671 = vmatmul.mubr.bf16.gmra.mxu0 %v1628
    %v1672 = vpop.f32.mrf.mxu0
    %v1673 = vadd.f32 0.0, %v1672
    %v1674 = vpop.f32.mrf.mxu0
    %v1675 = vpop.f32.mrf.mxu0
    %v1676 = vadd.f32 0.0, %v1675
    %v1677 = vpop.f32.mrf.mxu0
    %1678 = vdwg.mxu0
    %v1679 = vadd.f32 %v1578, %v1665
    %v1680 = vadd.f32 %v1579, %v1668
    %v1681 = vadd.f32 %v1580, %v1673
    %v1682 = vadd.f32 %v1581, %v1676
    %v1683 = vld [vmem:[#allocation3 + $0xb] sm:$0xff]
    %v1684 = vld [vmem:[#allocation3 + $0x13] sm:$0xff]
    %v1685 = vld [vmem:[#allocation3 + $0x1b] sm:$0xff]
    %v1686 = vld [vmem:[#allocation3 + $0x23] sm:$0xff]
    %1687 = vset.pattern.permute.xlu0 6
    %1688 = vperm.xlu0 %1687, %v1081
    %v1689 = vpop.permute.xlu0 %1688
    %1691 = vset.pattern.permute.xlu0 6
    %1692 = vperm.xlu0 %1691, %v1082
    %v1693 = vpop.permute.xlu0 %1692
    %1695 = vset.pattern.permute.xlu0 6
    %1696 = vperm.xlu0 %1695, %v1083
    %v1697 = vpop.permute.xlu0 %1696
    %1699 = vset.pattern.permute.xlu0 6
    %1700 = vperm.xlu0 %1699, %v1084
    %v1701 = vpop.permute.xlu0 %1700
    %v1703 = vmul.f32 %v1683, %v1689
    %v1704 = vmul.f32 %v1684, %v1693
    %v1705 = vmul.f32 %v1685, %v1697
    %v1706 = vmul.f32 %v1686, %v1701
    %v1707 = vpack.c.bf16 %v1704, %v1703
    %v1708 = vpack.c.bf16 %v1706, %v1705
    %v1709 = vld [vmem:[%s7 + $0x60] sm:$0xf]
    %v1710 = vld [vmem:[%s7 + $0x64] sm:$0xf]
    %v1711 = vld [vmem:[%s7 + $0x68] sm:$0xf]
    %v1712 = vld [vmem:[%s7 + $0x6c] sm:$0xf]
    %v1717 = vunpack.c.l.b16 %v1709
    %v1718 = vunpack.c.l.b16 %v1710
    %v1719 = vunpack.c.l.b16 %v1711
    %v1720 = vunpack.c.l.b16 %v1712
    %v1721 = vpack.c.b16 %v1718, %v1717
    %v1722 = vpack.c.b16 %v1720, %v1719
    %v1726 = vsel %vm1007, %v1707, 0
    %v1729 = vsel %vm1007, %v1708, 0
    %1731 = vmatprep.subr.bf16.mxu0 0
    %1732 = vmatpush1.bf16.msra.mxu0 0
    %1733 = vmatprep.subr.bf16.mxu0 0
    %1734 = vmatpush1.bf16.msra.mxu0 0
    %1735 = vmatprep.subr.bf16.mxu0 0
    %1736 = vmatpush1.bf16.msra.mxu0 0
    %1737 = vmatprep.subr.bf16.mxu0 0
    %1738 = vmatpush1.bf16.msra.mxu0 0
    %1739 = vmatprep.subr.bf16.mxu0 0
    %1740 = vmatpush1.bf16.msra.mxu0 0
    %1741 = vmatprep.subr.bf16.mxu0 0
    %1742 = vmatpush1.bf16.msra.mxu0 0
    %1743 = vmatprep.subr.bf16.mxu0 0
    %1744 = vmatpush1.bf16.msra.mxu0 %v1722
    %1745 = vmatprep.subr.bf16.mxu0 0
    %1746 = vmatpush1.bf16.msra.mxu0 %v1721
    %1747 = vmatprep.subr.bf16.mxu0 0
    %1748 = vmatpush2.bf16.msra.mxu0 0
    %1749 = vmatprep.subr.bf16.mxu0 0
    %1750 = vmatpush2.bf16.msra.mxu0 0
    %1751 = vmatprep.subr.bf16.mxu0 0
    %1752 = vmatpush2.bf16.msra.mxu0 0
    %1753 = vmatprep.subr.bf16.mxu0 0
    %1754 = vmatpush2.bf16.msra.mxu0 0
    %1755 = vmatprep.subr.bf16.mxu0 0
    %1756 = vmatpush2.bf16.msra.mxu0 0
    %1757 = vmatprep.subr.bf16.mxu0 0
    %1758 = vmatpush2.bf16.msra.mxu0 0
    %1759 = vmatprep.subr.bf16.mxu0 0
    %1760 = vmatpush2.bf16.msra.mxu0 0
    %1761 = vmatprep.subr.bf16.mxu0 0
    %1762 = vmatpush2.bf16.msra.mxu0 0
    %1763 = vmatprep.mubr.bf16.mxu0 0
    %1764 = vmatmul.mubr.bf16.gmra.mxu0 %v1726
    %v1765 = vpop.f32.mrf.mxu0
    %v1766 = vadd.f32 0.0, %v1765
    %v1767 = vpop.f32.mrf.mxu0
    %v1768 = vpop.f32.mrf.mxu0
    %v1769 = vadd.f32 0.0, %v1768
    %v1770 = vpop.f32.mrf.mxu0
    %1771 = vmatprep.mubr.bf16.mxu0 0
    %1772 = vmatmul.mubr.bf16.gmra.mxu0 %v1729
    %v1773 = vpop.f32.mrf.mxu0
    %v1774 = vadd.f32 0.0, %v1773
    %v1775 = vpop.f32.mrf.mxu0
    %v1776 = vpop.f32.mrf.mxu0
    %v1777 = vadd.f32 0.0, %v1776
    %v1778 = vpop.f32.mrf.mxu0
    %1779 = vdwg.mxu0
    %v1780 = vadd.f32 %v1679, %v1766
    %v1781 = vadd.f32 %v1680, %v1769
    %v1782 = vadd.f32 %v1681, %v1774
    %v1783 = vadd.f32 %v1682, %v1777
    %v1784 = vld [vmem:[#allocation3 + $0xc] sm:$0xff]
    %v1785 = vld [vmem:[#allocation3 + $0x14] sm:$0xff]
    %v1786 = vld [vmem:[#allocation3 + $0x1c] sm:$0xff]
    %v1787 = vld [vmem:[#allocation3 + $0x24] sm:$0xff]
    %1788 = vset.pattern.permute.xlu0 7
    %1789 = vperm.xlu0 %1788, %v1081
    %v1790 = vpop.permute.xlu0 %1789
    %1792 = vset.pattern.permute.xlu0 7
    %1793 = vperm.xlu0 %1792, %v1082
    %v1794 = vpop.permute.xlu0 %1793
    %1796 = vset.pattern.permute.xlu0 7
    %1797 = vperm.xlu0 %1796, %v1083
    %v1798 = vpop.permute.xlu0 %1797
    %1800 = vset.pattern.permute.xlu0 7
    %1801 = vperm.xlu0 %1800, %v1084
    %v1802 = vpop.permute.xlu0 %1801
    %v1804 = vmul.f32 %v1784, %v1790
    %v1805 = vmul.f32 %v1785, %v1794
    %v1806 = vmul.f32 %v1786, %v1798
    %v1807 = vmul.f32 %v1787, %v1802
    %v1808 = vpack.c.bf16 %v1805, %v1804
    %v1809 = vpack.c.bf16 %v1807, %v1806
    %v1810 = vld [vmem:[%s7 + $0x70] sm:$0xf]
    %v1811 = vld [vmem:[%s7 + $0x74] sm:$0xf]
    %v1812 = vld [vmem:[%s7 + $0x78] sm:$0xf]
    %v1813 = vld [vmem:[%s7 + $0x7c] sm:$0xf]
    %v1818 = vunpack.c.l.b16 %v1810
    %v1819 = vunpack.c.l.b16 %v1811
    %v1820 = vunpack.c.l.b16 %v1812
    %v1821 = vunpack.c.l.b16 %v1813
    %v1822 = vpack.c.b16 %v1819, %v1818
    %v1823 = vpack.c.b16 %v1821, %v1820
    %v1827 = vsel %vm1007, %v1808, 0
    %v1830 = vsel %vm1007, %v1809, 0
    %1832 = vmatprep.subr.bf16.mxu0 0
    %1833 = vmatpush1.bf16.msra.mxu0 0
    %1834 = vmatprep.subr.bf16.mxu0 0
    %1835 = vmatpush1.bf16.msra.mxu0 0
    %1836 = vmatprep.subr.bf16.mxu0 0
    %1837 = vmatpush1.bf16.msra.mxu0 0
    %1838 = vmatprep.subr.bf16.mxu0 0
    %1839 = vmatpush1.bf16.msra.mxu0 0
    %1840 = vmatprep.subr.bf16.mxu0 0
    %1841 = vmatpush1.bf16.msra.mxu0 0
    %1842 = vmatprep.subr.bf16.mxu0 0
    %1843 = vmatpush1.bf16.msra.mxu0 0
    %1844 = vmatprep.subr.bf16.mxu0 0
    %1845 = vmatpush1.bf16.msra.mxu0 %v1823
    %1846 = vmatprep.subr.bf16.mxu0 0
    %1847 = vmatpush1.bf16.msra.mxu0 %v1822
    %1848 = vmatprep.subr.bf16.mxu0 0
    %1849 = vmatpush2.bf16.msra.mxu0 0
    %1850 = vmatprep.subr.bf16.mxu0 0
    %1851 = vmatpush2.bf16.msra.mxu0 0
    %1852 = vmatprep.subr.bf16.mxu0 0
    %1853 = vmatpush2.bf16.msra.mxu0 0
    %1854 = vmatprep.subr.bf16.mxu0 0
    %1855 = vmatpush2.bf16.msra.mxu0 0
    %1856 = vmatprep.subr.bf16.mxu0 0
    %1857 = vmatpush2.bf16.msra.mxu0 0
    %1858 = vmatprep.subr.bf16.mxu0 0
    %1859 = vmatpush2.bf16.msra.mxu0 0
    %1860 = vmatprep.subr.bf16.mxu0 0
    %1861 = vmatpush2.bf16.msra.mxu0 0
    %1862 = vmatprep.subr.bf16.mxu0 0
    %1863 = vmatpush2.bf16.msra.mxu0 0
    %1864 = vmatprep.mubr.bf16.mxu0 0
    %1865 = vmatmul.mubr.bf16.gmra.mxu0 %v1827
    %v1866 = vpop.f32.mrf.mxu0
    %v1867 = vadd.f32 0.0, %v1866
    %v1868 = vpop.f32.mrf.mxu0
    %v1869 = vpop.f32.mrf.mxu0
    %v1870 = vadd.f32 0.0, %v1869
    %v1871 = vpop.f32.mrf.mxu0
    %1872 = vmatprep.mubr.bf16.mxu0 0
    %1873 = vmatmul.mubr.bf16.gmra.mxu0 %v1830
    %v1874 = vpop.f32.mrf.mxu0
    %v1875 = vadd.f32 0.0, %v1874
    %v1876 = vpop.f32.mrf.mxu0
    %v1877 = vpop.f32.mrf.mxu0
    %v1878 = vadd.f32 0.0, %v1877
    %v1879 = vpop.f32.mrf.mxu0
    %1880 = vdwg.mxu0
    %v1881 = vadd.f32 %v1780, %v1867
    %v1882 = vadd.f32 %v1781, %v1870
    %v1883 = vadd.f32 %v1782, %v1875
    %v1884 = vadd.f32 %v1783, %v1878
    %v1885 = vld [vmem:[#allocation3 + $0xd] sm:$0xff]
    %v1886 = vld [vmem:[#allocation3 + $0x15] sm:$0xff]
    %v1887 = vld [vmem:[#allocation3 + $0x1d] sm:$0xff]
    %v1888 = vld [vmem:[#allocation3 + $0x25] sm:$0xff]
    %1889 = vset.pattern.permute.xlu0 8
    %1890 = vperm.xlu0 %1889, %v1081
    %v1891 = vpop.permute.xlu0 %1890
    %1893 = vset.pattern.permute.xlu0 8
    %1894 = vperm.xlu0 %1893, %v1082
    %v1895 = vpop.permute.xlu0 %1894
    %1897 = vset.pattern.permute.xlu0 8
    %1898 = vperm.xlu0 %1897, %v1083
    %v1899 = vpop.permute.xlu0 %1898
    %1901 = vset.pattern.permute.xlu0 8
    %1902 = vperm.xlu0 %1901, %v1084
    %v1903 = vpop.permute.xlu0 %1902
    %v1905 = vmul.f32 %v1885, %v1891
    %v1906 = vmul.f32 %v1886, %v1895
    %v1907 = vmul.f32 %v1887, %v1899
    %v1908 = vmul.f32 %v1888, %v1903
    %v1909 = vpack.c.bf16 %v1906, %v1905
    %v1910 = vpack.c.bf16 %v1908, %v1907
    %v1911 = vld [vmem:[%s7 + $0x80] sm:$0xf]
    %v1912 = vld [vmem:[%s7 + $0x84] sm:$0xf]
    %v1913 = vld [vmem:[%s7 + $0x88] sm:$0xf]
    %v1914 = vld [vmem:[%s7 + $0x8c] sm:$0xf]
    %v1919 = vunpack.c.l.b16 %v1911
    %v1920 = vunpack.c.l.b16 %v1912
    %v1921 = vunpack.c.l.b16 %v1913
    %v1922 = vunpack.c.l.b16 %v1914
    %v1923 = vpack.c.b16 %v1920, %v1919
    %v1924 = vpack.c.b16 %v1922, %v1921
    %v1928 = vsel %vm1007, %v1909, 0
    %v1931 = vsel %vm1007, %v1910, 0
    %1933 = vmatprep.subr.bf16.mxu0 0
    %1934 = vmatpush1.bf16.msra.mxu0 0
    %1935 = vmatprep.subr.bf16.mxu0 0
    %1936 = vmatpush1.bf16.msra.mxu0 0
    %1937 = vmatprep.subr.bf16.mxu0 0
    %1938 = vmatpush1.bf16.msra.mxu0 0
    %1939 = vmatprep.subr.bf16.mxu0 0
    %1940 = vmatpush1.bf16.msra.mxu0 0
    %1941 = vmatprep.subr.bf16.mxu0 0
    %1942 = vmatpush1.bf16.msra.mxu0 0
    %1943 = vmatprep.subr.bf16.mxu0 0
    %1944 = vmatpush1.bf16.msra.mxu0 0
    %1945 = vmatprep.subr.bf16.mxu0 0
    %1946 = vmatpush1.bf16.msra.mxu0 %v1924
    %1947 = vmatprep.subr.bf16.mxu0 0
    %1948 = vmatpush1.bf16.msra.mxu0 %v1923
    %1949 = vmatprep.subr.bf16.mxu0 0
    %1950 = vmatpush2.bf16.msra.mxu0 0
    %1951 = vmatprep.subr.bf16.mxu0 0
    %1952 = vmatpush2.bf16.msra.mxu0 0
    %1953 = vmatprep.subr.bf16.mxu0 0
    %1954 = vmatpush2.bf16.msra.mxu0 0
    %1955 = vmatprep.subr.bf16.mxu0 0
    %1956 = vmatpush2.bf16.msra.mxu0 0
    %1957 = vmatprep.subr.bf16.mxu0 0
    %1958 = vmatpush2.bf16.msra.mxu0 0
    %1959 = vmatprep.subr.bf16.mxu0 0
    %1960 = vmatpush2.bf16.msra.mxu0 0
    %1961 = vmatprep.subr.bf16.mxu0 0
    %1962 = vmatpush2.bf16.msra.mxu0 0
    %1963 = vmatprep.subr.bf16.mxu0 0
    %1964 = vmatpush2.bf16.msra.mxu0 0
    %1965 = vmatprep.mubr.bf16.mxu0 0
    %1966 = vmatmul.mubr.bf16.gmra.mxu0 %v1928
    %v1967 = vpop.f32.mrf.mxu0
    %v1968 = vadd.f32 0.0, %v1967
    %v1969 = vpop.f32.mrf.mxu0
    %v1970 = vpop.f32.mrf.mxu0
    %v1971 = vadd.f32 0.0, %v1970
    %v1972 = vpop.f32.mrf.mxu0
    %1973 = vmatprep.mubr.bf16.mxu0 0
    %1974 = vmatmul.mubr.bf16.gmra.mxu0 %v1931
    %v1975 = vpop.f32.mrf.mxu0
    %v1976 = vadd.f32 0.0, %v1975
    %v1977 = vpop.f32.mrf.mxu0
    %v1978 = vpop.f32.mrf.mxu0
    %v1979 = vadd.f32 0.0, %v1978
    %v1980 = vpop.f32.mrf.mxu0
    %1981 = vdwg.mxu0
    %v1982 = vadd.f32 %v1881, %v1968
    %v1983 = vadd.f32 %v1882, %v1971
    %v1984 = vadd.f32 %v1883, %v1976
    %v1985 = vadd.f32 %v1884, %v1979
    %v1986 = vld [vmem:[%s8] sm:$0x1]
    %v1988 = vlaneseq
    %v1989 = vshrl.u32 %v1988, 7
    %v1990 = vsub.s32 0, %v1989
    %v1991 = vrot.slane %v1986, %v1990
    %v1993 = vadd.f32 %v1982, %v1991
    %v1994 = vadd.f32 %v1983, %v1991
    %v1995 = vadd.f32 %v1984, %v1991
    %v1996 = vadd.f32 %v1985, %v1991
    %v1997 = vadd.f32 %v1993, 0.0
    %v1998 = vadd.f32 %v1994, 0.0
    %v1999 = vadd.f32 %v1995, 0.0
    %v2000 = vadd.f32 %v1996, 0.0
    %v2001 = vmul.f32 %v1997, 0.5
    %v2002 = vmul.f32 %v1998, 0.5
    %v2003 = vmul.f32 %v1999, 0.5
    %v2004 = vmul.f32 %v2000, 0.5
    %v2005 = vtanh.pop %v2001
    %v2006 = vtanh.pop %v2002
    %v2007 = vtanh.pop %v2003
    %v2008 = vtanh.pop %v2004
    %v2009 = vadd.f32 %v2005, 1.0
    %v2010 = vadd.f32 %v2006, 1.0
    %v2011 = vadd.f32 %v2007, 1.0
    %v2012 = vadd.f32 %v2008, 1.0
    %v2013 = vmul.f32 %v2009, 0.5
    %v2014 = vmul.f32 %v2010, 0.5
    %v2015 = vmul.f32 %v2011, 0.5
    %v2016 = vmul.f32 %v2012, 0.5
    %v2017 = vadd.f32 %v2013, 0.001
    %v2018 = vadd.f32 %v2014, 0.001
    %v2019 = vadd.f32 %v2015, 0.001
    %v2020 = vadd.f32 %v2016, 0.001
    %2025 = vrot.lane.b32.xlu0 %v1993, 8
    %v2026 = vpop.permute.xlu0 %2025
    %2027 = vrot.lane.b32.xlu0 %v1994, 8
    %v2028 = vpop.permute.xlu0 %2027
    %2029 = vrot.lane.b32.xlu0 %v1995, 8
    %v2030 = vpop.permute.xlu0 %2029
    %2031 = vrot.lane.b32.xlu0 %v1996, 8
    %v2032 = vpop.permute.xlu0 %2031
    %v2037 = vadd.f32 %v136, %v2026
    %v2038 = vadd.f32 %v141, %v2028
    %v2039 = vadd.f32 %v146, %v2030
    %v2040 = vadd.f32 %v151, %v2032
    %v2041 = vmul.f32 %v2037, %v2017
    %v2042 = vmul.f32 %v2038, %v2018
    %v2043 = vmul.f32 %v2039, %v2019
    %v2044 = vmul.f32 %v2040, %v2020
    %v2045 = vsel %vm154, %v136, %v2041
    %v2046 = vsel %vm154, %v141, %v2042
    %v2047 = vsel %vm154, %v146, %v2043
    %v2048 = vsel %vm154, %v151, %v2044
    %2049 = vst.msk [vmem:[%s11] sm:$0xff] %vm56, %v2045
    %2050 = vst.msk [vmem:[%s11 + $0x8] sm:$0xff] %vm56, %v2046
    %2051 = vst.msk [vmem:[%s11 + $0x10] sm:$0xff] %vm56, %v2047
    %2052 = vst.msk [vmem:[%s11 + $0x18] sm:$0xff] %vm56, %v2048
    %v2053 = vld [vmem:[%s10] sm:$0x3]
    %v2054 = vlog2.pop %v2017
    %v2055 = vmul.f32 %v2054, 0.6931472
    %v2056 = vlog2.pop %v2018
    %v2057 = vmul.f32 %v2056, 0.6931472
    %v2058 = vlog2.pop %v2019
    %v2059 = vmul.f32 %v2058, 0.6931472
    %v2060 = vlog2.pop %v2020
    %v2061 = vmul.f32 %v2060, 0.6931472
    %2066 = vrot.lane.b32.xlu0 %v2055, 120
    %v2067 = vpop.permute.xlu0 %2066
    %2068 = vrot.lane.b32.xlu0 %v2057, 120
    %v2069 = vpop.permute.xlu0 %2068
    %2070 = vrot.lane.b32.xlu0 %v2059, 120
    %v2071 = vpop.permute.xlu0 %2070
    %2072 = vrot.lane.b32.xlu0 %v2061, 120
    %v2073 = vpop.permute.xlu0 %2072
    %v2079 = vsel %vm1007, %v2053, 0
    %2081 = vmatprep.subr.mxu0 0.0
    %2082 = vmatpush1.msra.mxu0 0.0
    %2083 = vmatprep.subr.mxu0 0.0
    %2084 = vmatpush1.msra.mxu0 0.0
    %2085 = vmatprep.subr.mxu0 0.0
    %2086 = vmatpush1.msra.mxu0 0.0
    %2087 = vmatprep.subr.mxu0 0.0
    %2088 = vmatpush1.msra.mxu0 0.0
    %2089 = vmatprep.subr.mxu0 0.0
    %2090 = vmatpush1.msra.mxu0 0.0
    %2091 = vmatprep.subr.mxu0 0.0
    %2092 = vmatpush1.msra.mxu0 0.0
    %2093 = vmatprep.subr.mxu0 0.0
    %2094 = vmatpush1.msra.mxu0 0.0
    %2095 = vmatprep.subr.mxu0 0.0
    %2096 = vmatpush1.msra.mxu0 0.0
    %2097 = vmatprep.subr.mxu0 0.0
    %2098 = vmatpush1.msra.mxu0 0.0
    %2099 = vmatprep.subr.mxu0 0.0
    %2100 = vmatpush1.msra.mxu0 0.0
    %2101 = vmatprep.subr.mxu0 0.0
    %2102 = vmatpush1.msra.mxu0 0.0
    %2103 = vmatprep.subr.mxu0 0.0
    %2104 = vmatpush1.msra.mxu0 0.0
    %2105 = vmatprep.subr.mxu0 0.0
    %2106 = vmatpush1.msra.mxu0 %v2073
    %2107 = vmatprep.subr.mxu0 0.0
    %2108 = vmatpush1.msra.mxu0 %v2071
    %2109 = vmatprep.subr.mxu0 0.0
    %2110 = vmatpush1.msra.mxu0 %v2069
    %2111 = vmatprep.subr.mxu0 0.0
    %2112 = vmatpush1.msra.mxu0 %v2067
    %2113 = vmatprep.subr.mxu0 0.0
    %2114 = vmatpush2.msra.mxu0 0.0
    %2115 = vmatprep.subr.mxu0 0.0
    %2116 = vmatpush2.msra.mxu0 0.0
    %2117 = vmatprep.subr.mxu0 0.0
    %2118 = vmatpush2.msra.mxu0 0.0
    %2119 = vmatprep.subr.mxu0 0.0
    %2120 = vmatpush2.msra.mxu0 0.0
    %2121 = vmatprep.subr.mxu0 0.0
    %2122 = vmatpush2.msra.mxu0 0.0
    %2123 = vmatprep.subr.mxu0 0.0
    %2124 = vmatpush2.msra.mxu0 0.0
    %2125 = vmatprep.subr.mxu0 0.0
    %2126 = vmatpush2.msra.mxu0 0.0
    %2127 = vmatprep.subr.mxu0 0.0
    %2128 = vmatpush2.msra.mxu0 0.0
    %2129 = vmatprep.subr.mxu0 0.0
    %2130 = vmatpush2.msra.mxu0 0.0
    %2131 = vmatprep.subr.mxu0 0.0
    %2132 = vmatpush2.msra.mxu0 0.0
    %2133 = vmatprep.subr.mxu0 0.0
    %2134 = vmatpush2.msra.mxu0 0.0
    %2135 = vmatprep.subr.mxu0 0.0
    %2136 = vmatpush2.msra.mxu0 0.0
    %2137 = vmatprep.subr.mxu0 0.0
    %2138 = vmatpush2.msra.mxu0 0.0
    %2139 = vmatprep.subr.mxu0 0.0
    %2140 = vmatpush2.msra.mxu0 0.0
    %2141 = vmatprep.subr.mxu0 0.0
    %2142 = vmatpush2.msra.mxu0 0.0
    %2143 = vmatprep.subr.mxu0 0.0
    %2144 = vmatpush2.msra.mxu0 0.0
    %2145 = vmatprep.mubr.f32.mxu0 0.0
    %2146 = vmatmul.mubr.f32.gmra.mxu0 %v2079
    %v2147 = vpop.f32.mrf.mxu0
    %v2148 = vadd.f32 0.0, %v2147
    %v2149 = vpop.f32.mrf.mxu0
    %2150 = vdwg.mxu0
    %vm2151 = vcmask 58368
    %v2152 = vsel %vm2151, %v2148, 0.0
    %2153 = vadd.xlane.f32.xlu0 %v2152
    %v2154 = vpop.xlane.xlu0 %2153
    %vm2155 = vcmask 1024
    %2156 = vst.msk [vmem:[%s12] sm:$0x3] %vm2155, %v2154
    %v2157 = vmul.f32 %v2045, %v2045
    %v2158 = vmul.f32 %v2046, %v2046
    %v2159 = vmul.f32 %v2047, %v2047
    %v2160 = vmul.f32 %v2048, %v2048
    %2161 = vmatprep.subr.mxu0 0.0
    %2162 = vmatpush1.msra.mxu0 0.0
    %2163 = vmatprep.subr.mxu0 0.0
    %2164 = vmatpush1.msra.mxu0 0.0
    %2165 = vmatprep.subr.mxu0 0.0
    %2166 = vmatpush1.msra.mxu0 0.0
    %2167 = vmatprep.subr.mxu0 0.0
    %2168 = vmatpush1.msra.mxu0 0.0
    %2169 = vmatprep.subr.mxu0 0.0
    %2170 = vmatpush1.msra.mxu0 0.0
    %2171 = vmatprep.subr.mxu0 0.0
    %2172 = vmatpush1.msra.mxu0 0.0
    %2173 = vmatprep.subr.mxu0 0.0
    %2174 = vmatpush1.msra.mxu0 0.0
    %2175 = vmatprep.subr.mxu0 0.0
    %2176 = vmatpush1.msra.mxu0 0.0
    %2177 = vmatprep.subr.mxu0 0.0
    %2178 = vmatpush1.msra.mxu0 0.0
    %2179 = vmatprep.subr.mxu0 0.0
    %2180 = vmatpush1.msra.mxu0 0.0
    %2181 = vmatprep.subr.mxu0 0.0
    %2182 = vmatpush1.msra.mxu0 0.0
    %2183 = vmatprep.subr.mxu0 0.0
    %2184 = vmatpush1.msra.mxu0 0.0
    %2185 = vmatprep.subr.mxu0 0.0
    %2186 = vmatpush1.msra.mxu0 %v2160
    %2187 = vmatprep.subr.mxu0 0.0
    %2188 = vmatpush1.msra.mxu0 %v2159
    %2189 = vmatprep.subr.mxu0 0.0
    %2190 = vmatpush1.msra.mxu0 %v2158
    %2191 = vmatprep.subr.mxu0 0.0
    %2192 = vmatpush1.msra.mxu0 %v2157
    %2193 = vmatprep.subr.mxu0 0.0
    %2194 = vmatpush2.msra.mxu0 0.0
    %2195 = vmatprep.subr.mxu0 0.0
    %2196 = vmatpush2.msra.mxu0 0.0
    %2197 = vmatprep.subr.mxu0 0.0
    %2198 = vmatpush2.msra.mxu0 0.0
    %2199 = vmatprep.subr.mxu0 0.0
    %2200 = vmatpush2.msra.mxu0 0.0
    %2201 = vmatprep.subr.mxu0 0.0
    %2202 = vmatpush2.msra.mxu0 0.0
    %2203 = vmatprep.subr.mxu0 0.0
    %2204 = vmatpush2.msra.mxu0 0.0
    %2205 = vmatprep.subr.mxu0 0.0
    %2206 = vmatpush2.msra.mxu0 0.0
    %2207 = vmatprep.subr.mxu0 0.0
    %2208 = vmatpush2.msra.mxu0 0.0
    %2209 = vmatprep.subr.mxu0 0.0
    %2210 = vmatpush2.msra.mxu0 0.0
    %2211 = vmatprep.subr.mxu0 0.0
    %2212 = vmatpush2.msra.mxu0 0.0
    %2213 = vmatprep.subr.mxu0 0.0
    %2214 = vmatpush2.msra.mxu0 0.0
    %2215 = vmatprep.subr.mxu0 0.0
    %2216 = vmatpush2.msra.mxu0 0.0
    %2217 = vmatprep.subr.mxu0 0.0
    %2218 = vmatpush2.msra.mxu0 0.0
    %2219 = vmatprep.subr.mxu0 0.0
    %2220 = vmatpush2.msra.mxu0 0.0
    %2221 = vmatprep.subr.mxu0 0.0
    %2222 = vmatpush2.msra.mxu0 0.0
    %2223 = vmatprep.subr.mxu0 0.0
    %2224 = vmatpush2.msra.mxu0 0.0
    %2225 = vmatprep.mubr.f32.mxu0 0.0
    %2226 = vmatmul.mubr.f32.gmra.mxu0 %v2079
    %v2227 = vpop.f32.mrf.mxu0
    %v2228 = vadd.f32 0.0, %v2227
    %v2229 = vpop.f32.mrf.mxu0
    %2230 = vdwg.mxu0
    %vm2231 = vcmask 123904
    %v2232 = vsel %vm2231, %v2228, 0.0
    %2233 = vadd.xlane.f32.xlu0 %v2232
    %v2234 = vpop.xlane.xlu0 %2233
    %v2235 = vmul.f32 %v2234, -0.5
    %2236 = vst.msk [vmem:[#allocation4] sm:$0x3] %vm2155, %v2235
    // Predicated region
    $region46: #{glow_forward.5} parent=1 // pred_check
      _
    $region47: #{glow_forward.5} parent=1 // pred_check_branch
      %2238 = sbr.rel (0) target = $region49
    $region48: #{glow_forward.5} parent=1 // pred_region
      _
    $region49: #{glow_forward.5} parent=1 // pred_fallthru
      _
    // Predicated region
    $region50: #{glow_forward.5} parent=1 // pred_check
      _
    $region51: #{glow_forward.5} parent=1 // pred_check_branch
      %2240 = sbr.rel (0) target = $region53
    $region52: #{glow_forward.5} parent=1 // pred_region
      _
    $region53: #{glow_forward.5} parent=1 // pred_fallthru
      _
    // Predicated region
    $region54: #{glow_forward.5} parent=1 // pred_check
      _
    $region55: #{glow_forward.5} parent=1 // pred_check_branch
      %2242 = sbr.rel (0) target = $region57
    $region56: #{glow_forward.5} parent=1 // pred_region
      %s2244 = ssub.s32 32, 32
      %2245 = vsyncadd [#allocation5], %s2244
      %s2247 = sshll.u32 [#allocation4], 4
      %s2248 = int_to_ptr.vmem [resolvable:$true] %s2247
      %2250 = dma.vmem_to_hbm [thread:$0]  %s2248, 32, %s13, [#allocation5]
    $region57: #{glow_forward.5} parent=1 // pred_fallthru
      _
    // Predicated region
    $region58: #{glow_forward.5} parent=1 // pred_check
      _
    $region59: #{glow_forward.5} parent=1 // pred_check_branch
      %2252 = sbr.rel (0) target = $region61
    $region60: #{glow_forward.5} parent=1 // pred_region
      _
    $region61: #{glow_forward.5} parent=1 // pred_fallthru
      _
    // Predicated region
    $region62: #{glow_forward.5} parent=1 // pred_check
      _
    $region63: #{glow_forward.5} parent=1 // pred_check_branch
      %2254 = sbr.rel (0) target = $region65
    $region64: #{glow_forward.5} parent=1 // pred_region
      _
    $region65: #{glow_forward.5} parent=1 // pred_fallthru
      _
    // Predicated region
    $region66: #{glow_forward.5} parent=1 // pred_check
      _
    $region67: #{glow_forward.5} parent=1 // pred_check_branch
      %2256 = sbr.rel (0) target = $region69
    $region68: #{glow_forward.5} parent=1 // pred_region
      %2257 = dma.done [#allocation5], 32
    $region69: #{glow_forward.5} parent=1 // pred_fallthru
      _
    %2258 = vsyncpa [#allocation5], 1

// kernel: glow_forward.8
$region0: #{glow_forward.8}
  #allocation0 [shape = 'u32[]', space=smem, size = 0x4, offset = 0x4, fixed_abs, tag = 'smem constant byte address 0x4 - core index']
  #allocation1 [shape = 'u32[144,128]{1,0:T(1,128)}', space=vmem, size = 0x12000, scoped, tag = 'internal scratch']
  #allocation2 [shape = 'f32[24,16]{1,0:T(8,128)}', space=vmem, size = 0x3000, scoped, tag = 'scratch operand']
  #allocation3 [shape = 'f32[24,32]{1,0:T(8,128)}', space=vmem, size = 0x3000, scoped, tag = 'scratch operand']
  %s0 = inlined_call_operand.vmem [shape: f32[8,32], index: 0, kind: input, shape index: {}]
  %s1 = inlined_call_operand.vmem [shape: f32[32,32], index: 1, kind: input, shape index: {}]
  %s2 = inlined_call_operand.vmem [shape: f32[1,32], index: 2, kind: input, shape index: {}]
  %s3 = inlined_call_operand.vmem [shape: bf16[144,32], index: 3, kind: input, shape index: {}]
  %s4 = inlined_call_operand.vmem [shape: f32[1,32], index: 4, kind: input, shape index: {}]
  %s5 = inlined_call_operand.vmem [shape: bf16[32,32], index: 5, kind: input, shape index: {}]
  %s6 = inlined_call_operand.vmem [shape: f32[1,32], index: 6, kind: input, shape index: {}]
  %s7 = inlined_call_operand.vmem [shape: bf16[288,32], index: 7, kind: input, shape index: {}]
  %s8 = inlined_call_operand.vmem [shape: f32[1,32], index: 8, kind: input, shape index: {}]
  %s9 = inlined_call_operand.vmem [shape: f32[8,9], index: 9, kind: input, shape index: {}]
  %s10 = inlined_call_operand.vmem [shape: f32[2,8], index: 10, kind: input, shape index: {}]
  %s11 = inlined_call_operand.vmem [shape: f32[8,32], index: 11, kind: output, shape index: {0}]
  %s12 = inlined_call_operand.vmem [shape: f32[2,1], index: 12, kind: output, shape index: {1}]
  %s13 = inlined_call_operand.hbm [shape: f32[2,1], index: 13, kind: output, shape index: {2}]
  %14 = xla_tuple %s11, %s12, %s13
  %s15 = sld [smem:[#allocation0]]
  $region70: #{glow_forward.8} parent=0
    _
  %s17 = ssub.s32 1, %s15
  %s18 = scalar_select 0, %s17, %s15
  $region1: #{glow_forward.8} parent=0
    #allocation4 [shape = 'u8[1024]{0}', space=vmem, size = 0x400, scoped, tag = 'output window, operand 2, single buffered']
    #allocation5 [shape = 's32[1]{0}', space=sflag, size = 0x4, scoped, tag = 'scoped memory for glow_forward.8']
    %19 = vsyncpa [#allocation5], 0
    // Predicated region
    $region2: #{glow_forward.8} parent=1 // pred_check
      _
    $region3: #{glow_forward.8} parent=1 // pred_check_branch
      %21 = sbr.rel (0) target = $region5
    $region4: #{glow_forward.8} parent=1 // pred_region
      _
    $region5: #{glow_forward.8} parent=1 // pred_fallthru
      _
    // Predicated region
    $region6: #{glow_forward.8} parent=1 // pred_check
      _
    $region7: #{glow_forward.8} parent=1 // pred_check_branch
      %23 = sbr.rel (0) target = $region9
    $region8: #{glow_forward.8} parent=1 // pred_region
      _
    $region9: #{glow_forward.8} parent=1 // pred_fallthru
      _
    // Predicated region
    $region10: #{glow_forward.8} parent=1 // pred_check
      _
    $region11: #{glow_forward.8} parent=1 // pred_check_branch
      %25 = sbr.rel (0) target = $region13
    $region12: #{glow_forward.8} parent=1 // pred_region
      _
    $region13: #{glow_forward.8} parent=1 // pred_fallthru
      _
    // Predicated region
    $region14: #{glow_forward.8} parent=1 // pred_check
      _
    $region15: #{glow_forward.8} parent=1 // pred_check_branch
      %27 = sbr.rel (0) target = $region17
    $region16: #{glow_forward.8} parent=1 // pred_region
      _
    $region17: #{glow_forward.8} parent=1 // pred_fallthru
      _
    // Predicated region
    $region18: #{glow_forward.8} parent=1 // pred_check
      _
    $region19: #{glow_forward.8} parent=1 // pred_check_branch
      %29 = sbr.rel (0) target = $region21
    $region20: #{glow_forward.8} parent=1 // pred_region
      _
    $region21: #{glow_forward.8} parent=1 // pred_fallthru
      _
    // Predicated region
    $region22: #{glow_forward.8} parent=1 // pred_check
      _
    $region23: #{glow_forward.8} parent=1 // pred_check_branch
      %31 = sbr.rel (0) target = $region25
    $region24: #{glow_forward.8} parent=1 // pred_region
      _
    $region25: #{glow_forward.8} parent=1 // pred_fallthru
      _
    // Predicated region
    $region26: #{glow_forward.8} parent=1 // pred_check
      _
    $region27: #{glow_forward.8} parent=1 // pred_check_branch
      %33 = sbr.rel (0) target = $region29
    $region28: #{glow_forward.8} parent=1 // pred_region
      _
    $region29: #{glow_forward.8} parent=1 // pred_fallthru
      _
    // Predicated region
    $region30: #{glow_forward.8} parent=1 // pred_check
      _
    $region31: #{glow_forward.8} parent=1 // pred_check_branch
      %35 = sbr.rel (0) target = $region33
    $region32: #{glow_forward.8} parent=1 // pred_region
      _
    $region33: #{glow_forward.8} parent=1 // pred_fallthru
      _
    // Predicated region
    $region34: #{glow_forward.8} parent=1 // pred_check
      _
    $region35: #{glow_forward.8} parent=1 // pred_check_branch
      %37 = sbr.rel (0) target = $region37
    $region36: #{glow_forward.8} parent=1 // pred_region
      _
    $region37: #{glow_forward.8} parent=1 // pred_fallthru
      _
    // Predicated region
    $region38: #{glow_forward.8} parent=1 // pred_check
      _
    $region39: #{glow_forward.8} parent=1 // pred_check_branch
      %39 = sbr.rel (0) target = $region41
    $region40: #{glow_forward.8} parent=1 // pred_region
      _
    $region41: #{glow_forward.8} parent=1 // pred_fallthru
      _
    // Predicated region
    $region42: #{glow_forward.8} parent=1 // pred_check
      _
    $region43: #{glow_forward.8} parent=1 // pred_check_branch
      %41 = sbr.rel (0) target = $region45
    $region44: #{glow_forward.8} parent=1 // pred_region
      _
    $region45: #{glow_forward.8} parent=1 // pred_fallthru
      _
    %v43 = vld [vmem:[%s0] sm:$0xff]
    %v44 = vld [vmem:[%s1] sm:$0xff]
    %v45 = vld [vmem:[%s1 + $0x8] sm:$0xff]
    %v46 = vld [vmem:[%s1 + $0x10] sm:$0xff]
    %v47 = vld [vmem:[%s1 + $0x18] sm:$0xff]
    %v48 = vld [vmem:[%s2] sm:$0x1]
    %v50 = vlaneseq
    %v51 = vshrl.u32 %v50, 7
    %v52 = vsub.s32 0, %v51
    %v53 = vrot.slane %v48, %v52
    %vm55 = vcmask 261120
    %v57 = vsel %vm55, %v43, 0
    %59 = vmatprep.subr.mxu0 0.0
    %60 = vmatpush1.msra.mxu0 0.0
    %61 = vmatprep.subr.mxu0 0.0
    %62 = vmatpush1.msra.mxu0 0.0
    %63 = vmatprep.subr.mxu0 0.0
    %64 = vmatpush1.msra.mxu0 0.0
    %65 = vmatprep.subr.mxu0 0.0
    %66 = vmatpush1.msra.mxu0 0.0
    %67 = vmatprep.subr.mxu0 0.0
    %68 = vmatpush1.msra.mxu0 0.0
    %69 = vmatprep.subr.mxu0 0.0
    %70 = vmatpush1.msra.mxu0 0.0
    %71 = vmatprep.subr.mxu0 0.0
    %72 = vmatpush1.msra.mxu0 0.0
    %73 = vmatprep.subr.mxu0 0.0
    %74 = vmatpush1.msra.mxu0 0.0
    %75 = vmatprep.subr.mxu0 0.0
    %76 = vmatpush1.msra.mxu0 0.0
    %77 = vmatprep.subr.mxu0 0.0
    %78 = vmatpush1.msra.mxu0 0.0
    %79 = vmatprep.subr.mxu0 0.0
    %80 = vmatpush1.msra.mxu0 0.0
    %81 = vmatprep.subr.mxu0 0.0
    %82 = vmatpush1.msra.mxu0 0.0
    %83 = vmatprep.subr.mxu0 0.0
    %84 = vmatpush1.msra.mxu0 %v47
    %85 = vmatprep.subr.mxu0 0.0
    %86 = vmatpush1.msra.mxu0 %v46
    %87 = vmatprep.subr.mxu0 0.0
    %88 = vmatpush1.msra.mxu0 %v45
    %89 = vmatprep.subr.mxu0 0.0
    %90 = vmatpush1.msra.mxu0 %v44
    %91 = vmatprep.subr.mxu0 0.0
    %92 = vmatpush2.msra.mxu0 0.0
    %93 = vmatprep.subr.mxu0 0.0
    %94 = vmatpush2.msra.mxu0 0.0
    %95 = vmatprep.subr.mxu0 0.0
    %96 = vmatpush2.msra.mxu0 0.0
    %97 = vmatprep.subr.mxu0 0.0
    %98 = vmatpush2.msra.mxu0 0.0
    %99 = vmatprep.subr.mxu0 0.0
    %100 = vmatpush2.msra.mxu0 0.0
    %101 = vmatprep.subr.mxu0 0.0
    %102 = vmatpush2.msra.mxu0 0.0
    %103 = vmatprep.subr.mxu0 0.0
    %104 = vmatpush2.msra.mxu0 0.0
    %105 = vmatprep.subr.mxu0 0.0
    %106 = vmatpush2.msra.mxu0 0.0
    %107 = vmatprep.subr.mxu0 0.0
    %108 = vmatpush2.msra.mxu0 0.0
    %109 = vmatprep.subr.mxu0 0.0
    %110 = vmatpush2.msra.mxu0 0.0
    %111 = vmatprep.subr.mxu0 0.0
    %112 = vmatpush2.msra.mxu0 0.0
    %113 = vmatprep.subr.mxu0 0.0
    %114 = vmatpush2.msra.mxu0 0.0
    %115 = vmatprep.subr.mxu0 0.0
    %116 = vmatpush2.msra.mxu0 0.0
    %117 = vmatprep.subr.mxu0 0.0
    %118 = vmatpush2.msra.mxu0 0.0
    %119 = vmatprep.subr.mxu0 0.0
    %120 = vmatpush2.msra.mxu0 0.0
    %121 = vmatprep.subr.mxu0 0.0
    %122 = vmatpush2.msra.mxu0 0.0
    %123 = vmatprep.mubr.f32.mxu0 0.0
    %124 = vmatmul.mubr.f32.gmra.mxu0 %v57
    %v125 = vpop.f32.mrf.mxu0
    %v126 = vadd.f32 %v53, %v125
    %v127 = vpop.f32.mrf.mxu0
    %128 = vdwg.mxu0
    %vm129 = vcmask 130048
    %130 = vst.msk [vmem:[#allocation2] sm:$0xff] %vm129, 0.0
    %131 = vst.msk [vmem:[#allocation2 + $0x8] sm:$0xff] %vm129, 0.0
    %132 = vst.msk [vmem:[#allocation2 + $0x10] sm:$0xff] %vm129, 0.0
    %133 = vst.msk [vmem:[#allocation2 + $0x8] sm:$0xff] %vm129, %v126
    %v134 = vld [vmem:[#allocation2 + $0x5] sm:$0xff]
    %v135 = vld [vmem:[%s9] sm:$0xff]
    %137 = vset.pattern.permute.xlu0 0
    %138 = vperm.xlu0 %137, %v135
    %v139 = vpop.permute.xlu0 %138
    %v141 = vmul.f32 %v134, %v139
    %v142 = vpack.c.bf16 %v141, %v141
    %v143 = vld [vmem:[%s3] sm:$0xf]
    %v144 = vld [vmem:[%s3 + $0x4] sm:$0xf]
    %v145 = vld [vmem:[#allocation2 + $0x6] sm:$0xff]
    %146 = vset.pattern.permute.xlu0 1
    %147 = vperm.xlu0 %146, %v135
    %v148 = vpop.permute.xlu0 %147
    %v150 = vmul.f32 %v145, %v148
    %v151 = vpack.c.bf16 %v150, %v150
    %v152 = vld [vmem:[%s3 + $0x8] sm:$0xf]
    %v153 = vld [vmem:[%s3 + $0xc] sm:$0xf]
    %v156 = vunpack.c.l.b16 %v152
    %v157 = vunpack.c.l.b16 %v153
    %v158 = vpack.c.b16 %v157, %v156
    %v161 = vsel %vm129, %v151, 0
    %163 = vmatprep.subr.bf16.mxu0 0
    %164 = vmatpush1.bf16.msra.mxu0 0
    %165 = vmatprep.subr.bf16.mxu0 0
    %166 = vmatpush1.bf16.msra.mxu0 0
    %167 = vmatprep.subr.bf16.mxu0 0
    %168 = vmatpush1.bf16.msra.mxu0 0
    %169 = vmatprep.subr.bf16.mxu0 0
    %170 = vmatpush1.bf16.msra.mxu0 0
    %171 = vmatprep.subr.bf16.mxu0 0
    %172 = vmatpush1.bf16.msra.mxu0 0
    %173 = vmatprep.subr.bf16.mxu0 0
    %174 = vmatpush1.bf16.msra.mxu0 0
    %175 = vmatprep.subr.bf16.mxu0 0
    %176 = vmatpush1.bf16.msra.mxu0 0
    %177 = vmatprep.subr.bf16.mxu0 0
    %178 = vmatpush1.bf16.msra.mxu0 %v158
    %179 = vmatprep.subr.bf16.mxu0 0
    %180 = vmatpush2.bf16.msra.mxu0 0
    %181 = vmatprep.subr.bf16.mxu0 0
    %182 = vmatpush2.bf16.msra.mxu0 0
    %183 = vmatprep.subr.bf16.mxu0 0
    %184 = vmatpush2.bf16.msra.mxu0 0
    %185 = vmatprep.subr.bf16.mxu0 0
    %186 = vmatpush2.bf16.msra.mxu0 0
    %187 = vmatprep.subr.bf16.mxu0 0
    %188 = vmatpush2.bf16.msra.mxu0 0
    %189 = vmatprep.subr.bf16.mxu0 0
    %190 = vmatpush2.bf16.msra.mxu0 0
    %191 = vmatprep.subr.bf16.mxu0 0
    %192 = vmatpush2.bf16.msra.mxu0 0
    %193 = vmatprep.subr.bf16.mxu0 0
    %194 = vmatpush2.bf16.msra.mxu0 0
    %195 = vmatprep.mubr.bf16.mxu0 0
    %196 = vmatmul.mubr.bf16.gmra.mxu0 %v161
    %v197 = vpop.f32.mrf.mxu0
    %v198 = vadd.f32 0.0, %v197
    %v199 = vpop.f32.mrf.mxu0
    %v200 = vpop.f32.mrf.mxu0
    %v201 = vpop.f32.mrf.mxu0
    %202 = vdwg.mxu0
    %v205 = vunpack.c.l.b16 %v143
    %v206 = vunpack.c.l.b16 %v144
    %v207 = vpack.c.b16 %v206, %v205
    %v210 = vsel %vm129, %v142, 0
    %212 = vmatprep.subr.bf16.mxu0 0
    %213 = vmatpush1.bf16.msra.mxu0 0
    %214 = vmatprep.subr.bf16.mxu0 0
    %215 = vmatpush1.bf16.msra.mxu0 0
    %216 = vmatprep.subr.bf16.mxu0 0
    %217 = vmatpush1.bf16.msra.mxu0 0
    %218 = vmatprep.subr.bf16.mxu0 0
    %219 = vmatpush1.bf16.msra.mxu0 0
    %220 = vmatprep.subr.bf16.mxu0 0
    %221 = vmatpush1.bf16.msra.mxu0 0
    %222 = vmatprep.subr.bf16.mxu0 0
    %223 = vmatpush1.bf16.msra.mxu0 0
    %224 = vmatprep.subr.bf16.mxu0 0
    %225 = vmatpush1.bf16.msra.mxu0 0
    %226 = vmatprep.subr.bf16.mxu0 0
    %227 = vmatpush1.bf16.msra.mxu0 %v207
    %228 = vmatprep.subr.bf16.mxu0 0
    %229 = vmatpush2.bf16.msra.mxu0 0
    %230 = vmatprep.subr.bf16.mxu0 0
    %231 = vmatpush2.bf16.msra.mxu0 0
    %232 = vmatprep.subr.bf16.mxu0 0
    %233 = vmatpush2.bf16.msra.mxu0 0
    %234 = vmatprep.subr.bf16.mxu0 0
    %235 = vmatpush2.bf16.msra.mxu0 0
    %236 = vmatprep.subr.bf16.mxu0 0
    %237 = vmatpush2.bf16.msra.mxu0 0
    %238 = vmatprep.subr.bf16.mxu0 0
    %239 = vmatpush2.bf16.msra.mxu0 0
    %240 = vmatprep.subr.bf16.mxu0 0
    %241 = vmatpush2.bf16.msra.mxu0 0
    %242 = vmatprep.subr.bf16.mxu0 0
    %243 = vmatpush2.bf16.msra.mxu0 0
    %244 = vmatprep.mubr.bf16.mxu0 0
    %245 = vmatmul.mubr.bf16.gmra.mxu0 %v210
    %v246 = vpop.f32.mrf.mxu0
    %v247 = vadd.f32 %v198, %v246
    %v248 = vpop.f32.mrf.mxu0
    %v249 = vpop.f32.mrf.mxu0
    %v250 = vpop.f32.mrf.mxu0
    %251 = vdwg.mxu0
    %v252 = vld [vmem:[#allocation2 + $0x7] sm:$0xff]
    %253 = vset.pattern.permute.xlu0 2
    %254 = vperm.xlu0 %253, %v135
    %v255 = vpop.permute.xlu0 %254
    %v257 = vmul.f32 %v252, %v255
    %v258 = vpack.c.bf16 %v257, %v257
    %v259 = vld [vmem:[%s3 + $0x10] sm:$0xf]
    %v260 = vld [vmem:[%s3 + $0x14] sm:$0xf]
    %v263 = vunpack.c.l.b16 %v259
    %v264 = vunpack.c.l.b16 %v260
    %v265 = vpack.c.b16 %v264, %v263
    %v268 = vsel %vm129, %v258, 0
    %270 = vmatprep.subr.bf16.mxu0 0
    %271 = vmatpush1.bf16.msra.mxu0 0
    %272 = vmatprep.subr.bf16.mxu0 0
    %273 = vmatpush1.bf16.msra.mxu0 0
    %274 = vmatprep.subr.bf16.mxu0 0
    %275 = vmatpush1.bf16.msra.mxu0 0
    %276 = vmatprep.subr.bf16.mxu0 0
    %277 = vmatpush1.bf16.msra.mxu0 0
    %278 = vmatprep.subr.bf16.mxu0 0
    %279 = vmatpush1.bf16.msra.mxu0 0
    %280 = vmatprep.subr.bf16.mxu0 0
    %281 = vmatpush1.bf16.msra.mxu0 0
    %282 = vmatprep.subr.bf16.mxu0 0
    %283 = vmatpush1.bf16.msra.mxu0 0
    %284 = vmatprep.subr.bf16.mxu0 0
    %285 = vmatpush1.bf16.msra.mxu0 %v265
    %286 = vmatprep.subr.bf16.mxu0 0
    %287 = vmatpush2.bf16.msra.mxu0 0
    %288 = vmatprep.subr.bf16.mxu0 0
    %289 = vmatpush2.bf16.msra.mxu0 0
    %290 = vmatprep.subr.bf16.mxu0 0
    %291 = vmatpush2.bf16.msra.mxu0 0
    %292 = vmatprep.subr.bf16.mxu0 0
    %293 = vmatpush2.bf16.msra.mxu0 0
    %294 = vmatprep.subr.bf16.mxu0 0
    %295 = vmatpush2.bf16.msra.mxu0 0
    %296 = vmatprep.subr.bf16.mxu0 0
    %297 = vmatpush2.bf16.msra.mxu0 0
    %298 = vmatprep.subr.bf16.mxu0 0
    %299 = vmatpush2.bf16.msra.mxu0 0
    %300 = vmatprep.subr.bf16.mxu0 0
    %301 = vmatpush2.bf16.msra.mxu0 0
    %302 = vmatprep.mubr.bf16.mxu0 0
    %303 = vmatmul.mubr.bf16.gmra.mxu0 %v268
    %v304 = vpop.f32.mrf.mxu0
    %v305 = vadd.f32 0.0, %v304
    %v306 = vpop.f32.mrf.mxu0
    %v307 = vpop.f32.mrf.mxu0
    %v308 = vpop.f32.mrf.mxu0
    %309 = vdwg.mxu0
    %v310 = vadd.f32 %v247, %v305
    %311 = vset.pattern.permute.xlu0 3
    %312 = vperm.xlu0 %311, %v135
    %v313 = vpop.permute.xlu0 %312
    %v315 = vmul.f32 %v252, %v313
    %v316 = vpack.c.bf16 %v315, %v315
    %v317 = vld [vmem:[%s3 + $0x18] sm:$0xf]
    %v318 = vld [vmem:[%s3 + $0x1c] sm:$0xf]
    %v321 = vunpack.c.l.b16 %v317
    %v322 = vunpack.c.l.b16 %v318
    %v323 = vpack.c.b16 %v322, %v321
    %v326 = vsel %vm129, %v316, 0
    %328 = vmatprep.subr.bf16.mxu0 0
    %329 = vmatpush1.bf16.msra.mxu0 0
    %330 = vmatprep.subr.bf16.mxu0 0
    %331 = vmatpush1.bf16.msra.mxu0 0
    %332 = vmatprep.subr.bf16.mxu0 0
    %333 = vmatpush1.bf16.msra.mxu0 0
    %334 = vmatprep.subr.bf16.mxu0 0
    %335 = vmatpush1.bf16.msra.mxu0 0
    %336 = vmatprep.subr.bf16.mxu0 0
    %337 = vmatpush1.bf16.msra.mxu0 0
    %338 = vmatprep.subr.bf16.mxu0 0
    %339 = vmatpush1.bf16.msra.mxu0 0
    %340 = vmatprep.subr.bf16.mxu0 0
    %341 = vmatpush1.bf16.msra.mxu0 0
    %342 = vmatprep.subr.bf16.mxu0 0
    %343 = vmatpush1.bf16.msra.mxu0 %v323
    %344 = vmatprep.subr.bf16.mxu0 0
    %345 = vmatpush2.bf16.msra.mxu0 0
    %346 = vmatprep.subr.bf16.mxu0 0
    %347 = vmatpush2.bf16.msra.mxu0 0
    %348 = vmatprep.subr.bf16.mxu0 0
    %349 = vmatpush2.bf16.msra.mxu0 0
    %350 = vmatprep.subr.bf16.mxu0 0
    %351 = vmatpush2.bf16.msra.mxu0 0
    %352 = vmatprep.subr.bf16.mxu0 0
    %353 = vmatpush2.bf16.msra.mxu0 0
    %354 = vmatprep.subr.bf16.mxu0 0
    %355 = vmatpush2.bf16.msra.mxu0 0
    %356 = vmatprep.subr.bf16.mxu0 0
    %357 = vmatpush2.bf16.msra.mxu0 0
    %358 = vmatprep.subr.bf16.mxu0 0
    %359 = vmatpush2.bf16.msra.mxu0 0
    %360 = vmatprep.mubr.bf16.mxu0 0
    %361 = vmatmul.mubr.bf16.gmra.mxu0 %v326
    %v362 = vpop.f32.mrf.mxu0
    %v363 = vadd.f32 0.0, %v362
    %v364 = vpop.f32.mrf.mxu0
    %v365 = vpop.f32.mrf.mxu0
    %v366 = vpop.f32.mrf.mxu0
    %367 = vdwg.mxu0
    %v368 = vadd.f32 %v310, %v363
    %v369 = vld [vmem:[#allocation2 + $0x8] sm:$0xff]
    %370 = vset.pattern.permute.xlu0 4
    %371 = vperm.xlu0 %370, %v135
    %v372 = vpop.permute.xlu0 %371
    %v374 = vmul.f32 %v369, %v372
    %v375 = vpack.c.bf16 %v374, %v374
    %v376 = vld [vmem:[%s3 + $0x20] sm:$0xf]
    %v377 = vld [vmem:[%s3 + $0x24] sm:$0xf]
    %v380 = vunpack.c.l.b16 %v376
    %v381 = vunpack.c.l.b16 %v377
    %v382 = vpack.c.b16 %v381, %v380
    %v385 = vsel %vm129, %v375, 0
    %387 = vmatprep.subr.bf16.mxu0 0
    %388 = vmatpush1.bf16.msra.mxu0 0
    %389 = vmatprep.subr.bf16.mxu0 0
    %390 = vmatpush1.bf16.msra.mxu0 0
    %391 = vmatprep.subr.bf16.mxu0 0
    %392 = vmatpush1.bf16.msra.mxu0 0
    %393 = vmatprep.subr.bf16.mxu0 0
    %394 = vmatpush1.bf16.msra.mxu0 0
    %395 = vmatprep.subr.bf16.mxu0 0
    %396 = vmatpush1.bf16.msra.mxu0 0
    %397 = vmatprep.subr.bf16.mxu0 0
    %398 = vmatpush1.bf16.msra.mxu0 0
    %399 = vmatprep.subr.bf16.mxu0 0
    %400 = vmatpush1.bf16.msra.mxu0 0
    %401 = vmatprep.subr.bf16.mxu0 0
    %402 = vmatpush1.bf16.msra.mxu0 %v382
    %403 = vmatprep.subr.bf16.mxu0 0
    %404 = vmatpush2.bf16.msra.mxu0 0
    %405 = vmatprep.subr.bf16.mxu0 0
    %406 = vmatpush2.bf16.msra.mxu0 0
    %407 = vmatprep.subr.bf16.mxu0 0
    %408 = vmatpush2.bf16.msra.mxu0 0
    %409 = vmatprep.subr.bf16.mxu0 0
    %410 = vmatpush2.bf16.msra.mxu0 0
    %411 = vmatprep.subr.bf16.mxu0 0
    %412 = vmatpush2.bf16.msra.mxu0 0
    %413 = vmatprep.subr.bf16.mxu0 0
    %414 = vmatpush2.bf16.msra.mxu0 0
    %415 = vmatprep.subr.bf16.mxu0 0
    %416 = vmatpush2.bf16.msra.mxu0 0
    %417 = vmatprep.subr.bf16.mxu0 0
    %418 = vmatpush2.bf16.msra.mxu0 0
    %419 = vmatprep.mubr.bf16.mxu0 0
    %420 = vmatmul.mubr.bf16.gmra.mxu0 %v385
    %v421 = vpop.f32.mrf.mxu0
    %v422 = vadd.f32 0.0, %v421
    %v423 = vpop.f32.mrf.mxu0
    %v424 = vpop.f32.mrf.mxu0
    %v425 = vpop.f32.mrf.mxu0
    %426 = vdwg.mxu0
    %v427 = vadd.f32 %v368, %v422
    %v428 = vld [vmem:[#allocation2 + $0x9] sm:$0xff]
    %429 = vset.pattern.permute.xlu0 5
    %430 = vperm.xlu0 %429, %v135
    %v431 = vpop.permute.xlu0 %430
    %v433 = vmul.f32 %v428, %v431
    %v434 = vpack.c.bf16 %v433, %v433
    %v435 = vld [vmem:[%s3 + $0x28] sm:$0xf]
    %v436 = vld [vmem:[%s3 + $0x2c] sm:$0xf]
    %v439 = vunpack.c.l.b16 %v435
    %v440 = vunpack.c.l.b16 %v436
    %v441 = vpack.c.b16 %v440, %v439
    %v444 = vsel %vm129, %v434, 0
    %446 = vmatprep.subr.bf16.mxu0 0
    %447 = vmatpush1.bf16.msra.mxu0 0
    %448 = vmatprep.subr.bf16.mxu0 0
    %449 = vmatpush1.bf16.msra.mxu0 0
    %450 = vmatprep.subr.bf16.mxu0 0
    %451 = vmatpush1.bf16.msra.mxu0 0
    %452 = vmatprep.subr.bf16.mxu0 0
    %453 = vmatpush1.bf16.msra.mxu0 0
    %454 = vmatprep.subr.bf16.mxu0 0
    %455 = vmatpush1.bf16.msra.mxu0 0
    %456 = vmatprep.subr.bf16.mxu0 0
    %457 = vmatpush1.bf16.msra.mxu0 0
    %458 = vmatprep.subr.bf16.mxu0 0
    %459 = vmatpush1.bf16.msra.mxu0 0
    %460 = vmatprep.subr.bf16.mxu0 0
    %461 = vmatpush1.bf16.msra.mxu0 %v441
    %462 = vmatprep.subr.bf16.mxu0 0
    %463 = vmatpush2.bf16.msra.mxu0 0
    %464 = vmatprep.subr.bf16.mxu0 0
    %465 = vmatpush2.bf16.msra.mxu0 0
    %466 = vmatprep.subr.bf16.mxu0 0
    %467 = vmatpush2.bf16.msra.mxu0 0
    %468 = vmatprep.subr.bf16.mxu0 0
    %469 = vmatpush2.bf16.msra.mxu0 0
    %470 = vmatprep.subr.bf16.mxu0 0
    %471 = vmatpush2.bf16.msra.mxu0 0
    %472 = vmatprep.subr.bf16.mxu0 0
    %473 = vmatpush2.bf16.msra.mxu0 0
    %474 = vmatprep.subr.bf16.mxu0 0
    %475 = vmatpush2.bf16.msra.mxu0 0
    %476 = vmatprep.subr.bf16.mxu0 0
    %477 = vmatpush2.bf16.msra.mxu0 0
    %478 = vmatprep.mubr.bf16.mxu0 0
    %479 = vmatmul.mubr.bf16.gmra.mxu0 %v444
    %v480 = vpop.f32.mrf.mxu0
    %v481 = vadd.f32 0.0, %v480
    %v482 = vpop.f32.mrf.mxu0
    %v483 = vpop.f32.mrf.mxu0
    %v484 = vpop.f32.mrf.mxu0
    %485 = vdwg.mxu0
    %v486 = vadd.f32 %v427, %v481
    %487 = vset.pattern.permute.xlu0 6
    %488 = vperm.xlu0 %487, %v135
    %v489 = vpop.permute.xlu0 %488
    %v491 = vmul.f32 %v428, %v489
    %v492 = vpack.c.bf16 %v491, %v491
    %v493 = vld [vmem:[%s3 + $0x30] sm:$0xf]
    %v494 = vld [vmem:[%s3 + $0x34] sm:$0xf]
    %v497 = vunpack.c.l.b16 %v493
    %v498 = vunpack.c.l.b16 %v494
    %v499 = vpack.c.b16 %v498, %v497
    %v502 = vsel %vm129, %v492, 0
    %504 = vmatprep.subr.bf16.mxu0 0
    %505 = vmatpush1.bf16.msra.mxu0 0
    %506 = vmatprep.subr.bf16.mxu0 0
    %507 = vmatpush1.bf16.msra.mxu0 0
    %508 = vmatprep.subr.bf16.mxu0 0
    %509 = vmatpush1.bf16.msra.mxu0 0
    %510 = vmatprep.subr.bf16.mxu0 0
    %511 = vmatpush1.bf16.msra.mxu0 0
    %512 = vmatprep.subr.bf16.mxu0 0
    %513 = vmatpush1.bf16.msra.mxu0 0
    %514 = vmatprep.subr.bf16.mxu0 0
    %515 = vmatpush1.bf16.msra.mxu0 0
    %516 = vmatprep.subr.bf16.mxu0 0
    %517 = vmatpush1.bf16.msra.mxu0 0
    %518 = vmatprep.subr.bf16.mxu0 0
    %519 = vmatpush1.bf16.msra.mxu0 %v499
    %520 = vmatprep.subr.bf16.mxu0 0
    %521 = vmatpush2.bf16.msra.mxu0 0
    %522 = vmatprep.subr.bf16.mxu0 0
    %523 = vmatpush2.bf16.msra.mxu0 0
    %524 = vmatprep.subr.bf16.mxu0 0
    %525 = vmatpush2.bf16.msra.mxu0 0
    %526 = vmatprep.subr.bf16.mxu0 0
    %527 = vmatpush2.bf16.msra.mxu0 0
    %528 = vmatprep.subr.bf16.mxu0 0
    %529 = vmatpush2.bf16.msra.mxu0 0
    %530 = vmatprep.subr.bf16.mxu0 0
    %531 = vmatpush2.bf16.msra.mxu0 0
    %532 = vmatprep.subr.bf16.mxu0 0
    %533 = vmatpush2.bf16.msra.mxu0 0
    %534 = vmatprep.subr.bf16.mxu0 0
    %535 = vmatpush2.bf16.msra.mxu0 0
    %536 = vmatprep.mubr.bf16.mxu0 0
    %537 = vmatmul.mubr.bf16.gmra.mxu0 %v502
    %v538 = vpop.f32.mrf.mxu0
    %v539 = vadd.f32 0.0, %v538
    %v540 = vpop.f32.mrf.mxu0
    %v541 = vpop.f32.mrf.mxu0
    %v542 = vpop.f32.mrf.mxu0
    %543 = vdwg.mxu0
    %v544 = vadd.f32 %v486, %v539
    %v545 = vld [vmem:[#allocation2 + $0xa] sm:$0xff]
    %546 = vset.pattern.permute.xlu0 7
    %547 = vperm.xlu0 %546, %v135
    %v548 = vpop.permute.xlu0 %547
    %v550 = vmul.f32 %v545, %v548
    %v551 = vpack.c.bf16 %v550, %v550
    %v552 = vld [vmem:[%s3 + $0x38] sm:$0xf]
    %v553 = vld [vmem:[%s3 + $0x3c] sm:$0xf]
    %v556 = vunpack.c.l.b16 %v552
    %v557 = vunpack.c.l.b16 %v553
    %v558 = vpack.c.b16 %v557, %v556
    %v561 = vsel %vm129, %v551, 0
    %563 = vmatprep.subr.bf16.mxu0 0
    %564 = vmatpush1.bf16.msra.mxu0 0
    %565 = vmatprep.subr.bf16.mxu0 0
    %566 = vmatpush1.bf16.msra.mxu0 0
    %567 = vmatprep.subr.bf16.mxu0 0
    %568 = vmatpush1.bf16.msra.mxu0 0
    %569 = vmatprep.subr.bf16.mxu0 0
    %570 = vmatpush1.bf16.msra.mxu0 0
    %571 = vmatprep.subr.bf16.mxu0 0
    %572 = vmatpush1.bf16.msra.mxu0 0
    %573 = vmatprep.subr.bf16.mxu0 0
    %574 = vmatpush1.bf16.msra.mxu0 0
    %575 = vmatprep.subr.bf16.mxu0 0
    %576 = vmatpush1.bf16.msra.mxu0 0
    %577 = vmatprep.subr.bf16.mxu0 0
    %578 = vmatpush1.bf16.msra.mxu0 %v558
    %579 = vmatprep.subr.bf16.mxu0 0
    %580 = vmatpush2.bf16.msra.mxu0 0
    %581 = vmatprep.subr.bf16.mxu0 0
    %582 = vmatpush2.bf16.msra.mxu0 0
    %583 = vmatprep.subr.bf16.mxu0 0
    %584 = vmatpush2.bf16.msra.mxu0 0
    %585 = vmatprep.subr.bf16.mxu0 0
    %586 = vmatpush2.bf16.msra.mxu0 0
    %587 = vmatprep.subr.bf16.mxu0 0
    %588 = vmatpush2.bf16.msra.mxu0 0
    %589 = vmatprep.subr.bf16.mxu0 0
    %590 = vmatpush2.bf16.msra.mxu0 0
    %591 = vmatprep.subr.bf16.mxu0 0
    %592 = vmatpush2.bf16.msra.mxu0 0
    %593 = vmatprep.subr.bf16.mxu0 0
    %594 = vmatpush2.bf16.msra.mxu0 0
    %595 = vmatprep.mubr.bf16.mxu0 0
    %596 = vmatmul.mubr.bf16.gmra.mxu0 %v561
    %v597 = vpop.f32.mrf.mxu0
    %v598 = vadd.f32 0.0, %v597
    %v599 = vpop.f32.mrf.mxu0
    %v600 = vpop.f32.mrf.mxu0
    %v601 = vpop.f32.mrf.mxu0
    %602 = vdwg.mxu0
    %v603 = vadd.f32 %v544, %v598
    %v604 = vld [vmem:[#allocation2 + $0xb] sm:$0xff]
    %605 = vset.pattern.permute.xlu0 8
    %606 = vperm.xlu0 %605, %v135
    %v607 = vpop.permute.xlu0 %606
    %v609 = vmul.f32 %v604, %v607
    %v610 = vpack.c.bf16 %v609, %v609
    %v611 = vld [vmem:[%s3 + $0x40] sm:$0xf]
    %v612 = vld [vmem:[%s3 + $0x44] sm:$0xf]
    %v615 = vunpack.c.l.b16 %v611
    %v616 = vunpack.c.l.b16 %v612
    %v617 = vpack.c.b16 %v616, %v615
    %v620 = vsel %vm129, %v610, 0
    %622 = vmatprep.subr.bf16.mxu0 0
    %623 = vmatpush1.bf16.msra.mxu0 0
    %624 = vmatprep.subr.bf16.mxu0 0
    %625 = vmatpush1.bf16.msra.mxu0 0
    %626 = vmatprep.subr.bf16.mxu0 0
    %627 = vmatpush1.bf16.msra.mxu0 0
    %628 = vmatprep.subr.bf16.mxu0 0
    %629 = vmatpush1.bf16.msra.mxu0 0
    %630 = vmatprep.subr.bf16.mxu0 0
    %631 = vmatpush1.bf16.msra.mxu0 0
    %632 = vmatprep.subr.bf16.mxu0 0
    %633 = vmatpush1.bf16.msra.mxu0 0
    %634 = vmatprep.subr.bf16.mxu0 0
    %635 = vmatpush1.bf16.msra.mxu0 0
    %636 = vmatprep.subr.bf16.mxu0 0
    %637 = vmatpush1.bf16.msra.mxu0 %v617
    %638 = vmatprep.subr.bf16.mxu0 0
    %639 = vmatpush2.bf16.msra.mxu0 0
    %640 = vmatprep.subr.bf16.mxu0 0
    %641 = vmatpush2.bf16.msra.mxu0 0
    %642 = vmatprep.subr.bf16.mxu0 0
    %643 = vmatpush2.bf16.msra.mxu0 0
    %644 = vmatprep.subr.bf16.mxu0 0
    %645 = vmatpush2.bf16.msra.mxu0 0
    %646 = vmatprep.subr.bf16.mxu0 0
    %647 = vmatpush2.bf16.msra.mxu0 0
    %648 = vmatprep.subr.bf16.mxu0 0
    %649 = vmatpush2.bf16.msra.mxu0 0
    %650 = vmatprep.subr.bf16.mxu0 0
    %651 = vmatpush2.bf16.msra.mxu0 0
    %652 = vmatprep.subr.bf16.mxu0 0
    %653 = vmatpush2.bf16.msra.mxu0 0
    %654 = vmatprep.mubr.bf16.mxu0 0
    %655 = vmatmul.mubr.bf16.gmra.mxu0 %v620
    %v656 = vpop.f32.mrf.mxu0
    %v657 = vadd.f32 0.0, %v656
    %v658 = vpop.f32.mrf.mxu0
    %v659 = vpop.f32.mrf.mxu0
    %v660 = vpop.f32.mrf.mxu0
    %661 = vdwg.mxu0
    %v662 = vadd.f32 %v603, %v657
    %v663 = vld [vmem:[%s4] sm:$0x1]
    %v665 = vlaneseq
    %v666 = vshrl.u32 %v665, 7
    %v667 = vsub.s32 0, %v666
    %v668 = vrot.slane %v663, %v667
    %v670 = vadd.f32 %v662, %v668
    %v671 = vmax.f32 %v670, 0.0
    %v672 = vpack.c.bf16 %v671, %v671
    %v673 = vld [vmem:[%s5] sm:$0xf]
    %v674 = vld [vmem:[%s5 + $0x4] sm:$0xf]
    %v675 = vld [vmem:[%s5 + $0x8] sm:$0xf]
    %v676 = vld [vmem:[%s5 + $0xc] sm:$0xf]
    %v677 = vld [vmem:[%s6] sm:$0x1]
    %v679 = vlaneseq
    %v680 = vshrl.u32 %v679, 7
    %v681 = vsub.s32 0, %v680
    %v682 = vrot.slane %v677, %v681
    %v688 = vunpack.c.l.b16 %v673
    %v689 = vunpack.c.l.b16 %v674
    %v690 = vunpack.c.l.b16 %v675
    %v691 = vunpack.c.l.b16 %v676
    %v692 = vpack.c.b16 %v689, %v688
    %v693 = vpack.c.b16 %v691, %v690
    %v697 = vsel %vm55, %v672, 0
    %699 = vmatprep.subr.bf16.mxu0 0
    %700 = vmatpush1.bf16.msra.mxu0 0
    %701 = vmatprep.subr.bf16.mxu0 0
    %702 = vmatpush1.bf16.msra.mxu0 0
    %703 = vmatprep.subr.bf16.mxu0 0
    %704 = vmatpush1.bf16.msra.mxu0 0
    %705 = vmatprep.subr.bf16.mxu0 0
    %706 = vmatpush1.bf16.msra.mxu0 0
    %707 = vmatprep.subr.bf16.mxu0 0
    %708 = vmatpush1.bf16.msra.mxu0 0
    %709 = vmatprep.subr.bf16.mxu0 0
    %710 = vmatpush1.bf16.msra.mxu0 0
    %711 = vmatprep.subr.bf16.mxu0 0
    %712 = vmatpush1.bf16.msra.mxu0 %v693
    %713 = vmatprep.subr.bf16.mxu0 0
    %714 = vmatpush1.bf16.msra.mxu0 %v692
    %715 = vmatprep.subr.bf16.mxu0 0
    %716 = vmatpush2.bf16.msra.mxu0 0
    %717 = vmatprep.subr.bf16.mxu0 0
    %718 = vmatpush2.bf16.msra.mxu0 0
    %719 = vmatprep.subr.bf16.mxu0 0
    %720 = vmatpush2.bf16.msra.mxu0 0
    %721 = vmatprep.subr.bf16.mxu0 0
    %722 = vmatpush2.bf16.msra.mxu0 0
    %723 = vmatprep.subr.bf16.mxu0 0
    %724 = vmatpush2.bf16.msra.mxu0 0
    %725 = vmatprep.subr.bf16.mxu0 0
    %726 = vmatpush2.bf16.msra.mxu0 0
    %727 = vmatprep.subr.bf16.mxu0 0
    %728 = vmatpush2.bf16.msra.mxu0 0
    %729 = vmatprep.subr.bf16.mxu0 0
    %730 = vmatpush2.bf16.msra.mxu0 0
    %731 = vmatprep.mubr.bf16.mxu0 0
    %732 = vmatmul.mubr.bf16.gmra.mxu0 %v697
    %v733 = vpop.f32.mrf.mxu0
    %v734 = vadd.f32 %v682, %v733
    %v735 = vpop.f32.mrf.mxu0
    %v736 = vpop.f32.mrf.mxu0
    %v737 = vpop.f32.mrf.mxu0
    %738 = vdwg.mxu0
    %v739 = vmax.f32 %v734, 0.0
    %740 = vst.msk [vmem:[#allocation3] sm:$0xff] %vm55, 0.0
    %741 = vst.msk [vmem:[#allocation3 + $0x8] sm:$0xff] %vm55, 0.0
    %742 = vst.msk [vmem:[#allocation3 + $0x10] sm:$0xff] %vm55, 0.0
    %743 = vst.msk [vmem:[#allocation3 + $0x8] sm:$0xff] %vm55, %v739
    %v744 = vld [vmem:[#allocation3 + $0x5] sm:$0xff]
    %v745 = vld [vmem:[%s9] sm:$0xff]
    %747 = vset.pattern.permute.xlu0 0
    %748 = vperm.xlu0 %747, %v745
    %v749 = vpop.permute.xlu0 %748
    %v751 = vmul.f32 %v744, %v749
    %v752 = vpack.c.bf16 %v751, %v751
    %v753 = vld [vmem:[%s7] sm:$0xf]
    %v754 = vld [vmem:[%s7 + $0x4] sm:$0xf]
    %v755 = vld [vmem:[%s7 + $0x8] sm:$0xf]
    %v756 = vld [vmem:[%s7 + $0xc] sm:$0xf]
    %v757 = vld [vmem:[#allocation3 + $0x6] sm:$0xff]
    %758 = vset.pattern.permute.xlu0 1
    %759 = vperm.xlu0 %758, %v745
    %v760 = vpop.permute.xlu0 %759
    %v762 = vmul.f32 %v757, %v760
    %v763 = vpack.c.bf16 %v762, %v762
    %v764 = vld [vmem:[%s7 + $0x10] sm:$0xf]
    %v765 = vld [vmem:[%s7 + $0x14] sm:$0xf]
    %v766 = vld [vmem:[%s7 + $0x18] sm:$0xf]
    %v767 = vld [vmem:[%s7 + $0x1c] sm:$0xf]
    %v772 = vunpack.c.l.b16 %v764
    %v773 = vunpack.c.l.b16 %v765
    %v774 = vunpack.c.l.b16 %v766
    %v775 = vunpack.c.l.b16 %v767
    %v776 = vpack.c.b16 %v773, %v772
    %v777 = vpack.c.b16 %v775, %v774
    %v781 = vsel %vm55, %v763, 0
    %783 = vmatprep.subr.bf16.mxu0 0
    %784 = vmatpush1.bf16.msra.mxu0 0
    %785 = vmatprep.subr.bf16.mxu0 0
    %786 = vmatpush1.bf16.msra.mxu0 0
    %787 = vmatprep.subr.bf16.mxu0 0
    %788 = vmatpush1.bf16.msra.mxu0 0
    %789 = vmatprep.subr.bf16.mxu0 0
    %790 = vmatpush1.bf16.msra.mxu0 0
    %791 = vmatprep.subr.bf16.mxu0 0
    %792 = vmatpush1.bf16.msra.mxu0 0
    %793 = vmatprep.subr.bf16.mxu0 0
    %794 = vmatpush1.bf16.msra.mxu0 0
    %795 = vmatprep.subr.bf16.mxu0 0
    %796 = vmatpush1.bf16.msra.mxu0 %v777
    %797 = vmatprep.subr.bf16.mxu0 0
    %798 = vmatpush1.bf16.msra.mxu0 %v776
    %799 = vmatprep.subr.bf16.mxu0 0
    %800 = vmatpush2.bf16.msra.mxu0 0
    %801 = vmatprep.subr.bf16.mxu0 0
    %802 = vmatpush2.bf16.msra.mxu0 0
    %803 = vmatprep.subr.bf16.mxu0 0
    %804 = vmatpush2.bf16.msra.mxu0 0
    %805 = vmatprep.subr.bf16.mxu0 0
    %806 = vmatpush2.bf16.msra.mxu0 0
    %807 = vmatprep.subr.bf16.mxu0 0
    %808 = vmatpush2.bf16.msra.mxu0 0
    %809 = vmatprep.subr.bf16.mxu0 0
    %810 = vmatpush2.bf16.msra.mxu0 0
    %811 = vmatprep.subr.bf16.mxu0 0
    %812 = vmatpush2.bf16.msra.mxu0 0
    %813 = vmatprep.subr.bf16.mxu0 0
    %814 = vmatpush2.bf16.msra.mxu0 0
    %815 = vmatprep.mubr.bf16.mxu0 0
    %816 = vmatmul.mubr.bf16.gmra.mxu0 %v781
    %v817 = vpop.f32.mrf.mxu0
    %v818 = vadd.f32 0.0, %v817
    %v819 = vpop.f32.mrf.mxu0
    %v820 = vpop.f32.mrf.mxu0
    %v821 = vpop.f32.mrf.mxu0
    %822 = vdwg.mxu0
    %v827 = vunpack.c.l.b16 %v753
    %v828 = vunpack.c.l.b16 %v754
    %v829 = vunpack.c.l.b16 %v755
    %v830 = vunpack.c.l.b16 %v756
    %v831 = vpack.c.b16 %v828, %v827
    %v832 = vpack.c.b16 %v830, %v829
    %v836 = vsel %vm55, %v752, 0
    %838 = vmatprep.subr.bf16.mxu0 0
    %839 = vmatpush1.bf16.msra.mxu0 0
    %840 = vmatprep.subr.bf16.mxu0 0
    %841 = vmatpush1.bf16.msra.mxu0 0
    %842 = vmatprep.subr.bf16.mxu0 0
    %843 = vmatpush1.bf16.msra.mxu0 0
    %844 = vmatprep.subr.bf16.mxu0 0
    %845 = vmatpush1.bf16.msra.mxu0 0
    %846 = vmatprep.subr.bf16.mxu0 0
    %847 = vmatpush1.bf16.msra.mxu0 0
    %848 = vmatprep.subr.bf16.mxu0 0
    %849 = vmatpush1.bf16.msra.mxu0 0
    %850 = vmatprep.subr.bf16.mxu0 0
    %851 = vmatpush1.bf16.msra.mxu0 %v832
    %852 = vmatprep.subr.bf16.mxu0 0
    %853 = vmatpush1.bf16.msra.mxu0 %v831
    %854 = vmatprep.subr.bf16.mxu0 0
    %855 = vmatpush2.bf16.msra.mxu0 0
    %856 = vmatprep.subr.bf16.mxu0 0
    %857 = vmatpush2.bf16.msra.mxu0 0
    %858 = vmatprep.subr.bf16.mxu0 0
    %859 = vmatpush2.bf16.msra.mxu0 0
    %860 = vmatprep.subr.bf16.mxu0 0
    %861 = vmatpush2.bf16.msra.mxu0 0
    %862 = vmatprep.subr.bf16.mxu0 0
    %863 = vmatpush2.bf16.msra.mxu0 0
    %864 = vmatprep.subr.bf16.mxu0 0
    %865 = vmatpush2.bf16.msra.mxu0 0
    %866 = vmatprep.subr.bf16.mxu0 0
    %867 = vmatpush2.bf16.msra.mxu0 0
    %868 = vmatprep.subr.bf16.mxu0 0
    %869 = vmatpush2.bf16.msra.mxu0 0
    %870 = vmatprep.mubr.bf16.mxu0 0
    %871 = vmatmul.mubr.bf16.gmra.mxu0 %v836
    %v872 = vpop.f32.mrf.mxu0
    %v873 = vadd.f32 %v818, %v872
    %v874 = vpop.f32.mrf.mxu0
    %v875 = vpop.f32.mrf.mxu0
    %v876 = vpop.f32.mrf.mxu0
    %877 = vdwg.mxu0
    %v878 = vld [vmem:[#allocation3 + $0x7] sm:$0xff]
    %879 = vset.pattern.permute.xlu0 2
    %880 = vperm.xlu0 %879, %v745
    %v881 = vpop.permute.xlu0 %880
    %v883 = vmul.f32 %v878, %v881
    %v884 = vpack.c.bf16 %v883, %v883
    %v885 = vld [vmem:[%s7 + $0x20] sm:$0xf]
    %v886 = vld [vmem:[%s7 + $0x24] sm:$0xf]
    %v887 = vld [vmem:[%s7 + $0x28] sm:$0xf]
    %v888 = vld [vmem:[%s7 + $0x2c] sm:$0xf]
    %v893 = vunpack.c.l.b16 %v885
    %v894 = vunpack.c.l.b16 %v886
    %v895 = vunpack.c.l.b16 %v887
    %v896 = vunpack.c.l.b16 %v888
    %v897 = vpack.c.b16 %v894, %v893
    %v898 = vpack.c.b16 %v896, %v895
    %v902 = vsel %vm55, %v884, 0
    %904 = vmatprep.subr.bf16.mxu0 0
    %905 = vmatpush1.bf16.msra.mxu0 0
    %906 = vmatprep.subr.bf16.mxu0 0
    %907 = vmatpush1.bf16.msra.mxu0 0
    %908 = vmatprep.subr.bf16.mxu0 0
    %909 = vmatpush1.bf16.msra.mxu0 0
    %910 = vmatprep.subr.bf16.mxu0 0
    %911 = vmatpush1.bf16.msra.mxu0 0
    %912 = vmatprep.subr.bf16.mxu0 0
    %913 = vmatpush1.bf16.msra.mxu0 0
    %914 = vmatprep.subr.bf16.mxu0 0
    %915 = vmatpush1.bf16.msra.mxu0 0
    %916 = vmatprep.subr.bf16.mxu0 0
    %917 = vmatpush1.bf16.msra.mxu0 %v898
    %918 = vmatprep.subr.bf16.mxu0 0
    %919 = vmatpush1.bf16.msra.mxu0 %v897
    %920 = vmatprep.subr.bf16.mxu0 0
    %921 = vmatpush2.bf16.msra.mxu0 0
    %922 = vmatprep.subr.bf16.mxu0 0
    %923 = vmatpush2.bf16.msra.mxu0 0
    %924 = vmatprep.subr.bf16.mxu0 0
    %925 = vmatpush2.bf16.msra.mxu0 0
    %926 = vmatprep.subr.bf16.mxu0 0
    %927 = vmatpush2.bf16.msra.mxu0 0
    %928 = vmatprep.subr.bf16.mxu0 0
    %929 = vmatpush2.bf16.msra.mxu0 0
    %930 = vmatprep.subr.bf16.mxu0 0
    %931 = vmatpush2.bf16.msra.mxu0 0
    %932 = vmatprep.subr.bf16.mxu0 0
    %933 = vmatpush2.bf16.msra.mxu0 0
    %934 = vmatprep.subr.bf16.mxu0 0
    %935 = vmatpush2.bf16.msra.mxu0 0
    %936 = vmatprep.mubr.bf16.mxu0 0
    %937 = vmatmul.mubr.bf16.gmra.mxu0 %v902
    %v938 = vpop.f32.mrf.mxu0
    %v939 = vadd.f32 0.0, %v938
    %v940 = vpop.f32.mrf.mxu0
    %v941 = vpop.f32.mrf.mxu0
    %v942 = vpop.f32.mrf.mxu0
    %943 = vdwg.mxu0
    %v944 = vadd.f32 %v873, %v939
    %945 = vset.pattern.permute.xlu0 3
    %946 = vperm.xlu0 %945, %v745
    %v947 = vpop.permute.xlu0 %946
    %v949 = vmul.f32 %v878, %v947
    %v950 = vpack.c.bf16 %v949, %v949
    %v951 = vld [vmem:[%s7 + $0x30] sm:$0xf]
    %v952 = vld [vmem:[%s7 + $0x34] sm:$0xf]
    %v953 = vld [vmem:[%s7 + $0x38] sm:$0xf]
    %v954 = vld [vmem:[%s7 + $0x3c] sm:$0xf]
    %v959 = vunpack.c.l.b16 %v951
    %v960 = vunpack.c.l.b16 %v952
    %v961 = vunpack.c.l.b16 %v953
    %v962 = vunpack.c.l.b16 %v954
    %v963 = vpack.c.b16 %v960, %v959
    %v964 = vpack.c.b16 %v962, %v961
    %v968 = vsel %vm55, %v950, 0
    %970 = vmatprep.subr.bf16.mxu0 0
    %971 = vmatpush1.bf16.msra.mxu0 0
    %972 = vmatprep.subr.bf16.mxu0 0
    %973 = vmatpush1.bf16.msra.mxu0 0
    %974 = vmatprep.subr.bf16.mxu0 0
    %975 = vmatpush1.bf16.msra.mxu0 0
    %976 = vmatprep.subr.bf16.mxu0 0
    %977 = vmatpush1.bf16.msra.mxu0 0
    %978 = vmatprep.subr.bf16.mxu0 0
    %979 = vmatpush1.bf16.msra.mxu0 0
    %980 = vmatprep.subr.bf16.mxu0 0
    %981 = vmatpush1.bf16.msra.mxu0 0
    %982 = vmatprep.subr.bf16.mxu0 0
    %983 = vmatpush1.bf16.msra.mxu0 %v964
    %984 = vmatprep.subr.bf16.mxu0 0
    %985 = vmatpush1.bf16.msra.mxu0 %v963
    %986 = vmatprep.subr.bf16.mxu0 0
    %987 = vmatpush2.bf16.msra.mxu0 0
    %988 = vmatprep.subr.bf16.mxu0 0
    %989 = vmatpush2.bf16.msra.mxu0 0
    %990 = vmatprep.subr.bf16.mxu0 0
    %991 = vmatpush2.bf16.msra.mxu0 0
    %992 = vmatprep.subr.bf16.mxu0 0
    %993 = vmatpush2.bf16.msra.mxu0 0
    %994 = vmatprep.subr.bf16.mxu0 0
    %995 = vmatpush2.bf16.msra.mxu0 0
    %996 = vmatprep.subr.bf16.mxu0 0
    %997 = vmatpush2.bf16.msra.mxu0 0
    %998 = vmatprep.subr.bf16.mxu0 0
    %999 = vmatpush2.bf16.msra.mxu0 0
    %1000 = vmatprep.subr.bf16.mxu0 0
    %1001 = vmatpush2.bf16.msra.mxu0 0
    %1002 = vmatprep.mubr.bf16.mxu0 0
    %1003 = vmatmul.mubr.bf16.gmra.mxu0 %v968
    %v1004 = vpop.f32.mrf.mxu0
    %v1005 = vadd.f32 0.0, %v1004
    %v1006 = vpop.f32.mrf.mxu0
    %v1007 = vpop.f32.mrf.mxu0
    %v1008 = vpop.f32.mrf.mxu0
    %1009 = vdwg.mxu0
    %v1010 = vadd.f32 %v944, %v1005
    %v1011 = vld [vmem:[#allocation3 + $0x8] sm:$0xff]
    %1012 = vset.pattern.permute.xlu0 4
    %1013 = vperm.xlu0 %1012, %v745
    %v1014 = vpop.permute.xlu0 %1013
    %v1016 = vmul.f32 %v1011, %v1014
    %v1017 = vpack.c.bf16 %v1016, %v1016
    %v1018 = vld [vmem:[%s7 + $0x40] sm:$0xf]
    %v1019 = vld [vmem:[%s7 + $0x44] sm:$0xf]
    %v1020 = vld [vmem:[%s7 + $0x48] sm:$0xf]
    %v1021 = vld [vmem:[%s7 + $0x4c] sm:$0xf]
    %v1026 = vunpack.c.l.b16 %v1018
    %v1027 = vunpack.c.l.b16 %v1019
    %v1028 = vunpack.c.l.b16 %v1020
    %v1029 = vunpack.c.l.b16 %v1021
    %v1030 = vpack.c.b16 %v1027, %v1026
    %v1031 = vpack.c.b16 %v1029, %v1028
    %v1035 = vsel %vm55, %v1017, 0
    %1037 = vmatprep.subr.bf16.mxu0 0
    %1038 = vmatpush1.bf16.msra.mxu0 0
    %1039 = vmatprep.subr.bf16.mxu0 0
    %1040 = vmatpush1.bf16.msra.mxu0 0
    %1041 = vmatprep.subr.bf16.mxu0 0
    %1042 = vmatpush1.bf16.msra.mxu0 0
    %1043 = vmatprep.subr.bf16.mxu0 0
    %1044 = vmatpush1.bf16.msra.mxu0 0
    %1045 = vmatprep.subr.bf16.mxu0 0
    %1046 = vmatpush1.bf16.msra.mxu0 0
    %1047 = vmatprep.subr.bf16.mxu0 0
    %1048 = vmatpush1.bf16.msra.mxu0 0
    %1049 = vmatprep.subr.bf16.mxu0 0
    %1050 = vmatpush1.bf16.msra.mxu0 %v1031
    %1051 = vmatprep.subr.bf16.mxu0 0
    %1052 = vmatpush1.bf16.msra.mxu0 %v1030
    %1053 = vmatprep.subr.bf16.mxu0 0
    %1054 = vmatpush2.bf16.msra.mxu0 0
    %1055 = vmatprep.subr.bf16.mxu0 0
    %1056 = vmatpush2.bf16.msra.mxu0 0
    %1057 = vmatprep.subr.bf16.mxu0 0
    %1058 = vmatpush2.bf16.msra.mxu0 0
    %1059 = vmatprep.subr.bf16.mxu0 0
    %1060 = vmatpush2.bf16.msra.mxu0 0
    %1061 = vmatprep.subr.bf16.mxu0 0
    %1062 = vmatpush2.bf16.msra.mxu0 0
    %1063 = vmatprep.subr.bf16.mxu0 0
    %1064 = vmatpush2.bf16.msra.mxu0 0
    %1065 = vmatprep.subr.bf16.mxu0 0
    %1066 = vmatpush2.bf16.msra.mxu0 0
    %1067 = vmatprep.subr.bf16.mxu0 0
    %1068 = vmatpush2.bf16.msra.mxu0 0
    %1069 = vmatprep.mubr.bf16.mxu0 0
    %1070 = vmatmul.mubr.bf16.gmra.mxu0 %v1035
    %v1071 = vpop.f32.mrf.mxu0
    %v1072 = vadd.f32 0.0, %v1071
    %v1073 = vpop.f32.mrf.mxu0
    %v1074 = vpop.f32.mrf.mxu0
    %v1075 = vpop.f32.mrf.mxu0
    %1076 = vdwg.mxu0
    %v1077 = vadd.f32 %v1010, %v1072
    %v1078 = vld [vmem:[#allocation3 + $0x9] sm:$0xff]
    %1079 = vset.pattern.permute.xlu0 5
    %1080 = vperm.xlu0 %1079, %v745
    %v1081 = vpop.permute.xlu0 %1080
    %v1083 = vmul.f32 %v1078, %v1081
    %v1084 = vpack.c.bf16 %v1083, %v1083
    %v1085 = vld [vmem:[%s7 + $0x50] sm:$0xf]
    %v1086 = vld [vmem:[%s7 + $0x54] sm:$0xf]
    %v1087 = vld [vmem:[%s7 + $0x58] sm:$0xf]
    %v1088 = vld [vmem:[%s7 + $0x5c] sm:$0xf]
    %v1093 = vunpack.c.l.b16 %v1085
    %v1094 = vunpack.c.l.b16 %v1086
    %v1095 = vunpack.c.l.b16 %v1087
    %v1096 = vunpack.c.l.b16 %v1088
    %v1097 = vpack.c.b16 %v1094, %v1093
    %v1098 = vpack.c.b16 %v1096, %v1095
    %v1102 = vsel %vm55, %v1084, 0
    %1104 = vmatprep.subr.bf16.mxu0 0
    %1105 = vmatpush1.bf16.msra.mxu0 0
    %1106 = vmatprep.subr.bf16.mxu0 0
    %1107 = vmatpush1.bf16.msra.mxu0 0
    %1108 = vmatprep.subr.bf16.mxu0 0
    %1109 = vmatpush1.bf16.msra.mxu0 0
    %1110 = vmatprep.subr.bf16.mxu0 0
    %1111 = vmatpush1.bf16.msra.mxu0 0
    %1112 = vmatprep.subr.bf16.mxu0 0
    %1113 = vmatpush1.bf16.msra.mxu0 0
    %1114 = vmatprep.subr.bf16.mxu0 0
    %1115 = vmatpush1.bf16.msra.mxu0 0
    %1116 = vmatprep.subr.bf16.mxu0 0
    %1117 = vmatpush1.bf16.msra.mxu0 %v1098
    %1118 = vmatprep.subr.bf16.mxu0 0
    %1119 = vmatpush1.bf16.msra.mxu0 %v1097
    %1120 = vmatprep.subr.bf16.mxu0 0
    %1121 = vmatpush2.bf16.msra.mxu0 0
    %1122 = vmatprep.subr.bf16.mxu0 0
    %1123 = vmatpush2.bf16.msra.mxu0 0
    %1124 = vmatprep.subr.bf16.mxu0 0
    %1125 = vmatpush2.bf16.msra.mxu0 0
    %1126 = vmatprep.subr.bf16.mxu0 0
    %1127 = vmatpush2.bf16.msra.mxu0 0
    %1128 = vmatprep.subr.bf16.mxu0 0
    %1129 = vmatpush2.bf16.msra.mxu0 0
    %1130 = vmatprep.subr.bf16.mxu0 0
    %1131 = vmatpush2.bf16.msra.mxu0 0
    %1132 = vmatprep.subr.bf16.mxu0 0
    %1133 = vmatpush2.bf16.msra.mxu0 0
    %1134 = vmatprep.subr.bf16.mxu0 0
    %1135 = vmatpush2.bf16.msra.mxu0 0
    %1136 = vmatprep.mubr.bf16.mxu0 0
    %1137 = vmatmul.mubr.bf16.gmra.mxu0 %v1102
    %v1138 = vpop.f32.mrf.mxu0
    %v1139 = vadd.f32 0.0, %v1138
    %v1140 = vpop.f32.mrf.mxu0
    %v1141 = vpop.f32.mrf.mxu0
    %v1142 = vpop.f32.mrf.mxu0
    %1143 = vdwg.mxu0
    %v1144 = vadd.f32 %v1077, %v1139
    %1145 = vset.pattern.permute.xlu0 6
    %1146 = vperm.xlu0 %1145, %v745
    %v1147 = vpop.permute.xlu0 %1146
    %v1149 = vmul.f32 %v1078, %v1147
    %v1150 = vpack.c.bf16 %v1149, %v1149
    %v1151 = vld [vmem:[%s7 + $0x60] sm:$0xf]
    %v1152 = vld [vmem:[%s7 + $0x64] sm:$0xf]
    %v1153 = vld [vmem:[%s7 + $0x68] sm:$0xf]
    %v1154 = vld [vmem:[%s7 + $0x6c] sm:$0xf]
    %v1159 = vunpack.c.l.b16 %v1151
    %v1160 = vunpack.c.l.b16 %v1152
    %v1161 = vunpack.c.l.b16 %v1153
    %v1162 = vunpack.c.l.b16 %v1154
    %v1163 = vpack.c.b16 %v1160, %v1159
    %v1164 = vpack.c.b16 %v1162, %v1161
    %v1168 = vsel %vm55, %v1150, 0
    %1170 = vmatprep.subr.bf16.mxu0 0
    %1171 = vmatpush1.bf16.msra.mxu0 0
    %1172 = vmatprep.subr.bf16.mxu0 0
    %1173 = vmatpush1.bf16.msra.mxu0 0
    %1174 = vmatprep.subr.bf16.mxu0 0
    %1175 = vmatpush1.bf16.msra.mxu0 0
    %1176 = vmatprep.subr.bf16.mxu0 0
    %1177 = vmatpush1.bf16.msra.mxu0 0
    %1178 = vmatprep.subr.bf16.mxu0 0
    %1179 = vmatpush1.bf16.msra.mxu0 0
    %1180 = vmatprep.subr.bf16.mxu0 0
    %1181 = vmatpush1.bf16.msra.mxu0 0
    %1182 = vmatprep.subr.bf16.mxu0 0
    %1183 = vmatpush1.bf16.msra.mxu0 %v1164
    %1184 = vmatprep.subr.bf16.mxu0 0
    %1185 = vmatpush1.bf16.msra.mxu0 %v1163
    %1186 = vmatprep.subr.bf16.mxu0 0
    %1187 = vmatpush2.bf16.msra.mxu0 0
    %1188 = vmatprep.subr.bf16.mxu0 0
    %1189 = vmatpush2.bf16.msra.mxu0 0
    %1190 = vmatprep.subr.bf16.mxu0 0
    %1191 = vmatpush2.bf16.msra.mxu0 0
    %1192 = vmatprep.subr.bf16.mxu0 0
    %1193 = vmatpush2.bf16.msra.mxu0 0
    %1194 = vmatprep.subr.bf16.mxu0 0
    %1195 = vmatpush2.bf16.msra.mxu0 0
    %1196 = vmatprep.subr.bf16.mxu0 0
    %1197 = vmatpush2.bf16.msra.mxu0 0
    %1198 = vmatprep.subr.bf16.mxu0 0
    %1199 = vmatpush2.bf16.msra.mxu0 0
    %1200 = vmatprep.subr.bf16.mxu0 0
    %1201 = vmatpush2.bf16.msra.mxu0 0
    %1202 = vmatprep.mubr.bf16.mxu0 0
    %1203 = vmatmul.mubr.bf16.gmra.mxu0 %v1168
    %v1204 = vpop.f32.mrf.mxu0
    %v1205 = vadd.f32 0.0, %v1204
    %v1206 = vpop.f32.mrf.mxu0
    %v1207 = vpop.f32.mrf.mxu0
    %v1208 = vpop.f32.mrf.mxu0
    %1209 = vdwg.mxu0
    %v1210 = vadd.f32 %v1144, %v1205
    %v1211 = vld [vmem:[#allocation3 + $0xa] sm:$0xff]
    %1212 = vset.pattern.permute.xlu0 7
    %1213 = vperm.xlu0 %1212, %v745
    %v1214 = vpop.permute.xlu0 %1213
    %v1216 = vmul.f32 %v1211, %v1214
    %v1217 = vpack.c.bf16 %v1216, %v1216
    %v1218 = vld [vmem:[%s7 + $0x70] sm:$0xf]
    %v1219 = vld [vmem:[%s7 + $0x74] sm:$0xf]
    %v1220 = vld [vmem:[%s7 + $0x78] sm:$0xf]
    %v1221 = vld [vmem:[%s7 + $0x7c] sm:$0xf]
    %v1226 = vunpack.c.l.b16 %v1218
    %v1227 = vunpack.c.l.b16 %v1219
    %v1228 = vunpack.c.l.b16 %v1220
    %v1229 = vunpack.c.l.b16 %v1221
    %v1230 = vpack.c.b16 %v1227, %v1226
    %v1231 = vpack.c.b16 %v1229, %v1228
    %v1235 = vsel %vm55, %v1217, 0
    %1237 = vmatprep.subr.bf16.mxu0 0
    %1238 = vmatpush1.bf16.msra.mxu0 0
    %1239 = vmatprep.subr.bf16.mxu0 0
    %1240 = vmatpush1.bf16.msra.mxu0 0
    %1241 = vmatprep.subr.bf16.mxu0 0
    %1242 = vmatpush1.bf16.msra.mxu0 0
    %1243 = vmatprep.subr.bf16.mxu0 0
    %1244 = vmatpush1.bf16.msra.mxu0 0
    %1245 = vmatprep.subr.bf16.mxu0 0
    %1246 = vmatpush1.bf16.msra.mxu0 0
    %1247 = vmatprep.subr.bf16.mxu0 0
    %1248 = vmatpush1.bf16.msra.mxu0 0
    %1249 = vmatprep.subr.bf16.mxu0 0
    %1250 = vmatpush1.bf16.msra.mxu0 %v1231
    %1251 = vmatprep.subr.bf16.mxu0 0
    %1252 = vmatpush1.bf16.msra.mxu0 %v1230
    %1253 = vmatprep.subr.bf16.mxu0 0
    %1254 = vmatpush2.bf16.msra.mxu0 0
    %1255 = vmatprep.subr.bf16.mxu0 0
    %1256 = vmatpush2.bf16.msra.mxu0 0
    %1257 = vmatprep.subr.bf16.mxu0 0
    %1258 = vmatpush2.bf16.msra.mxu0 0
    %1259 = vmatprep.subr.bf16.mxu0 0
    %1260 = vmatpush2.bf16.msra.mxu0 0
    %1261 = vmatprep.subr.bf16.mxu0 0
    %1262 = vmatpush2.bf16.msra.mxu0 0
    %1263 = vmatprep.subr.bf16.mxu0 0
    %1264 = vmatpush2.bf16.msra.mxu0 0
    %1265 = vmatprep.subr.bf16.mxu0 0
    %1266 = vmatpush2.bf16.msra.mxu0 0
    %1267 = vmatprep.subr.bf16.mxu0 0
    %1268 = vmatpush2.bf16.msra.mxu0 0
    %1269 = vmatprep.mubr.bf16.mxu0 0
    %1270 = vmatmul.mubr.bf16.gmra.mxu0 %v1235
    %v1271 = vpop.f32.mrf.mxu0
    %v1272 = vadd.f32 0.0, %v1271
    %v1273 = vpop.f32.mrf.mxu0
    %v1274 = vpop.f32.mrf.mxu0
    %v1275 = vpop.f32.mrf.mxu0
    %1276 = vdwg.mxu0
    %v1277 = vadd.f32 %v1210, %v1272
    %v1278 = vld [vmem:[#allocation3 + $0xb] sm:$0xff]
    %1279 = vset.pattern.permute.xlu0 8
    %1280 = vperm.xlu0 %1279, %v745
    %v1281 = vpop.permute.xlu0 %1280
    %v1283 = vmul.f32 %v1278, %v1281
    %v1284 = vpack.c.bf16 %v1283, %v1283
    %v1285 = vld [vmem:[%s7 + $0x80] sm:$0xf]
    %v1286 = vld [vmem:[%s7 + $0x84] sm:$0xf]
    %v1287 = vld [vmem:[%s7 + $0x88] sm:$0xf]
    %v1288 = vld [vmem:[%s7 + $0x8c] sm:$0xf]
    %v1293 = vunpack.c.l.b16 %v1285
    %v1294 = vunpack.c.l.b16 %v1286
    %v1295 = vunpack.c.l.b16 %v1287
    %v1296 = vunpack.c.l.b16 %v1288
    %v1297 = vpack.c.b16 %v1294, %v1293
    %v1298 = vpack.c.b16 %v1296, %v1295
    %v1302 = vsel %vm55, %v1284, 0
    %1304 = vmatprep.subr.bf16.mxu0 0
    %1305 = vmatpush1.bf16.msra.mxu0 0
    %1306 = vmatprep.subr.bf16.mxu0 0
    %1307 = vmatpush1.bf16.msra.mxu0 0
    %1308 = vmatprep.subr.bf16.mxu0 0
    %1309 = vmatpush1.bf16.msra.mxu0 0
    %1310 = vmatprep.subr.bf16.mxu0 0
    %1311 = vmatpush1.bf16.msra.mxu0 0
    %1312 = vmatprep.subr.bf16.mxu0 0
    %1313 = vmatpush1.bf16.msra.mxu0 0
    %1314 = vmatprep.subr.bf16.mxu0 0
    %1315 = vmatpush1.bf16.msra.mxu0 0
    %1316 = vmatprep.subr.bf16.mxu0 0
    %1317 = vmatpush1.bf16.msra.mxu0 %v1298
    %1318 = vmatprep.subr.bf16.mxu0 0
    %1319 = vmatpush1.bf16.msra.mxu0 %v1297
    %1320 = vmatprep.subr.bf16.mxu0 0
    %1321 = vmatpush2.bf16.msra.mxu0 0
    %1322 = vmatprep.subr.bf16.mxu0 0
    %1323 = vmatpush2.bf16.msra.mxu0 0
    %1324 = vmatprep.subr.bf16.mxu0 0
    %1325 = vmatpush2.bf16.msra.mxu0 0
    %1326 = vmatprep.subr.bf16.mxu0 0
    %1327 = vmatpush2.bf16.msra.mxu0 0
    %1328 = vmatprep.subr.bf16.mxu0 0
    %1329 = vmatpush2.bf16.msra.mxu0 0
    %1330 = vmatprep.subr.bf16.mxu0 0
    %1331 = vmatpush2.bf16.msra.mxu0 0
    %1332 = vmatprep.subr.bf16.mxu0 0
    %1333 = vmatpush2.bf16.msra.mxu0 0
    %1334 = vmatprep.subr.bf16.mxu0 0
    %1335 = vmatpush2.bf16.msra.mxu0 0
    %1336 = vmatprep.mubr.bf16.mxu0 0
    %1337 = vmatmul.mubr.bf16.gmra.mxu0 %v1302
    %v1338 = vpop.f32.mrf.mxu0
    %v1339 = vadd.f32 0.0, %v1338
    %v1340 = vpop.f32.mrf.mxu0
    %v1341 = vpop.f32.mrf.mxu0
    %v1342 = vpop.f32.mrf.mxu0
    %1343 = vdwg.mxu0
    %v1344 = vadd.f32 %v1277, %v1339
    %v1345 = vld [vmem:[%s8] sm:$0x1]
    %v1347 = vlaneseq
    %v1348 = vshrl.u32 %v1347, 7
    %v1349 = vsub.s32 0, %v1348
    %v1350 = vrot.slane %v1345, %v1349
    %v1352 = vadd.f32 %v1344, %v1350
    %v1353 = vadd.f32 %v1352, 0.0
    %v1354 = vmul.f32 %v1353, 0.5
    %v1355 = vtanh.pop %v1354
    %v1356 = vadd.f32 %v1355, 1.0
    %v1357 = vmul.f32 %v1356, 0.5
    %v1358 = vadd.f32 %v1357, 0.001
    %1360 = vrot.lane.b32.xlu0 %v1352, 16
    %v1361 = vpop.permute.xlu0 %1360
    %v1363 = vadd.f32 %v126, %v1361
    %v1364 = vmul.f32 %v1363, %v1358
    %v1365 = vsel %vm129, %v126, %v1364
    %1366 = vst.msk [vmem:[%s11] sm:$0xff] %vm55, %v1365
    %v1367 = vld [vmem:[%s10] sm:$0x3]
    %v1368 = vlog2.pop %v1358
    %v1369 = vmul.f32 %v1368, 0.6931472
    %1371 = vrot.lane.b32.xlu0 %v1369, 112
    %v1372 = vpop.permute.xlu0 %1371
    %vm1374 = vcmask 64512
    %v1376 = vsel %vm1374, %v1367, 0
    %1378 = vmatprep.subr.mxu0 0.0
    %1379 = vmatpush1.msra.mxu0 0.0
    %1380 = vmatprep.subr.mxu0 0.0
    %1381 = vmatpush1.msra.mxu0 0.0
    %1382 = vmatprep.subr.mxu0 0.0
    %1383 = vmatpush1.msra.mxu0 0.0
    %1384 = vmatprep.subr.mxu0 0.0
    %1385 = vmatpush1.msra.mxu0 0.0
    %1386 = vmatprep.subr.mxu0 0.0
    %1387 = vmatpush1.msra.mxu0 0.0
    %1388 = vmatprep.subr.mxu0 0.0
    %1389 = vmatpush1.msra.mxu0 0.0
    %1390 = vmatprep.subr.mxu0 0.0
    %1391 = vmatpush1.msra.mxu0 0.0
    %1392 = vmatprep.subr.mxu0 0.0
    %1393 = vmatpush1.msra.mxu0 0.0
    %1394 = vmatprep.subr.mxu0 0.0
    %1395 = vmatpush1.msra.mxu0 0.0
    %1396 = vmatprep.subr.mxu0 0.0
    %1397 = vmatpush1.msra.mxu0 0.0
    %1398 = vmatprep.subr.mxu0 0.0
    %1399 = vmatpush1.msra.mxu0 0.0
    %1400 = vmatprep.subr.mxu0 0.0
    %1401 = vmatpush1.msra.mxu0 0.0
    %1402 = vmatprep.subr.mxu0 0.0
    %1403 = vmatpush1.msra.mxu0 0.0
    %1404 = vmatprep.subr.mxu0 0.0
    %1405 = vmatpush1.msra.mxu0 0.0
    %1406 = vmatprep.subr.mxu0 0.0
    %1407 = vmatpush1.msra.mxu0 0.0
    %1408 = vmatprep.subr.mxu0 0.0
    %1409 = vmatpush1.msra.mxu0 %v1372
    %1410 = vmatprep.subr.mxu0 0.0
    %1411 = vmatpush2.msra.mxu0 0.0
    %1412 = vmatprep.subr.mxu0 0.0
    %1413 = vmatpush2.msra.mxu0 0.0
    %1414 = vmatprep.subr.mxu0 0.0
    %1415 = vmatpush2.msra.mxu0 0.0
    %1416 = vmatprep.subr.mxu0 0.0
    %1417 = vmatpush2.msra.mxu0 0.0
    %1418 = vmatprep.subr.mxu0 0.0
    %1419 = vmatpush2.msra.mxu0 0.0
    %1420 = vmatprep.subr.mxu0 0.0
    %1421 = vmatpush2.msra.mxu0 0.0
    %1422 = vmatprep.subr.mxu0 0.0
    %1423 = vmatpush2.msra.mxu0 0.0
    %1424 = vmatprep.subr.mxu0 0.0
    %1425 = vmatpush2.msra.mxu0 0.0
    %1426 = vmatprep.subr.mxu0 0.0
    %1427 = vmatpush2.msra.mxu0 0.0
    %1428 = vmatprep.subr.mxu0 0.0
    %1429 = vmatpush2.msra.mxu0 0.0
    %1430 = vmatprep.subr.mxu0 0.0
    %1431 = vmatpush2.msra.mxu0 0.0
    %1432 = vmatprep.subr.mxu0 0.0
    %1433 = vmatpush2.msra.mxu0 0.0
    %1434 = vmatprep.subr.mxu0 0.0
    %1435 = vmatpush2.msra.mxu0 0.0
    %1436 = vmatprep.subr.mxu0 0.0
    %1437 = vmatpush2.msra.mxu0 0.0
    %1438 = vmatprep.subr.mxu0 0.0
    %1439 = vmatpush2.msra.mxu0 0.0
    %1440 = vmatprep.subr.mxu0 0.0
    %1441 = vmatpush2.msra.mxu0 0.0
    %1442 = vmatprep.mubr.f32.mxu0 0.0
    %1443 = vmatmul.mubr.f32.gmra.mxu0 %v1376
    %v1444 = vpop.f32.mrf.mxu0
    %v1445 = vadd.f32 0.0, %v1444
    %v1446 = vpop.f32.mrf.mxu0
    %1447 = vdwg.mxu0
    %vm1448 = vcmask 123904
    %v1449 = vsel %vm1448, %v1445, 0.0
    %1450 = vadd.xlane.f32.xlu0 %v1449
    %v1451 = vpop.xlane.xlu0 %1450
    %vm1452 = vcmask 1024
    %1453 = vst.msk [vmem:[%s12] sm:$0x3] %vm1452, %v1451
    %v1454 = vmul.f32 %v1365, %v1365
    %1455 = vmatprep.subr.mxu0 0.0
    %1456 = vmatpush1.msra.mxu0 0.0
    %1457 = vmatprep.subr.mxu0 0.0
    %1458 = vmatpush1.msra.mxu0 0.0
    %1459 = vmatprep.subr.mxu0 0.0
    %1460 = vmatpush1.msra.mxu0 0.0
    %1461 = vmatprep.subr.mxu0 0.0
    %1462 = vmatpush1.msra.mxu0 0.0
    %1463 = vmatprep.subr.mxu0 0.0
    %1464 = vmatpush1.msra.mxu0 0.0
    %1465 = vmatprep.subr.mxu0 0.0
    %1466 = vmatpush1.msra.mxu0 0.0
    %1467 = vmatprep.subr.mxu0 0.0
    %1468 = vmatpush1.msra.mxu0 0.0
    %1469 = vmatprep.subr.mxu0 0.0
    %1470 = vmatpush1.msra.mxu0 0.0
    %1471 = vmatprep.subr.mxu0 0.0
    %1472 = vmatpush1.msra.mxu0 0.0
    %1473 = vmatprep.subr.mxu0 0.0
    %1474 = vmatpush1.msra.mxu0 0.0
    %1475 = vmatprep.subr.mxu0 0.0
    %1476 = vmatpush1.msra.mxu0 0.0
    %1477 = vmatprep.subr.mxu0 0.0
    %1478 = vmatpush1.msra.mxu0 0.0
    %1479 = vmatprep.subr.mxu0 0.0
    %1480 = vmatpush1.msra.mxu0 0.0
    %1481 = vmatprep.subr.mxu0 0.0
    %1482 = vmatpush1.msra.mxu0 0.0
    %1483 = vmatprep.subr.mxu0 0.0
    %1484 = vmatpush1.msra.mxu0 0.0
    %1485 = vmatprep.subr.mxu0 0.0
    %1486 = vmatpush1.msra.mxu0 %v1454
    %1487 = vmatprep.subr.mxu0 0.0
    %1488 = vmatpush2.msra.mxu0 0.0
    %1489 = vmatprep.subr.mxu0 0.0
    %1490 = vmatpush2.msra.mxu0 0.0
    %1491 = vmatprep.subr.mxu0 0.0
    %1492 = vmatpush2.msra.mxu0 0.0
    %1493 = vmatprep.subr.mxu0 0.0
    %1494 = vmatpush2.msra.mxu0 0.0
    %1495 = vmatprep.subr.mxu0 0.0
    %1496 = vmatpush2.msra.mxu0 0.0
    %1497 = vmatprep.subr.mxu0 0.0
    %1498 = vmatpush2.msra.mxu0 0.0
    %1499 = vmatprep.subr.mxu0 0.0
    %1500 = vmatpush2.msra.mxu0 0.0
    %1501 = vmatprep.subr.mxu0 0.0
    %1502 = vmatpush2.msra.mxu0 0.0
    %1503 = vmatprep.subr.mxu0 0.0
    %1504 = vmatpush2.msra.mxu0 0.0
    %1505 = vmatprep.subr.mxu0 0.0
    %1506 = vmatpush2.msra.mxu0 0.0
    %1507 = vmatprep.subr.mxu0 0.0
    %1508 = vmatpush2.msra.mxu0 0.0
    %1509 = vmatprep.subr.mxu0 0.0
    %1510 = vmatpush2.msra.mxu0 0.0
    %1511 = vmatprep.subr.mxu0 0.0
    %1512 = vmatpush2.msra.mxu0 0.0
    %1513 = vmatprep.subr.mxu0 0.0
    %1514 = vmatpush2.msra.mxu0 0.0
    %1515 = vmatprep.subr.mxu0 0.0
    %1516 = vmatpush2.msra.mxu0 0.0
    %1517 = vmatprep.subr.mxu0 0.0
    %1518 = vmatpush2.msra.mxu0 0.0
    %1519 = vmatprep.mubr.f32.mxu0 0.0
    %1520 = vmatmul.mubr.f32.gmra.mxu0 %v1376
    %v1521 = vpop.f32.mrf.mxu0
    %v1522 = vadd.f32 0.0, %v1521
    %v1523 = vpop.f32.mrf.mxu0
    %1524 = vdwg.mxu0
    %vm1525 = vcmask 254976
    %v1526 = vsel %vm1525, %v1522, 0.0
    %1527 = vadd.xlane.f32.xlu0 %v1526
    %v1528 = vpop.xlane.xlu0 %1527
    %v1529 = vmul.f32 %v1528, -0.5
    %1530 = vst.msk [vmem:[#allocation4] sm:$0x3] %vm1452, %v1529
    // Predicated region
    $region46: #{glow_forward.8} parent=1 // pred_check
      _
    $region47: #{glow_forward.8} parent=1 // pred_check_branch
      %1532 = sbr.rel (0) target = $region49
    $region48: #{glow_forward.8} parent=1 // pred_region
      _
    $region49: #{glow_forward.8} parent=1 // pred_fallthru
      _
    // Predicated region
    $region50: #{glow_forward.8} parent=1 // pred_check
      _
    $region51: #{glow_forward.8} parent=1 // pred_check_branch
      %1534 = sbr.rel (0) target = $region53
    $region52: #{glow_forward.8} parent=1 // pred_region
      _
    $region53: #{glow_forward.8} parent=1 // pred_fallthru
      _
    // Predicated region
    $region54: #{glow_forward.8} parent=1 // pred_check
      _
    $region55: #{glow_forward.8} parent=1 // pred_check_branch
      %1536 = sbr.rel (0) target = $region57
    $region56: #{glow_forward.8} parent=1 // pred_region
      %s1538 = ssub.s32 32, 32
      %1539 = vsyncadd [#allocation5], %s1538
      %s1541 = sshll.u32 [#allocation4], 4
      %s1542 = int_to_ptr.vmem [resolvable:$true] %s1541
      %1544 = dma.vmem_to_hbm [thread:$0]  %s1542, 32, %s13, [#allocation5]
    $region57: #{glow_forward.8} parent=1 // pred_fallthru
      _
    // Predicated region
    $region58: #{glow_forward.8} parent=1 // pred_check
      _
    $region59: #{glow_forward.8} parent=1 // pred_check_branch
      %1546 = sbr.rel (0) target = $region61
    $region60: #{glow_forward.8} parent=1 // pred_region
      _
    $region61: #{glow_forward.8} parent=1 // pred_fallthru
      _
    // Predicated region
    $region62: #{glow_forward.8} parent=1 // pred_check
      _
    $region63: #{glow_forward.8} parent=1 // pred_check_branch
      %1548 = sbr.rel (0) target = $region65
    $region64: #{glow_forward.8} parent=1 // pred_region
      _
    $region65: #{glow_forward.8} parent=1 // pred_fallthru
      _
    // Predicated region
    $region66: #{glow_forward.8} parent=1 // pred_check
      _
    $region67: #{glow_forward.8} parent=1 // pred_check_branch
      %1550 = sbr.rel (0) target = $region69
    $region68: #{glow_forward.8} parent=1 // pred_region
      %1551 = dma.done [#allocation5], 32
    $region69: #{glow_forward.8} parent=1 // pred_fallthru
      _
    %1552 = vsyncpa [#allocation5], 1

// kernel: glow_forward.9
$region0: #{glow_forward.9}
  #allocation0 [shape = 'u32[]', space=smem, size = 0x4, offset = 0x4, fixed_abs, tag = 'smem constant byte address 0x4 - core index']
  #allocation1 [shape = 'u32[144,128]{1,0:T(1,128)}', space=vmem, size = 0x12000, scoped, tag = 'internal scratch']
  #allocation2 [shape = 'f32[24,16]{1,0:T(8,128)}', space=vmem, size = 0x3000, scoped, tag = 'scratch operand']
  #allocation3 [shape = 'f32[24,32]{1,0:T(8,128)}', space=vmem, size = 0x3000, scoped, tag = 'scratch operand']
  %s0 = inlined_call_operand.vmem [shape: f32[8,32], index: 0, kind: input, shape index: {}]
  %s1 = inlined_call_operand.vmem [shape: f32[32,32], index: 1, kind: input, shape index: {}]
  %s2 = inlined_call_operand.vmem [shape: f32[1,32], index: 2, kind: input, shape index: {}]
  %s3 = inlined_call_operand.vmem [shape: bf16[144,32], index: 3, kind: input, shape index: {}]
  %s4 = inlined_call_operand.vmem [shape: f32[1,32], index: 4, kind: input, shape index: {}]
  %s5 = inlined_call_operand.vmem [shape: bf16[32,32], index: 5, kind: input, shape index: {}]
  %s6 = inlined_call_operand.vmem [shape: f32[1,32], index: 6, kind: input, shape index: {}]
  %s7 = inlined_call_operand.vmem [shape: bf16[288,32], index: 7, kind: input, shape index: {}]
  %s8 = inlined_call_operand.vmem [shape: f32[1,32], index: 8, kind: input, shape index: {}]
  %s9 = inlined_call_operand.vmem [shape: f32[8,9], index: 9, kind: input, shape index: {}]
  %s10 = inlined_call_operand.vmem [shape: f32[2,8], index: 10, kind: input, shape index: {}]
  %s11 = inlined_call_operand.hbm [shape: f32[8,32], index: 11, kind: output, shape index: {0}]
  %s12 = inlined_call_operand.vmem [shape: f32[2,1], index: 12, kind: output, shape index: {1}]
  %s13 = inlined_call_operand.vmem [shape: f32[2,1], index: 13, kind: output, shape index: {2}]
  %14 = xla_tuple %s11, %s12, %s13
  %s15 = sld [smem:[#allocation0]]
  $region70: #{glow_forward.9} parent=0
    _
  %s17 = ssub.s32 1, %s15
  %s18 = scalar_select 0, %s17, %s15
  $region1: #{glow_forward.9} parent=0
    #allocation4 [shape = 'u8[4096]{0}', space=vmem, size = 0x1000, scoped, tag = 'output window, operand 0, single buffered']
    #allocation5 [shape = 's32[1]{0}', space=sflag, size = 0x4, scoped, tag = 'scoped memory for glow_forward.9']
    %19 = vsyncpa [#allocation5], 0
    // Predicated region
    $region2: #{glow_forward.9} parent=1 // pred_check
      _
    $region3: #{glow_forward.9} parent=1 // pred_check_branch
      %21 = sbr.rel (0) target = $region5
    $region4: #{glow_forward.9} parent=1 // pred_region
      _
    $region5: #{glow_forward.9} parent=1 // pred_fallthru
      _
    // Predicated region
    $region6: #{glow_forward.9} parent=1 // pred_check
      _
    $region7: #{glow_forward.9} parent=1 // pred_check_branch
      %23 = sbr.rel (0) target = $region9
    $region8: #{glow_forward.9} parent=1 // pred_region
      _
    $region9: #{glow_forward.9} parent=1 // pred_fallthru
      _
    // Predicated region
    $region10: #{glow_forward.9} parent=1 // pred_check
      _
    $region11: #{glow_forward.9} parent=1 // pred_check_branch
      %25 = sbr.rel (0) target = $region13
    $region12: #{glow_forward.9} parent=1 // pred_region
      _
    $region13: #{glow_forward.9} parent=1 // pred_fallthru
      _
    // Predicated region
    $region14: #{glow_forward.9} parent=1 // pred_check
      _
    $region15: #{glow_forward.9} parent=1 // pred_check_branch
      %27 = sbr.rel (0) target = $region17
    $region16: #{glow_forward.9} parent=1 // pred_region
      _
    $region17: #{glow_forward.9} parent=1 // pred_fallthru
      _
    // Predicated region
    $region18: #{glow_forward.9} parent=1 // pred_check
      _
    $region19: #{glow_forward.9} parent=1 // pred_check_branch
      %29 = sbr.rel (0) target = $region21
    $region20: #{glow_forward.9} parent=1 // pred_region
      _
    $region21: #{glow_forward.9} parent=1 // pred_fallthru
      _
    // Predicated region
    $region22: #{glow_forward.9} parent=1 // pred_check
      _
    $region23: #{glow_forward.9} parent=1 // pred_check_branch
      %31 = sbr.rel (0) target = $region25
    $region24: #{glow_forward.9} parent=1 // pred_region
      _
    $region25: #{glow_forward.9} parent=1 // pred_fallthru
      _
    // Predicated region
    $region26: #{glow_forward.9} parent=1 // pred_check
      _
    $region27: #{glow_forward.9} parent=1 // pred_check_branch
      %33 = sbr.rel (0) target = $region29
    $region28: #{glow_forward.9} parent=1 // pred_region
      _
    $region29: #{glow_forward.9} parent=1 // pred_fallthru
      _
    // Predicated region
    $region30: #{glow_forward.9} parent=1 // pred_check
      _
    $region31: #{glow_forward.9} parent=1 // pred_check_branch
      %35 = sbr.rel (0) target = $region33
    $region32: #{glow_forward.9} parent=1 // pred_region
      _
    $region33: #{glow_forward.9} parent=1 // pred_fallthru
      _
    // Predicated region
    $region34: #{glow_forward.9} parent=1 // pred_check
      _
    $region35: #{glow_forward.9} parent=1 // pred_check_branch
      %37 = sbr.rel (0) target = $region37
    $region36: #{glow_forward.9} parent=1 // pred_region
      _
    $region37: #{glow_forward.9} parent=1 // pred_fallthru
      _
    // Predicated region
    $region38: #{glow_forward.9} parent=1 // pred_check
      _
    $region39: #{glow_forward.9} parent=1 // pred_check_branch
      %39 = sbr.rel (0) target = $region41
    $region40: #{glow_forward.9} parent=1 // pred_region
      _
    $region41: #{glow_forward.9} parent=1 // pred_fallthru
      _
    // Predicated region
    $region42: #{glow_forward.9} parent=1 // pred_check
      _
    $region43: #{glow_forward.9} parent=1 // pred_check_branch
      %41 = sbr.rel (0) target = $region45
    $region44: #{glow_forward.9} parent=1 // pred_region
      _
    $region45: #{glow_forward.9} parent=1 // pred_fallthru
      _
    %v43 = vld [vmem:[%s0] sm:$0xff]
    %v44 = vld [vmem:[%s1] sm:$0xff]
    %v45 = vld [vmem:[%s1 + $0x8] sm:$0xff]
    %v46 = vld [vmem:[%s1 + $0x10] sm:$0xff]
    %v47 = vld [vmem:[%s1 + $0x18] sm:$0xff]
    %v48 = vld [vmem:[%s2] sm:$0x1]
    %v50 = vlaneseq
    %v51 = vshrl.u32 %v50, 7
    %v52 = vsub.s32 0, %v51
    %v53 = vrot.slane %v48, %v52
    %vm55 = vcmask 261120
    %v57 = vsel %vm55, %v43, 0
    %59 = vmatprep.subr.mxu0 0.0
    %60 = vmatpush1.msra.mxu0 0.0
    %61 = vmatprep.subr.mxu0 0.0
    %62 = vmatpush1.msra.mxu0 0.0
    %63 = vmatprep.subr.mxu0 0.0
    %64 = vmatpush1.msra.mxu0 0.0
    %65 = vmatprep.subr.mxu0 0.0
    %66 = vmatpush1.msra.mxu0 0.0
    %67 = vmatprep.subr.mxu0 0.0
    %68 = vmatpush1.msra.mxu0 0.0
    %69 = vmatprep.subr.mxu0 0.0
    %70 = vmatpush1.msra.mxu0 0.0
    %71 = vmatprep.subr.mxu0 0.0
    %72 = vmatpush1.msra.mxu0 0.0
    %73 = vmatprep.subr.mxu0 0.0
    %74 = vmatpush1.msra.mxu0 0.0
    %75 = vmatprep.subr.mxu0 0.0
    %76 = vmatpush1.msra.mxu0 0.0
    %77 = vmatprep.subr.mxu0 0.0
    %78 = vmatpush1.msra.mxu0 0.0
    %79 = vmatprep.subr.mxu0 0.0
    %80 = vmatpush1.msra.mxu0 0.0
    %81 = vmatprep.subr.mxu0 0.0
    %82 = vmatpush1.msra.mxu0 0.0
    %83 = vmatprep.subr.mxu0 0.0
    %84 = vmatpush1.msra.mxu0 %v47
    %85 = vmatprep.subr.mxu0 0.0
    %86 = vmatpush1.msra.mxu0 %v46
    %87 = vmatprep.subr.mxu0 0.0
    %88 = vmatpush1.msra.mxu0 %v45
    %89 = vmatprep.subr.mxu0 0.0
    %90 = vmatpush1.msra.mxu0 %v44
    %91 = vmatprep.subr.mxu0 0.0
    %92 = vmatpush2.msra.mxu0 0.0
    %93 = vmatprep.subr.mxu0 0.0
    %94 = vmatpush2.msra.mxu0 0.0
    %95 = vmatprep.subr.mxu0 0.0
    %96 = vmatpush2.msra.mxu0 0.0
    %97 = vmatprep.subr.mxu0 0.0
    %98 = vmatpush2.msra.mxu0 0.0
    %99 = vmatprep.subr.mxu0 0.0
    %100 = vmatpush2.msra.mxu0 0.0
    %101 = vmatprep.subr.mxu0 0.0
    %102 = vmatpush2.msra.mxu0 0.0
    %103 = vmatprep.subr.mxu0 0.0
    %104 = vmatpush2.msra.mxu0 0.0
    %105 = vmatprep.subr.mxu0 0.0
    %106 = vmatpush2.msra.mxu0 0.0
    %107 = vmatprep.subr.mxu0 0.0
    %108 = vmatpush2.msra.mxu0 0.0
    %109 = vmatprep.subr.mxu0 0.0
    %110 = vmatpush2.msra.mxu0 0.0
    %111 = vmatprep.subr.mxu0 0.0
    %112 = vmatpush2.msra.mxu0 0.0
    %113 = vmatprep.subr.mxu0 0.0
    %114 = vmatpush2.msra.mxu0 0.0
    %115 = vmatprep.subr.mxu0 0.0
    %116 = vmatpush2.msra.mxu0 0.0
    %117 = vmatprep.subr.mxu0 0.0
    %118 = vmatpush2.msra.mxu0 0.0
    %119 = vmatprep.subr.mxu0 0.0
    %120 = vmatpush2.msra.mxu0 0.0
    %121 = vmatprep.subr.mxu0 0.0
    %122 = vmatpush2.msra.mxu0 0.0
    %123 = vmatprep.mubr.f32.mxu0 0.0
    %124 = vmatmul.mubr.f32.gmra.mxu0 %v57
    %v125 = vpop.f32.mrf.mxu0
    %v126 = vadd.f32 %v53, %v125
    %v127 = vpop.f32.mrf.mxu0
    %128 = vdwg.mxu0
    %vm129 = vcmask 130048
    %130 = vst.msk [vmem:[#allocation2] sm:$0xff] %vm129, 0.0
    %131 = vst.msk [vmem:[#allocation2 + $0x8] sm:$0xff] %vm129, 0.0
    %132 = vst.msk [vmem:[#allocation2 + $0x10] sm:$0xff] %vm129, 0.0
    %133 = vst.msk [vmem:[#allocation2 + $0x8] sm:$0xff] %vm129, %v126
    %v134 = vld [vmem:[#allocation2 + $0x5] sm:$0xff]
    %v135 = vld [vmem:[%s9] sm:$0xff]
    %137 = vset.pattern.permute.xlu0 0
    %138 = vperm.xlu0 %137, %v135
    %v139 = vpop.permute.xlu0 %138
    %v141 = vmul.f32 %v134, %v139
    %v142 = vpack.c.bf16 %v141, %v141
    %v143 = vld [vmem:[%s3] sm:$0xf]
    %v144 = vld [vmem:[%s3 + $0x4] sm:$0xf]
    %v145 = vld [vmem:[#allocation2 + $0x6] sm:$0xff]
    %146 = vset.pattern.permute.xlu0 1
    %147 = vperm.xlu0 %146, %v135
    %v148 = vpop.permute.xlu0 %147
    %v150 = vmul.f32 %v145, %v148
    %v151 = vpack.c.bf16 %v150, %v150
    %v152 = vld [vmem:[%s3 + $0x8] sm:$0xf]
    %v153 = vld [vmem:[%s3 + $0xc] sm:$0xf]
    %v156 = vunpack.c.l.b16 %v152
    %v157 = vunpack.c.l.b16 %v153
    %v158 = vpack.c.b16 %v157, %v156
    %v161 = vsel %vm129, %v151, 0
    %163 = vmatprep.subr.bf16.mxu0 0
    %164 = vmatpush1.bf16.msra.mxu0 0
    %165 = vmatprep.subr.bf16.mxu0 0
    %166 = vmatpush1.bf16.msra.mxu0 0
    %167 = vmatprep.subr.bf16.mxu0 0
    %168 = vmatpush1.bf16.msra.mxu0 0
    %169 = vmatprep.subr.bf16.mxu0 0
    %170 = vmatpush1.bf16.msra.mxu0 0
    %171 = vmatprep.subr.bf16.mxu0 0
    %172 = vmatpush1.bf16.msra.mxu0 0
    %173 = vmatprep.subr.bf16.mxu0 0
    %174 = vmatpush1.bf16.msra.mxu0 0
    %175 = vmatprep.subr.bf16.mxu0 0
    %176 = vmatpush1.bf16.msra.mxu0 0
    %177 = vmatprep.subr.bf16.mxu0 0
    %178 = vmatpush1.bf16.msra.mxu0 %v158
    %179 = vmatprep.subr.bf16.mxu0 0
    %180 = vmatpush2.bf16.msra.mxu0 0
    %181 = vmatprep.subr.bf16.mxu0 0
    %182 = vmatpush2.bf16.msra.mxu0 0
    %183 = vmatprep.subr.bf16.mxu0 0
    %184 = vmatpush2.bf16.msra.mxu0 0
    %185 = vmatprep.subr.bf16.mxu0 0
    %186 = vmatpush2.bf16.msra.mxu0 0
    %187 = vmatprep.subr.bf16.mxu0 0
    %188 = vmatpush2.bf16.msra.mxu0 0
    %189 = vmatprep.subr.bf16.mxu0 0
    %190 = vmatpush2.bf16.msra.mxu0 0
    %191 = vmatprep.subr.bf16.mxu0 0
    %192 = vmatpush2.bf16.msra.mxu0 0
    %193 = vmatprep.subr.bf16.mxu0 0
    %194 = vmatpush2.bf16.msra.mxu0 0
    %195 = vmatprep.mubr.bf16.mxu0 0
    %196 = vmatmul.mubr.bf16.gmra.mxu0 %v161
    %v197 = vpop.f32.mrf.mxu0
    %v198 = vadd.f32 0.0, %v197
    %v199 = vpop.f32.mrf.mxu0
    %v200 = vpop.f32.mrf.mxu0
    %v201 = vpop.f32.mrf.mxu0
    %202 = vdwg.mxu0
    %v205 = vunpack.c.l.b16 %v143
    %v206 = vunpack.c.l.b16 %v144
    %v207 = vpack.c.b16 %v206, %v205
    %v210 = vsel %vm129, %v142, 0
    %212 = vmatprep.subr.bf16.mxu0 0
    %213 = vmatpush1.bf16.msra.mxu0 0
    %214 = vmatprep.subr.bf16.mxu0 0
    %215 = vmatpush1.bf16.msra.mxu0 0
    %216 = vmatprep.subr.bf16.mxu0 0
    %217 = vmatpush1.bf16.msra.mxu0 0
    %218 = vmatprep.subr.bf16.mxu0 0
    %219 = vmatpush1.bf16.msra.mxu0 0
    %220 = vmatprep.subr.bf16.mxu0 0
    %221 = vmatpush1.bf16.msra.mxu0 0
    %222 = vmatprep.subr.bf16.mxu0 0
    %223 = vmatpush1.bf16.msra.mxu0 0
    %224 = vmatprep.subr.bf16.mxu0 0
    %225 = vmatpush1.bf16.msra.mxu0 0
    %226 = vmatprep.subr.bf16.mxu0 0
    %227 = vmatpush1.bf16.msra.mxu0 %v207
    %228 = vmatprep.subr.bf16.mxu0 0
    %229 = vmatpush2.bf16.msra.mxu0 0
    %230 = vmatprep.subr.bf16.mxu0 0
    %231 = vmatpush2.bf16.msra.mxu0 0
    %232 = vmatprep.subr.bf16.mxu0 0
    %233 = vmatpush2.bf16.msra.mxu0 0
    %234 = vmatprep.subr.bf16.mxu0 0
    %235 = vmatpush2.bf16.msra.mxu0 0
    %236 = vmatprep.subr.bf16.mxu0 0
    %237 = vmatpush2.bf16.msra.mxu0 0
    %238 = vmatprep.subr.bf16.mxu0 0
    %239 = vmatpush2.bf16.msra.mxu0 0
    %240 = vmatprep.subr.bf16.mxu0 0
    %241 = vmatpush2.bf16.msra.mxu0 0
    %242 = vmatprep.subr.bf16.mxu0 0
    %243 = vmatpush2.bf16.msra.mxu0 0
    %244 = vmatprep.mubr.bf16.mxu0 0
    %245 = vmatmul.mubr.bf16.gmra.mxu0 %v210
    %v246 = vpop.f32.mrf.mxu0
    %v247 = vadd.f32 %v198, %v246
    %v248 = vpop.f32.mrf.mxu0
    %v249 = vpop.f32.mrf.mxu0
    %v250 = vpop.f32.mrf.mxu0
    %251 = vdwg.mxu0
    %v252 = vld [vmem:[#allocation2 + $0x7] sm:$0xff]
    %253 = vset.pattern.permute.xlu0 2
    %254 = vperm.xlu0 %253, %v135
    %v255 = vpop.permute.xlu0 %254
    %v257 = vmul.f32 %v252, %v255
    %v258 = vpack.c.bf16 %v257, %v257
    %v259 = vld [vmem:[%s3 + $0x10] sm:$0xf]
    %v260 = vld [vmem:[%s3 + $0x14] sm:$0xf]
    %v263 = vunpack.c.l.b16 %v259
    %v264 = vunpack.c.l.b16 %v260
    %v265 = vpack.c.b16 %v264, %v263
    %v268 = vsel %vm129, %v258, 0
    %270 = vmatprep.subr.bf16.mxu0 0
    %271 = vmatpush1.bf16.msra.mxu0 0
    %272 = vmatprep.subr.bf16.mxu0 0
    %273 = vmatpush1.bf16.msra.mxu0 0
    %274 = vmatprep.subr.bf16.mxu0 0
    %275 = vmatpush1.bf16.msra.mxu0 0
    %276 = vmatprep.subr.bf16.mxu0 0
    %277 = vmatpush1.bf16.msra.mxu0 0
    %278 = vmatprep.subr.bf16.mxu0 0
    %279 = vmatpush1.bf16.msra.mxu0 0
    %280 = vmatprep.subr.bf16.mxu0 0
    %281 = vmatpush1.bf16.msra.mxu0 0
    %282 = vmatprep.subr.bf16.mxu0 0
    %283 = vmatpush1.bf16.msra.mxu0 0
    %284 = vmatprep.subr.bf16.mxu0 0
    %285 = vmatpush1.bf16.msra.mxu0 %v265
    %286 = vmatprep.subr.bf16.mxu0 0
    %287 = vmatpush2.bf16.msra.mxu0 0
    %288 = vmatprep.subr.bf16.mxu0 0
    %289 = vmatpush2.bf16.msra.mxu0 0
    %290 = vmatprep.subr.bf16.mxu0 0
    %291 = vmatpush2.bf16.msra.mxu0 0
    %292 = vmatprep.subr.bf16.mxu0 0
    %293 = vmatpush2.bf16.msra.mxu0 0
    %294 = vmatprep.subr.bf16.mxu0 0
    %295 = vmatpush2.bf16.msra.mxu0 0
    %296 = vmatprep.subr.bf16.mxu0 0
    %297 = vmatpush2.bf16.msra.mxu0 0
    %298 = vmatprep.subr.bf16.mxu0 0
    %299 = vmatpush2.bf16.msra.mxu0 0
    %300 = vmatprep.subr.bf16.mxu0 0
    %301 = vmatpush2.bf16.msra.mxu0 0
    %302 = vmatprep.mubr.bf16.mxu0 0
    %303 = vmatmul.mubr.bf16.gmra.mxu0 %v268
    %v304 = vpop.f32.mrf.mxu0
    %v305 = vadd.f32 0.0, %v304
    %v306 = vpop.f32.mrf.mxu0
    %v307 = vpop.f32.mrf.mxu0
    %v308 = vpop.f32.mrf.mxu0
    %309 = vdwg.mxu0
    %v310 = vadd.f32 %v247, %v305
    %311 = vset.pattern.permute.xlu0 3
    %312 = vperm.xlu0 %311, %v135
    %v313 = vpop.permute.xlu0 %312
    %v315 = vmul.f32 %v252, %v313
    %v316 = vpack.c.bf16 %v315, %v315
    %v317 = vld [vmem:[%s3 + $0x18] sm:$0xf]
    %v318 = vld [vmem:[%s3 + $0x1c] sm:$0xf]
    %v321 = vunpack.c.l.b16 %v317
    %v322 = vunpack.c.l.b16 %v318
    %v323 = vpack.c.b16 %v322, %v321
    %v326 = vsel %vm129, %v316, 0
    %328 = vmatprep.subr.bf16.mxu0 0
    %329 = vmatpush1.bf16.msra.mxu0 0
    %330 = vmatprep.subr.bf16.mxu0 0
    %331 = vmatpush1.bf16.msra.mxu0 0
    %332 = vmatprep.subr.bf16.mxu0 0
    %333 = vmatpush1.bf16.msra.mxu0 0
    %334 = vmatprep.subr.bf16.mxu0 0
    %335 = vmatpush1.bf16.msra.mxu0 0
    %336 = vmatprep.subr.bf16.mxu0 0
    %337 = vmatpush1.bf16.msra.mxu0 0
    %338 = vmatprep.subr.bf16.mxu0 0
    %339 = vmatpush1.bf16.msra.mxu0 0
    %340 = vmatprep.subr.bf16.mxu0 0
    %341 = vmatpush1.bf16.msra.mxu0 0
    %342 = vmatprep.subr.bf16.mxu0 0
    %343 = vmatpush1.bf16.msra.mxu0 %v323
    %344 = vmatprep.subr.bf16.mxu0 0
    %345 = vmatpush2.bf16.msra.mxu0 0
    %346 = vmatprep.subr.bf16.mxu0 0
    %347 = vmatpush2.bf16.msra.mxu0 0
    %348 = vmatprep.subr.bf16.mxu0 0
    %349 = vmatpush2.bf16.msra.mxu0 0
    %350 = vmatprep.subr.bf16.mxu0 0
    %351 = vmatpush2.bf16.msra.mxu0 0
    %352 = vmatprep.subr.bf16.mxu0 0
    %353 = vmatpush2.bf16.msra.mxu0 0
    %354 = vmatprep.subr.bf16.mxu0 0
    %355 = vmatpush2.bf16.msra.mxu0 0
    %356 = vmatprep.subr.bf16.mxu0 0
    %357 = vmatpush2.bf16.msra.mxu0 0
    %358 = vmatprep.subr.bf16.mxu0 0
    %359 = vmatpush2.bf16.msra.mxu0 0
    %360 = vmatprep.mubr.bf16.mxu0 0
    %361 = vmatmul.mubr.bf16.gmra.mxu0 %v326
    %v362 = vpop.f32.mrf.mxu0
    %v363 = vadd.f32 0.0, %v362
    %v364 = vpop.f32.mrf.mxu0
    %v365 = vpop.f32.mrf.mxu0
    %v366 = vpop.f32.mrf.mxu0
    %367 = vdwg.mxu0
    %v368 = vadd.f32 %v310, %v363
    %v369 = vld [vmem:[#allocation2 + $0x8] sm:$0xff]
    %370 = vset.pattern.permute.xlu0 4
    %371 = vperm.xlu0 %370, %v135
    %v372 = vpop.permute.xlu0 %371
    %v374 = vmul.f32 %v369, %v372
    %v375 = vpack.c.bf16 %v374, %v374
    %v376 = vld [vmem:[%s3 + $0x20] sm:$0xf]
    %v377 = vld [vmem:[%s3 + $0x24] sm:$0xf]
    %v380 = vunpack.c.l.b16 %v376
    %v381 = vunpack.c.l.b16 %v377
    %v382 = vpack.c.b16 %v381, %v380
    %v385 = vsel %vm129, %v375, 0
    %387 = vmatprep.subr.bf16.mxu0 0
    %388 = vmatpush1.bf16.msra.mxu0 0
    %389 = vmatprep.subr.bf16.mxu0 0
    %390 = vmatpush1.bf16.msra.mxu0 0
    %391 = vmatprep.subr.bf16.mxu0 0
    %392 = vmatpush1.bf16.msra.mxu0 0
    %393 = vmatprep.subr.bf16.mxu0 0
    %394 = vmatpush1.bf16.msra.mxu0 0
    %395 = vmatprep.subr.bf16.mxu0 0
    %396 = vmatpush1.bf16.msra.mxu0 0
    %397 = vmatprep.subr.bf16.mxu0 0
    %398 = vmatpush1.bf16.msra.mxu0 0
    %399 = vmatprep.subr.bf16.mxu0 0
    %400 = vmatpush1.bf16.msra.mxu0 0
    %401 = vmatprep.subr.bf16.mxu0 0
    %402 = vmatpush1.bf16.msra.mxu0 %v382
    %403 = vmatprep.subr.bf16.mxu0 0
    %404 = vmatpush2.bf16.msra.mxu0 0
    %405 = vmatprep.subr.bf16.mxu0 0
    %406 = vmatpush2.bf16.msra.mxu0 0
    %407 = vmatprep.subr.bf16.mxu0 0
    %408 = vmatpush2.bf16.msra.mxu0 0
    %409 = vmatprep.subr.bf16.mxu0 0
    %410 = vmatpush2.bf16.msra.mxu0 0
    %411 = vmatprep.subr.bf16.mxu0 0
    %412 = vmatpush2.bf16.msra.mxu0 0
    %413 = vmatprep.subr.bf16.mxu0 0
    %414 = vmatpush2.bf16.msra.mxu0 0
    %415 = vmatprep.subr.bf16.mxu0 0
    %416 = vmatpush2.bf16.msra.mxu0 0
    %417 = vmatprep.subr.bf16.mxu0 0
    %418 = vmatpush2.bf16.msra.mxu0 0
    %419 = vmatprep.mubr.bf16.mxu0 0
    %420 = vmatmul.mubr.bf16.gmra.mxu0 %v385
    %v421 = vpop.f32.mrf.mxu0
    %v422 = vadd.f32 0.0, %v421
    %v423 = vpop.f32.mrf.mxu0
    %v424 = vpop.f32.mrf.mxu0
    %v425 = vpop.f32.mrf.mxu0
    %426 = vdwg.mxu0
    %v427 = vadd.f32 %v368, %v422
    %v428 = vld [vmem:[#allocation2 + $0x9] sm:$0xff]
    %429 = vset.pattern.permute.xlu0 5
    %430 = vperm.xlu0 %429, %v135
    %v431 = vpop.permute.xlu0 %430
    %v433 = vmul.f32 %v428, %v431
    %v434 = vpack.c.bf16 %v433, %v433
    %v435 = vld [vmem:[%s3 + $0x28] sm:$0xf]
    %v436 = vld [vmem:[%s3 + $0x2c] sm:$0xf]
    %v439 = vunpack.c.l.b16 %v435
    %v440 = vunpack.c.l.b16 %v436
    %v441 = vpack.c.b16 %v440, %v439
    %v444 = vsel %vm129, %v434, 0
    %446 = vmatprep.subr.bf16.mxu0 0
    %447 = vmatpush1.bf16.msra.mxu0 0
    %448 = vmatprep.subr.bf16.mxu0 0
    %449 = vmatpush1.bf16.msra.mxu0 0
    %450 = vmatprep.subr.bf16.mxu0 0
    %451 = vmatpush1.bf16.msra.mxu0 0
    %452 = vmatprep.subr.bf16.mxu0 0
    %453 = vmatpush1.bf16.msra.mxu0 0
    %454 = vmatprep.subr.bf16.mxu0 0
    %455 = vmatpush1.bf16.msra.mxu0 0
    %456 = vmatprep.subr.bf16.mxu0 0
    %457 = vmatpush1.bf16.msra.mxu0 0
    %458 = vmatprep.subr.bf16.mxu0 0
    %459 = vmatpush1.bf16.msra.mxu0 0
    %460 = vmatprep.subr.bf16.mxu0 0
    %461 = vmatpush1.bf16.msra.mxu0 %v441
    %462 = vmatprep.subr.bf16.mxu0 0
    %463 = vmatpush2.bf16.msra.mxu0 0
    %464 = vmatprep.subr.bf16.mxu0 0
    %465 = vmatpush2.bf16.msra.mxu0 0
    %466 = vmatprep.subr.bf16.mxu0 0
    %467 = vmatpush2.bf16.msra.mxu0 0
    %468 = vmatprep.subr.bf16.mxu0 0
    %469 = vmatpush2.bf16.msra.mxu0 0
    %470 = vmatprep.subr.bf16.mxu0 0
    %471 = vmatpush2.bf16.msra.mxu0 0
    %472 = vmatprep.subr.bf16.mxu0 0
    %473 = vmatpush2.bf16.msra.mxu0 0
    %474 = vmatprep.subr.bf16.mxu0 0
    %475 = vmatpush2.bf16.msra.mxu0 0
    %476 = vmatprep.subr.bf16.mxu0 0
    %477 = vmatpush2.bf16.msra.mxu0 0
    %478 = vmatprep.mubr.bf16.mxu0 0
    %479 = vmatmul.mubr.bf16.gmra.mxu0 %v444
    %v480 = vpop.f32.mrf.mxu0
    %v481 = vadd.f32 0.0, %v480
    %v482 = vpop.f32.mrf.mxu0
    %v483 = vpop.f32.mrf.mxu0
    %v484 = vpop.f32.mrf.mxu0
    %485 = vdwg.mxu0
    %v486 = vadd.f32 %v427, %v481
    %487 = vset.pattern.permute.xlu0 6
    %488 = vperm.xlu0 %487, %v135
    %v489 = vpop.permute.xlu0 %488
    %v491 = vmul.f32 %v428, %v489
    %v492 = vpack.c.bf16 %v491, %v491
    %v493 = vld [vmem:[%s3 + $0x30] sm:$0xf]
    %v494 = vld [vmem:[%s3 + $0x34] sm:$0xf]
    %v497 = vunpack.c.l.b16 %v493
    %v498 = vunpack.c.l.b16 %v494
    %v499 = vpack.c.b16 %v498, %v497
    %v502 = vsel %vm129, %v492, 0
    %504 = vmatprep.subr.bf16.mxu0 0
    %505 = vmatpush1.bf16.msra.mxu0 0
    %506 = vmatprep.subr.bf16.mxu0 0
    %507 = vmatpush1.bf16.msra.mxu0 0
    %508 = vmatprep.subr.bf16.mxu0 0
    %509 = vmatpush1.bf16.msra.mxu0 0
    %510 = vmatprep.subr.bf16.mxu0 0
    %511 = vmatpush1.bf16.msra.mxu0 0
    %512 = vmatprep.subr.bf16.mxu0 0
    %513 = vmatpush1.bf16.msra.mxu0 0
    %514 = vmatprep.subr.bf16.mxu0 0
    %515 = vmatpush1.bf16.msra.mxu0 0
    %516 = vmatprep.subr.bf16.mxu0 0
    %517 = vmatpush1.bf16.msra.mxu0 0
    %518 = vmatprep.subr.bf16.mxu0 0
    %519 = vmatpush1.bf16.msra.mxu0 %v499
    %520 = vmatprep.subr.bf16.mxu0 0
    %521 = vmatpush2.bf16.msra.mxu0 0
    %522 = vmatprep.subr.bf16.mxu0 0
    %523 = vmatpush2.bf16.msra.mxu0 0
    %524 = vmatprep.subr.bf16.mxu0 0
    %525 = vmatpush2.bf16.msra.mxu0 0
    %526 = vmatprep.subr.bf16.mxu0 0
    %527 = vmatpush2.bf16.msra.mxu0 0
    %528 = vmatprep.subr.bf16.mxu0 0
    %529 = vmatpush2.bf16.msra.mxu0 0
    %530 = vmatprep.subr.bf16.mxu0 0
    %531 = vmatpush2.bf16.msra.mxu0 0
    %532 = vmatprep.subr.bf16.mxu0 0
    %533 = vmatpush2.bf16.msra.mxu0 0
    %534 = vmatprep.subr.bf16.mxu0 0
    %535 = vmatpush2.bf16.msra.mxu0 0
    %536 = vmatprep.mubr.bf16.mxu0 0
    %537 = vmatmul.mubr.bf16.gmra.mxu0 %v502
    %v538 = vpop.f32.mrf.mxu0
    %v539 = vadd.f32 0.0, %v538
    %v540 = vpop.f32.mrf.mxu0
    %v541 = vpop.f32.mrf.mxu0
    %v542 = vpop.f32.mrf.mxu0
    %543 = vdwg.mxu0
    %v544 = vadd.f32 %v486, %v539
    %v545 = vld [vmem:[#allocation2 + $0xa] sm:$0xff]
    %546 = vset.pattern.permute.xlu0 7
    %547 = vperm.xlu0 %546, %v135
    %v548 = vpop.permute.xlu0 %547
    %v550 = vmul.f32 %v545, %v548
    %v551 = vpack.c.bf16 %v550, %v550
    %v552 = vld [vmem:[%s3 + $0x38] sm:$0xf]
    %v553 = vld [vmem:[%s3 + $0x3c] sm:$0xf]
    %v556 = vunpack.c.l.b16 %v552
    %v557 = vunpack.c.l.b16 %v553
    %v558 = vpack.c.b16 %v557, %v556
    %v561 = vsel %vm129, %v551, 0
    %563 = vmatprep.subr.bf16.mxu0 0
    %564 = vmatpush1.bf16.msra.mxu0 0
    %565 = vmatprep.subr.bf16.mxu0 0
    %566 = vmatpush1.bf16.msra.mxu0 0
    %567 = vmatprep.subr.bf16.mxu0 0
    %568 = vmatpush1.bf16.msra.mxu0 0
    %569 = vmatprep.subr.bf16.mxu0 0
    %570 = vmatpush1.bf16.msra.mxu0 0
    %571 = vmatprep.subr.bf16.mxu0 0
    %572 = vmatpush1.bf16.msra.mxu0 0
    %573 = vmatprep.subr.bf16.mxu0 0
    %574 = vmatpush1.bf16.msra.mxu0 0
    %575 = vmatprep.subr.bf16.mxu0 0
    %576 = vmatpush1.bf16.msra.mxu0 0
    %577 = vmatprep.subr.bf16.mxu0 0
    %578 = vmatpush1.bf16.msra.mxu0 %v558
    %579 = vmatprep.subr.bf16.mxu0 0
    %580 = vmatpush2.bf16.msra.mxu0 0
    %581 = vmatprep.subr.bf16.mxu0 0
    %582 = vmatpush2.bf16.msra.mxu0 0
    %583 = vmatprep.subr.bf16.mxu0 0
    %584 = vmatpush2.bf16.msra.mxu0 0
    %585 = vmatprep.subr.bf16.mxu0 0
    %586 = vmatpush2.bf16.msra.mxu0 0
    %587 = vmatprep.subr.bf16.mxu0 0
    %588 = vmatpush2.bf16.msra.mxu0 0
    %589 = vmatprep.subr.bf16.mxu0 0
    %590 = vmatpush2.bf16.msra.mxu0 0
    %591 = vmatprep.subr.bf16.mxu0 0
    %592 = vmatpush2.bf16.msra.mxu0 0
    %593 = vmatprep.subr.bf16.mxu0 0
    %594 = vmatpush2.bf16.msra.mxu0 0
    %595 = vmatprep.mubr.bf16.mxu0 0
    %596 = vmatmul.mubr.bf16.gmra.mxu0 %v561
    %v597 = vpop.f32.mrf.mxu0
    %v598 = vadd.f32 0.0, %v597
    %v599 = vpop.f32.mrf.mxu0
    %v600 = vpop.f32.mrf.mxu0
    %v601 = vpop.f32.mrf.mxu0
    %602 = vdwg.mxu0
    %v603 = vadd.f32 %v544, %v598
    %v604 = vld [vmem:[#allocation2 + $0xb] sm:$0xff]
    %605 = vset.pattern.permute.xlu0 8
    %606 = vperm.xlu0 %605, %v135
    %v607 = vpop.permute.xlu0 %606
    %v609 = vmul.f32 %v604, %v607
    %v610 = vpack.c.bf16 %v609, %v609
    %v611 = vld [vmem:[%s3 + $0x40] sm:$0xf]
    %v612 = vld [vmem:[%s3 + $0x44] sm:$0xf]
    %v615 = vunpack.c.l.b16 %v611
    %v616 = vunpack.c.l.b16 %v612
    %v617 = vpack.c.b16 %v616, %v615
    %v620 = vsel %vm129, %v610, 0
    %622 = vmatprep.subr.bf16.mxu0 0
    %623 = vmatpush1.bf16.msra.mxu0 0
    %624 = vmatprep.subr.bf16.mxu0 0
    %625 = vmatpush1.bf16.msra.mxu0 0
    %626 = vmatprep.subr.bf16.mxu0 0
    %627 = vmatpush1.bf16.msra.mxu0 0
    %628 = vmatprep.subr.bf16.mxu0 0
    %629 = vmatpush1.bf16.msra.mxu0 0
    %630 = vmatprep.subr.bf16.mxu0 0
    %631 = vmatpush1.bf16.msra.mxu0 0
    %632 = vmatprep.subr.bf16.mxu0 0
    %633 = vmatpush1.bf16.msra.mxu0 0
    %634 = vmatprep.subr.bf16.mxu0 0
    %635 = vmatpush1.bf16.msra.mxu0 0
    %636 = vmatprep.subr.bf16.mxu0 0
    %637 = vmatpush1.bf16.msra.mxu0 %v617
    %638 = vmatprep.subr.bf16.mxu0 0
    %639 = vmatpush2.bf16.msra.mxu0 0
    %640 = vmatprep.subr.bf16.mxu0 0
    %641 = vmatpush2.bf16.msra.mxu0 0
    %642 = vmatprep.subr.bf16.mxu0 0
    %643 = vmatpush2.bf16.msra.mxu0 0
    %644 = vmatprep.subr.bf16.mxu0 0
    %645 = vmatpush2.bf16.msra.mxu0 0
    %646 = vmatprep.subr.bf16.mxu0 0
    %647 = vmatpush2.bf16.msra.mxu0 0
    %648 = vmatprep.subr.bf16.mxu0 0
    %649 = vmatpush2.bf16.msra.mxu0 0
    %650 = vmatprep.subr.bf16.mxu0 0
    %651 = vmatpush2.bf16.msra.mxu0 0
    %652 = vmatprep.subr.bf16.mxu0 0
    %653 = vmatpush2.bf16.msra.mxu0 0
    %654 = vmatprep.mubr.bf16.mxu0 0
    %655 = vmatmul.mubr.bf16.gmra.mxu0 %v620
    %v656 = vpop.f32.mrf.mxu0
    %v657 = vadd.f32 0.0, %v656
    %v658 = vpop.f32.mrf.mxu0
    %v659 = vpop.f32.mrf.mxu0
    %v660 = vpop.f32.mrf.mxu0
    %661 = vdwg.mxu0
    %v662 = vadd.f32 %v603, %v657
    %v663 = vld [vmem:[%s4] sm:$0x1]
    %v665 = vlaneseq
    %v666 = vshrl.u32 %v665, 7
    %v667 = vsub.s32 0, %v666
    %v668 = vrot.slane %v663, %v667
    %v670 = vadd.f32 %v662, %v668
    %v671 = vmax.f32 %v670, 0.0
    %v672 = vpack.c.bf16 %v671, %v671
    %v673 = vld [vmem:[%s5] sm:$0xf]
    %v674 = vld [vmem:[%s5 + $0x4] sm:$0xf]
    %v675 = vld [vmem:[%s5 + $0x8] sm:$0xf]
    %v676 = vld [vmem:[%s5 + $0xc] sm:$0xf]
    %v677 = vld [vmem:[%s6] sm:$0x1]
    %v679 = vlaneseq
    %v680 = vshrl.u32 %v679, 7
    %v681 = vsub.s32 0, %v680
    %v682 = vrot.slane %v677, %v681
    %v688 = vunpack.c.l.b16 %v673
    %v689 = vunpack.c.l.b16 %v674
    %v690 = vunpack.c.l.b16 %v675
    %v691 = vunpack.c.l.b16 %v676
    %v692 = vpack.c.b16 %v689, %v688
    %v693 = vpack.c.b16 %v691, %v690
    %v697 = vsel %vm55, %v672, 0
    %699 = vmatprep.subr.bf16.mxu0 0
    %700 = vmatpush1.bf16.msra.mxu0 0
    %701 = vmatprep.subr.bf16.mxu0 0
    %702 = vmatpush1.bf16.msra.mxu0 0
    %703 = vmatprep.subr.bf16.mxu0 0
    %704 = vmatpush1.bf16.msra.mxu0 0
    %705 = vmatprep.subr.bf16.mxu0 0
    %706 = vmatpush1.bf16.msra.mxu0 0
    %707 = vmatprep.subr.bf16.mxu0 0
    %708 = vmatpush1.bf16.msra.mxu0 0
    %709 = vmatprep.subr.bf16.mxu0 0
    %710 = vmatpush1.bf16.msra.mxu0 0
    %711 = vmatprep.subr.bf16.mxu0 0
    %712 = vmatpush1.bf16.msra.mxu0 %v693
    %713 = vmatprep.subr.bf16.mxu0 0
    %714 = vmatpush1.bf16.msra.mxu0 %v692
    %715 = vmatprep.subr.bf16.mxu0 0
    %716 = vmatpush2.bf16.msra.mxu0 0
    %717 = vmatprep.subr.bf16.mxu0 0
    %718 = vmatpush2.bf16.msra.mxu0 0
    %719 = vmatprep.subr.bf16.mxu0 0
    %720 = vmatpush2.bf16.msra.mxu0 0
    %721 = vmatprep.subr.bf16.mxu0 0
    %722 = vmatpush2.bf16.msra.mxu0 0
    %723 = vmatprep.subr.bf16.mxu0 0
    %724 = vmatpush2.bf16.msra.mxu0 0
    %725 = vmatprep.subr.bf16.mxu0 0
    %726 = vmatpush2.bf16.msra.mxu0 0
    %727 = vmatprep.subr.bf16.mxu0 0
    %728 = vmatpush2.bf16.msra.mxu0 0
    %729 = vmatprep.subr.bf16.mxu0 0
    %730 = vmatpush2.bf16.msra.mxu0 0
    %731 = vmatprep.mubr.bf16.mxu0 0
    %732 = vmatmul.mubr.bf16.gmra.mxu0 %v697
    %v733 = vpop.f32.mrf.mxu0
    %v734 = vadd.f32 %v682, %v733
    %v735 = vpop.f32.mrf.mxu0
    %v736 = vpop.f32.mrf.mxu0
    %v737 = vpop.f32.mrf.mxu0
    %738 = vdwg.mxu0
    %v739 = vmax.f32 %v734, 0.0
    %740 = vst.msk [vmem:[#allocation3] sm:$0xff] %vm55, 0.0
    %741 = vst.msk [vmem:[#allocation3 + $0x8] sm:$0xff] %vm55, 0.0
    %742 = vst.msk [vmem:[#allocation3 + $0x10] sm:$0xff] %vm55, 0.0
    %743 = vst.msk [vmem:[#allocation3 + $0x8] sm:$0xff] %vm55, %v739
    %v744 = vld [vmem:[#allocation3 + $0x5] sm:$0xff]
    %v745 = vld [vmem:[%s9] sm:$0xff]
    %747 = vset.pattern.permute.xlu0 0
    %748 = vperm.xlu0 %747, %v745
    %v749 = vpop.permute.xlu0 %748
    %v751 = vmul.f32 %v744, %v749
    %v752 = vpack.c.bf16 %v751, %v751
    %v753 = vld [vmem:[%s7] sm:$0xf]
    %v754 = vld [vmem:[%s7 + $0x4] sm:$0xf]
    %v755 = vld [vmem:[%s7 + $0x8] sm:$0xf]
    %v756 = vld [vmem:[%s7 + $0xc] sm:$0xf]
    %v757 = vld [vmem:[#allocation3 + $0x6] sm:$0xff]
    %758 = vset.pattern.permute.xlu0 1
    %759 = vperm.xlu0 %758, %v745
    %v760 = vpop.permute.xlu0 %759
    %v762 = vmul.f32 %v757, %v760
    %v763 = vpack.c.bf16 %v762, %v762
    %v764 = vld [vmem:[%s7 + $0x10] sm:$0xf]
    %v765 = vld [vmem:[%s7 + $0x14] sm:$0xf]
    %v766 = vld [vmem:[%s7 + $0x18] sm:$0xf]
    %v767 = vld [vmem:[%s7 + $0x1c] sm:$0xf]
    %v772 = vunpack.c.l.b16 %v764
    %v773 = vunpack.c.l.b16 %v765
    %v774 = vunpack.c.l.b16 %v766
    %v775 = vunpack.c.l.b16 %v767
    %v776 = vpack.c.b16 %v773, %v772
    %v777 = vpack.c.b16 %v775, %v774
    %v781 = vsel %vm55, %v763, 0
    %783 = vmatprep.subr.bf16.mxu0 0
    %784 = vmatpush1.bf16.msra.mxu0 0
    %785 = vmatprep.subr.bf16.mxu0 0
    %786 = vmatpush1.bf16.msra.mxu0 0
    %787 = vmatprep.subr.bf16.mxu0 0
    %788 = vmatpush1.bf16.msra.mxu0 0
    %789 = vmatprep.subr.bf16.mxu0 0
    %790 = vmatpush1.bf16.msra.mxu0 0
    %791 = vmatprep.subr.bf16.mxu0 0
    %792 = vmatpush1.bf16.msra.mxu0 0
    %793 = vmatprep.subr.bf16.mxu0 0
    %794 = vmatpush1.bf16.msra.mxu0 0
    %795 = vmatprep.subr.bf16.mxu0 0
    %796 = vmatpush1.bf16.msra.mxu0 %v777
    %797 = vmatprep.subr.bf16.mxu0 0
    %798 = vmatpush1.bf16.msra.mxu0 %v776
    %799 = vmatprep.subr.bf16.mxu0 0
    %800 = vmatpush2.bf16.msra.mxu0 0
    %801 = vmatprep.subr.bf16.mxu0 0
    %802 = vmatpush2.bf16.msra.mxu0 0
    %803 = vmatprep.subr.bf16.mxu0 0
    %804 = vmatpush2.bf16.msra.mxu0 0
    %805 = vmatprep.subr.bf16.mxu0 0
    %806 = vmatpush2.bf16.msra.mxu0 0
    %807 = vmatprep.subr.bf16.mxu0 0
    %808 = vmatpush2.bf16.msra.mxu0 0
    %809 = vmatprep.subr.bf16.mxu0 0
    %810 = vmatpush2.bf16.msra.mxu0 0
    %811 = vmatprep.subr.bf16.mxu0 0
    %812 = vmatpush2.bf16.msra.mxu0 0
    %813 = vmatprep.subr.bf16.mxu0 0
    %814 = vmatpush2.bf16.msra.mxu0 0
    %815 = vmatprep.mubr.bf16.mxu0 0
    %816 = vmatmul.mubr.bf16.gmra.mxu0 %v781
    %v817 = vpop.f32.mrf.mxu0
    %v818 = vadd.f32 0.0, %v817
    %v819 = vpop.f32.mrf.mxu0
    %v820 = vpop.f32.mrf.mxu0
    %v821 = vpop.f32.mrf.mxu0
    %822 = vdwg.mxu0
    %v827 = vunpack.c.l.b16 %v753
    %v828 = vunpack.c.l.b16 %v754
    %v829 = vunpack.c.l.b16 %v755
    %v830 = vunpack.c.l.b16 %v756
    %v831 = vpack.c.b16 %v828, %v827
    %v832 = vpack.c.b16 %v830, %v829
    %v836 = vsel %vm55, %v752, 0
    %838 = vmatprep.subr.bf16.mxu0 0
    %839 = vmatpush1.bf16.msra.mxu0 0
    %840 = vmatprep.subr.bf16.mxu0 0
    %841 = vmatpush1.bf16.msra.mxu0 0
    %842 = vmatprep.subr.bf16.mxu0 0
    %843 = vmatpush1.bf16.msra.mxu0 0
    %844 = vmatprep.subr.bf16.mxu0 0
    %845 = vmatpush1.bf16.msra.mxu0 0
    %846 = vmatprep.subr.bf16.mxu0 0
    %847 = vmatpush1.bf16.msra.mxu0 0
    %848 = vmatprep.subr.bf16.mxu0 0
    %849 = vmatpush1.bf16.msra.mxu0 0
    %850 = vmatprep.subr.bf16.mxu0 0
    %851 = vmatpush1.bf16.msra.mxu0 %v832
    %852 = vmatprep.subr.bf16.mxu0 0
    %853 = vmatpush1.bf16.msra.mxu0 %v831
    %854 = vmatprep.subr.bf16.mxu0 0
    %855 = vmatpush2.bf16.msra.mxu0 0
    %856 = vmatprep.subr.bf16.mxu0 0
    %857 = vmatpush2.bf16.msra.mxu0 0
    %858 = vmatprep.subr.bf16.mxu0 0
    %859 = vmatpush2.bf16.msra.mxu0 0
    %860 = vmatprep.subr.bf16.mxu0 0
    %861 = vmatpush2.bf16.msra.mxu0 0
    %862 = vmatprep.subr.bf16.mxu0 0
    %863 = vmatpush2.bf16.msra.mxu0 0
    %864 = vmatprep.subr.bf16.mxu0 0
    %865 = vmatpush2.bf16.msra.mxu0 0
    %866 = vmatprep.subr.bf16.mxu0 0
    %867 = vmatpush2.bf16.msra.mxu0 0
    %868 = vmatprep.subr.bf16.mxu0 0
    %869 = vmatpush2.bf16.msra.mxu0 0
    %870 = vmatprep.mubr.bf16.mxu0 0
    %871 = vmatmul.mubr.bf16.gmra.mxu0 %v836
    %v872 = vpop.f32.mrf.mxu0
    %v873 = vadd.f32 %v818, %v872
    %v874 = vpop.f32.mrf.mxu0
    %v875 = vpop.f32.mrf.mxu0
    %v876 = vpop.f32.mrf.mxu0
    %877 = vdwg.mxu0
    %v878 = vld [vmem:[#allocation3 + $0x7] sm:$0xff]
    %879 = vset.pattern.permute.xlu0 2
    %880 = vperm.xlu0 %879, %v745
    %v881 = vpop.permute.xlu0 %880
    %v883 = vmul.f32 %v878, %v881
    %v884 = vpack.c.bf16 %v883, %v883
    %v885 = vld [vmem:[%s7 + $0x20] sm:$0xf]
    %v886 = vld [vmem:[%s7 + $0x24] sm:$0xf]
    %v887 = vld [vmem:[%s7 + $0x28] sm:$0xf]
    %v888 = vld [vmem:[%s7 + $0x2c] sm:$0xf]
    %v893 = vunpack.c.l.b16 %v885
    %v894 = vunpack.c.l.b16 %v886
    %v895 = vunpack.c.l.b16 %v887
    %v896 = vunpack.c.l.b16 %v888
    %v897 = vpack.c.b16 %v894, %v893
    %v898 = vpack.c.b16 %v896, %v895
    %v902 = vsel %vm55, %v884, 0
    %904 = vmatprep.subr.bf16.mxu0 0
    %905 = vmatpush1.bf16.msra.mxu0 0
    %906 = vmatprep.subr.bf16.mxu0 0
    %907 = vmatpush1.bf16.msra.mxu0 0
    %908 = vmatprep.subr.bf16.mxu0 0
    %909 = vmatpush1.bf16.msra.mxu0 0
    %910 = vmatprep.subr.bf16.mxu0 0
    %911 = vmatpush1.bf16.msra.mxu0 0
    %912 = vmatprep.subr.bf16.mxu0 0
    %913 = vmatpush1.bf16.msra.mxu0 0
    %914 = vmatprep.subr.bf16.mxu0 0
    %915 = vmatpush1.bf16.msra.mxu0 0
    %916 = vmatprep.subr.bf16.mxu0 0
    %917 = vmatpush1.bf16.msra.mxu0 %v898
    %918 = vmatprep.subr.bf16.mxu0 0
    %919 = vmatpush1.bf16.msra.mxu0 %v897
    %920 = vmatprep.subr.bf16.mxu0 0
    %921 = vmatpush2.bf16.msra.mxu0 0
    %922 = vmatprep.subr.bf16.mxu0 0
    %923 = vmatpush2.bf16.msra.mxu0 0
    %924 = vmatprep.subr.bf16.mxu0 0
    %925 = vmatpush2.bf16.msra.mxu0 0
    %926 = vmatprep.subr.bf16.mxu0 0
    %927 = vmatpush2.bf16.msra.mxu0 0
    %928 = vmatprep.subr.bf16.mxu0 0
    %929 = vmatpush2.bf16.msra.mxu0 0
    %930 = vmatprep.subr.bf16.mxu0 0
    %931 = vmatpush2.bf16.msra.mxu0 0
    %932 = vmatprep.subr.bf16.mxu0 0
    %933 = vmatpush2.bf16.msra.mxu0 0
    %934 = vmatprep.subr.bf16.mxu0 0
    %935 = vmatpush2.bf16.msra.mxu0 0
    %936 = vmatprep.mubr.bf16.mxu0 0
    %937 = vmatmul.mubr.bf16.gmra.mxu0 %v902
    %v938 = vpop.f32.mrf.mxu0
    %v939 = vadd.f32 0.0, %v938
    %v940 = vpop.f32.mrf.mxu0
    %v941 = vpop.f32.mrf.mxu0
    %v942 = vpop.f32.mrf.mxu0
    %943 = vdwg.mxu0
    %v944 = vadd.f32 %v873, %v939
    %945 = vset.pattern.permute.xlu0 3
    %946 = vperm.xlu0 %945, %v745
    %v947 = vpop.permute.xlu0 %946
    %v949 = vmul.f32 %v878, %v947
    %v950 = vpack.c.bf16 %v949, %v949
    %v951 = vld [vmem:[%s7 + $0x30] sm:$0xf]
    %v952 = vld [vmem:[%s7 + $0x34] sm:$0xf]
    %v953 = vld [vmem:[%s7 + $0x38] sm:$0xf]
    %v954 = vld [vmem:[%s7 + $0x3c] sm:$0xf]
    %v959 = vunpack.c.l.b16 %v951
    %v960 = vunpack.c.l.b16 %v952
    %v961 = vunpack.c.l.b16 %v953
    %v962 = vunpack.c.l.b16 %v954
    %v963 = vpack.c.b16 %v960, %v959
    %v964 = vpack.c.b16 %v962, %v961
    %v968 = vsel %vm55, %v950, 0
    %970 = vmatprep.subr.bf16.mxu0 0
    %971 = vmatpush1.bf16.msra.mxu0 0
    %972 = vmatprep.subr.bf16.mxu0 0
    %973 = vmatpush1.bf16.msra.mxu0 0
    %974 = vmatprep.subr.bf16.mxu0 0
    %975 = vmatpush1.bf16.msra.mxu0 0
    %976 = vmatprep.subr.bf16.mxu0 0
    %977 = vmatpush1.bf16.msra.mxu0 0
    %978 = vmatprep.subr.bf16.mxu0 0
    %979 = vmatpush1.bf16.msra.mxu0 0
    %980 = vmatprep.subr.bf16.mxu0 0
    %981 = vmatpush1.bf16.msra.mxu0 0
    %982 = vmatprep.subr.bf16.mxu0 0
    %983 = vmatpush1.bf16.msra.mxu0 %v964
    %984 = vmatprep.subr.bf16.mxu0 0
    %985 = vmatpush1.bf16.msra.mxu0 %v963
    %986 = vmatprep.subr.bf16.mxu0 0
    %987 = vmatpush2.bf16.msra.mxu0 0
    %988 = vmatprep.subr.bf16.mxu0 0
    %989 = vmatpush2.bf16.msra.mxu0 0
    %990 = vmatprep.subr.bf16.mxu0 0
    %991 = vmatpush2.bf16.msra.mxu0 0
    %992 = vmatprep.subr.bf16.mxu0 0
    %993 = vmatpush2.bf16.msra.mxu0 0
    %994 = vmatprep.subr.bf16.mxu0 0
    %995 = vmatpush2.bf16.msra.mxu0 0
    %996 = vmatprep.subr.bf16.mxu0 0
    %997 = vmatpush2.bf16.msra.mxu0 0
    %998 = vmatprep.subr.bf16.mxu0 0
    %999 = vmatpush2.bf16.msra.mxu0 0
    %1000 = vmatprep.subr.bf16.mxu0 0
    %1001 = vmatpush2.bf16.msra.mxu0 0
    %1002 = vmatprep.mubr.bf16.mxu0 0
    %1003 = vmatmul.mubr.bf16.gmra.mxu0 %v968
    %v1004 = vpop.f32.mrf.mxu0
    %v1005 = vadd.f32 0.0, %v1004
    %v1006 = vpop.f32.mrf.mxu0
    %v1007 = vpop.f32.mrf.mxu0
    %v1008 = vpop.f32.mrf.mxu0
    %1009 = vdwg.mxu0
    %v1010 = vadd.f32 %v944, %v1005
    %v1011 = vld [vmem:[#allocation3 + $0x8] sm:$0xff]
    %1012 = vset.pattern.permute.xlu0 4
    %1013 = vperm.xlu0 %1012, %v745
    %v1014 = vpop.permute.xlu0 %1013
    %v1016 = vmul.f32 %v1011, %v1014
    %v1017 = vpack.c.bf16 %v1016, %v1016
    %v1018 = vld [vmem:[%s7 + $0x40] sm:$0xf]
    %v1019 = vld [vmem:[%s7 + $0x44] sm:$0xf]
    %v1020 = vld [vmem:[%s7 + $0x48] sm:$0xf]
    %v1021 = vld [vmem:[%s7 + $0x4c] sm:$0xf]
    %v1026 = vunpack.c.l.b16 %v1018
    %v1027 = vunpack.c.l.b16 %v1019
    %v1028 = vunpack.c.l.b16 %v1020
    %v1029 = vunpack.c.l.b16 %v1021
    %v1030 = vpack.c.b16 %v1027, %v1026
    %v1031 = vpack.c.b16 %v1029, %v1028
    %v1035 = vsel %vm55, %v1017, 0
    %1037 = vmatprep.subr.bf16.mxu0 0
    %1038 = vmatpush1.bf16.msra.mxu0 0
    %1039 = vmatprep.subr.bf16.mxu0 0
    %1040 = vmatpush1.bf16.msra.mxu0 0
    %1041 = vmatprep.subr.bf16.mxu0 0
    %1042 = vmatpush1.bf16.msra.mxu0 0
    %1043 = vmatprep.subr.bf16.mxu0 0
    %1044 = vmatpush1.bf16.msra.mxu0 0
    %1045 = vmatprep.subr.bf16.mxu0 0
    %1046 = vmatpush1.bf16.msra.mxu0 0
    %1047 = vmatprep.subr.bf16.mxu0 0
    %1048 = vmatpush1.bf16.msra.mxu0 0
    %1049 = vmatprep.subr.bf16.mxu0 0
    %1050 = vmatpush1.bf16.msra.mxu0 %v1031
    %1051 = vmatprep.subr.bf16.mxu0 0
    %1052 = vmatpush1.bf16.msra.mxu0 %v1030
    %1053 = vmatprep.subr.bf16.mxu0 0
    %1054 = vmatpush2.bf16.msra.mxu0 0
    %1055 = vmatprep.subr.bf16.mxu0 0
    %1056 = vmatpush2.bf16.msra.mxu0 0
    %1057 = vmatprep.subr.bf16.mxu0 0
    %1058 = vmatpush2.bf16.msra.mxu0 0
    %1059 = vmatprep.subr.bf16.mxu0 0
    %1060 = vmatpush2.bf16.msra.mxu0 0
    %1061 = vmatprep.subr.bf16.mxu0 0
    %1062 = vmatpush2.bf16.msra.mxu0 0
    %1063 = vmatprep.subr.bf16.mxu0 0
    %1064 = vmatpush2.bf16.msra.mxu0 0
    %1065 = vmatprep.subr.bf16.mxu0 0
    %1066 = vmatpush2.bf16.msra.mxu0 0
    %1067 = vmatprep.subr.bf16.mxu0 0
    %1068 = vmatpush2.bf16.msra.mxu0 0
    %1069 = vmatprep.mubr.bf16.mxu0 0
    %1070 = vmatmul.mubr.bf16.gmra.mxu0 %v1035
    %v1071 = vpop.f32.mrf.mxu0
    %v1072 = vadd.f32 0.0, %v1071
    %v1073 = vpop.f32.mrf.mxu0
    %v1074 = vpop.f32.mrf.mxu0
    %v1075 = vpop.f32.mrf.mxu0
    %1076 = vdwg.mxu0
    %v1077 = vadd.f32 %v1010, %v1072
    %v1078 = vld [vmem:[#allocation3 + $0x9] sm:$0xff]
    %1079 = vset.pattern.permute.xlu0 5
    %1080 = vperm.xlu0 %1079, %v745
    %v1081 = vpop.permute.xlu0 %1080
    %v1083 = vmul.f32 %v1078, %v1081
    %v1084 = vpack.c.bf16 %v1083, %v1083
    %v1085 = vld [vmem:[%s7 + $0x50] sm:$0xf]
    %v1086 = vld [vmem:[%s7 + $0x54] sm:$0xf]
    %v1087 = vld [vmem:[%s7 + $0x58] sm:$0xf]
    %v1088 = vld [vmem:[%s7 + $0x5c] sm:$0xf]
    %v1093 = vunpack.c.l.b16 %v1085
    %v1094 = vunpack.c.l.b16 %v1086
    %v1095 = vunpack.c.l.b16 %v1087
    %v1096 = vunpack.c.l.b16 %v1088
    %v1097 = vpack.c.b16 %v1094, %v1093
    %v1098 = vpack.c.b16 %v1096, %v1095
    %v1102 = vsel %vm55, %v1084, 0
    %1104 = vmatprep.subr.bf16.mxu0 0
    %1105 = vmatpush1.bf16.msra.mxu0 0
    %1106 = vmatprep.subr.bf16.mxu0 0
    %1107 = vmatpush1.bf16.msra.mxu0 0
    %1108 = vmatprep.subr.bf16.mxu0 0
    %1109 = vmatpush1.bf16.msra.mxu0 0
    %1110 = vmatprep.subr.bf16.mxu0 0
    %1111 = vmatpush1.bf16.msra.mxu0 0
    %1112 = vmatprep.subr.bf16.mxu0 0
    %1113 = vmatpush1.bf16.msra.mxu0 0
    %1114 = vmatprep.subr.bf16.mxu0 0
    %1115 = vmatpush1.bf16.msra.mxu0 0
    %1116 = vmatprep.subr.bf16.mxu0 0
    %1117 = vmatpush1.bf16.msra.mxu0 %v1098
    %1118 = vmatprep.subr.bf16.mxu0 0
    %1119 = vmatpush1.bf16.msra.mxu0 %v1097
    %1120 = vmatprep.subr.bf16.mxu0 0
    %1121 = vmatpush2.bf16.msra.mxu0 0
    %1122 = vmatprep.subr.bf16.mxu0 0
    %1123 = vmatpush2.bf16.msra.mxu0 0
    %1124 = vmatprep.subr.bf16.mxu0 0
    %1125 = vmatpush2.bf16.msra.mxu0 0
    %1126 = vmatprep.subr.bf16.mxu0 0
    %1127 = vmatpush2.bf16.msra.mxu0 0
    %1128 = vmatprep.subr.bf16.mxu0 0
    %1129 = vmatpush2.bf16.msra.mxu0 0
    %1130 = vmatprep.subr.bf16.mxu0 0
    %1131 = vmatpush2.bf16.msra.mxu0 0
    %1132 = vmatprep.subr.bf16.mxu0 0
    %1133 = vmatpush2.bf16.msra.mxu0 0
    %1134 = vmatprep.subr.bf16.mxu0 0
    %1135 = vmatpush2.bf16.msra.mxu0 0
    %1136 = vmatprep.mubr.bf16.mxu0 0
    %1137 = vmatmul.mubr.bf16.gmra.mxu0 %v1102
    %v1138 = vpop.f32.mrf.mxu0
    %v1139 = vadd.f32 0.0, %v1138
    %v1140 = vpop.f32.mrf.mxu0
    %v1141 = vpop.f32.mrf.mxu0
    %v1142 = vpop.f32.mrf.mxu0
    %1143 = vdwg.mxu0
    %v1144 = vadd.f32 %v1077, %v1139
    %1145 = vset.pattern.permute.xlu0 6
    %1146 = vperm.xlu0 %1145, %v745
    %v1147 = vpop.permute.xlu0 %1146
    %v1149 = vmul.f32 %v1078, %v1147
    %v1150 = vpack.c.bf16 %v1149, %v1149
    %v1151 = vld [vmem:[%s7 + $0x60] sm:$0xf]
    %v1152 = vld [vmem:[%s7 + $0x64] sm:$0xf]
    %v1153 = vld [vmem:[%s7 + $0x68] sm:$0xf]
    %v1154 = vld [vmem:[%s7 + $0x6c] sm:$0xf]
    %v1159 = vunpack.c.l.b16 %v1151
    %v1160 = vunpack.c.l.b16 %v1152
    %v1161 = vunpack.c.l.b16 %v1153
    %v1162 = vunpack.c.l.b16 %v1154
    %v1163 = vpack.c.b16 %v1160, %v1159
    %v1164 = vpack.c.b16 %v1162, %v1161
    %v1168 = vsel %vm55, %v1150, 0
    %1170 = vmatprep.subr.bf16.mxu0 0
    %1171 = vmatpush1.bf16.msra.mxu0 0
    %1172 = vmatprep.subr.bf16.mxu0 0
    %1173 = vmatpush1.bf16.msra.mxu0 0
    %1174 = vmatprep.subr.bf16.mxu0 0
    %1175 = vmatpush1.bf16.msra.mxu0 0
    %1176 = vmatprep.subr.bf16.mxu0 0
    %1177 = vmatpush1.bf16.msra.mxu0 0
    %1178 = vmatprep.subr.bf16.mxu0 0
    %1179 = vmatpush1.bf16.msra.mxu0 0
    %1180 = vmatprep.subr.bf16.mxu0 0
    %1181 = vmatpush1.bf16.msra.mxu0 0
    %1182 = vmatprep.subr.bf16.mxu0 0
    %1183 = vmatpush1.bf16.msra.mxu0 %v1164
    %1184 = vmatprep.subr.bf16.mxu0 0
    %1185 = vmatpush1.bf16.msra.mxu0 %v1163
    %1186 = vmatprep.subr.bf16.mxu0 0
    %1187 = vmatpush2.bf16.msra.mxu0 0
    %1188 = vmatprep.subr.bf16.mxu0 0
    %1189 = vmatpush2.bf16.msra.mxu0 0
    %1190 = vmatprep.subr.bf16.mxu0 0
    %1191 = vmatpush2.bf16.msra.mxu0 0
    %1192 = vmatprep.subr.bf16.mxu0 0
    %1193 = vmatpush2.bf16.msra.mxu0 0
    %1194 = vmatprep.subr.bf16.mxu0 0
    %1195 = vmatpush2.bf16.msra.mxu0 0
    %1196 = vmatprep.subr.bf16.mxu0 0
    %1197 = vmatpush2.bf16.msra.mxu0 0
    %1198 = vmatprep.subr.bf16.mxu0 0
    %1199 = vmatpush2.bf16.msra.mxu0 0
    %1200 = vmatprep.subr.bf16.mxu0 0
    %1201 = vmatpush2.bf16.msra.mxu0 0
    %1202 = vmatprep.mubr.bf16.mxu0 0
    %1203 = vmatmul.mubr.bf16.gmra.mxu0 %v1168
    %v1204 = vpop.f32.mrf.mxu0
    %v1205 = vadd.f32 0.0, %v1204
    %v1206 = vpop.f32.mrf.mxu0
    %v1207 = vpop.f32.mrf.mxu0
    %v1208 = vpop.f32.mrf.mxu0
    %1209 = vdwg.mxu0
    %v1210 = vadd.f32 %v1144, %v1205
    %v1211 = vld [vmem:[#allocation3 + $0xa] sm:$0xff]
    %1212 = vset.pattern.permute.xlu0 7
    %1213 = vperm.xlu0 %1212, %v745
    %v1214 = vpop.permute.xlu0 %1213
    %v1216 = vmul.f32 %v1211, %v1214
    %v1217 = vpack.c.bf16 %v1216, %v1216
    %v1218 = vld [vmem:[%s7 + $0x70] sm:$0xf]
    %v1219 = vld [vmem:[%s7 + $0x74] sm:$0xf]
    %v1220 = vld [vmem:[%s7 + $0x78] sm:$0xf]
    %v1221 = vld [vmem:[%s7 + $0x7c] sm:$0xf]
    %v1226 = vunpack.c.l.b16 %v1218
    %v1227 = vunpack.c.l.b16 %v1219
    %v1228 = vunpack.c.l.b16 %v1220
    %v1229 = vunpack.c.l.b16 %v1221
    %v1230 = vpack.c.b16 %v1227, %v1226
    %v1231 = vpack.c.b16 %v1229, %v1228
    %v1235 = vsel %vm55, %v1217, 0
    %1237 = vmatprep.subr.bf16.mxu0 0
    %1238 = vmatpush1.bf16.msra.mxu0 0
    %1239 = vmatprep.subr.bf16.mxu0 0
    %1240 = vmatpush1.bf16.msra.mxu0 0
    %1241 = vmatprep.subr.bf16.mxu0 0
    %1242 = vmatpush1.bf16.msra.mxu0 0
    %1243 = vmatprep.subr.bf16.mxu0 0
    %1244 = vmatpush1.bf16.msra.mxu0 0
    %1245 = vmatprep.subr.bf16.mxu0 0
    %1246 = vmatpush1.bf16.msra.mxu0 0
    %1247 = vmatprep.subr.bf16.mxu0 0
    %1248 = vmatpush1.bf16.msra.mxu0 0
    %1249 = vmatprep.subr.bf16.mxu0 0
    %1250 = vmatpush1.bf16.msra.mxu0 %v1231
    %1251 = vmatprep.subr.bf16.mxu0 0
    %1252 = vmatpush1.bf16.msra.mxu0 %v1230
    %1253 = vmatprep.subr.bf16.mxu0 0
    %1254 = vmatpush2.bf16.msra.mxu0 0
    %1255 = vmatprep.subr.bf16.mxu0 0
    %1256 = vmatpush2.bf16.msra.mxu0 0
    %1257 = vmatprep.subr.bf16.mxu0 0
    %1258 = vmatpush2.bf16.msra.mxu0 0
    %1259 = vmatprep.subr.bf16.mxu0 0
    %1260 = vmatpush2.bf16.msra.mxu0 0
    %1261 = vmatprep.subr.bf16.mxu0 0
    %1262 = vmatpush2.bf16.msra.mxu0 0
    %1263 = vmatprep.subr.bf16.mxu0 0
    %1264 = vmatpush2.bf16.msra.mxu0 0
    %1265 = vmatprep.subr.bf16.mxu0 0
    %1266 = vmatpush2.bf16.msra.mxu0 0
    %1267 = vmatprep.subr.bf16.mxu0 0
    %1268 = vmatpush2.bf16.msra.mxu0 0
    %1269 = vmatprep.mubr.bf16.mxu0 0
    %1270 = vmatmul.mubr.bf16.gmra.mxu0 %v1235
    %v1271 = vpop.f32.mrf.mxu0
    %v1272 = vadd.f32 0.0, %v1271
    %v1273 = vpop.f32.mrf.mxu0
    %v1274 = vpop.f32.mrf.mxu0
    %v1275 = vpop.f32.mrf.mxu0
    %1276 = vdwg.mxu0
    %v1277 = vadd.f32 %v1210, %v1272
    %v1278 = vld [vmem:[#allocation3 + $0xb] sm:$0xff]
    %1279 = vset.pattern.permute.xlu0 8
    %1280 = vperm.xlu0 %1279, %v745
    %v1281 = vpop.permute.xlu0 %1280
    %v1283 = vmul.f32 %v1278, %v1281
    %v1284 = vpack.c.bf16 %v1283, %v1283
    %v1285 = vld [vmem:[%s7 + $0x80] sm:$0xf]
    %v1286 = vld [vmem:[%s7 + $0x84] sm:$0xf]
    %v1287 = vld [vmem:[%s7 + $0x88] sm:$0xf]
    %v1288 = vld [vmem:[%s7 + $0x8c] sm:$0xf]
    %v1293 = vunpack.c.l.b16 %v1285
    %v1294 = vunpack.c.l.b16 %v1286
    %v1295 = vunpack.c.l.b16 %v1287
    %v1296 = vunpack.c.l.b16 %v1288
    %v1297 = vpack.c.b16 %v1294, %v1293
    %v1298 = vpack.c.b16 %v1296, %v1295
    %v1302 = vsel %vm55, %v1284, 0
    %1304 = vmatprep.subr.bf16.mxu0 0
    %1305 = vmatpush1.bf16.msra.mxu0 0
    %1306 = vmatprep.subr.bf16.mxu0 0
    %1307 = vmatpush1.bf16.msra.mxu0 0
    %1308 = vmatprep.subr.bf16.mxu0 0
    %1309 = vmatpush1.bf16.msra.mxu0 0
    %1310 = vmatprep.subr.bf16.mxu0 0
    %1311 = vmatpush1.bf16.msra.mxu0 0
    %1312 = vmatprep.subr.bf16.mxu0 0
    %1313 = vmatpush1.bf16.msra.mxu0 0
    %1314 = vmatprep.subr.bf16.mxu0 0
    %1315 = vmatpush1.bf16.msra.mxu0 0
    %1316 = vmatprep.subr.bf16.mxu0 0
    %1317 = vmatpush1.bf16.msra.mxu0 %v1298
    %1318 = vmatprep.subr.bf16.mxu0 0
    %1319 = vmatpush1.bf16.msra.mxu0 %v1297
    %1320 = vmatprep.subr.bf16.mxu0 0
    %1321 = vmatpush2.bf16.msra.mxu0 0
    %1322 = vmatprep.subr.bf16.mxu0 0
    %1323 = vmatpush2.bf16.msra.mxu0 0
    %1324 = vmatprep.subr.bf16.mxu0 0
    %1325 = vmatpush2.bf16.msra.mxu0 0
    %1326 = vmatprep.subr.bf16.mxu0 0
    %1327 = vmatpush2.bf16.msra.mxu0 0
    %1328 = vmatprep.subr.bf16.mxu0 0
    %1329 = vmatpush2.bf16.msra.mxu0 0
    %1330 = vmatprep.subr.bf16.mxu0 0
    %1331 = vmatpush2.bf16.msra.mxu0 0
    %1332 = vmatprep.subr.bf16.mxu0 0
    %1333 = vmatpush2.bf16.msra.mxu0 0
    %1334 = vmatprep.subr.bf16.mxu0 0
    %1335 = vmatpush2.bf16.msra.mxu0 0
    %1336 = vmatprep.mubr.bf16.mxu0 0
    %1337 = vmatmul.mubr.bf16.gmra.mxu0 %v1302
    %v1338 = vpop.f32.mrf.mxu0
    %v1339 = vadd.f32 0.0, %v1338
    %v1340 = vpop.f32.mrf.mxu0
    %v1341 = vpop.f32.mrf.mxu0
    %v1342 = vpop.f32.mrf.mxu0
    %1343 = vdwg.mxu0
    %v1344 = vadd.f32 %v1277, %v1339
    %v1345 = vld [vmem:[%s8] sm:$0x1]
    %v1347 = vlaneseq
    %v1348 = vshrl.u32 %v1347, 7
    %v1349 = vsub.s32 0, %v1348
    %v1350 = vrot.slane %v1345, %v1349
    %v1352 = vadd.f32 %v1344, %v1350
    %v1353 = vadd.f32 %v1352, 0.0
    %v1354 = vmul.f32 %v1353, 0.5
    %v1355 = vtanh.pop %v1354
    %v1356 = vadd.f32 %v1355, 1.0
    %v1357 = vmul.f32 %v1356, 0.5
    %v1358 = vadd.f32 %v1357, 0.001
    %1360 = vrot.lane.b32.xlu0 %v1352, 16
    %v1361 = vpop.permute.xlu0 %1360
    %v1363 = vadd.f32 %v126, %v1361
    %v1364 = vmul.f32 %v1363, %v1358
    %v1365 = vsel %vm129, %v126, %v1364
    %1366 = vst.msk [vmem:[#allocation4] sm:$0xff] %vm55, %v1365
    %v1367 = vld [vmem:[%s10] sm:$0x3]
    %v1368 = vlog2.pop %v1358
    %v1369 = vmul.f32 %v1368, 0.6931472
    %1371 = vrot.lane.b32.xlu0 %v1369, 112
    %v1372 = vpop.permute.xlu0 %1371
    %vm1374 = vcmask 64512
    %v1376 = vsel %vm1374, %v1367, 0
    %1378 = vmatprep.subr.mxu0 0.0
    %1379 = vmatpush1.msra.mxu0 0.0
    %1380 = vmatprep.subr.mxu0 0.0
    %1381 = vmatpush1.msra.mxu0 0.0
    %1382 = vmatprep.subr.mxu0 0.0
    %1383 = vmatpush1.msra.mxu0 0.0
    %1384 = vmatprep.subr.mxu0 0.0
    %1385 = vmatpush1.msra.mxu0 0.0
    %1386 = vmatprep.subr.mxu0 0.0
    %1387 = vmatpush1.msra.mxu0 0.0
    %1388 = vmatprep.subr.mxu0 0.0
    %1389 = vmatpush1.msra.mxu0 0.0
    %1390 = vmatprep.subr.mxu0 0.0
    %1391 = vmatpush1.msra.mxu0 0.0
    %1392 = vmatprep.subr.mxu0 0.0
    %1393 = vmatpush1.msra.mxu0 0.0
    %1394 = vmatprep.subr.mxu0 0.0
    %1395 = vmatpush1.msra.mxu0 0.0
    %1396 = vmatprep.subr.mxu0 0.0
    %1397 = vmatpush1.msra.mxu0 0.0
    %1398 = vmatprep.subr.mxu0 0.0
    %1399 = vmatpush1.msra.mxu0 0.0
    %1400 = vmatprep.subr.mxu0 0.0
    %1401 = vmatpush1.msra.mxu0 0.0
    %1402 = vmatprep.subr.mxu0 0.0
    %1403 = vmatpush1.msra.mxu0 0.0
    %1404 = vmatprep.subr.mxu0 0.0
    %1405 = vmatpush1.msra.mxu0 0.0
    %1406 = vmatprep.subr.mxu0 0.0
    %1407 = vmatpush1.msra.mxu0 0.0
    %1408 = vmatprep.subr.mxu0 0.0
    %1409 = vmatpush1.msra.mxu0 %v1372
    %1410 = vmatprep.subr.mxu0 0.0
    %1411 = vmatpush2.msra.mxu0 0.0
    %1412 = vmatprep.subr.mxu0 0.0
    %1413 = vmatpush2.msra.mxu0 0.0
    %1414 = vmatprep.subr.mxu0 0.0
    %1415 = vmatpush2.msra.mxu0 0.0
    %1416 = vmatprep.subr.mxu0 0.0
    %1417 = vmatpush2.msra.mxu0 0.0
    %1418 = vmatprep.subr.mxu0 0.0
    %1419 = vmatpush2.msra.mxu0 0.0
    %1420 = vmatprep.subr.mxu0 0.0
    %1421 = vmatpush2.msra.mxu0 0.0
    %1422 = vmatprep.subr.mxu0 0.0
    %1423 = vmatpush2.msra.mxu0 0.0
    %1424 = vmatprep.subr.mxu0 0.0
    %1425 = vmatpush2.msra.mxu0 0.0
    %1426 = vmatprep.subr.mxu0 0.0
    %1427 = vmatpush2.msra.mxu0 0.0
    %1428 = vmatprep.subr.mxu0 0.0
    %1429 = vmatpush2.msra.mxu0 0.0
    %1430 = vmatprep.subr.mxu0 0.0
    %1431 = vmatpush2.msra.mxu0 0.0
    %1432 = vmatprep.subr.mxu0 0.0
    %1433 = vmatpush2.msra.mxu0 0.0
    %1434 = vmatprep.subr.mxu0 0.0
    %1435 = vmatpush2.msra.mxu0 0.0
    %1436 = vmatprep.subr.mxu0 0.0
    %1437 = vmatpush2.msra.mxu0 0.0
    %1438 = vmatprep.subr.mxu0 0.0
    %1439 = vmatpush2.msra.mxu0 0.0
    %1440 = vmatprep.subr.mxu0 0.0
    %1441 = vmatpush2.msra.mxu0 0.0
    %1442 = vmatprep.mubr.f32.mxu0 0.0
    %1443 = vmatmul.mubr.f32.gmra.mxu0 %v1376
    %v1444 = vpop.f32.mrf.mxu0
    %v1445 = vadd.f32 0.0, %v1444
    %v1446 = vpop.f32.mrf.mxu0
    %1447 = vdwg.mxu0
    %vm1448 = vcmask 123904
    %v1449 = vsel %vm1448, %v1445, 0.0
    %1450 = vadd.xlane.f32.xlu0 %v1449
    %v1451 = vpop.xlane.xlu0 %1450
    %vm1452 = vcmask 1024
    %1453 = vst.msk [vmem:[%s12] sm:$0x3] %vm1452, %v1451
    %v1454 = vmul.f32 %v1365, %v1365
    %1455 = vmatprep.subr.mxu0 0.0
    %1456 = vmatpush1.msra.mxu0 0.0
    %1457 = vmatprep.subr.mxu0 0.0
    %1458 = vmatpush1.msra.mxu0 0.0
    %1459 = vmatprep.subr.mxu0 0.0
    %1460 = vmatpush1.msra.mxu0 0.0
    %1461 = vmatprep.subr.mxu0 0.0
    %1462 = vmatpush1.msra.mxu0 0.0
    %1463 = vmatprep.subr.mxu0 0.0
    %1464 = vmatpush1.msra.mxu0 0.0
    %1465 = vmatprep.subr.mxu0 0.0
    %1466 = vmatpush1.msra.mxu0 0.0
    %1467 = vmatprep.subr.mxu0 0.0
    %1468 = vmatpush1.msra.mxu0 0.0
    %1469 = vmatprep.subr.mxu0 0.0
    %1470 = vmatpush1.msra.mxu0 0.0
    %1471 = vmatprep.subr.mxu0 0.0
    %1472 = vmatpush1.msra.mxu0 0.0
    %1473 = vmatprep.subr.mxu0 0.0
    %1474 = vmatpush1.msra.mxu0 0.0
    %1475 = vmatprep.subr.mxu0 0.0
    %1476 = vmatpush1.msra.mxu0 0.0
    %1477 = vmatprep.subr.mxu0 0.0
    %1478 = vmatpush1.msra.mxu0 0.0
    %1479 = vmatprep.subr.mxu0 0.0
    %1480 = vmatpush1.msra.mxu0 0.0
    %1481 = vmatprep.subr.mxu0 0.0
    %1482 = vmatpush1.msra.mxu0 0.0
    %1483 = vmatprep.subr.mxu0 0.0
    %1484 = vmatpush1.msra.mxu0 0.0
    %1485 = vmatprep.subr.mxu0 0.0
    %1486 = vmatpush1.msra.mxu0 %v1454
    %1487 = vmatprep.subr.mxu0 0.0
    %1488 = vmatpush2.msra.mxu0 0.0
    %1489 = vmatprep.subr.mxu0 0.0
    %1490 = vmatpush2.msra.mxu0 0.0
    %1491 = vmatprep.subr.mxu0 0.0
    %1492 = vmatpush2.msra.mxu0 0.0
    %1493 = vmatprep.subr.mxu0 0.0
    %1494 = vmatpush2.msra.mxu0 0.0
    %1495 = vmatprep.subr.mxu0 0.0
    %1496 = vmatpush2.msra.mxu0 0.0
    %1497 = vmatprep.subr.mxu0 0.0
    %1498 = vmatpush2.msra.mxu0 0.0
    %1499 = vmatprep.subr.mxu0 0.0
    %1500 = vmatpush2.msra.mxu0 0.0
    %1501 = vmatprep.subr.mxu0 0.0
    %1502 = vmatpush2.msra.mxu0 0.0
    %1503 = vmatprep.subr.mxu0 0.0
    %1504 = vmatpush2.msra.mxu0 0.0
    %1505 = vmatprep.subr.mxu0 0.0
    %1506 = vmatpush2.msra.mxu0 0.0
    %1507 = vmatprep.subr.mxu0 0.0
    %1508 = vmatpush2.msra.mxu0 0.0
    %1509 = vmatprep.subr.mxu0 0.0
    %1510 = vmatpush2.msra.mxu0 0.0
    %1511 = vmatprep.subr.mxu0 0.0
    %1512 = vmatpush2.msra.mxu0 0.0
    %1513 = vmatprep.subr.mxu0 0.0
    %1514 = vmatpush2.msra.mxu0 0.0
    %1515 = vmatprep.subr.mxu0 0.0
    %1516 = vmatpush2.msra.mxu0 0.0
    %1517 = vmatprep.subr.mxu0 0.0
    %1518 = vmatpush2.msra.mxu0 0.0
    %1519 = vmatprep.mubr.f32.mxu0 0.0
    %1520 = vmatmul.mubr.f32.gmra.mxu0 %v1376
    %v1521 = vpop.f32.mrf.mxu0
    %v1522 = vadd.f32 0.0, %v1521
    %v1523 = vpop.f32.mrf.mxu0
    %1524 = vdwg.mxu0
    %vm1525 = vcmask 254976
    %v1526 = vsel %vm1525, %v1522, 0.0
    %1527 = vadd.xlane.f32.xlu0 %v1526
    %v1528 = vpop.xlane.xlu0 %1527
    %v1529 = vmul.f32 %v1528, -0.5
    %1530 = vst.msk [vmem:[%s13] sm:$0x3] %vm1452, %v1529
    // Predicated region
    $region46: #{glow_forward.9} parent=1 // pred_check
      _
    $region47: #{glow_forward.9} parent=1 // pred_check_branch
      %1532 = sbr.rel (0) target = $region49
    $region48: #{glow_forward.9} parent=1 // pred_region
      %s1534 = ssub.s32 128, 128
      %1535 = vsyncadd [#allocation5], %s1534
      %s1537 = sshll.u32 [#allocation4], 4
      %s1538 = int_to_ptr.vmem [resolvable:$true] %s1537
      %1540 = dma.vmem_to_hbm [thread:$0]  %s1538, 128, %s11, [#allocation5]
    $region49: #{glow_forward.9} parent=1 // pred_fallthru
      _
    // Predicated region
    $region50: #{glow_forward.9} parent=1 // pred_check
      _
    $region51: #{glow_forward.9} parent=1 // pred_check_branch
      %1542 = sbr.rel (0) target = $region53
    $region52: #{glow_forward.9} parent=1 // pred_region
      _
    $region53: #{glow_forward.9} parent=1 // pred_fallthru
      _
    // Predicated region
    $region54: #{glow_forward.9} parent=1 // pred_check
      _
    $region55: #{glow_forward.9} parent=1 // pred_check_branch
      %1544 = sbr.rel (0) target = $region57
    $region56: #{glow_forward.9} parent=1 // pred_region
      _
    $region57: #{glow_forward.9} parent=1 // pred_fallthru
      _
    // Predicated region
    $region58: #{glow_forward.9} parent=1 // pred_check
      _
    $region59: #{glow_forward.9} parent=1 // pred_check_branch
      %1546 = sbr.rel (0) target = $region61
    $region60: #{glow_forward.9} parent=1 // pred_region
      %1547 = dma.done [#allocation5], 128
    $region61: #{glow_forward.9} parent=1 // pred_fallthru
      _
    // Predicated region
    $region62: #{glow_forward.9} parent=1 // pred_check
      _
    $region63: #{glow_forward.9} parent=1 // pred_check_branch
      %1549 = sbr.rel (0) target = $region65
    $region64: #{glow_forward.9} parent=1 // pred_region
      _
    $region65: #{glow_forward.9} parent=1 // pred_fallthru
      _
    // Predicated region
    $region66: #{glow_forward.9} parent=1 // pred_check
      _
    $region67: #{glow_forward.9} parent=1 // pred_check_branch
      %1551 = sbr.rel (0) target = $region69
    $region68: #{glow_forward.9} parent=1 // pred_region
      _
    $region69: #{glow_forward.9} parent=1 // pred_fallthru
      _
    %1552 = vsyncpa [#allocation5], 1

</llo_original>
